<compile_context>
chip_gen: v7x
topology: tpu7x:2x2x1
jax: 0.10.0
libtpu: 0.0.40
codegen_flags: <defaults>
</compile_context>

<pallas_src>
import functools

import numpy as np

import jax
import jax.numpy as jnp
from jax.experimental import pallas as pl
from jax.experimental.pallas import tpu as pltpu

NUM_CLASSES = 21
HIDDEN = 32
LANES = 128  # TPU lane width; classifier output padded to this for dense stores


def _tap_masks(H, W):
    """[9, H*W, 1] f32 validity masks for the 9 taps of a 3x3 'same' conv.

    Tap t = (di+1)*3 + (dj+1) reads source pixel (i+di, j+dj).  The mask zeroes
    contributions whose source lies outside the image (i.e. it IS the zero padding),
    which also kills the wrap-around rows introduced by pltpu.roll on the flattened
    [H*W, C] activation.
    """
    i = np.arange(H)[:, None]
    j = np.arange(W)[None, :]
    masks = []
    for di in (-1, 0, 1):
        for dj in (-1, 0, 1):
            ok = (i + di >= 0) & (i + di < H) & (j + dj >= 0) & (j + dj < W)  # [H, W]
            masks.append(ok.astype(np.float32).reshape(H * W, 1))
    return jnp.asarray(np.stack(masks, axis=0))  # [9, H*W, 1]


# --------------------------------------------------------------------------
# Fused Pallas kernel: conv3x3+ReLU -> conv3x3+ReLU -> conv1x1 (per batch tile)
# --------------------------------------------------------------------------
def _pdfnet_fused_kernel(mask_ref, x_ref, w1_ref, b1_ref, w2_ref, b2_ref,
                         w3_ref, b3_ref, o_ref, *, H, W):
    """mask_ref: [9, H*W, 1] f32   tap validity masks (zero padding folded in)
       x_ref:    [1, H*W, Cin] f32 flattened NHWC input tile for this batch element
       w1/w2:    [9, Cin, Cout] bf16 tap-major 3x3 weights;  w3: [Cin, 128] bf16
       b1/b2:    [1, Cout] f32;  b3: [1, 128] f32
       o_ref:    [1, H*W, 128] f32 lane-dense logits (classes padded to 128)
    """
    hw = H * W

    def conv3x3(h, w_tap_ref, b_row_ref):
        cout = w_tap_ref.shape[-1]
        acc = jnp.zeros((hw, cout), jnp.float32)
        t = 0
        for di in (-1, 0, 1):
            for dj in (-1, 0, 1):
                s = di * W + dj  # flat source offset of this tap
                src = h if s == 0 else pltpu.roll(h, shift=(-s) % hw, axis=0)
                src = src * mask_ref[t]                 # zero out-of-image sources
                acc = acc + jnp.dot(src.astype(jnp.bfloat16), w_tap_ref[t],
                                    preferred_element_type=jnp.float32)
                t += 1
        return jnp.maximum(acc + b_row_ref[...], 0.0)

    h1 = conv3x3(x_ref[0], w1_ref, b1_ref)              # [H*W, HIDDEN]
    h2 = conv3x3(h1, w2_ref, b2_ref)                    # [H*W, HIDDEN]
    logits = jnp.dot(h2.astype(jnp.bfloat16), w3_ref[...],
                     preferred_element_type=jnp.float32) + b3_ref[...]
    o_ref[0] = logits                                   # dense 128-lane store


# --------------------------------------------------------------------------
# Parameter init (deterministic, synthetic — no checkpoint loading)
# --------------------------------------------------------------------------
def init_params(key, c_in, hidden=HIDDEN, num_classes=NUM_CLASSES):
    k1, k2, k3 = jax.random.split(key, 3)
    scale1 = 1.0 / jnp.sqrt(3.0 * 3.0 * c_in)
    scale2 = 1.0 / jnp.sqrt(3.0 * 3.0 * hidden)
    scale3 = 1.0 / jnp.sqrt(float(hidden))
    return {
        "w1": jax.random.normal(k1, (3, 3, c_in, hidden), jnp.float32) * scale1,
        "b1": jnp.zeros((hidden,), jnp.float32),
        "w2": jax.random.normal(k2, (3, 3, hidden, hidden), jnp.float32) * scale2,
        "b2": jnp.zeros((hidden,), jnp.float32),
        "w3": jax.random.normal(k3, (hidden, num_classes), jnp.float32) * scale3,
        "b3": jnp.zeros((num_classes,), jnp.float32),
    }


# --------------------------------------------------------------------------
# PDFNET forward:  NCHW in -> NCHW logits out  (matches nn.Module semantics)
# --------------------------------------------------------------------------
@jax.jit
def pdfnet_forward(params, x_nchw):
    B, C, H, W = x_nchw.shape
    hw = H * W
    hidden = params["w1"].shape[-1]
    num_classes = params["w3"].shape[-1]

    # NCHW -> flat NHWC rows [B, H*W, C]  (free layout plumbing in XLA).
    x = jnp.transpose(x_nchw, (0, 2, 3, 1)).reshape(B, hw, C).astype(jnp.float32)

    # Hoisted weight/bias layout transforms: tap-major 3x3 weights, bf16 MXU operands,
    # classifier padded to a dense 128-lane output (sliced back below).
    w1 = params["w1"].reshape(9, C, hidden).astype(jnp.bfloat16)
    w2 = params["w2"].reshape(9, hidden, hidden).astype(jnp.bfloat16)
    b1 = params["b1"].reshape(1, hidden).astype(jnp.float32)
    b2 = params["b2"].reshape(1, hidden).astype(jnp.float32)
    w3 = jnp.zeros((hidden, LANES), jnp.bfloat16).at[:, :num_classes].set(
        params["w3"].astype(jnp.bfloat16))
    b3 = jnp.zeros((1, LANES), jnp.float32).at[:, :num_classes].set(
        params["b3"].reshape(1, num_classes).astype(jnp.float32))

    masks = _tap_masks(H, W)  # [9, H*W, 1] compile-time constants

    out = pl.pallas_call(
        functools.partial(_pdfnet_fused_kernel, H=H, W=W),
        out_shape=jax.ShapeDtypeStruct((B, hw, LANES), jnp.float32),
        grid=(B,),
        in_specs=[
            pl.BlockSpec((9, hw, 1), lambda b: (0, 0, 0)),             # masks (DMA'd once)
            pl.BlockSpec((1, hw, C), lambda b: (b, 0, 0)),             # x tile of batch b
            pl.BlockSpec((9, C, hidden), lambda b: (0, 0, 0)),         # w1    (DMA'd once)
            pl.BlockSpec((1, hidden), lambda b: (0, 0)),               # b1
            pl.BlockSpec((9, hidden, hidden), lambda b: (0, 0, 0)),    # w2
            pl.BlockSpec((1, hidden), lambda b: (0, 0)),               # b2
            pl.BlockSpec((hidden, LANES), lambda b: (0, 0)),           # w3 (lane padded)
            pl.BlockSpec((1, LANES), lambda b: (0, 0)),                # b3 (lane padded)
        ],
        out_specs=pl.BlockSpec((1, hw, LANES), lambda b: (b, 0, 0)),
        compiler_params=pltpu.CompilerParams(
            dimension_semantics=("parallel",),   # batch tiles independent (v7x: 2 TCs)
        ),
    )(masks, x, w1, b1, w2, b2, w3, b3)

    # Strip lane padding, restore NCHW (free layout plumbing outside the kernel).
    logits = out[:, :, :num_classes].reshape(B, H, W, num_classes)
    return jnp.transpose(logits, (0, 3, 1, 2))


if __name__ == "__main__":
    key = jax.random.PRNGKey(0)
    k_x, k_p = jax.random.split(key)

    B, C, H, W = 2, 4, 16, 16
    x = jax.random.normal(k_x, (B, C, H, W), jnp.float32)
    params = init_params(k_p, c_in=C)

    logits = pdfnet_forward(params, x)
    logits = jax.block_until_ready(logits)

    assert logits.shape == (B, NUM_CLASSES, H, W), logits.shape
    assert bool(jnp.all(jnp.isfinite(logits)))
    print("KERNEL_OK")
</pallas_src>

<mosaic_0001>
module attributes {stable_mosaic.version = 11 : i64} {
  func.func @_pdfnet_fused_kernel(%arg0: i32, %arg1: memref<9x256x1xf32, #tpu.memory_space<vmem>>, %arg2: memref<1x256x4xf32, #tpu.memory_space<vmem>>, %arg3: memref<9x4x32xbf16, #tpu.memory_space<vmem>>, %arg4: memref<1x32xf32, #tpu.memory_space<vmem>>, %arg5: memref<9x32x32xbf16, #tpu.memory_space<vmem>>, %arg6: memref<1x32xf32, #tpu.memory_space<vmem>>, %arg7: memref<32x128xbf16, #tpu.memory_space<vmem>>, %arg8: memref<1x128xf32, #tpu.memory_space<vmem>>, %arg9: memref<1x256x128xf32, #tpu.memory_space<vmem>>) attributes {dimension_semantics = [#tpu.dimension_semantics<parallel>], iteration_bounds = array<i64: 2>, scalar_prefetch = 0 : i64, scratch_operands = 0 : i64, tpu.core_type = #tpu.core_type<tc>, window_params = [{pipeline_mode = #tpu.pipeline_mode<synchronous>, transform_indices = @transform_0, window_bounds = array<i64: 9, 256, 1>}, {transform_indices = @transform_1, window_bounds = array<i64: 1, 256, 4>}, {pipeline_mode = #tpu.pipeline_mode<synchronous>, transform_indices = @transform_2, window_bounds = array<i64: 9, 4, 32>}, {pipeline_mode = #tpu.pipeline_mode<synchronous>, transform_indices = @transform_3, window_bounds = array<i64: 1, 32>}, {pipeline_mode = #tpu.pipeline_mode<synchronous>, transform_indices = @transform_4, window_bounds = array<i64: 9, 32, 32>}, {pipeline_mode = #tpu.pipeline_mode<synchronous>, transform_indices = @transform_5, window_bounds = array<i64: 1, 32>}, {pipeline_mode = #tpu.pipeline_mode<synchronous>, transform_indices = @transform_6, window_bounds = array<i64: 32, 128>}, {pipeline_mode = #tpu.pipeline_mode<synchronous>, transform_indices = @transform_7, window_bounds = array<i64: 1, 128>}, {transform_indices = @transform_8, window_bounds = array<i64: 1, 256, 128>}]} {
    %c0 = arith.constant 0 : index
    %c0_0 = arith.constant 0 : index
    %c0_1 = arith.constant 0 : index
    %0 = vector.load %arg2[%c0, %c0_0, %c0_1] : memref<1x256x4xf32, #tpu.memory_space<vmem>>, vector<1x256x4xf32>
    %1 = vector.shape_cast %0 : vector<1x256x4xf32> to vector<256x4xf32>
    %cst = arith.constant 0.000000e+00 : f32
    %2 = vector.broadcast %cst : f32 to vector<256x32xf32>
    %c17_i32 = arith.constant 17 : i32
    %3 = tpu.dynamic_rotate %1 by %c17_i32 dim 0 : vector<256x4xf32>, i32 -> vector<256x4xf32>
    %c0_2 = arith.constant 0 : index
    %c0_3 = arith.constant 0 : index
    %c0_4 = arith.constant 0 : index
    %4 = vector.load %arg1[%c0_2, %c0_3, %c0_4] : memref<9x256x1xf32, #tpu.memory_space<vmem>>, vector<1x256x1xf32>
    %5 = vector.shape_cast %4 : vector<1x256x1xf32> to vector<256x1xf32>
    %6 = vector.broadcast %5 : vector<256x1xf32> to vector<256x4xf32>
    %7 = arith.mulf %3, %6 : vector<256x4xf32>
    %8 = arith.truncf %7 : vector<256x4xf32> to vector<256x4xbf16>
    %c0_5 = arith.constant 0 : index
    %c0_6 = arith.constant 0 : index
    %c0_7 = arith.constant 0 : index
    %9 = vector.load %arg3[%c0_5, %c0_6, %c0_7] : memref<9x4x32xbf16, #tpu.memory_space<vmem>>, vector<1x4x32xbf16>
    %10 = vector.shape_cast %9 : vector<1x4x32xbf16> to vector<4x32xbf16>
    %cst_8 = arith.constant dense<0.000000e+00> : vector<256x32xf32>
    %11 = tpu.matmul %8, %10, %cst_8 {dimension_numbers = #tpu.dot_dimension_numbers<[1], [0], [0], [1], [0, 0, 1, 1], [], []>} : vector<256x4xbf16>, vector<4x32xbf16>, vector<256x32xf32> -> vector<256x32xf32>
    %12 = arith.addf %2, %11 : vector<256x32xf32>
    %c16_i32 = arith.constant 16 : i32
    %13 = tpu.dynamic_rotate %1 by %c16_i32 dim 0 : vector<256x4xf32>, i32 -> vector<256x4xf32>
    %c1 = arith.constant 1 : index
    %c0_9 = arith.constant 0 : index
    %c0_10 = arith.constant 0 : index
    %14 = vector.load %arg1[%c1, %c0_9, %c0_10] : memref<9x256x1xf32, #tpu.memory_space<vmem>>, vector<1x256x1xf32>
    %15 = vector.shape_cast %14 : vector<1x256x1xf32> to vector<256x1xf32>
    %16 = vector.broadcast %15 : vector<256x1xf32> to vector<256x4xf32>
    %17 = arith.mulf %13, %16 : vector<256x4xf32>
    %18 = arith.truncf %17 : vector<256x4xf32> to vector<256x4xbf16>
    %c1_11 = arith.constant 1 : index
    %c0_12 = arith.constant 0 : index
    %c0_13 = arith.constant 0 : index
    %19 = vector.load %arg3[%c1_11, %c0_12, %c0_13] : memref<9x4x32xbf16, #tpu.memory_space<vmem>>, vector<1x4x32xbf16>
    %20 = vector.shape_cast %19 : vector<1x4x32xbf16> to vector<4x32xbf16>
    %cst_14 = arith.constant dense<0.000000e+00> : vector<256x32xf32>
    %21 = tpu.matmul %18, %20, %cst_14 {dimension_numbers = #tpu.dot_dimension_numbers<[1], [0], [0], [1], [0, 0, 1, 1], [], []>} : vector<256x4xbf16>, vector<4x32xbf16>, vector<256x32xf32> -> vector<256x32xf32>
    %22 = arith.addf %12, %21 : vector<256x32xf32>
    %c15_i32 = arith.constant 15 : i32
    %23 = tpu.dynamic_rotate %1 by %c15_i32 dim 0 : vector<256x4xf32>, i32 -> vector<256x4xf32>
    %c2 = arith.constant 2 : index
    %c0_15 = arith.constant 0 : index
    %c0_16 = arith.constant 0 : index
    %24 = vector.load %arg1[%c2, %c0_15, %c0_16] : memref<9x256x1xf32, #tpu.memory_space<vmem>>, vector<1x256x1xf32>
    %25 = vector.shape_cast %24 : vector<1x256x1xf32> to vector<256x1xf32>
    %26 = vector.broadcast %25 : vector<256x1xf32> to vector<256x4xf32>
    %27 = arith.mulf %23, %26 : vector<256x4xf32>
    %28 = arith.truncf %27 : vector<256x4xf32> to vector<256x4xbf16>
    %c2_17 = arith.constant 2 : index
    %c0_18 = arith.constant 0 : index
    %c0_19 = arith.constant 0 : index
    %29 = vector.load %arg3[%c2_17, %c0_18, %c0_19] : memref<9x4x32xbf16, #tpu.memory_space<vmem>>, vector<1x4x32xbf16>
    %30 = vector.shape_cast %29 : vector<1x4x32xbf16> to vector<4x32xbf16>
    %cst_20 = arith.constant dense<0.000000e+00> : vector<256x32xf32>
    %31 = tpu.matmul %28, %30, %cst_20 {dimension_numbers = #tpu.dot_dimension_numbers<[1], [0], [0], [1], [0, 0, 1, 1], [], []>} : vector<256x4xbf16>, vector<4x32xbf16>, vector<256x32xf32> -> vector<256x32xf32>
    %32 = arith.addf %22, %31 : vector<256x32xf32>
    %c1_i32 = arith.constant 1 : i32
    %33 = tpu.dynamic_rotate %1 by %c1_i32 dim 0 : vector<256x4xf32>, i32 -> vector<256x4xf32>
    %c3 = arith.constant 3 : index
    %c0_21 = arith.constant 0 : index
    %c0_22 = arith.constant 0 : index
    %34 = vector.load %arg1[%c3, %c0_21, %c0_22] : memref<9x256x1xf32, #tpu.memory_space<vmem>>, vector<1x256x1xf32>
    %35 = vector.shape_cast %34 : vector<1x256x1xf32> to vector<256x1xf32>
    %36 = vector.broadcast %35 : vector<256x1xf32> to vector<256x4xf32>
    %37 = arith.mulf %33, %36 : vector<256x4xf32>
    %38 = arith.truncf %37 : vector<256x4xf32> to vector<256x4xbf16>
    %c3_23 = arith.constant 3 : index
    %c0_24 = arith.constant 0 : index
    %c0_25 = arith.constant 0 : index
    %39 = vector.load %arg3[%c3_23, %c0_24, %c0_25] : memref<9x4x32xbf16, #tpu.memory_space<vmem>>, vector<1x4x32xbf16>
    %40 = vector.shape_cast %39 : vector<1x4x32xbf16> to vector<4x32xbf16>
    %cst_26 = arith.constant dense<0.000000e+00> : vector<256x32xf32>
    %41 = tpu.matmul %38, %40, %cst_26 {dimension_numbers = #tpu.dot_dimension_numbers<[1], [0], [0], [1], [0, 0, 1, 1], [], []>} : vector<256x4xbf16>, vector<4x32xbf16>, vector<256x32xf32> -> vector<256x32xf32>
    %42 = arith.addf %32, %41 : vector<256x32xf32>
    %c4 = arith.constant 4 : index
    %c0_27 = arith.constant 0 : index
    %c0_28 = arith.constant 0 : index
    %43 = vector.load %arg1[%c4, %c0_27, %c0_28] : memref<9x256x1xf32, #tpu.memory_space<vmem>>, vector<1x256x1xf32>
    %44 = vector.shape_cast %43 : vector<1x256x1xf32> to vector<256x1xf32>
    %45 = vector.broadcast %44 : vector<256x1xf32> to vector<256x4xf32>
    %46 = arith.mulf %1, %45 : vector<256x4xf32>
    %47 = arith.truncf %46 : vector<256x4xf32> to vector<256x4xbf16>
    %c4_29 = arith.constant 4 : index
    %c0_30 = arith.constant 0 : index
    %c0_31 = arith.constant 0 : index
    %48 = vector.load %arg3[%c4_29, %c0_30, %c0_31] : memref<9x4x32xbf16, #tpu.memory_space<vmem>>, vector<1x4x32xbf16>
    %49 = vector.shape_cast %48 : vector<1x4x32xbf16> to vector<4x32xbf16>
    %cst_32 = arith.constant dense<0.000000e+00> : vector<256x32xf32>
    %50 = tpu.matmul %47, %49, %cst_32 {dimension_numbers = #tpu.dot_dimension_numbers<[1], [0], [0], [1], [0, 0, 1, 1], [], []>} : vector<256x4xbf16>, vector<4x32xbf16>, vector<256x32xf32> -> vector<256x32xf32>
    %51 = arith.addf %42, %50 : vector<256x32xf32>
    %c255_i32 = arith.constant 255 : i32
    %52 = tpu.dynamic_rotate %1 by %c255_i32 dim 0 : vector<256x4xf32>, i32 -> vector<256x4xf32>
    %c5 = arith.constant 5 : index
    %c0_33 = arith.constant 0 : index
    %c0_34 = arith.constant 0 : index
    %53 = vector.load %arg1[%c5, %c0_33, %c0_34] : memref<9x256x1xf32, #tpu.memory_space<vmem>>, vector<1x256x1xf32>
    %54 = vector.shape_cast %53 : vector<1x256x1xf32> to vector<256x1xf32>
    %55 = vector.broadcast %54 : vector<256x1xf32> to vector<256x4xf32>
    %56 = arith.mulf %52, %55 : vector<256x4xf32>
    %57 = arith.truncf %56 : vector<256x4xf32> to vector<256x4xbf16>
    %c5_35 = arith.constant 5 : index
    %c0_36 = arith.constant 0 : index
    %c0_37 = arith.constant 0 : index
    %58 = vector.load %arg3[%c5_35, %c0_36, %c0_37] : memref<9x4x32xbf16, #tpu.memory_space<vmem>>, vector<1x4x32xbf16>
    %59 = vector.shape_cast %58 : vector<1x4x32xbf16> to vector<4x32xbf16>
    %cst_38 = arith.constant dense<0.000000e+00> : vector<256x32xf32>
    %60 = tpu.matmul %57, %59, %cst_38 {dimension_numbers = #tpu.dot_dimension_numbers<[1], [0], [0], [1], [0, 0, 1, 1], [], []>} : vector<256x4xbf16>, vector<4x32xbf16>, vector<256x32xf32> -> vector<256x32xf32>
    %61 = arith.addf %51, %60 : vector<256x32xf32>
    %c241_i32 = arith.constant 241 : i32
    %62 = tpu.dynamic_rotate %1 by %c241_i32 dim 0 : vector<256x4xf32>, i32 -> vector<256x4xf32>
    %c6 = arith.constant 6 : index
    %c0_39 = arith.constant 0 : index
    %c0_40 = arith.constant 0 : index
    %63 = vector.load %arg1[%c6, %c0_39, %c0_40] : memref<9x256x1xf32, #tpu.memory_space<vmem>>, vector<1x256x1xf32>
    %64 = vector.shape_cast %63 : vector<1x256x1xf32> to vector<256x1xf32>
    %65 = vector.broadcast %64 : vector<256x1xf32> to vector<256x4xf32>
    %66 = arith.mulf %62, %65 : vector<256x4xf32>
    %67 = arith.truncf %66 : vector<256x4xf32> to vector<256x4xbf16>
    %c6_41 = arith.constant 6 : index
    %c0_42 = arith.constant 0 : index
    %c0_43 = arith.constant 0 : index
    %68 = vector.load %arg3[%c6_41, %c0_42, %c0_43] : memref<9x4x32xbf16, #tpu.memory_space<vmem>>, vector<1x4x32xbf16>
    %69 = vector.shape_cast %68 : vector<1x4x32xbf16> to vector<4x32xbf16>
    %cst_44 = arith.constant dense<0.000000e+00> : vector<256x32xf32>
    %70 = tpu.matmul %67, %69, %cst_44 {dimension_numbers = #tpu.dot_dimension_numbers<[1], [0], [0], [1], [0, 0, 1, 1], [], []>} : vector<256x4xbf16>, vector<4x32xbf16>, vector<256x32xf32> -> vector<256x32xf32>
    %71 = arith.addf %61, %70 : vector<256x32xf32>
    %c240_i32 = arith.constant 240 : i32
    %72 = tpu.dynamic_rotate %1 by %c240_i32 dim 0 : vector<256x4xf32>, i32 -> vector<256x4xf32>
    %c7 = arith.constant 7 : index
    %c0_45 = arith.constant 0 : index
    %c0_46 = arith.constant 0 : index
    %73 = vector.load %arg1[%c7, %c0_45, %c0_46] : memref<9x256x1xf32, #tpu.memory_space<vmem>>, vector<1x256x1xf32>
    %74 = vector.shape_cast %73 : vector<1x256x1xf32> to vector<256x1xf32>
    %75 = vector.broadcast %74 : vector<256x1xf32> to vector<256x4xf32>
    %76 = arith.mulf %72, %75 : vector<256x4xf32>
    %77 = arith.truncf %76 : vector<256x4xf32> to vector<256x4xbf16>
    %c7_47 = arith.constant 7 : index
    %c0_48 = arith.constant 0 : index
    %c0_49 = arith.constant 0 : index
    %78 = vector.load %arg3[%c7_47, %c0_48, %c0_49] : memref<9x4x32xbf16, #tpu.memory_space<vmem>>, vector<1x4x32xbf16>
    %79 = vector.shape_cast %78 : vector<1x4x32xbf16> to vector<4x32xbf16>
    %cst_50 = arith.constant dense<0.000000e+00> : vector<256x32xf32>
    %80 = tpu.matmul %77, %79, %cst_50 {dimension_numbers = #tpu.dot_dimension_numbers<[1], [0], [0], [1], [0, 0, 1, 1], [], []>} : vector<256x4xbf16>, vector<4x32xbf16>, vector<256x32xf32> -> vector<256x32xf32>
    %81 = arith.addf %71, %80 : vector<256x32xf32>
    %c239_i32 = arith.constant 239 : i32
    %82 = tpu.dynamic_rotate %1 by %c239_i32 dim 0 : vector<256x4xf32>, i32 -> vector<256x4xf32>
    %c8 = arith.constant 8 : index
    %c0_51 = arith.constant 0 : index
    %c0_52 = arith.constant 0 : index
    %83 = vector.load %arg1[%c8, %c0_51, %c0_52] : memref<9x256x1xf32, #tpu.memory_space<vmem>>, vector<1x256x1xf32>
    %84 = vector.shape_cast %83 : vector<1x256x1xf32> to vector<256x1xf32>
    %85 = vector.broadcast %84 : vector<256x1xf32> to vector<256x4xf32>
    %86 = arith.mulf %82, %85 : vector<256x4xf32>
    %87 = arith.truncf %86 : vector<256x4xf32> to vector<256x4xbf16>
    %c8_53 = arith.constant 8 : index
    %c0_54 = arith.constant 0 : index
    %c0_55 = arith.constant 0 : index
    %88 = vector.load %arg3[%c8_53, %c0_54, %c0_55] : memref<9x4x32xbf16, #tpu.memory_space<vmem>>, vector<1x4x32xbf16>
    %89 = vector.shape_cast %88 : vector<1x4x32xbf16> to vector<4x32xbf16>
    %cst_56 = arith.constant dense<0.000000e+00> : vector<256x32xf32>
    %90 = tpu.matmul %87, %89, %cst_56 {dimension_numbers = #tpu.dot_dimension_numbers<[1], [0], [0], [1], [0, 0, 1, 1], [], []>} : vector<256x4xbf16>, vector<4x32xbf16>, vector<256x32xf32> -> vector<256x32xf32>
    %91 = arith.addf %81, %90 : vector<256x32xf32>
    %c0_57 = arith.constant 0 : index
    %c0_58 = arith.constant 0 : index
    %92 = vector.load %arg4[%c0_57, %c0_58] : memref<1x32xf32, #tpu.memory_space<vmem>>, vector<1x32xf32>
    %93 = vector.broadcast %92 : vector<1x32xf32> to vector<256x32xf32>
    %94 = arith.addf %91, %93 : vector<256x32xf32>
    %cst_59 = arith.constant 0.000000e+00 : f32
    %95 = vector.broadcast %cst_59 : f32 to vector<256x32xf32>
    %96 = arith.maximumf %94, %95 : vector<256x32xf32>
    %cst_60 = arith.constant 0.000000e+00 : f32
    %97 = vector.broadcast %cst_60 : f32 to vector<256x32xf32>
    %c17_i32_61 = arith.constant 17 : i32
    %98 = tpu.dynamic_rotate %96 by %c17_i32_61 dim 0 : vector<256x32xf32>, i32 -> vector<256x32xf32>
    %c0_62 = arith.constant 0 : index
    %c0_63 = arith.constant 0 : index
    %c0_64 = arith.constant 0 : index
    %99 = vector.load %arg1[%c0_62, %c0_63, %c0_64] : memref<9x256x1xf32, #tpu.memory_space<vmem>>, vector<1x256x1xf32>
    %100 = vector.shape_cast %99 : vector<1x256x1xf32> to vector<256x1xf32>
    %101 = vector.broadcast %100 : vector<256x1xf32> to vector<256x32xf32>
    %102 = arith.mulf %98, %101 : vector<256x32xf32>
    %103 = arith.truncf %102 : vector<256x32xf32> to vector<256x32xbf16>
    %c0_65 = arith.constant 0 : index
    %c0_66 = arith.constant 0 : index
    %c0_67 = arith.constant 0 : index
    %104 = vector.load %arg5[%c0_65, %c0_66, %c0_67] : memref<9x32x32xbf16, #tpu.memory_space<vmem>>, vector<1x32x32xbf16>
    %105 = vector.shape_cast %104 : vector<1x32x32xbf16> to vector<32x32xbf16>
    %cst_68 = arith.constant dense<0.000000e+00> : vector<256x32xf32>
    %106 = tpu.matmul %103, %105, %cst_68 {dimension_numbers = #tpu.dot_dimension_numbers<[1], [0], [0], [1], [0, 0, 1, 1], [], []>} : vector<256x32xbf16>, vector<32x32xbf16>, vector<256x32xf32> -> vector<256x32xf32>
    %107 = arith.addf %97, %106 : vector<256x32xf32>
    %c16_i32_69 = arith.constant 16 : i32
    %108 = tpu.dynamic_rotate %96 by %c16_i32_69 dim 0 : vector<256x32xf32>, i32 -> vector<256x32xf32>
    %c1_70 = arith.constant 1 : index
    %c0_71 = arith.constant 0 : index
    %c0_72 = arith.constant 0 : index
    %109 = vector.load %arg1[%c1_70, %c0_71, %c0_72] : memref<9x256x1xf32, #tpu.memory_space<vmem>>, vector<1x256x1xf32>
    %110 = vector.shape_cast %109 : vector<1x256x1xf32> to vector<256x1xf32>
    %111 = vector.broadcast %110 : vector<256x1xf32> to vector<256x32xf32>
    %112 = arith.mulf %108, %111 : vector<256x32xf32>
    %113 = arith.truncf %112 : vector<256x32xf32> to vector<256x32xbf16>
    %c1_73 = arith.constant 1 : index
    %c0_74 = arith.constant 0 : index
    %c0_75 = arith.constant 0 : index
    %114 = vector.load %arg5[%c1_73, %c0_74, %c0_75] : memref<9x32x32xbf16, #tpu.memory_space<vmem>>, vector<1x32x32xbf16>
    %115 = vector.shape_cast %114 : vector<1x32x32xbf16> to vector<32x32xbf16>
    %cst_76 = arith.constant dense<0.000000e+00> : vector<256x32xf32>
    %116 = tpu.matmul %113, %115, %cst_76 {dimension_numbers = #tpu.dot_dimension_numbers<[1], [0], [0], [1], [0, 0, 1, 1], [], []>} : vector<256x32xbf16>, vector<32x32xbf16>, vector<256x32xf32> -> vector<256x32xf32>
    %117 = arith.addf %107, %116 : vector<256x32xf32>
    %c15_i32_77 = arith.constant 15 : i32
    %118 = tpu.dynamic_rotate %96 by %c15_i32_77 dim 0 : vector<256x32xf32>, i32 -> vector<256x32xf32>
    %c2_78 = arith.constant 2 : index
    %c0_79 = arith.constant 0 : index
    %c0_80 = arith.constant 0 : index
    %119 = vector.load %arg1[%c2_78, %c0_79, %c0_80] : memref<9x256x1xf32, #tpu.memory_space<vmem>>, vector<1x256x1xf32>
    %120 = vector.shape_cast %119 : vector<1x256x1xf32> to vector<256x1xf32>
    %121 = vector.broadcast %120 : vector<256x1xf32> to vector<256x32xf32>
    %122 = arith.mulf %118, %121 : vector<256x32xf32>
    %123 = arith.truncf %122 : vector<256x32xf32> to vector<256x32xbf16>
    %c2_81 = arith.constant 2 : index
    %c0_82 = arith.constant 0 : index
    %c0_83 = arith.constant 0 : index
    %124 = vector.load %arg5[%c2_81, %c0_82, %c0_83] : memref<9x32x32xbf16, #tpu.memory_space<vmem>>, vector<1x32x32xbf16>
    %125 = vector.shape_cast %124 : vector<1x32x32xbf16> to vector<32x32xbf16>
    %cst_84 = arith.constant dense<0.000000e+00> : vector<256x32xf32>
    %126 = tpu.matmul %123, %125, %cst_84 {dimension_numbers = #tpu.dot_dimension_numbers<[1], [0], [0], [1], [0, 0, 1, 1], [], []>} : vector<256x32xbf16>, vector<32x32xbf16>, vector<256x32xf32> -> vector<256x32xf32>
    %127 = arith.addf %117, %126 : vector<256x32xf32>
    %c1_i32_85 = arith.constant 1 : i32
    %128 = tpu.dynamic_rotate %96 by %c1_i32_85 dim 0 : vector<256x32xf32>, i32 -> vector<256x32xf32>
    %c3_86 = arith.constant 3 : index
    %c0_87 = arith.constant 0 : index
    %c0_88 = arith.constant 0 : index
    %129 = vector.load %arg1[%c3_86, %c0_87, %c0_88] : memref<9x256x1xf32, #tpu.memory_space<vmem>>, vector<1x256x1xf32>
    %130 = vector.shape_cast %129 : vector<1x256x1xf32> to vector<256x1xf32>
    %131 = vector.broadcast %130 : vector<256x1xf32> to vector<256x32xf32>
    %132 = arith.mulf %128, %131 : vector<256x32xf32>
    %133 = arith.truncf %132 : vector<256x32xf32> to vector<256x32xbf16>
    %c3_89 = arith.constant 3 : index
    %c0_90 = arith.constant 0 : index
    %c0_91 = arith.constant 0 : index
    %134 = vector.load %arg5[%c3_89, %c0_90, %c0_91] : memref<9x32x32xbf16, #tpu.memory_space<vmem>>, vector<1x32x32xbf16>
    %135 = vector.shape_cast %134 : vector<1x32x32xbf16> to vector<32x32xbf16>
    %cst_92 = arith.constant dense<0.000000e+00> : vector<256x32xf32>
    %136 = tpu.matmul %133, %135, %cst_92 {dimension_numbers = #tpu.dot_dimension_numbers<[1], [0], [0], [1], [0, 0, 1, 1], [], []>} : vector<256x32xbf16>, vector<32x32xbf16>, vector<256x32xf32> -> vector<256x32xf32>
    %137 = arith.addf %127, %136 : vector<256x32xf32>
    %c4_93 = arith.constant 4 : index
    %c0_94 = arith.constant 0 : index
    %c0_95 = arith.constant 0 : index
    %138 = vector.load %arg1[%c4_93, %c0_94, %c0_95] : memref<9x256x1xf32, #tpu.memory_space<vmem>>, vector<1x256x1xf32>
    %139 = vector.shape_cast %138 : vector<1x256x1xf32> to vector<256x1xf32>
    %140 = vector.broadcast %139 : vector<256x1xf32> to vector<256x32xf32>
    %141 = arith.mulf %96, %140 : vector<256x32xf32>
    %142 = arith.truncf %141 : vector<256x32xf32> to vector<256x32xbf16>
    %c4_96 = arith.constant 4 : index
    %c0_97 = arith.constant 0 : index
    %c0_98 = arith.constant 0 : index
    %143 = vector.load %arg5[%c4_96, %c0_97, %c0_98] : memref<9x32x32xbf16, #tpu.memory_space<vmem>>, vector<1x32x32xbf16>
    %144 = vector.shape_cast %143 : vector<1x32x32xbf16> to vector<32x32xbf16>
    %cst_99 = arith.constant dense<0.000000e+00> : vector<256x32xf32>
    %145 = tpu.matmul %142, %144, %cst_99 {dimension_numbers = #tpu.dot_dimension_numbers<[1], [0], [0], [1], [0, 0, 1, 1], [], []>} : vector<256x32xbf16>, vector<32x32xbf16>, vector<256x32xf32> -> vector<256x32xf32>
    %146 = arith.addf %137, %145 : vector<256x32xf32>
    %c255_i32_100 = arith.constant 255 : i32
    %147 = tpu.dynamic_rotate %96 by %c255_i32_100 dim 0 : vector<256x32xf32>, i32 -> vector<256x32xf32>
    %c5_101 = arith.constant 5 : index
    %c0_102 = arith.constant 0 : index
    %c0_103 = arith.constant 0 : index
    %148 = vector.load %arg1[%c5_101, %c0_102, %c0_103] : memref<9x256x1xf32, #tpu.memory_space<vmem>>, vector<1x256x1xf32>
    %149 = vector.shape_cast %148 : vector<1x256x1xf32> to vector<256x1xf32>
    %150 = vector.broadcast %149 : vector<256x1xf32> to vector<256x32xf32>
    %151 = arith.mulf %147, %150 : vector<256x32xf32>
    %152 = arith.truncf %151 : vector<256x32xf32> to vector<256x32xbf16>
    %c5_104 = arith.constant 5 : index
    %c0_105 = arith.constant 0 : index
    %c0_106 = arith.constant 0 : index
    %153 = vector.load %arg5[%c5_104, %c0_105, %c0_106] : memref<9x32x32xbf16, #tpu.memory_space<vmem>>, vector<1x32x32xbf16>
    %154 = vector.shape_cast %153 : vector<1x32x32xbf16> to vector<32x32xbf16>
    %cst_107 = arith.constant dense<0.000000e+00> : vector<256x32xf32>
    %155 = tpu.matmul %152, %154, %cst_107 {dimension_numbers = #tpu.dot_dimension_numbers<[1], [0], [0], [1], [0, 0, 1, 1], [], []>} : vector<256x32xbf16>, vector<32x32xbf16>, vector<256x32xf32> -> vector<256x32xf32>
    %156 = arith.addf %146, %155 : vector<256x32xf32>
    %c241_i32_108 = arith.constant 241 : i32
    %157 = tpu.dynamic_rotate %96 by %c241_i32_108 dim 0 : vector<256x32xf32>, i32 -> vector<256x32xf32>
    %c6_109 = arith.constant 6 : index
    %c0_110 = arith.constant 0 : index
    %c0_111 = arith.constant 0 : index
    %158 = vector.load %arg1[%c6_109, %c0_110, %c0_111] : memref<9x256x1xf32, #tpu.memory_space<vmem>>, vector<1x256x1xf32>
    %159 = vector.shape_cast %158 : vector<1x256x1xf32> to vector<256x1xf32>
    %160 = vector.broadcast %159 : vector<256x1xf32> to vector<256x32xf32>
    %161 = arith.mulf %157, %160 : vector<256x32xf32>
    %162 = arith.truncf %161 : vector<256x32xf32> to vector<256x32xbf16>
    %c6_112 = arith.constant 6 : index
    %c0_113 = arith.constant 0 : index
    %c0_114 = arith.constant 0 : index
    %163 = vector.load %arg5[%c6_112, %c0_113, %c0_114] : memref<9x32x32xbf16, #tpu.memory_space<vmem>>, vector<1x32x32xbf16>
    %164 = vector.shape_cast %163 : vector<1x32x32xbf16> to vector<32x32xbf16>
    %cst_115 = arith.constant dense<0.000000e+00> : vector<256x32xf32>
    %165 = tpu.matmul %162, %164, %cst_115 {dimension_numbers = #tpu.dot_dimension_numbers<[1], [0], [0], [1], [0, 0, 1, 1], [], []>} : vector<256x32xbf16>, vector<32x32xbf16>, vector<256x32xf32> -> vector<256x32xf32>
    %166 = arith.addf %156, %165 : vector<256x32xf32>
    %c240_i32_116 = arith.constant 240 : i32
    %167 = tpu.dynamic_rotate %96 by %c240_i32_116 dim 0 : vector<256x32xf32>, i32 -> vector<256x32xf32>
    %c7_117 = arith.constant 7 : index
    %c0_118 = arith.constant 0 : index
    %c0_119 = arith.constant 0 : index
    %168 = vector.load %arg1[%c7_117, %c0_118, %c0_119] : memref<9x256x1xf32, #tpu.memory_space<vmem>>, vector<1x256x1xf32>
    %169 = vector.shape_cast %168 : vector<1x256x1xf32> to vector<256x1xf32>
    %170 = vector.broadcast %169 : vector<256x1xf32> to vector<256x32xf32>
    %171 = arith.mulf %167, %170 : vector<256x32xf32>
    %172 = arith.truncf %171 : vector<256x32xf32> to vector<256x32xbf16>
    %c7_120 = arith.constant 7 : index
    %c0_121 = arith.constant 0 : index
    %c0_122 = arith.constant 0 : index
    %173 = vector.load %arg5[%c7_120, %c0_121, %c0_122] : memref<9x32x32xbf16, #tpu.memory_space<vmem>>, vector<1x32x32xbf16>
    %174 = vector.shape_cast %173 : vector<1x32x32xbf16> to vector<32x32xbf16>
    %cst_123 = arith.constant dense<0.000000e+00> : vector<256x32xf32>
    %175 = tpu.matmul %172, %174, %cst_123 {dimension_numbers = #tpu.dot_dimension_numbers<[1], [0], [0], [1], [0, 0, 1, 1], [], []>} : vector<256x32xbf16>, vector<32x32xbf16>, vector<256x32xf32> -> vector<256x32xf32>
    %176 = arith.addf %166, %175 : vector<256x32xf32>
    %c239_i32_124 = arith.constant 239 : i32
    %177 = tpu.dynamic_rotate %96 by %c239_i32_124 dim 0 : vector<256x32xf32>, i32 -> vector<256x32xf32>
    %c8_125 = arith.constant 8 : index
    %c0_126 = arith.constant 0 : index
    %c0_127 = arith.constant 0 : index
    %178 = vector.load %arg1[%c8_125, %c0_126, %c0_127] : memref<9x256x1xf32, #tpu.memory_space<vmem>>, vector<1x256x1xf32>
    %179 = vector.shape_cast %178 : vector<1x256x1xf32> to vector<256x1xf32>
    %180 = vector.broadcast %179 : vector<256x1xf32> to vector<256x32xf32>
    %181 = arith.mulf %177, %180 : vector<256x32xf32>
    %182 = arith.truncf %181 : vector<256x32xf32> to vector<256x32xbf16>
    %c8_128 = arith.constant 8 : index
    %c0_129 = arith.constant 0 : index
    %c0_130 = arith.constant 0 : index
    %183 = vector.load %arg5[%c8_128, %c0_129, %c0_130] : memref<9x32x32xbf16, #tpu.memory_space<vmem>>, vector<1x32x32xbf16>
    %184 = vector.shape_cast %183 : vector<1x32x32xbf16> to vector<32x32xbf16>
    %cst_131 = arith.constant dense<0.000000e+00> : vector<256x32xf32>
    %185 = tpu.matmul %182, %184, %cst_131 {dimension_numbers = #tpu.dot_dimension_numbers<[1], [0], [0], [1], [0, 0, 1, 1], [], []>} : vector<256x32xbf16>, vector<32x32xbf16>, vector<256x32xf32> -> vector<256x32xf32>
    %186 = arith.addf %176, %185 : vector<256x32xf32>
    %c0_132 = arith.constant 0 : index
    %c0_133 = arith.constant 0 : index
    %187 = vector.load %arg6[%c0_132, %c0_133] : memref<1x32xf32, #tpu.memory_space<vmem>>, vector<1x32xf32>
    %188 = vector.broadcast %187 : vector<1x32xf32> to vector<256x32xf32>
    %189 = arith.addf %186, %188 : vector<256x32xf32>
    %cst_134 = arith.constant 0.000000e+00 : f32
    %190 = vector.broadcast %cst_134 : f32 to vector<256x32xf32>
    %191 = arith.maximumf %189, %190 : vector<256x32xf32>
    %192 = arith.truncf %191 : vector<256x32xf32> to vector<256x32xbf16>
    %c0_135 = arith.constant 0 : index
    %c0_136 = arith.constant 0 : index
    %193 = vector.load %arg7[%c0_135, %c0_136] : memref<32x128xbf16, #tpu.memory_space<vmem>>, vector<32x128xbf16>
    %cst_137 = arith.constant dense<0.000000e+00> : vector<256x128xf32>
    %194 = tpu.matmul %192, %193, %cst_137 {dimension_numbers = #tpu.dot_dimension_numbers<[1], [0], [0], [1], [0, 0, 1, 1], [], []>} : vector<256x32xbf16>, vector<32x128xbf16>, vector<256x128xf32> -> vector<256x128xf32>
    %c0_138 = arith.constant 0 : index
    %c0_139 = arith.constant 0 : index
    %195 = vector.load %arg8[%c0_138, %c0_139] : memref<1x128xf32, #tpu.memory_space<vmem>>, vector<1x128xf32>
    %196 = vector.broadcast %195 : vector<1x128xf32> to vector<256x128xf32>
    %197 = arith.addf %194, %196 : vector<256x128xf32>
    %c0_140 = arith.constant 0 : index
    %c0_141 = arith.constant 0 : index
    %c0_142 = arith.constant 0 : index
    %198 = vector.load %arg9[%c0_140, %c0_141, %c0_142] : memref<1x256x128xf32, #tpu.memory_space<vmem>>, vector<1x256x128xf32>
    %199 = vector.shape_cast %198 : vector<1x256x128xf32> to vector<256x128xf32>
    %200 = vector.shape_cast %197 : vector<256x128xf32> to vector<1x256x128xf32>
    tpu.vector_store %arg9[%c0_140, %c0_141, %c0_142], %200 {strides = array<i32>} : memref<1x256x128xf32, #tpu.memory_space<vmem>>, vector<1x256x128xf32>,
    return
  }
  func.func @transform_0(%arg0: i32) -> (i32, i32, i32) {
    %c0_i32 = arith.constant 0 : i32
    %c0_i32_0 = arith.constant 0 : i32
    %c0_i32_1 = arith.constant 0 : i32
    %c0_i32_2 = arith.constant 0 : i32
    return %c0_i32, %c0_i32_0, %c0_i32_1 : i32, i32, i32
  }
  func.func @transform_1(%arg0: i32) -> (i32, i32, i32) {
    %c0_i32 = arith.constant 0 : i32
    %c0_i32_0 = arith.constant 0 : i32
    %c0_i32_1 = arith.constant 0 : i32
    return %arg0, %c0_i32, %c0_i32_0 : i32, i32, i32
  }
  func.func @transform_2(%arg0: i32) -> (i32, i32, i32) {
    %c0_i32 = arith.constant 0 : i32
    %c0_i32_0 = arith.constant 0 : i32
    %c0_i32_1 = arith.constant 0 : i32
    %c0_i32_2 = arith.constant 0 : i32
    return %c0_i32, %c0_i32_0, %c0_i32_1 : i32, i32, i32
  }
  func.func @transform_3(%arg0: i32) -> (i32, i32) {
    %c0_i32 = arith.constant 0 : i32
    %c0_i32_0 = arith.constant 0 : i32
    %c0_i32_1 = arith.constant 0 : i32
    return %c0_i32, %c0_i32_0 : i32, i32
  }
  func.func @transform_4(%arg0: i32) -> (i32, i32, i32) {
    %c0_i32 = arith.constant 0 : i32
    %c0_i32_0 = arith.constant 0 : i32
    %c0_i32_1 = arith.constant 0 : i32
    %c0_i32_2 = arith.constant 0 : i32
    return %c0_i32, %c0_i32_0, %c0_i32_1 : i32, i32, i32
  }
  func.func @transform_5(%arg0: i32) -> (i32, i32) {
    %c0_i32 = arith.constant 0 : i32
    %c0_i32_0 = arith.constant 0 : i32
    %c0_i32_1 = arith.constant 0 : i32
    return %c0_i32, %c0_i32_0 : i32, i32
  }
  func.func @transform_6(%arg0: i32) -> (i32, i32) {
    %c0_i32 = arith.constant 0 : i32
    %c0_i32_0 = arith.constant 0 : i32
    %c0_i32_1 = arith.constant 0 : i32
    return %c0_i32, %c0_i32_0 : i32, i32
  }
  func.func @transform_7(%arg0: i32) -> (i32, i32) {
    %c0_i32 = arith.constant 0 : i32
    %c0_i32_0 = arith.constant 0 : i32
    %c0_i32_1 = arith.constant 0 : i32
    return %c0_i32, %c0_i32_0 : i32, i32
  }
  func.func @transform_8(%arg0: i32) -> (i32, i32, i32) {
    %c0_i32 = arith.constant 0 : i32
    %c0_i32_0 = arith.constant 0 : i32
    %c0_i32_1 = arith.constant 0 : i32
    return %arg0, %c0_i32, %c0_i32_0 : i32, i32, i32
  }
}

</mosaic_0001>

<llo_original>
// kernel: pdfnet_forward.1
$region0: #{pdfnet_forward.1}
  #allocation0 [shape = 'u32[]', space=smem, size = 0x4, offset = 0x4, fixed_abs, tag = 'smem constant byte address 0x4 - core index']
  #allocation1 [shape = 'u32[144,128]{1,0:T(1,128)}', space=vmem, size = 0x12000, scoped, tag = 'internal scratch']
  %s0 = inlined_call_operand.hbm [shape: f32[9,256,1], index: 0, kind: input, shape index: {}]
  %s1 = inlined_call_operand.vmem [shape: f32[2,256,4], index: 1, kind: input, shape index: {}]
  %s2 = inlined_call_operand.vmem [shape: bf16[9,4,32], index: 2, kind: input, shape index: {}]
  %s3 = inlined_call_operand.hbm [shape: f32[1,32], index: 3, kind: input, shape index: {}]
  %s4 = inlined_call_operand.vmem [shape: bf16[9,32,32], index: 4, kind: input, shape index: {}]
  %s5 = inlined_call_operand.hbm [shape: f32[1,32], index: 5, kind: input, shape index: {}]
  %s6 = inlined_call_operand.vmem [shape: bf16[32,128], index: 6, kind: input, shape index: {}]
  %s7 = inlined_call_operand.vmem [shape: f32[1,128], index: 7, kind: input, shape index: {}]
  %s8 = inlined_call_operand.hbm [shape: f32[2,256,128], index: 8, kind: output, shape index: {}]
  %s9 = sld [smem:[#allocation0]]
  $region77: #{pdfnet_forward.1} parent=0
    _
  %s11 = ssub.s32 1, %s9
  %s12 = scalar_select 0, %s11, %s9
  $region1: #{pdfnet_forward.1} parent=0
    #allocation2 [shape = 'u8[1179648]{0}', space=vmem, size = 0x120000, scoped, tag = 'input window, operand 0, single buffered']
    #allocation3 [shape = 's32[2]{0}', space=sflag, size = 0x8, scoped, tag = 'scoped memory for pdfnet_forward.1']
    #allocation4 [shape = 's32[2]{0}', space=sflag, size = 0x8, scoped, tag = 'scoped memory for pdfnet_forward.1']
    #allocation5 [shape = 'u8[512]{0}', space=vmem, size = 0x400, scoped, tag = 'input window, operand 3, single buffered']
    #allocation6 [shape = 's32[1]{0}', space=sflag, size = 0x4, scoped, tag = 'scoped memory for pdfnet_forward.1']
    #allocation7 [shape = 'u8[512]{0}', space=vmem, size = 0x400, scoped, tag = 'input window, operand 5, single buffered']
    #allocation8 [shape = 'u8[262144]{0}', space=vmem, size = 0x40000, scoped, tag = 'output window, operand 0']
    %13 = vsyncpa [#allocation3], 0
    %14 = vsyncpa [#allocation6], 0
    %15 = vsyncpa [#allocation4], 0
    %s16 = scalar_lea.sflag [#allocation4], 1
    %17 = vsyncpa %s16, 0
    loop: start=0, step=1, limit=4
    $region2: #{pdfnet_forward.1} parent=1 // loop_pre_header
      _
    $region3: #{pdfnet_forward.1} parent=1 // loop_header
      %s19 = sphi 0, %s23
      %p20 = scmp.ge.s32.totalorder %s19, 4
      %s27 = sphi 0, %s27
      %s29 = sphi 0, %s27
      %s30 = sphi 0, %s29
      %s44 = sphi 0, %s30
      %s50 = sphi 0, %s52
      %s53 = sphi 0, %s50
      %s54 = sphi 0, %s53
      %s70 = sphi 0, %s54
      %s74 = sphi 0, %s74
      %s76 = sphi 0, %s74
      %s77 = sphi 0, %s76
      %s91 = sphi 0, %s77
      %s95 = sphi 0, %s95
      %s97 = sphi 0, %s95
      %s98 = sphi 0, %s97
      %s112 = sphi 0, %s98
      %s116 = sphi 0, %s116
      %s118 = sphi 0, %s116
      %s119 = sphi 0, %s118
      %s133 = sphi 0, %s119
      %s137 = sphi 0, %s137
      %s139 = sphi 0, %s137
      %s140 = sphi 0, %s139
      %s154 = sphi 0, %s140
      %s158 = sphi 0, %s158
      %s160 = sphi 0, %s158
      %s161 = sphi 0, %s160
      %s175 = sphi 0, %s161
      %s179 = sphi 0, %s179
      %s181 = sphi 0, %s179
      %s182 = sphi 0, %s181
      %s196 = sphi 0, %s182
      %s202 = sphi 0, %s204
      %s205 = sphi 0, %s202
      %s206 = sphi 0, %s205
      %s222 = sphi 0, %s206
    $region4: #{pdfnet_forward.1} parent=1 // loop_header_branch
      %22 = sbr.rel (%p20) target = $region8
    $region5: #{pdfnet_forward.1} parent=1 // loop_body
      %s24 = ssub.s32 %s19, 1
      %s25 = ssub.s32 %s19, 2
      %s26 = sadd.s32 %s19, 1
      %s28 = sadd.s32 %s27, 1
      %p31 = scmp.eq.s32.totalorder %s19, 1
      %p32 = scmp.ne.s32.totalorder %s27, %s29
      %p33 = scmp.eq.s32.totalorder %s19, 0
      %p34 = por %p32, %p33
      %p35 = scmp.ne.s32.totalorder %s27, %s29
      %p36 = scmp.eq.s32.totalorder %s24, 1
      %p37 = por %p35, %p36
      %p38 = scmp.ne.s32.totalorder %s29, %s30
      %p39 = scmp.eq.s32.totalorder %s24, 0
      %p40 = por %p38, %p39
      %p41 = scmp.ne.s32.totalorder %s29, %s30
      %p42 = scmp.eq.s32.totalorder %s25, 1
      %p43 = por %p41, %p42
      %p45 = scmp.ne.s32.totalorder %s30, %s44
      %p46 = scmp.eq.s32.totalorder %s25, 0
      %p47 = por %p45, %p46
      %s48 = ssub.s32 %s19, %s26
      %p49 = scmp.eq.s32.totalorder %s48, 0
      %s51 = sadd.s32 %s50, 1
      %s52 = scalar_select %p49, %s50, %s51
      %p55 = pneg %p49
      %p56 = scmp.eq.s32.totalorder %s19, 1
      %p57 = por %p55, %p56
      %p58 = scmp.ne.s32.totalorder %s50, %s53
      %p59 = scmp.eq.s32.totalorder %s19, 0
      %p60 = por %p58, %p59
      %p61 = scmp.ne.s32.totalorder %s50, %s53
      %p62 = scmp.eq.s32.totalorder %s24, 1
      %p63 = por %p61, %p62
      %p64 = scmp.ne.s32.totalorder %s53, %s54
      %p65 = scmp.eq.s32.totalorder %s24, 0
      %p66 = por %p64, %p65
      %p67 = scmp.ne.s32.totalorder %s53, %s54
      %p68 = scmp.eq.s32.totalorder %s25, 1
      %p69 = por %p67, %p68
      %p71 = scmp.ne.s32.totalorder %s54, %s70
      %p72 = scmp.eq.s32.totalorder %s25, 0
      %p73 = por %p71, %p72
      %s75 = sadd.s32 %s74, 1
      %p78 = scmp.eq.s32.totalorder %s19, 1
      %p79 = scmp.ne.s32.totalorder %s74, %s76
      %p80 = scmp.eq.s32.totalorder %s19, 0
      %p81 = por %p79, %p80
      %p82 = scmp.ne.s32.totalorder %s74, %s76
      %p83 = scmp.eq.s32.totalorder %s24, 1
      %p84 = por %p82, %p83
      %p85 = scmp.ne.s32.totalorder %s76, %s77
      %p86 = scmp.eq.s32.totalorder %s24, 0
      %p87 = por %p85, %p86
      %p88 = scmp.ne.s32.totalorder %s76, %s77
      %p89 = scmp.eq.s32.totalorder %s25, 1
      %p90 = por %p88, %p89
      %p92 = scmp.ne.s32.totalorder %s77, %s91
      %p93 = scmp.eq.s32.totalorder %s25, 0
      %p94 = por %p92, %p93
      %s96 = sadd.s32 %s95, 1
      %p99 = scmp.eq.s32.totalorder %s19, 1
      %p100 = scmp.ne.s32.totalorder %s95, %s97
      %p101 = scmp.eq.s32.totalorder %s19, 0
      %p102 = por %p100, %p101
      %p103 = scmp.ne.s32.totalorder %s95, %s97
      %p104 = scmp.eq.s32.totalorder %s24, 1
      %p105 = por %p103, %p104
      %p106 = scmp.ne.s32.totalorder %s97, %s98
      %p107 = scmp.eq.s32.totalorder %s24, 0
      %p108 = por %p106, %p107
      %p109 = scmp.ne.s32.totalorder %s97, %s98
      %p110 = scmp.eq.s32.totalorder %s25, 1
      %p111 = por %p109, %p110
      %p113 = scmp.ne.s32.totalorder %s98, %s112
      %p114 = scmp.eq.s32.totalorder %s25, 0
      %p115 = por %p113, %p114
      %s117 = sadd.s32 %s116, 1
      %p120 = scmp.eq.s32.totalorder %s19, 1
      %p121 = scmp.ne.s32.totalorder %s116, %s118
      %p122 = scmp.eq.s32.totalorder %s19, 0
      %p123 = por %p121, %p122
      %p124 = scmp.ne.s32.totalorder %s116, %s118
      %p125 = scmp.eq.s32.totalorder %s24, 1
      %p126 = por %p124, %p125
      %p127 = scmp.ne.s32.totalorder %s118, %s119
      %p128 = scmp.eq.s32.totalorder %s24, 0
      %p129 = por %p127, %p128
      %p130 = scmp.ne.s32.totalorder %s118, %s119
      %p131 = scmp.eq.s32.totalorder %s25, 1
      %p132 = por %p130, %p131
      %p134 = scmp.ne.s32.totalorder %s119, %s133
      %p135 = scmp.eq.s32.totalorder %s25, 0
      %p136 = por %p134, %p135
      %s138 = sadd.s32 %s137, 1
      %p141 = scmp.eq.s32.totalorder %s19, 1
      %p142 = scmp.ne.s32.totalorder %s137, %s139
      %p143 = scmp.eq.s32.totalorder %s19, 0
      %p144 = por %p142, %p143
      %p145 = scmp.ne.s32.totalorder %s137, %s139
      %p146 = scmp.eq.s32.totalorder %s24, 1
      %p147 = por %p145, %p146
      %p148 = scmp.ne.s32.totalorder %s139, %s140
      %p149 = scmp.eq.s32.totalorder %s24, 0
      %p150 = por %p148, %p149
      %p151 = scmp.ne.s32.totalorder %s139, %s140
      %p152 = scmp.eq.s32.totalorder %s25, 1
      %p153 = por %p151, %p152
      %p155 = scmp.ne.s32.totalorder %s140, %s154
      %p156 = scmp.eq.s32.totalorder %s25, 0
      %p157 = por %p155, %p156
      %s159 = sadd.s32 %s158, 1
      %p162 = scmp.eq.s32.totalorder %s19, 1
      %p163 = scmp.ne.s32.totalorder %s158, %s160
      %p164 = scmp.eq.s32.totalorder %s19, 0
      %p165 = por %p163, %p164
      %p166 = scmp.ne.s32.totalorder %s158, %s160
      %p167 = scmp.eq.s32.totalorder %s24, 1
      %p168 = por %p166, %p167
      %p169 = scmp.ne.s32.totalorder %s160, %s161
      %p170 = scmp.eq.s32.totalorder %s24, 0
      %p171 = por %p169, %p170
      %p172 = scmp.ne.s32.totalorder %s160, %s161
      %p173 = scmp.eq.s32.totalorder %s25, 1
      %p174 = por %p172, %p173
      %p176 = scmp.ne.s32.totalorder %s161, %s175
      %p177 = scmp.eq.s32.totalorder %s25, 0
      %p178 = por %p176, %p177
      %s180 = sadd.s32 %s179, 1
      %p183 = scmp.eq.s32.totalorder %s19, 1
      %p184 = scmp.ne.s32.totalorder %s179, %s181
      %p185 = scmp.eq.s32.totalorder %s19, 0
      %p186 = por %p184, %p185
      %p187 = scmp.ne.s32.totalorder %s179, %s181
      %p188 = scmp.eq.s32.totalorder %s24, 1
      %p189 = por %p187, %p188
      %p190 = scmp.ne.s32.totalorder %s181, %s182
      %p191 = scmp.eq.s32.totalorder %s24, 0
      %p192 = por %p190, %p191
      %p193 = scmp.ne.s32.totalorder %s181, %s182
      %p194 = scmp.eq.s32.totalorder %s25, 1
      %p195 = por %p193, %p194
      %p197 = scmp.ne.s32.totalorder %s182, %s196
      %p198 = scmp.eq.s32.totalorder %s25, 0
      %p199 = por %p197, %p198
      %s200 = ssub.s32 %s19, %s26
      %p201 = scmp.eq.s32.totalorder %s200, 0
      %s203 = sadd.s32 %s202, 1
      %s204 = scalar_select %p201, %s202, %s203
      %p207 = pneg %p201
      %p208 = scmp.eq.s32.totalorder %s19, 1
      %p209 = por %p207, %p208
      %p210 = scmp.ne.s32.totalorder %s202, %s205
      %p211 = scmp.eq.s32.totalorder %s19, 0
      %p212 = por %p210, %p211
      %p213 = scmp.ne.s32.totalorder %s202, %s205
      %p214 = scmp.eq.s32.totalorder %s24, 1
      %p215 = por %p213, %p214
      %p216 = scmp.ne.s32.totalorder %s205, %s206
      %p217 = scmp.eq.s32.totalorder %s24, 0
      %p218 = por %p216, %p217
      %p219 = scmp.ne.s32.totalorder %s205, %s206
      %p220 = scmp.eq.s32.totalorder %s25, 1
      %p221 = por %p219, %p220
      %p223 = scmp.ne.s32.totalorder %s206, %s222
      %p224 = scmp.eq.s32.totalorder %s25, 0
      %p225 = por %p223, %p224
      %p226 = scmp.le.s32.totalorder 1, %s19
      %p227 = scmp.lt.s32.totalorder %s19, 3
      %p228 = pnand %p226, %p227
      %p229 = pneg %p228
      // Predicated region
      $region9: #{pdfnet_forward.1} parent=5 // pred_check
        _
      $region10: #{pdfnet_forward.1} parent=5 // pred_check_branch
        %231 = sbr.rel (%p228) target = $region12
      $region11: #{pdfnet_forward.1} parent=5 // pred_region
        %s232 = ssub.s32 %s19, 1
        // Predicated region
        $region13: #{pdfnet_forward.1} parent=11 // pred_check
          %p233 = pneg %p40
        $region14: #{pdfnet_forward.1} parent=11 // pred_check_branch
          %235 = sbr.rel (%p233) target = $region16
        $region15: #{pdfnet_forward.1} parent=11 // pred_region
          %s237 = ssub.s32 36864, 36864
          %238 = vsyncadd [#allocation3], %s237
          %s239 = sshll.u32 [#allocation2], 4
          %s240 = int_to_ptr.vmem [resolvable:$true] %s239
          %245 = dma.hbm_to_vmem [thread:$0]  %s0, 36864, %s240, [#allocation3], 128, 128, 8
        $region16: #{pdfnet_forward.1} parent=11 // pred_fallthru
          _
        // Predicated region
        $region17: #{pdfnet_forward.1} parent=11 // pred_check
          %p246 = pneg %p87
        $region18: #{pdfnet_forward.1} parent=11 // pred_check_branch
          %248 = sbr.rel (%p246) target = $region20
        $region19: #{pdfnet_forward.1} parent=11 // pred_region
          _
        $region20: #{pdfnet_forward.1} parent=11 // pred_fallthru
          _
        // Predicated region
        $region21: #{pdfnet_forward.1} parent=11 // pred_check
          %p249 = pneg %p108
        $region22: #{pdfnet_forward.1} parent=11 // pred_check_branch
          %251 = sbr.rel (%p249) target = $region24
        $region23: #{pdfnet_forward.1} parent=11 // pred_region
          %s253 = ssub.s32 16, 16
          %254 = vsyncadd [#allocation6], %s253
          %s256 = sshll.u32 [#allocation5], 4
          %s257 = int_to_ptr.vmem [resolvable:$true] %s256
          %259 = dma.hbm_to_vmem [thread:$0]  %s3, 16, %s257, [#allocation6]
        $region24: #{pdfnet_forward.1} parent=11 // pred_fallthru
          _
        // Predicated region
        $region25: #{pdfnet_forward.1} parent=11 // pred_check
          %p260 = pneg %p129
        $region26: #{pdfnet_forward.1} parent=11 // pred_check_branch
          %262 = sbr.rel (%p260) target = $region28
        $region27: #{pdfnet_forward.1} parent=11 // pred_region
          _
        $region28: #{pdfnet_forward.1} parent=11 // pred_fallthru
          _
        // Predicated region
        $region29: #{pdfnet_forward.1} parent=11 // pred_check
          %p263 = pneg %p150
        $region30: #{pdfnet_forward.1} parent=11 // pred_check_branch
          %265 = sbr.rel (%p263) target = $region32
        $region31: #{pdfnet_forward.1} parent=11 // pred_region
          %s267 = ssub.s32 16, 16
          %268 = vsyncadd [#allocation6], %s267
          %s270 = sshll.u32 [#allocation7], 4
          %s271 = int_to_ptr.vmem [resolvable:$true] %s270
          %273 = dma.hbm_to_vmem [thread:$0]  %s5, 16, %s271, [#allocation6]
        $region32: #{pdfnet_forward.1} parent=11 // pred_fallthru
          _
        // Predicated region
        $region33: #{pdfnet_forward.1} parent=11 // pred_check
          %p274 = pneg %p171
        $region34: #{pdfnet_forward.1} parent=11 // pred_check_branch
          %276 = sbr.rel (%p274) target = $region36
        $region35: #{pdfnet_forward.1} parent=11 // pred_region
          _
        $region36: #{pdfnet_forward.1} parent=11 // pred_fallthru
          _
        // Predicated region
        $region37: #{pdfnet_forward.1} parent=11 // pred_check
          %p277 = pneg %p192
        $region38: #{pdfnet_forward.1} parent=11 // pred_check_branch
          %279 = sbr.rel (%p277) target = $region40
        $region39: #{pdfnet_forward.1} parent=11 // pred_region
          _
        $region40: #{pdfnet_forward.1} parent=11 // pred_fallthru
          _
      $region12: #{pdfnet_forward.1} parent=5 // pred_fallthru
        _
      %p280 = scmp.lt.s32.totalorder %s19, 2
      // Predicated region
      $region41: #{pdfnet_forward.1} parent=5 // pred_check
        %p281 = pneg %p280
      $region42: #{pdfnet_forward.1} parent=5 // pred_check_branch
        %283 = sbr.rel (%p281) target = $region44
      $region43: #{pdfnet_forward.1} parent=5 // pred_region
        // Predicated region
        $region45: #{pdfnet_forward.1} parent=43 // pred_check
          %p284 = pneg %p60
        $region46: #{pdfnet_forward.1} parent=43 // pred_check_branch
          %286 = sbr.rel (%p284) target = $region48
        $region47: #{pdfnet_forward.1} parent=43 // pred_region
          %p287 = scmp.lt.s32.totalorder %s19, 1
          %s288 = scalar_select %p287, %s19, 1
          %s289 = smul.addr %s288, 32
          %s290 = smul.addr %s289, 8
          %s291 = scalar_lea.vmem %s1, %s290
        $region48: #{pdfnet_forward.1} parent=43 // pred_fallthru
          _
      $region44: #{pdfnet_forward.1} parent=5 // pred_fallthru
        _
      %p292 = scmp.le.s32.totalorder 1, %s19
      %p293 = scmp.lt.s32.totalorder %s19, 3
      %p294 = pnand %p292, %p293
      %p295 = pneg %p294
      // Predicated region
      $region49: #{pdfnet_forward.1} parent=5 // pred_check
        _
      $region50: #{pdfnet_forward.1} parent=5 // pred_check_branch
        %297 = sbr.rel (%p294) target = $region52
      $region51: #{pdfnet_forward.1} parent=5 // pred_region
        %s298 = ssub.s32 %s19, 1
        // Predicated region
        $region53: #{pdfnet_forward.1} parent=51 // pred_check
          %p299 = pneg %p40
        $region54: #{pdfnet_forward.1} parent=51 // pred_check_branch
          %301 = sbr.rel (%p299) target = $region56
        $region55: #{pdfnet_forward.1} parent=51 // pred_region
          %302 = dma.done [#allocation3], 36864
        $region56: #{pdfnet_forward.1} parent=51 // pred_fallthru
          _
        // Predicated region
        $region57: #{pdfnet_forward.1} parent=51 // pred_check
          %p303 = pneg %p108
        $region58: #{pdfnet_forward.1} parent=51 // pred_check_branch
          %305 = sbr.rel (%p303) target = $region60
        $region59: #{pdfnet_forward.1} parent=51 // pred_region
          %306 = dma.done [#allocation6], 16
        $region60: #{pdfnet_forward.1} parent=51 // pred_fallthru
          _
        // Predicated region
        $region61: #{pdfnet_forward.1} parent=51 // pred_check
          %p307 = pneg %p150
        $region62: #{pdfnet_forward.1} parent=51 // pred_check_branch
          %309 = sbr.rel (%p307) target = $region64
        $region63: #{pdfnet_forward.1} parent=51 // pred_region
          %310 = dma.done [#allocation6], 16
        $region64: #{pdfnet_forward.1} parent=51 // pred_fallthru
          _
        %p311 = pneg %p40
        %p312 = pneg %p37
        %p313 = scmp.lt.s32.totalorder %s24, 1
        %s314 = scalar_select %p313, %s24, 1
        %s315 = smul.addr %s314, 32
        %s316 = smul.addr %s315, 8
        %s317 = scalar_lea.vmem %s1, %s316
        %p318 = pneg %p66
        %p319 = pneg %p63
        %p320 = pneg %p87
        %p321 = pneg %p84
        %p322 = pneg %p108
        %p323 = pneg %p105
        %p324 = pneg %p129
        %p325 = pneg %p126
        %p326 = pneg %p150
        %p327 = pneg %p147
        %p328 = pneg %p171
        %p329 = pneg %p168
        %p330 = pneg %p192
        %p331 = pneg %p189
        %p332 = pneg %p218
        %p333 = pneg %p215
        %s334 = sand.u32 %s205, 1
        %s335 = scalar_lea.sflag [#allocation4], %s334
        %s336 = sand.u32 %s205, 1
        %s337 = smul.addr %s336, 256
        %s338 = scalar_lea.vmem [#allocation8], %s337
        %p339 = scmp.lt.s32.totalorder %s24, 1
        %s340 = scalar_select %p339, %s24, 1
        %s341 = smul.addr %s340, 32
        %s342 = smul.addr %s341, 8
        %s343 = scalar_lea.vmem %s1, %s342
        %v345 = vld [vmem:[%s343] sm:$0xff]
        %v346 = vld [vmem:[%s343 + $0x8] sm:$0xff]
        %v347 = vld [vmem:[%s343 + $0x10] sm:$0xff]
        %v348 = vld [vmem:[%s343 + $0x18] sm:$0xff]
        %v349 = vld [vmem:[%s343 + $0x20] sm:$0xff]
        %v350 = vld [vmem:[%s343 + $0x28] sm:$0xff]
        %v351 = vld [vmem:[%s343 + $0x30] sm:$0xff]
        %v352 = vld [vmem:[%s343 + $0x38] sm:$0xff]
        %v353 = vld [vmem:[%s343 + $0x40] sm:$0xff]
        %v354 = vld [vmem:[%s343 + $0x48] sm:$0xff]
        %v355 = vld [vmem:[%s343 + $0x50] sm:$0xff]
        %v356 = vld [vmem:[%s343 + $0x58] sm:$0xff]
        %v357 = vld [vmem:[%s343 + $0x60] sm:$0xff]
        %v358 = vld [vmem:[%s343 + $0x68] sm:$0xff]
        %v359 = vld [vmem:[%s343 + $0x70] sm:$0xff]
        %v360 = vld [vmem:[%s343 + $0x78] sm:$0xff]
        %v361 = vld [vmem:[%s343 + $0x80] sm:$0xff]
        %v362 = vld [vmem:[%s343 + $0x88] sm:$0xff]
        %v363 = vld [vmem:[%s343 + $0x90] sm:$0xff]
        %v364 = vld [vmem:[%s343 + $0x98] sm:$0xff]
        %v365 = vld [vmem:[%s343 + $0xa0] sm:$0xff]
        %v366 = vld [vmem:[%s343 + $0xa8] sm:$0xff]
        %v367 = vld [vmem:[%s343 + $0xb0] sm:$0xff]
        %v368 = vld [vmem:[%s343 + $0xb8] sm:$0xff]
        %v369 = vld [vmem:[%s343 + $0xc0] sm:$0xff]
        %v370 = vld [vmem:[%s343 + $0xc8] sm:$0xff]
        %v371 = vld [vmem:[%s343 + $0xd0] sm:$0xff]
        %v372 = vld [vmem:[%s343 + $0xd8] sm:$0xff]
        %v373 = vld [vmem:[%s343 + $0xe0] sm:$0xff]
        %v374 = vld [vmem:[%s343 + $0xe8] sm:$0xff]
        %v375 = vld [vmem:[%s343 + $0xf0] sm:$0xff]
        %v376 = vld [vmem:[%s343 + $0xf8] sm:$0xff]
        %v377 = vrot.slane %v345, 7
        %v378 = vrot.slane %v346, 7
        %v379 = vrot.slane %v347, 7
        %v380 = vrot.slane %v348, 7
        %v381 = vrot.slane %v349, 7
        %v382 = vrot.slane %v350, 7
        %v383 = vrot.slane %v351, 7
        %v384 = vrot.slane %v352, 7
        %v385 = vrot.slane %v353, 7
        %v386 = vrot.slane %v354, 7
        %v387 = vrot.slane %v355, 7
        %v388 = vrot.slane %v356, 7
        %v389 = vrot.slane %v357, 7
        %v390 = vrot.slane %v358, 7
        %v391 = vrot.slane %v359, 7
        %v392 = vrot.slane %v360, 7
        %v393 = vrot.slane %v361, 7
        %v394 = vrot.slane %v362, 7
        %v395 = vrot.slane %v363, 7
        %v396 = vrot.slane %v364, 7
        %v397 = vrot.slane %v365, 7
        %v398 = vrot.slane %v366, 7
        %v399 = vrot.slane %v367, 7
        %v400 = vrot.slane %v368, 7
        %v401 = vrot.slane %v369, 7
        %v402 = vrot.slane %v370, 7
        %v403 = vrot.slane %v371, 7
        %v404 = vrot.slane %v372, 7
        %v405 = vrot.slane %v373, 7
        %v406 = vrot.slane %v374, 7
        %v407 = vrot.slane %v375, 7
        %v408 = vrot.slane %v376, 7
        %v409 = vlaneseq
        %v410 = vshrl.u32 %v409, 7
        %vm411 = vcmp.lt.s32.totalorder %v410, 1
        %v412 = vsel %vm411, %v407, %v408
        %v413 = vsel %vm411, %v406, %v407
        %v414 = vsel %vm411, %v405, %v406
        %v415 = vsel %vm411, %v404, %v405
        %v416 = vsel %vm411, %v403, %v404
        %v417 = vsel %vm411, %v402, %v403
        %v418 = vsel %vm411, %v401, %v402
        %v419 = vsel %vm411, %v400, %v401
        %v420 = vsel %vm411, %v399, %v400
        %v421 = vsel %vm411, %v398, %v399
        %v422 = vsel %vm411, %v397, %v398
        %v423 = vsel %vm411, %v396, %v397
        %v424 = vsel %vm411, %v395, %v396
        %v425 = vsel %vm411, %v394, %v395
        %v426 = vsel %vm411, %v393, %v394
        %v427 = vsel %vm411, %v392, %v393
        %v428 = vsel %vm411, %v391, %v392
        %v429 = vsel %vm411, %v390, %v391
        %v430 = vsel %vm411, %v389, %v390
        %v431 = vsel %vm411, %v388, %v389
        %v432 = vsel %vm411, %v387, %v388
        %v433 = vsel %vm411, %v386, %v387
        %v434 = vsel %vm411, %v385, %v386
        %v435 = vsel %vm411, %v384, %v385
        %v436 = vsel %vm411, %v383, %v384
        %v437 = vsel %vm411, %v382, %v383
        %v438 = vsel %vm411, %v381, %v382
        %v439 = vsel %vm411, %v380, %v381
        %v440 = vsel %vm411, %v379, %v380
        %v441 = vsel %vm411, %v378, %v379
        %v442 = vsel %vm411, %v377, %v378
        %v443 = vsel %vm411, %v408, %v377
        %v444 = vld [vmem:[#allocation2] sm:$0xff]
        %v445 = vld [vmem:[#allocation2 + $0x8] sm:$0xff]
        %v446 = vld [vmem:[#allocation2 + $0x10] sm:$0xff]
        %v447 = vld [vmem:[#allocation2 + $0x18] sm:$0xff]
        %v448 = vld [vmem:[#allocation2 + $0x20] sm:$0xff]
        %v449 = vld [vmem:[#allocation2 + $0x28] sm:$0xff]
        %v450 = vld [vmem:[#allocation2 + $0x30] sm:$0xff]
        %v451 = vld [vmem:[#allocation2 + $0x38] sm:$0xff]
        %v452 = vld [vmem:[#allocation2 + $0x40] sm:$0xff]
        %v453 = vld [vmem:[#allocation2 + $0x48] sm:$0xff]
        %v454 = vld [vmem:[#allocation2 + $0x50] sm:$0xff]
        %v455 = vld [vmem:[#allocation2 + $0x58] sm:$0xff]
        %v456 = vld [vmem:[#allocation2 + $0x60] sm:$0xff]
        %v457 = vld [vmem:[#allocation2 + $0x68] sm:$0xff]
        %v458 = vld [vmem:[#allocation2 + $0x70] sm:$0xff]
        %v459 = vld [vmem:[#allocation2 + $0x78] sm:$0xff]
        %v460 = vld [vmem:[#allocation2 + $0x80] sm:$0xff]
        %v461 = vld [vmem:[#allocation2 + $0x88] sm:$0xff]
        %v462 = vld [vmem:[#allocation2 + $0x90] sm:$0xff]
        %v463 = vld [vmem:[#allocation2 + $0x98] sm:$0xff]
        %v464 = vld [vmem:[#allocation2 + $0xa0] sm:$0xff]
        %v465 = vld [vmem:[#allocation2 + $0xa8] sm:$0xff]
        %v466 = vld [vmem:[#allocation2 + $0xb0] sm:$0xff]
        %v467 = vld [vmem:[#allocation2 + $0xb8] sm:$0xff]
        %v468 = vld [vmem:[#allocation2 + $0xc0] sm:$0xff]
        %v469 = vld [vmem:[#allocation2 + $0xc8] sm:$0xff]
        %v470 = vld [vmem:[#allocation2 + $0xd0] sm:$0xff]
        %v471 = vld [vmem:[#allocation2 + $0xd8] sm:$0xff]
        %v472 = vld [vmem:[#allocation2 + $0xe0] sm:$0xff]
        %v473 = vld [vmem:[#allocation2 + $0xe8] sm:$0xff]
        %v474 = vld [vmem:[#allocation2 + $0xf0] sm:$0xff]
        %v475 = vld [vmem:[#allocation2 + $0xf8] sm:$0xff]
        %477 = vset.pattern.permute.xlu0 0
        %478 = vperm.xlu0 %477, %v444
        %v479 = vpop.permute.xlu0 %478
        %482 = vset.pattern.permute.xlu0 0
        %483 = vperm.xlu0 %482, %v445
        %v484 = vpop.permute.xlu0 %483
        %487 = vset.pattern.permute.xlu0 0
        %488 = vperm.xlu0 %487, %v446
        %v489 = vpop.permute.xlu0 %488
        %492 = vset.pattern.permute.xlu0 0
        %493 = vperm.xlu0 %492, %v447
        %v494 = vpop.permute.xlu0 %493
        %497 = vset.pattern.permute.xlu0 0
        %498 = vperm.xlu0 %497, %v448
        %v499 = vpop.permute.xlu0 %498
        %502 = vset.pattern.permute.xlu0 0
        %503 = vperm.xlu0 %502, %v449
        %v504 = vpop.permute.xlu0 %503
        %507 = vset.pattern.permute.xlu0 0
        %508 = vperm.xlu0 %507, %v450
        %v509 = vpop.permute.xlu0 %508
        %512 = vset.pattern.permute.xlu0 0
        %513 = vperm.xlu0 %512, %v451
        %v514 = vpop.permute.xlu0 %513
        %517 = vset.pattern.permute.xlu0 0
        %518 = vperm.xlu0 %517, %v452
        %v519 = vpop.permute.xlu0 %518
        %522 = vset.pattern.permute.xlu0 0
        %523 = vperm.xlu0 %522, %v453
        %v524 = vpop.permute.xlu0 %523
        %527 = vset.pattern.permute.xlu0 0
        %528 = vperm.xlu0 %527, %v454
        %v529 = vpop.permute.xlu0 %528
        %532 = vset.pattern.permute.xlu0 0
        %533 = vperm.xlu0 %532, %v455
        %v534 = vpop.permute.xlu0 %533
        %537 = vset.pattern.permute.xlu0 0
        %538 = vperm.xlu0 %537, %v456
        %v539 = vpop.permute.xlu0 %538
        %542 = vset.pattern.permute.xlu0 0
        %543 = vperm.xlu0 %542, %v457
        %v544 = vpop.permute.xlu0 %543
        %547 = vset.pattern.permute.xlu0 0
        %548 = vperm.xlu0 %547, %v458
        %v549 = vpop.permute.xlu0 %548
        %552 = vset.pattern.permute.xlu0 0
        %553 = vperm.xlu0 %552, %v459
        %v554 = vpop.permute.xlu0 %553
        %557 = vset.pattern.permute.xlu0 0
        %558 = vperm.xlu0 %557, %v460
        %v559 = vpop.permute.xlu0 %558
        %562 = vset.pattern.permute.xlu0 0
        %563 = vperm.xlu0 %562, %v461
        %v564 = vpop.permute.xlu0 %563
        %567 = vset.pattern.permute.xlu0 0
        %568 = vperm.xlu0 %567, %v462
        %v569 = vpop.permute.xlu0 %568
        %572 = vset.pattern.permute.xlu0 0
        %573 = vperm.xlu0 %572, %v463
        %v574 = vpop.permute.xlu0 %573
        %577 = vset.pattern.permute.xlu0 0
        %578 = vperm.xlu0 %577, %v464
        %v579 = vpop.permute.xlu0 %578
        %582 = vset.pattern.permute.xlu0 0
        %583 = vperm.xlu0 %582, %v465
        %v584 = vpop.permute.xlu0 %583
        %587 = vset.pattern.permute.xlu0 0
        %588 = vperm.xlu0 %587, %v466
        %v589 = vpop.permute.xlu0 %588
        %592 = vset.pattern.permute.xlu0 0
        %593 = vperm.xlu0 %592, %v467
        %v594 = vpop.permute.xlu0 %593
        %597 = vset.pattern.permute.xlu0 0
        %598 = vperm.xlu0 %597, %v468
        %v599 = vpop.permute.xlu0 %598
        %602 = vset.pattern.permute.xlu0 0
        %603 = vperm.xlu0 %602, %v469
        %v604 = vpop.permute.xlu0 %603
        %607 = vset.pattern.permute.xlu0 0
        %608 = vperm.xlu0 %607, %v470
        %v609 = vpop.permute.xlu0 %608
        %612 = vset.pattern.permute.xlu0 0
        %613 = vperm.xlu0 %612, %v471
        %v614 = vpop.permute.xlu0 %613
        %617 = vset.pattern.permute.xlu0 0
        %618 = vperm.xlu0 %617, %v472
        %v619 = vpop.permute.xlu0 %618
        %622 = vset.pattern.permute.xlu0 0
        %623 = vperm.xlu0 %622, %v473
        %v624 = vpop.permute.xlu0 %623
        %627 = vset.pattern.permute.xlu0 0
        %628 = vperm.xlu0 %627, %v474
        %v629 = vpop.permute.xlu0 %628
        %632 = vset.pattern.permute.xlu0 0
        %633 = vperm.xlu0 %632, %v475
        %v634 = vpop.permute.xlu0 %633
        %v636 = vmul.f32 %v413, %v479
        %v637 = vmul.f32 %v412, %v484
        %v638 = vmul.f32 %v443, %v489
        %v639 = vmul.f32 %v442, %v494
        %v640 = vmul.f32 %v441, %v499
        %v641 = vmul.f32 %v440, %v504
        %v642 = vmul.f32 %v439, %v509
        %v643 = vmul.f32 %v438, %v514
        %v644 = vmul.f32 %v437, %v519
        %v645 = vmul.f32 %v436, %v524
        %v646 = vmul.f32 %v435, %v529
        %v647 = vmul.f32 %v434, %v534
        %v648 = vmul.f32 %v433, %v539
        %v649 = vmul.f32 %v432, %v544
        %v650 = vmul.f32 %v431, %v549
        %v651 = vmul.f32 %v430, %v554
        %v652 = vmul.f32 %v429, %v559
        %v653 = vmul.f32 %v428, %v564
        %v654 = vmul.f32 %v427, %v569
        %v655 = vmul.f32 %v426, %v574
        %v656 = vmul.f32 %v425, %v579
        %v657 = vmul.f32 %v424, %v584
        %v658 = vmul.f32 %v423, %v589
        %v659 = vmul.f32 %v422, %v594
        %v660 = vmul.f32 %v421, %v599
        %v661 = vmul.f32 %v420, %v604
        %v662 = vmul.f32 %v419, %v609
        %v663 = vmul.f32 %v418, %v614
        %v664 = vmul.f32 %v417, %v619
        %v665 = vmul.f32 %v416, %v624
        %v666 = vmul.f32 %v415, %v629
        %v667 = vmul.f32 %v414, %v634
        %v668 = vpack.c.bf16 %v637, %v636
        %v669 = vpack.c.bf16 %v639, %v638
        %v670 = vpack.c.bf16 %v641, %v640
        %v671 = vpack.c.bf16 %v643, %v642
        %v672 = vpack.c.bf16 %v645, %v644
        %v673 = vpack.c.bf16 %v647, %v646
        %v674 = vpack.c.bf16 %v649, %v648
        %v675 = vpack.c.bf16 %v651, %v650
        %v676 = vpack.c.bf16 %v653, %v652
        %v677 = vpack.c.bf16 %v655, %v654
        %v678 = vpack.c.bf16 %v657, %v656
        %v679 = vpack.c.bf16 %v659, %v658
        %v680 = vpack.c.bf16 %v661, %v660
        %v681 = vpack.c.bf16 %v663, %v662
        %v682 = vpack.c.bf16 %v665, %v664
        %v683 = vpack.c.bf16 %v667, %v666
        %v684 = vld [vmem:[%s2] sm:$0x3]
        %s685 = scalar_lea.vmem [#allocation2], 256
        %v686 = vld [vmem:[%s685] sm:$0xff]
        %v687 = vld [vmem:[%s685 + $0x8] sm:$0xff]
        %v688 = vld [vmem:[%s685 + $0x10] sm:$0xff]
        %v689 = vld [vmem:[%s685 + $0x18] sm:$0xff]
        %v690 = vld [vmem:[%s685 + $0x20] sm:$0xff]
        %v691 = vld [vmem:[%s685 + $0x28] sm:$0xff]
        %v692 = vld [vmem:[%s685 + $0x30] sm:$0xff]
        %v693 = vld [vmem:[%s685 + $0x38] sm:$0xff]
        %v694 = vld [vmem:[%s685 + $0x40] sm:$0xff]
        %v695 = vld [vmem:[%s685 + $0x48] sm:$0xff]
        %v696 = vld [vmem:[%s685 + $0x50] sm:$0xff]
        %v697 = vld [vmem:[%s685 + $0x58] sm:$0xff]
        %v698 = vld [vmem:[%s685 + $0x60] sm:$0xff]
        %v699 = vld [vmem:[%s685 + $0x68] sm:$0xff]
        %v700 = vld [vmem:[%s685 + $0x70] sm:$0xff]
        %v701 = vld [vmem:[%s685 + $0x78] sm:$0xff]
        %v702 = vld [vmem:[%s685 + $0x80] sm:$0xff]
        %v703 = vld [vmem:[%s685 + $0x88] sm:$0xff]
        %v704 = vld [vmem:[%s685 + $0x90] sm:$0xff]
        %v705 = vld [vmem:[%s685 + $0x98] sm:$0xff]
        %v706 = vld [vmem:[%s685 + $0xa0] sm:$0xff]
        %v707 = vld [vmem:[%s685 + $0xa8] sm:$0xff]
        %v708 = vld [vmem:[%s685 + $0xb0] sm:$0xff]
        %v709 = vld [vmem:[%s685 + $0xb8] sm:$0xff]
        %v710 = vld [vmem:[%s685 + $0xc0] sm:$0xff]
        %v711 = vld [vmem:[%s685 + $0xc8] sm:$0xff]
        %v712 = vld [vmem:[%s685 + $0xd0] sm:$0xff]
        %v713 = vld [vmem:[%s685 + $0xd8] sm:$0xff]
        %v714 = vld [vmem:[%s685 + $0xe0] sm:$0xff]
        %v715 = vld [vmem:[%s685 + $0xe8] sm:$0xff]
        %v716 = vld [vmem:[%s685 + $0xf0] sm:$0xff]
        %v717 = vld [vmem:[%s685 + $0xf8] sm:$0xff]
        %719 = vset.pattern.permute.xlu0 0
        %720 = vperm.xlu0 %719, %v686
        %v721 = vpop.permute.xlu0 %720
        %724 = vset.pattern.permute.xlu0 0
        %725 = vperm.xlu0 %724, %v687
        %v726 = vpop.permute.xlu0 %725
        %729 = vset.pattern.permute.xlu0 0
        %730 = vperm.xlu0 %729, %v688
        %v731 = vpop.permute.xlu0 %730
        %734 = vset.pattern.permute.xlu0 0
        %735 = vperm.xlu0 %734, %v689
        %v736 = vpop.permute.xlu0 %735
        %739 = vset.pattern.permute.xlu0 0
        %740 = vperm.xlu0 %739, %v690
        %v741 = vpop.permute.xlu0 %740
        %744 = vset.pattern.permute.xlu0 0
        %745 = vperm.xlu0 %744, %v691
        %v746 = vpop.permute.xlu0 %745
        %749 = vset.pattern.permute.xlu0 0
        %750 = vperm.xlu0 %749, %v692
        %v751 = vpop.permute.xlu0 %750
        %754 = vset.pattern.permute.xlu0 0
        %755 = vperm.xlu0 %754, %v693
        %v756 = vpop.permute.xlu0 %755
        %759 = vset.pattern.permute.xlu0 0
        %760 = vperm.xlu0 %759, %v694
        %v761 = vpop.permute.xlu0 %760
        %764 = vset.pattern.permute.xlu0 0
        %765 = vperm.xlu0 %764, %v695
        %v766 = vpop.permute.xlu0 %765
        %769 = vset.pattern.permute.xlu0 0
        %770 = vperm.xlu0 %769, %v696
        %v771 = vpop.permute.xlu0 %770
        %774 = vset.pattern.permute.xlu0 0
        %775 = vperm.xlu0 %774, %v697
        %v776 = vpop.permute.xlu0 %775
        %779 = vset.pattern.permute.xlu0 0
        %780 = vperm.xlu0 %779, %v698
        %v781 = vpop.permute.xlu0 %780
        %784 = vset.pattern.permute.xlu0 0
        %785 = vperm.xlu0 %784, %v699
        %v786 = vpop.permute.xlu0 %785
        %789 = vset.pattern.permute.xlu0 0
        %790 = vperm.xlu0 %789, %v700
        %v791 = vpop.permute.xlu0 %790
        %794 = vset.pattern.permute.xlu0 0
        %795 = vperm.xlu0 %794, %v701
        %v796 = vpop.permute.xlu0 %795
        %799 = vset.pattern.permute.xlu0 0
        %800 = vperm.xlu0 %799, %v702
        %v801 = vpop.permute.xlu0 %800
        %804 = vset.pattern.permute.xlu0 0
        %805 = vperm.xlu0 %804, %v703
        %v806 = vpop.permute.xlu0 %805
        %809 = vset.pattern.permute.xlu0 0
        %810 = vperm.xlu0 %809, %v704
        %v811 = vpop.permute.xlu0 %810
        %814 = vset.pattern.permute.xlu0 0
        %815 = vperm.xlu0 %814, %v705
        %v816 = vpop.permute.xlu0 %815
        %819 = vset.pattern.permute.xlu0 0
        %820 = vperm.xlu0 %819, %v706
        %v821 = vpop.permute.xlu0 %820
        %824 = vset.pattern.permute.xlu0 0
        %825 = vperm.xlu0 %824, %v707
        %v826 = vpop.permute.xlu0 %825
        %829 = vset.pattern.permute.xlu0 0
        %830 = vperm.xlu0 %829, %v708
        %v831 = vpop.permute.xlu0 %830
        %834 = vset.pattern.permute.xlu0 0
        %835 = vperm.xlu0 %834, %v709
        %v836 = vpop.permute.xlu0 %835
        %839 = vset.pattern.permute.xlu0 0
        %840 = vperm.xlu0 %839, %v710
        %v841 = vpop.permute.xlu0 %840
        %844 = vset.pattern.permute.xlu0 0
        %845 = vperm.xlu0 %844, %v711
        %v846 = vpop.permute.xlu0 %845
        %849 = vset.pattern.permute.xlu0 0
        %850 = vperm.xlu0 %849, %v712
        %v851 = vpop.permute.xlu0 %850
        %854 = vset.pattern.permute.xlu0 0
        %855 = vperm.xlu0 %854, %v713
        %v856 = vpop.permute.xlu0 %855
        %859 = vset.pattern.permute.xlu0 0
        %860 = vperm.xlu0 %859, %v714
        %v861 = vpop.permute.xlu0 %860
        %864 = vset.pattern.permute.xlu0 0
        %865 = vperm.xlu0 %864, %v715
        %v866 = vpop.permute.xlu0 %865
        %869 = vset.pattern.permute.xlu0 0
        %870 = vperm.xlu0 %869, %v716
        %v871 = vpop.permute.xlu0 %870
        %874 = vset.pattern.permute.xlu0 0
        %875 = vperm.xlu0 %874, %v717
        %v876 = vpop.permute.xlu0 %875
        %v878 = vmul.f32 %v375, %v721
        %v879 = vmul.f32 %v376, %v726
        %v880 = vmul.f32 %v345, %v731
        %v881 = vmul.f32 %v346, %v736
        %v882 = vmul.f32 %v347, %v741
        %v883 = vmul.f32 %v348, %v746
        %v884 = vmul.f32 %v349, %v751
        %v885 = vmul.f32 %v350, %v756
        %v886 = vmul.f32 %v351, %v761
        %v887 = vmul.f32 %v352, %v766
        %v888 = vmul.f32 %v353, %v771
        %v889 = vmul.f32 %v354, %v776
        %v890 = vmul.f32 %v355, %v781
        %v891 = vmul.f32 %v356, %v786
        %v892 = vmul.f32 %v357, %v791
        %v893 = vmul.f32 %v358, %v796
        %v894 = vmul.f32 %v359, %v801
        %v895 = vmul.f32 %v360, %v806
        %v896 = vmul.f32 %v361, %v811
        %v897 = vmul.f32 %v362, %v816
        %v898 = vmul.f32 %v363, %v821
        %v899 = vmul.f32 %v364, %v826
        %v900 = vmul.f32 %v365, %v831
        %v901 = vmul.f32 %v366, %v836
        %v902 = vmul.f32 %v367, %v841
        %v903 = vmul.f32 %v368, %v846
        %v904 = vmul.f32 %v369, %v851
        %v905 = vmul.f32 %v370, %v856
        %v906 = vmul.f32 %v371, %v861
        %v907 = vmul.f32 %v372, %v866
        %v908 = vmul.f32 %v373, %v871
        %v909 = vmul.f32 %v374, %v876
        %v910 = vpack.c.bf16 %v879, %v878
        %v911 = vpack.c.bf16 %v881, %v880
        %v912 = vpack.c.bf16 %v883, %v882
        %v913 = vpack.c.bf16 %v885, %v884
        %v914 = vpack.c.bf16 %v887, %v886
        %v915 = vpack.c.bf16 %v889, %v888
        %v916 = vpack.c.bf16 %v891, %v890
        %v917 = vpack.c.bf16 %v893, %v892
        %v918 = vpack.c.bf16 %v895, %v894
        %v919 = vpack.c.bf16 %v897, %v896
        %v920 = vpack.c.bf16 %v899, %v898
        %v921 = vpack.c.bf16 %v901, %v900
        %v922 = vpack.c.bf16 %v903, %v902
        %v923 = vpack.c.bf16 %v905, %v904
        %v924 = vpack.c.bf16 %v907, %v906
        %v925 = vpack.c.bf16 %v909, %v908
        %s926 = scalar_lea.vmem %s2, 2
        %v927 = vld [vmem:[%s926] sm:$0x3]
        %vm928 = vcmask 31744
        %v930 = vsel %vm928, %v910, 0
        %v933 = vsel %vm928, %v911, 0
        %v936 = vsel %vm928, %v912, 0
        %v939 = vsel %vm928, %v913, 0
        %v942 = vsel %vm928, %v914, 0
        %v945 = vsel %vm928, %v915, 0
        %v948 = vsel %vm928, %v916, 0
        %v951 = vsel %vm928, %v917, 0
        %v954 = vsel %vm928, %v918, 0
        %v957 = vsel %vm928, %v919, 0
        %v960 = vsel %vm928, %v920, 0
        %v963 = vsel %vm928, %v921, 0
        %v966 = vsel %vm928, %v922, 0
        %v969 = vsel %vm928, %v923, 0
        %v972 = vsel %vm928, %v924, 0
        %v975 = vsel %vm928, %v925, 0
        %vm977 = vcmask 1041408
        %v979 = vsel %vm977, %v927, 0
        %981 = vmatprep.subr.bf16.mxu0 0
        %982 = vmatpush1.bf16.msra.mxu0 %v979
        %983 = vmatprep.subr.bf16.mxu0 0
        %984 = vmatpush1.bf16.msra.mxu0 0
        %985 = vmatprep.subr.bf16.mxu0 0
        %986 = vmatpush1.bf16.msra.mxu0 0
        %987 = vmatprep.subr.bf16.mxu0 0
        %988 = vmatpush1.bf16.msra.mxu0 0
        %989 = vmatprep.subr.bf16.mxu0 0
        %990 = vmatpush1.bf16.msra.mxu0 0
        %991 = vmatprep.subr.bf16.mxu0 0
        %992 = vmatpush1.bf16.msra.mxu0 0
        %993 = vmatprep.subr.bf16.mxu0 0
        %994 = vmatpush1.bf16.msra.mxu0 0
        %995 = vmatprep.subr.bf16.mxu0 0
        %996 = vmatpush1.bf16.msra.mxu0 0
        %997 = vmatprep.subr.bf16.mxu0 0
        %998 = vmatpush1.bf16.msra.mxu0 0
        %999 = vmatprep.subr.bf16.mxu0 0
        %1000 = vmatpush1.bf16.msra.mxu0 0
        %1001 = vmatprep.subr.bf16.mxu0 0
        %1002 = vmatpush1.bf16.msra.mxu0 0
        %1003 = vmatprep.subr.bf16.mxu0 0
        %1004 = vmatpush1.bf16.msra.mxu0 0
        %1005 = vmatprep.subr.bf16.mxu0 0
        %1006 = vmatpush1.bf16.msra.mxu0 0
        %1007 = vmatprep.subr.bf16.mxu0 0
        %1008 = vmatpush1.bf16.msra.mxu0 0
        %1009 = vmatprep.subr.bf16.mxu0 0
        %1010 = vmatpush1.bf16.msra.mxu0 0
        %1011 = vmatprep.subr.bf16.mxu0 0
        %1012 = vmatpush1.bf16.msra.mxu0 0
        %1013 = vmatprep.mubr.bf16.mxu0 0
        %1014 = vmatmul.mubr.bf16.gmra.mrb[0].mxu0 %v930
        %v1015 = vpop.f32.mrb[0].mxu0
        %v1016 = vadd.f32 0.0, %v1015
        %v1017 = vpop.f32.mrb[0].mxu0
        %v1018 = vpop.f32.mrb[0].mxu0
        %v1019 = vadd.f32 0.0, %v1018
        %v1020 = vpop.f32.mrb[0].mxu0
        %1021 = vmatprep.mubr.bf16.mxu0 0
        %1022 = vmatmul.mubr.bf16.gmra.mrb[0].mxu0 %v933
        %v1023 = vpop.f32.mrb[0].mxu0
        %v1024 = vadd.f32 0.0, %v1023
        %v1025 = vpop.f32.mrb[0].mxu0
        %v1026 = vpop.f32.mrb[0].mxu0
        %v1027 = vadd.f32 0.0, %v1026
        %v1028 = vpop.f32.mrb[0].mxu0
        %1029 = vmatprep.mubr.bf16.mxu0 0
        %1030 = vmatmul.mubr.bf16.gmra.mrb[0].mxu0 %v936
        %v1031 = vpop.f32.mrb[0].mxu0
        %v1032 = vadd.f32 0.0, %v1031
        %v1033 = vpop.f32.mrb[0].mxu0
        %v1034 = vpop.f32.mrb[0].mxu0
        %v1035 = vadd.f32 0.0, %v1034
        %v1036 = vpop.f32.mrb[0].mxu0
        %1037 = vmatprep.mubr.bf16.mxu0 0
        %1038 = vmatmul.mubr.bf16.gmra.mrb[0].mxu0 %v939
        %v1039 = vpop.f32.mrb[0].mxu0
        %v1040 = vadd.f32 0.0, %v1039
        %v1041 = vpop.f32.mrb[0].mxu0
        %v1042 = vpop.f32.mrb[0].mxu0
        %v1043 = vadd.f32 0.0, %v1042
        %v1044 = vpop.f32.mrb[0].mxu0
        %1045 = vmatprep.mubr.bf16.mxu0 0
        %1046 = vmatmul.mubr.bf16.gmra.mrb[0].mxu0 %v942
        %v1047 = vpop.f32.mrb[0].mxu0
        %v1048 = vadd.f32 0.0, %v1047
        %v1049 = vpop.f32.mrb[0].mxu0
        %v1050 = vpop.f32.mrb[0].mxu0
        %v1051 = vadd.f32 0.0, %v1050
        %v1052 = vpop.f32.mrb[0].mxu0
        %1053 = vmatprep.mubr.bf16.mxu0 0
        %1054 = vmatmul.mubr.bf16.gmra.mrb[0].mxu0 %v945
        %v1055 = vpop.f32.mrb[0].mxu0
        %v1056 = vadd.f32 0.0, %v1055
        %v1057 = vpop.f32.mrb[0].mxu0
        %v1058 = vpop.f32.mrb[0].mxu0
        %v1059 = vadd.f32 0.0, %v1058
        %v1060 = vpop.f32.mrb[0].mxu0
        %1061 = vmatprep.mubr.bf16.mxu0 0
        %1062 = vmatmul.mubr.bf16.gmra.mrb[0].mxu0 %v948
        %v1063 = vpop.f32.mrb[0].mxu0
        %v1064 = vadd.f32 0.0, %v1063
        %v1065 = vpop.f32.mrb[0].mxu0
        %v1066 = vpop.f32.mrb[0].mxu0
        %v1067 = vadd.f32 0.0, %v1066
        %v1068 = vpop.f32.mrb[0].mxu0
        %1069 = vmatprep.mubr.bf16.mxu0 0
        %1070 = vmatmul.mubr.bf16.gmra.mrb[0].mxu0 %v951
        %v1071 = vpop.f32.mrb[0].mxu0
        %v1072 = vadd.f32 0.0, %v1071
        %v1073 = vpop.f32.mrb[0].mxu0
        %v1074 = vpop.f32.mrb[0].mxu0
        %v1075 = vadd.f32 0.0, %v1074
        %v1076 = vpop.f32.mrb[0].mxu0
        %1077 = vmatprep.mubr.bf16.mxu0 0
        %1078 = vmatmul.mubr.bf16.gmra.mrb[0].mxu0 %v954
        %v1079 = vpop.f32.mrb[0].mxu0
        %v1080 = vadd.f32 0.0, %v1079
        %v1081 = vpop.f32.mrb[0].mxu0
        %v1082 = vpop.f32.mrb[0].mxu0
        %v1083 = vadd.f32 0.0, %v1082
        %v1084 = vpop.f32.mrb[0].mxu0
        %1085 = vmatprep.mubr.bf16.mxu0 0
        %1086 = vmatmul.mubr.bf16.gmra.mrb[0].mxu0 %v957
        %v1087 = vpop.f32.mrb[0].mxu0
        %v1088 = vadd.f32 0.0, %v1087
        %v1089 = vpop.f32.mrb[0].mxu0
        %v1090 = vpop.f32.mrb[0].mxu0
        %v1091 = vadd.f32 0.0, %v1090
        %v1092 = vpop.f32.mrb[0].mxu0
        %1093 = vmatprep.mubr.bf16.mxu0 0
        %1094 = vmatmul.mubr.bf16.gmra.mrb[0].mxu0 %v960
        %v1095 = vpop.f32.mrb[0].mxu0
        %v1096 = vadd.f32 0.0, %v1095
        %v1097 = vpop.f32.mrb[0].mxu0
        %v1098 = vpop.f32.mrb[0].mxu0
        %v1099 = vadd.f32 0.0, %v1098
        %v1100 = vpop.f32.mrb[0].mxu0
        %1101 = vmatprep.mubr.bf16.mxu0 0
        %1102 = vmatmul.mubr.bf16.gmra.mrb[0].mxu0 %v963
        %v1103 = vpop.f32.mrb[0].mxu0
        %v1104 = vadd.f32 0.0, %v1103
        %v1105 = vpop.f32.mrb[0].mxu0
        %v1106 = vpop.f32.mrb[0].mxu0
        %v1107 = vadd.f32 0.0, %v1106
        %v1108 = vpop.f32.mrb[0].mxu0
        %1109 = vmatprep.mubr.bf16.mxu0 0
        %1110 = vmatmul.mubr.bf16.gmra.mrb[0].mxu0 %v966
        %v1111 = vpop.f32.mrb[0].mxu0
        %v1112 = vadd.f32 0.0, %v1111
        %v1113 = vpop.f32.mrb[0].mxu0
        %v1114 = vpop.f32.mrb[0].mxu0
        %v1115 = vadd.f32 0.0, %v1114
        %v1116 = vpop.f32.mrb[0].mxu0
        %1117 = vmatprep.mubr.bf16.mxu0 0
        %1118 = vmatmul.mubr.bf16.gmra.mrb[0].mxu0 %v969
        %v1119 = vpop.f32.mrb[0].mxu0
        %v1120 = vadd.f32 0.0, %v1119
        %v1121 = vpop.f32.mrb[0].mxu0
        %v1122 = vpop.f32.mrb[0].mxu0
        %v1123 = vadd.f32 0.0, %v1122
        %v1124 = vpop.f32.mrb[0].mxu0
        %1125 = vmatprep.mubr.bf16.mxu0 0
        %1126 = vmatmul.mubr.bf16.gmra.mrb[0].mxu0 %v972
        %v1127 = vpop.f32.mrb[0].mxu0
        %v1128 = vadd.f32 0.0, %v1127
        %v1129 = vpop.f32.mrb[0].mxu0
        %v1130 = vpop.f32.mrb[0].mxu0
        %v1131 = vadd.f32 0.0, %v1130
        %v1132 = vpop.f32.mrb[0].mxu0
        %1133 = vmatprep.mubr.bf16.mxu0 0
        %1134 = vmatmul.mubr.bf16.gmra.mrb[0].mxu0 %v975
        %v1135 = vpop.f32.mrb[0].mxu0
        %v1136 = vadd.f32 0.0, %v1135
        %v1137 = vpop.f32.mrb[0].mxu0
        %v1138 = vpop.f32.mrb[0].mxu0
        %v1139 = vadd.f32 0.0, %v1138
        %v1140 = vpop.f32.mrb[0].mxu0
        %1141 = vdwg.mxu0
        %v1143 = vsel %vm928, %v668, 0
        %v1146 = vsel %vm928, %v669, 0
        %v1149 = vsel %vm928, %v670, 0
        %v1152 = vsel %vm928, %v671, 0
        %v1155 = vsel %vm928, %v672, 0
        %v1158 = vsel %vm928, %v673, 0
        %v1161 = vsel %vm928, %v674, 0
        %v1164 = vsel %vm928, %v675, 0
        %v1167 = vsel %vm928, %v676, 0
        %v1170 = vsel %vm928, %v677, 0
        %v1173 = vsel %vm928, %v678, 0
        %v1176 = vsel %vm928, %v679, 0
        %v1179 = vsel %vm928, %v680, 0
        %v1182 = vsel %vm928, %v681, 0
        %v1185 = vsel %vm928, %v682, 0
        %v1188 = vsel %vm928, %v683, 0
        %v1191 = vsel %vm977, %v684, 0
        %1193 = vmatprep.subr.bf16.mxu0 0
        %1194 = vmatpush1.bf16.msra.mxu0 %v1191
        %1195 = vmatprep.subr.bf16.mxu0 0
        %1196 = vmatpush1.bf16.msra.mxu0 0
        %1197 = vmatprep.subr.bf16.mxu0 0
        %1198 = vmatpush1.bf16.msra.mxu0 0
        %1199 = vmatprep.subr.bf16.mxu0 0
        %1200 = vmatpush1.bf16.msra.mxu0 0
        %1201 = vmatprep.subr.bf16.mxu0 0
        %1202 = vmatpush1.bf16.msra.mxu0 0
        %1203 = vmatprep.subr.bf16.mxu0 0
        %1204 = vmatpush1.bf16.msra.mxu0 0
        %1205 = vmatprep.subr.bf16.mxu0 0
        %1206 = vmatpush1.bf16.msra.mxu0 0
        %1207 = vmatprep.subr.bf16.mxu0 0
        %1208 = vmatpush1.bf16.msra.mxu0 0
        %1209 = vmatprep.subr.bf16.mxu0 0
        %1210 = vmatpush1.bf16.msra.mxu0 0
        %1211 = vmatprep.subr.bf16.mxu0 0
        %1212 = vmatpush1.bf16.msra.mxu0 0
        %1213 = vmatprep.subr.bf16.mxu0 0
        %1214 = vmatpush1.bf16.msra.mxu0 0
        %1215 = vmatprep.subr.bf16.mxu0 0
        %1216 = vmatpush1.bf16.msra.mxu0 0
        %1217 = vmatprep.subr.bf16.mxu0 0
        %1218 = vmatpush1.bf16.msra.mxu0 0
        %1219 = vmatprep.subr.bf16.mxu0 0
        %1220 = vmatpush1.bf16.msra.mxu0 0
        %1221 = vmatprep.subr.bf16.mxu0 0
        %1222 = vmatpush1.bf16.msra.mxu0 0
        %1223 = vmatprep.subr.bf16.mxu0 0
        %1224 = vmatpush1.bf16.msra.mxu0 0
        %1225 = vmatprep.mubr.bf16.mxu0 0
        %1226 = vmatmul.mubr.bf16.gmra.mrb[0].mxu0 %v1143
        %v1227 = vpop.f32.mrb[0].mxu0
        %v1228 = vadd.f32 %v1016, %v1227
        %v1229 = vpop.f32.mrb[0].mxu0
        %v1230 = vpop.f32.mrb[0].mxu0
        %v1231 = vadd.f32 %v1019, %v1230
        %v1232 = vpop.f32.mrb[0].mxu0
        %1233 = vmatprep.mubr.bf16.mxu0 0
        %1234 = vmatmul.mubr.bf16.gmra.mrb[0].mxu0 %v1146
        %v1235 = vpop.f32.mrb[0].mxu0
        %v1236 = vadd.f32 %v1024, %v1235
        %v1237 = vpop.f32.mrb[0].mxu0
        %v1238 = vpop.f32.mrb[0].mxu0
        %v1239 = vadd.f32 %v1027, %v1238
        %v1240 = vpop.f32.mrb[0].mxu0
        %1241 = vmatprep.mubr.bf16.mxu0 0
        %1242 = vmatmul.mubr.bf16.gmra.mrb[0].mxu0 %v1149
        %v1243 = vpop.f32.mrb[0].mxu0
        %v1244 = vadd.f32 %v1032, %v1243
        %v1245 = vpop.f32.mrb[0].mxu0
        %v1246 = vpop.f32.mrb[0].mxu0
        %v1247 = vadd.f32 %v1035, %v1246
        %v1248 = vpop.f32.mrb[0].mxu0
        %1249 = vmatprep.mubr.bf16.mxu0 0
        %1250 = vmatmul.mubr.bf16.gmra.mrb[0].mxu0 %v1152
        %v1251 = vpop.f32.mrb[0].mxu0
        %v1252 = vadd.f32 %v1040, %v1251
        %v1253 = vpop.f32.mrb[0].mxu0
        %v1254 = vpop.f32.mrb[0].mxu0
        %v1255 = vadd.f32 %v1043, %v1254
        %v1256 = vpop.f32.mrb[0].mxu0
        %1257 = vmatprep.mubr.bf16.mxu0 0
        %1258 = vmatmul.mubr.bf16.gmra.mrb[0].mxu0 %v1155
        %v1259 = vpop.f32.mrb[0].mxu0
        %v1260 = vadd.f32 %v1048, %v1259
        %v1261 = vpop.f32.mrb[0].mxu0
        %v1262 = vpop.f32.mrb[0].mxu0
        %v1263 = vadd.f32 %v1051, %v1262
        %v1264 = vpop.f32.mrb[0].mxu0
        %1265 = vmatprep.mubr.bf16.mxu0 0
        %1266 = vmatmul.mubr.bf16.gmra.mrb[0].mxu0 %v1158
        %v1267 = vpop.f32.mrb[0].mxu0
        %v1268 = vadd.f32 %v1056, %v1267
        %v1269 = vpop.f32.mrb[0].mxu0
        %v1270 = vpop.f32.mrb[0].mxu0
        %v1271 = vadd.f32 %v1059, %v1270
        %v1272 = vpop.f32.mrb[0].mxu0
        %1273 = vmatprep.mubr.bf16.mxu0 0
        %1274 = vmatmul.mubr.bf16.gmra.mrb[0].mxu0 %v1161
        %v1275 = vpop.f32.mrb[0].mxu0
        %v1276 = vadd.f32 %v1064, %v1275
        %v1277 = vpop.f32.mrb[0].mxu0
        %v1278 = vpop.f32.mrb[0].mxu0
        %v1279 = vadd.f32 %v1067, %v1278
        %v1280 = vpop.f32.mrb[0].mxu0
        %1281 = vmatprep.mubr.bf16.mxu0 0
        %1282 = vmatmul.mubr.bf16.gmra.mrb[0].mxu0 %v1164
        %v1283 = vpop.f32.mrb[0].mxu0
        %v1284 = vadd.f32 %v1072, %v1283
        %v1285 = vpop.f32.mrb[0].mxu0
        %v1286 = vpop.f32.mrb[0].mxu0
        %v1287 = vadd.f32 %v1075, %v1286
        %v1288 = vpop.f32.mrb[0].mxu0
        %1289 = vmatprep.mubr.bf16.mxu0 0
        %1290 = vmatmul.mubr.bf16.gmra.mrb[0].mxu0 %v1167
        %v1291 = vpop.f32.mrb[0].mxu0
        %v1292 = vadd.f32 %v1080, %v1291
        %v1293 = vpop.f32.mrb[0].mxu0
        %v1294 = vpop.f32.mrb[0].mxu0
        %v1295 = vadd.f32 %v1083, %v1294
        %v1296 = vpop.f32.mrb[0].mxu0
        %1297 = vmatprep.mubr.bf16.mxu0 0
        %1298 = vmatmul.mubr.bf16.gmra.mrb[0].mxu0 %v1170
        %v1299 = vpop.f32.mrb[0].mxu0
        %v1300 = vadd.f32 %v1088, %v1299
        %v1301 = vpop.f32.mrb[0].mxu0
        %v1302 = vpop.f32.mrb[0].mxu0
        %v1303 = vadd.f32 %v1091, %v1302
        %v1304 = vpop.f32.mrb[0].mxu0
        %1305 = vmatprep.mubr.bf16.mxu0 0
        %1306 = vmatmul.mubr.bf16.gmra.mrb[0].mxu0 %v1173
        %v1307 = vpop.f32.mrb[0].mxu0
        %v1308 = vadd.f32 %v1096, %v1307
        %v1309 = vpop.f32.mrb[0].mxu0
        %v1310 = vpop.f32.mrb[0].mxu0
        %v1311 = vadd.f32 %v1099, %v1310
        %v1312 = vpop.f32.mrb[0].mxu0
        %1313 = vmatprep.mubr.bf16.mxu0 0
        %1314 = vmatmul.mubr.bf16.gmra.mrb[0].mxu0 %v1176
        %v1315 = vpop.f32.mrb[0].mxu0
        %v1316 = vadd.f32 %v1104, %v1315
        %v1317 = vpop.f32.mrb[0].mxu0
        %v1318 = vpop.f32.mrb[0].mxu0
        %v1319 = vadd.f32 %v1107, %v1318
        %v1320 = vpop.f32.mrb[0].mxu0
        %1321 = vmatprep.mubr.bf16.mxu0 0
        %1322 = vmatmul.mubr.bf16.gmra.mrb[0].mxu0 %v1179
        %v1323 = vpop.f32.mrb[0].mxu0
        %v1324 = vadd.f32 %v1112, %v1323
        %v1325 = vpop.f32.mrb[0].mxu0
        %v1326 = vpop.f32.mrb[0].mxu0
        %v1327 = vadd.f32 %v1115, %v1326
        %v1328 = vpop.f32.mrb[0].mxu0
        %1329 = vmatprep.mubr.bf16.mxu0 0
        %1330 = vmatmul.mubr.bf16.gmra.mrb[0].mxu0 %v1182
        %v1331 = vpop.f32.mrb[0].mxu0
        %v1332 = vadd.f32 %v1120, %v1331
        %v1333 = vpop.f32.mrb[0].mxu0
        %v1334 = vpop.f32.mrb[0].mxu0
        %v1335 = vadd.f32 %v1123, %v1334
        %v1336 = vpop.f32.mrb[0].mxu0
        %1337 = vmatprep.mubr.bf16.mxu0 0
        %1338 = vmatmul.mubr.bf16.gmra.mrb[0].mxu0 %v1185
        %v1339 = vpop.f32.mrb[0].mxu0
        %v1340 = vadd.f32 %v1128, %v1339
        %v1341 = vpop.f32.mrb[0].mxu0
        %v1342 = vpop.f32.mrb[0].mxu0
        %v1343 = vadd.f32 %v1131, %v1342
        %v1344 = vpop.f32.mrb[0].mxu0
        %1345 = vmatprep.mubr.bf16.mxu0 0
        %1346 = vmatmul.mubr.bf16.gmra.mrb[0].mxu0 %v1188
        %v1347 = vpop.f32.mrb[0].mxu0
        %v1348 = vadd.f32 %v1136, %v1347
        %v1349 = vpop.f32.mrb[0].mxu0
        %v1350 = vpop.f32.mrb[0].mxu0
        %v1351 = vadd.f32 %v1139, %v1350
        %v1352 = vpop.f32.mrb[0].mxu0
        %1353 = vdwg.mxu0
        %v1354 = vrot.slane %v345, 1
        %v1355 = vrot.slane %v346, 1
        %v1356 = vrot.slane %v347, 1
        %v1357 = vrot.slane %v348, 1
        %v1358 = vrot.slane %v349, 1
        %v1359 = vrot.slane %v350, 1
        %v1360 = vrot.slane %v351, 1
        %v1361 = vrot.slane %v352, 1
        %v1362 = vrot.slane %v353, 1
        %v1363 = vrot.slane %v354, 1
        %v1364 = vrot.slane %v355, 1
        %v1365 = vrot.slane %v356, 1
        %v1366 = vrot.slane %v357, 1
        %v1367 = vrot.slane %v358, 1
        %v1368 = vrot.slane %v359, 1
        %v1369 = vrot.slane %v360, 1
        %v1370 = vrot.slane %v361, 1
        %v1371 = vrot.slane %v362, 1
        %v1372 = vrot.slane %v363, 1
        %v1373 = vrot.slane %v364, 1
        %v1374 = vrot.slane %v365, 1
        %v1375 = vrot.slane %v366, 1
        %v1376 = vrot.slane %v367, 1
        %v1377 = vrot.slane %v368, 1
        %v1378 = vrot.slane %v369, 1
        %v1379 = vrot.slane %v370, 1
        %v1380 = vrot.slane %v371, 1
        %v1381 = vrot.slane %v372, 1
        %v1382 = vrot.slane %v373, 1
        %v1383 = vrot.slane %v374, 1
        %v1384 = vrot.slane %v375, 1
        %v1385 = vrot.slane %v376, 1
        %vm1386 = vcmp.lt.s32.totalorder %v410, 7
        %v1387 = vsel %vm1386, %v1384, %v1385
        %v1388 = vsel %vm1386, %v1383, %v1384
        %v1389 = vsel %vm1386, %v1382, %v1383
        %v1390 = vsel %vm1386, %v1381, %v1382
        %v1391 = vsel %vm1386, %v1380, %v1381
        %v1392 = vsel %vm1386, %v1379, %v1380
        %v1393 = vsel %vm1386, %v1378, %v1379
        %v1394 = vsel %vm1386, %v1377, %v1378
        %v1395 = vsel %vm1386, %v1376, %v1377
        %v1396 = vsel %vm1386, %v1375, %v1376
        %v1397 = vsel %vm1386, %v1374, %v1375
        %v1398 = vsel %vm1386, %v1373, %v1374
        %v1399 = vsel %vm1386, %v1372, %v1373
        %v1400 = vsel %vm1386, %v1371, %v1372
        %v1401 = vsel %vm1386, %v1370, %v1371
        %v1402 = vsel %vm1386, %v1369, %v1370
        %v1403 = vsel %vm1386, %v1368, %v1369
        %v1404 = vsel %vm1386, %v1367, %v1368
        %v1405 = vsel %vm1386, %v1366, %v1367
        %v1406 = vsel %vm1386, %v1365, %v1366
        %v1407 = vsel %vm1386, %v1364, %v1365
        %v1408 = vsel %vm1386, %v1363, %v1364
        %v1409 = vsel %vm1386, %v1362, %v1363
        %v1410 = vsel %vm1386, %v1361, %v1362
        %v1411 = vsel %vm1386, %v1360, %v1361
        %v1412 = vsel %vm1386, %v1359, %v1360
        %v1413 = vsel %vm1386, %v1358, %v1359
        %v1414 = vsel %vm1386, %v1357, %v1358
        %v1415 = vsel %vm1386, %v1356, %v1357
        %v1416 = vsel %vm1386, %v1355, %v1356
        %v1417 = vsel %vm1386, %v1354, %v1355
        %v1418 = vsel %vm1386, %v1385, %v1354
        %s1419 = scalar_lea.vmem [#allocation2], 512
        %v1420 = vld [vmem:[%s1419] sm:$0xff]
        %v1421 = vld [vmem:[%s1419 + $0x8] sm:$0xff]
        %v1422 = vld [vmem:[%s1419 + $0x10] sm:$0xff]
        %v1423 = vld [vmem:[%s1419 + $0x18] sm:$0xff]
        %v1424 = vld [vmem:[%s1419 + $0x20] sm:$0xff]
        %v1425 = vld [vmem:[%s1419 + $0x28] sm:$0xff]
        %v1426 = vld [vmem:[%s1419 + $0x30] sm:$0xff]
        %v1427 = vld [vmem:[%s1419 + $0x38] sm:$0xff]
        %v1428 = vld [vmem:[%s1419 + $0x40] sm:$0xff]
        %v1429 = vld [vmem:[%s1419 + $0x48] sm:$0xff]
        %v1430 = vld [vmem:[%s1419 + $0x50] sm:$0xff]
        %v1431 = vld [vmem:[%s1419 + $0x58] sm:$0xff]
        %v1432 = vld [vmem:[%s1419 + $0x60] sm:$0xff]
        %v1433 = vld [vmem:[%s1419 + $0x68] sm:$0xff]
        %v1434 = vld [vmem:[%s1419 + $0x70] sm:$0xff]
        %v1435 = vld [vmem:[%s1419 + $0x78] sm:$0xff]
        %v1436 = vld [vmem:[%s1419 + $0x80] sm:$0xff]
        %v1437 = vld [vmem:[%s1419 + $0x88] sm:$0xff]
        %v1438 = vld [vmem:[%s1419 + $0x90] sm:$0xff]
        %v1439 = vld [vmem:[%s1419 + $0x98] sm:$0xff]
        %v1440 = vld [vmem:[%s1419 + $0xa0] sm:$0xff]
        %v1441 = vld [vmem:[%s1419 + $0xa8] sm:$0xff]
        %v1442 = vld [vmem:[%s1419 + $0xb0] sm:$0xff]
        %v1443 = vld [vmem:[%s1419 + $0xb8] sm:$0xff]
        %v1444 = vld [vmem:[%s1419 + $0xc0] sm:$0xff]
        %v1445 = vld [vmem:[%s1419 + $0xc8] sm:$0xff]
        %v1446 = vld [vmem:[%s1419 + $0xd0] sm:$0xff]
        %v1447 = vld [vmem:[%s1419 + $0xd8] sm:$0xff]
        %v1448 = vld [vmem:[%s1419 + $0xe0] sm:$0xff]
        %v1449 = vld [vmem:[%s1419 + $0xe8] sm:$0xff]
        %v1450 = vld [vmem:[%s1419 + $0xf0] sm:$0xff]
        %v1451 = vld [vmem:[%s1419 + $0xf8] sm:$0xff]
        %1453 = vset.pattern.permute.xlu0 0
        %1454 = vperm.xlu0 %1453, %v1420
        %v1455 = vpop.permute.xlu0 %1454
        %1458 = vset.pattern.permute.xlu0 0
        %1459 = vperm.xlu0 %1458, %v1421
        %v1460 = vpop.permute.xlu0 %1459
        %1463 = vset.pattern.permute.xlu0 0
        %1464 = vperm.xlu0 %1463, %v1422
        %v1465 = vpop.permute.xlu0 %1464
        %1468 = vset.pattern.permute.xlu0 0
        %1469 = vperm.xlu0 %1468, %v1423
        %v1470 = vpop.permute.xlu0 %1469
        %1473 = vset.pattern.permute.xlu0 0
        %1474 = vperm.xlu0 %1473, %v1424
        %v1475 = vpop.permute.xlu0 %1474
        %1478 = vset.pattern.permute.xlu0 0
        %1479 = vperm.xlu0 %1478, %v1425
        %v1480 = vpop.permute.xlu0 %1479
        %1483 = vset.pattern.permute.xlu0 0
        %1484 = vperm.xlu0 %1483, %v1426
        %v1485 = vpop.permute.xlu0 %1484
        %1488 = vset.pattern.permute.xlu0 0
        %1489 = vperm.xlu0 %1488, %v1427
        %v1490 = vpop.permute.xlu0 %1489
        %1493 = vset.pattern.permute.xlu0 0
        %1494 = vperm.xlu0 %1493, %v1428
        %v1495 = vpop.permute.xlu0 %1494
        %1498 = vset.pattern.permute.xlu0 0
        %1499 = vperm.xlu0 %1498, %v1429
        %v1500 = vpop.permute.xlu0 %1499
        %1503 = vset.pattern.permute.xlu0 0
        %1504 = vperm.xlu0 %1503, %v1430
        %v1505 = vpop.permute.xlu0 %1504
        %1508 = vset.pattern.permute.xlu0 0
        %1509 = vperm.xlu0 %1508, %v1431
        %v1510 = vpop.permute.xlu0 %1509
        %1513 = vset.pattern.permute.xlu0 0
        %1514 = vperm.xlu0 %1513, %v1432
        %v1515 = vpop.permute.xlu0 %1514
        %1518 = vset.pattern.permute.xlu0 0
        %1519 = vperm.xlu0 %1518, %v1433
        %v1520 = vpop.permute.xlu0 %1519
        %1523 = vset.pattern.permute.xlu0 0
        %1524 = vperm.xlu0 %1523, %v1434
        %v1525 = vpop.permute.xlu0 %1524
        %1528 = vset.pattern.permute.xlu0 0
        %1529 = vperm.xlu0 %1528, %v1435
        %v1530 = vpop.permute.xlu0 %1529
        %1533 = vset.pattern.permute.xlu0 0
        %1534 = vperm.xlu0 %1533, %v1436
        %v1535 = vpop.permute.xlu0 %1534
        %1538 = vset.pattern.permute.xlu0 0
        %1539 = vperm.xlu0 %1538, %v1437
        %v1540 = vpop.permute.xlu0 %1539
        %1543 = vset.pattern.permute.xlu0 0
        %1544 = vperm.xlu0 %1543, %v1438
        %v1545 = vpop.permute.xlu0 %1544
        %1548 = vset.pattern.permute.xlu0 0
        %1549 = vperm.xlu0 %1548, %v1439
        %v1550 = vpop.permute.xlu0 %1549
        %1553 = vset.pattern.permute.xlu0 0
        %1554 = vperm.xlu0 %1553, %v1440
        %v1555 = vpop.permute.xlu0 %1554
        %1558 = vset.pattern.permute.xlu0 0
        %1559 = vperm.xlu0 %1558, %v1441
        %v1560 = vpop.permute.xlu0 %1559
        %1563 = vset.pattern.permute.xlu0 0
        %1564 = vperm.xlu0 %1563, %v1442
        %v1565 = vpop.permute.xlu0 %1564
        %1568 = vset.pattern.permute.xlu0 0
        %1569 = vperm.xlu0 %1568, %v1443
        %v1570 = vpop.permute.xlu0 %1569
        %1573 = vset.pattern.permute.xlu0 0
        %1574 = vperm.xlu0 %1573, %v1444
        %v1575 = vpop.permute.xlu0 %1574
        %1578 = vset.pattern.permute.xlu0 0
        %1579 = vperm.xlu0 %1578, %v1445
        %v1580 = vpop.permute.xlu0 %1579
        %1583 = vset.pattern.permute.xlu0 0
        %1584 = vperm.xlu0 %1583, %v1446
        %v1585 = vpop.permute.xlu0 %1584
        %1588 = vset.pattern.permute.xlu0 0
        %1589 = vperm.xlu0 %1588, %v1447
        %v1590 = vpop.permute.xlu0 %1589
        %1593 = vset.pattern.permute.xlu0 0
        %1594 = vperm.xlu0 %1593, %v1448
        %v1595 = vpop.permute.xlu0 %1594
        %1598 = vset.pattern.permute.xlu0 0
        %1599 = vperm.xlu0 %1598, %v1449
        %v1600 = vpop.permute.xlu0 %1599
        %1603 = vset.pattern.permute.xlu0 0
        %1604 = vperm.xlu0 %1603, %v1450
        %v1605 = vpop.permute.xlu0 %1604
        %1608 = vset.pattern.permute.xlu0 0
        %1609 = vperm.xlu0 %1608, %v1451
        %v1610 = vpop.permute.xlu0 %1609
        %v1612 = vmul.f32 %v1387, %v1455
        %v1613 = vmul.f32 %v1418, %v1460
        %v1614 = vmul.f32 %v1417, %v1465
        %v1615 = vmul.f32 %v1416, %v1470
        %v1616 = vmul.f32 %v1415, %v1475
        %v1617 = vmul.f32 %v1414, %v1480
        %v1618 = vmul.f32 %v1413, %v1485
        %v1619 = vmul.f32 %v1412, %v1490
        %v1620 = vmul.f32 %v1411, %v1495
        %v1621 = vmul.f32 %v1410, %v1500
        %v1622 = vmul.f32 %v1409, %v1505
        %v1623 = vmul.f32 %v1408, %v1510
        %v1624 = vmul.f32 %v1407, %v1515
        %v1625 = vmul.f32 %v1406, %v1520
        %v1626 = vmul.f32 %v1405, %v1525
        %v1627 = vmul.f32 %v1404, %v1530
        %v1628 = vmul.f32 %v1403, %v1535
        %v1629 = vmul.f32 %v1402, %v1540
        %v1630 = vmul.f32 %v1401, %v1545
        %v1631 = vmul.f32 %v1400, %v1550
        %v1632 = vmul.f32 %v1399, %v1555
        %v1633 = vmul.f32 %v1398, %v1560
        %v1634 = vmul.f32 %v1397, %v1565
        %v1635 = vmul.f32 %v1396, %v1570
        %v1636 = vmul.f32 %v1395, %v1575
        %v1637 = vmul.f32 %v1394, %v1580
        %v1638 = vmul.f32 %v1393, %v1585
        %v1639 = vmul.f32 %v1392, %v1590
        %v1640 = vmul.f32 %v1391, %v1595
        %v1641 = vmul.f32 %v1390, %v1600
        %v1642 = vmul.f32 %v1389, %v1605
        %v1643 = vmul.f32 %v1388, %v1610
        %v1644 = vpack.c.bf16 %v1613, %v1612
        %v1645 = vpack.c.bf16 %v1615, %v1614
        %v1646 = vpack.c.bf16 %v1617, %v1616
        %v1647 = vpack.c.bf16 %v1619, %v1618
        %v1648 = vpack.c.bf16 %v1621, %v1620
        %v1649 = vpack.c.bf16 %v1623, %v1622
        %v1650 = vpack.c.bf16 %v1625, %v1624
        %v1651 = vpack.c.bf16 %v1627, %v1626
        %v1652 = vpack.c.bf16 %v1629, %v1628
        %v1653 = vpack.c.bf16 %v1631, %v1630
        %v1654 = vpack.c.bf16 %v1633, %v1632
        %v1655 = vpack.c.bf16 %v1635, %v1634
        %v1656 = vpack.c.bf16 %v1637, %v1636
        %v1657 = vpack.c.bf16 %v1639, %v1638
        %v1658 = vpack.c.bf16 %v1641, %v1640
        %v1659 = vpack.c.bf16 %v1643, %v1642
        %s1660 = scalar_lea.vmem %s2, 4
        %v1661 = vld [vmem:[%s1660] sm:$0x3]
        %v1663 = vsel %vm928, %v1644, 0
        %v1666 = vsel %vm928, %v1645, 0
        %v1669 = vsel %vm928, %v1646, 0
        %v1672 = vsel %vm928, %v1647, 0
        %v1675 = vsel %vm928, %v1648, 0
        %v1678 = vsel %vm928, %v1649, 0
        %v1681 = vsel %vm928, %v1650, 0
        %v1684 = vsel %vm928, %v1651, 0
        %v1687 = vsel %vm928, %v1652, 0
        %v1690 = vsel %vm928, %v1653, 0
        %v1693 = vsel %vm928, %v1654, 0
        %v1696 = vsel %vm928, %v1655, 0
        %v1699 = vsel %vm928, %v1656, 0
        %v1702 = vsel %vm928, %v1657, 0
        %v1705 = vsel %vm928, %v1658, 0
        %v1708 = vsel %vm928, %v1659, 0
        %v1711 = vsel %vm977, %v1661, 0
        %1713 = vmatprep.subr.bf16.mxu0 0
        %1714 = vmatpush1.bf16.msra.mxu0 %v1711
        %1715 = vmatprep.subr.bf16.mxu0 0
        %1716 = vmatpush1.bf16.msra.mxu0 0
        %1717 = vmatprep.subr.bf16.mxu0 0
        %1718 = vmatpush1.bf16.msra.mxu0 0
        %1719 = vmatprep.subr.bf16.mxu0 0
        %1720 = vmatpush1.bf16.msra.mxu0 0
        %1721 = vmatprep.subr.bf16.mxu0 0
        %1722 = vmatpush1.bf16.msra.mxu0 0
        %1723 = vmatprep.subr.bf16.mxu0 0
        %1724 = vmatpush1.bf16.msra.mxu0 0
        %1725 = vmatprep.subr.bf16.mxu0 0
        %1726 = vmatpush1.bf16.msra.mxu0 0
        %1727 = vmatprep.subr.bf16.mxu0 0
        %1728 = vmatpush1.bf16.msra.mxu0 0
        %1729 = vmatprep.subr.bf16.mxu0 0
        %1730 = vmatpush1.bf16.msra.mxu0 0
        %1731 = vmatprep.subr.bf16.mxu0 0
        %1732 = vmatpush1.bf16.msra.mxu0 0
        %1733 = vmatprep.subr.bf16.mxu0 0
        %1734 = vmatpush1.bf16.msra.mxu0 0
        %1735 = vmatprep.subr.bf16.mxu0 0
        %1736 = vmatpush1.bf16.msra.mxu0 0
        %1737 = vmatprep.subr.bf16.mxu0 0
        %1738 = vmatpush1.bf16.msra.mxu0 0
        %1739 = vmatprep.subr.bf16.mxu0 0
        %1740 = vmatpush1.bf16.msra.mxu0 0
        %1741 = vmatprep.subr.bf16.mxu0 0
        %1742 = vmatpush1.bf16.msra.mxu0 0
        %1743 = vmatprep.subr.bf16.mxu0 0
        %1744 = vmatpush1.bf16.msra.mxu0 0
        %1745 = vmatprep.mubr.bf16.mxu0 0
        %1746 = vmatmul.mubr.bf16.gmra.mrb[0].mxu0 %v1663
        %v1747 = vpop.f32.mrb[0].mxu0
        %v1748 = vadd.f32 0.0, %v1747
        %v1749 = vpop.f32.mrb[0].mxu0
        %v1750 = vpop.f32.mrb[0].mxu0
        %v1751 = vadd.f32 0.0, %v1750
        %v1752 = vpop.f32.mrb[0].mxu0
        %1753 = vmatprep.mubr.bf16.mxu0 0
        %1754 = vmatmul.mubr.bf16.gmra.mrb[0].mxu0 %v1666
        %v1755 = vpop.f32.mrb[0].mxu0
        %v1756 = vadd.f32 0.0, %v1755
        %v1757 = vpop.f32.mrb[0].mxu0
        %v1758 = vpop.f32.mrb[0].mxu0
        %v1759 = vadd.f32 0.0, %v1758
        %v1760 = vpop.f32.mrb[0].mxu0
        %1761 = vmatprep.mubr.bf16.mxu0 0
        %1762 = vmatmul.mubr.bf16.gmra.mrb[0].mxu0 %v1669
        %v1763 = vpop.f32.mrb[0].mxu0
        %v1764 = vadd.f32 0.0, %v1763
        %v1765 = vpop.f32.mrb[0].mxu0
        %v1766 = vpop.f32.mrb[0].mxu0
        %v1767 = vadd.f32 0.0, %v1766
        %v1768 = vpop.f32.mrb[0].mxu0
        %1769 = vmatprep.mubr.bf16.mxu0 0
        %1770 = vmatmul.mubr.bf16.gmra.mrb[0].mxu0 %v1672
        %v1771 = vpop.f32.mrb[0].mxu0
        %v1772 = vadd.f32 0.0, %v1771
        %v1773 = vpop.f32.mrb[0].mxu0
        %v1774 = vpop.f32.mrb[0].mxu0
        %v1775 = vadd.f32 0.0, %v1774
        %v1776 = vpop.f32.mrb[0].mxu0
        %1777 = vmatprep.mubr.bf16.mxu0 0
        %1778 = vmatmul.mubr.bf16.gmra.mrb[0].mxu0 %v1675
        %v1779 = vpop.f32.mrb[0].mxu0
        %v1780 = vadd.f32 0.0, %v1779
        %v1781 = vpop.f32.mrb[0].mxu0
        %v1782 = vpop.f32.mrb[0].mxu0
        %v1783 = vadd.f32 0.0, %v1782
        %v1784 = vpop.f32.mrb[0].mxu0
        %1785 = vmatprep.mubr.bf16.mxu0 0
        %1786 = vmatmul.mubr.bf16.gmra.mrb[0].mxu0 %v1678
        %v1787 = vpop.f32.mrb[0].mxu0
        %v1788 = vadd.f32 0.0, %v1787
        %v1789 = vpop.f32.mrb[0].mxu0
        %v1790 = vpop.f32.mrb[0].mxu0
        %v1791 = vadd.f32 0.0, %v1790
        %v1792 = vpop.f32.mrb[0].mxu0
        %1793 = vmatprep.mubr.bf16.mxu0 0
        %1794 = vmatmul.mubr.bf16.gmra.mrb[0].mxu0 %v1681
        %v1795 = vpop.f32.mrb[0].mxu0
        %v1796 = vadd.f32 0.0, %v1795
        %v1797 = vpop.f32.mrb[0].mxu0
        %v1798 = vpop.f32.mrb[0].mxu0
        %v1799 = vadd.f32 0.0, %v1798
        %v1800 = vpop.f32.mrb[0].mxu0
        %1801 = vmatprep.mubr.bf16.mxu0 0
        %1802 = vmatmul.mubr.bf16.gmra.mrb[0].mxu0 %v1684
        %v1803 = vpop.f32.mrb[0].mxu0
        %v1804 = vadd.f32 0.0, %v1803
        %v1805 = vpop.f32.mrb[0].mxu0
        %v1806 = vpop.f32.mrb[0].mxu0
        %v1807 = vadd.f32 0.0, %v1806
        %v1808 = vpop.f32.mrb[0].mxu0
        %1809 = vmatprep.mubr.bf16.mxu0 0
        %1810 = vmatmul.mubr.bf16.gmra.mrb[0].mxu0 %v1687
        %v1811 = vpop.f32.mrb[0].mxu0
        %v1812 = vadd.f32 0.0, %v1811
        %v1813 = vpop.f32.mrb[0].mxu0
        %v1814 = vpop.f32.mrb[0].mxu0
        %v1815 = vadd.f32 0.0, %v1814
        %v1816 = vpop.f32.mrb[0].mxu0
        %1817 = vmatprep.mubr.bf16.mxu0 0
        %1818 = vmatmul.mubr.bf16.gmra.mrb[0].mxu0 %v1690
        %v1819 = vpop.f32.mrb[0].mxu0
        %v1820 = vadd.f32 0.0, %v1819
        %v1821 = vpop.f32.mrb[0].mxu0
        %v1822 = vpop.f32.mrb[0].mxu0
        %v1823 = vadd.f32 0.0, %v1822
        %v1824 = vpop.f32.mrb[0].mxu0
        %1825 = vmatprep.mubr.bf16.mxu0 0
        %1826 = vmatmul.mubr.bf16.gmra.mrb[0].mxu0 %v1693
        %v1827 = vpop.f32.mrb[0].mxu0
        %v1828 = vadd.f32 0.0, %v1827
        %v1829 = vpop.f32.mrb[0].mxu0
        %v1830 = vpop.f32.mrb[0].mxu0
        %v1831 = vadd.f32 0.0, %v1830
        %v1832 = vpop.f32.mrb[0].mxu0
        %1833 = vmatprep.mubr.bf16.mxu0 0
        %1834 = vmatmul.mubr.bf16.gmra.mrb[0].mxu0 %v1696
        %v1835 = vpop.f32.mrb[0].mxu0
        %v1836 = vadd.f32 0.0, %v1835
        %v1837 = vpop.f32.mrb[0].mxu0
        %v1838 = vpop.f32.mrb[0].mxu0
        %v1839 = vadd.f32 0.0, %v1838
        %v1840 = vpop.f32.mrb[0].mxu0
        %1841 = vmatprep.mubr.bf16.mxu0 0
        %1842 = vmatmul.mubr.bf16.gmra.mrb[0].mxu0 %v1699
        %v1843 = vpop.f32.mrb[0].mxu0
        %v1844 = vadd.f32 0.0, %v1843
        %v1845 = vpop.f32.mrb[0].mxu0
        %v1846 = vpop.f32.mrb[0].mxu0
        %v1847 = vadd.f32 0.0, %v1846
        %v1848 = vpop.f32.mrb[0].mxu0
        %1849 = vmatprep.mubr.bf16.mxu0 0
        %1850 = vmatmul.mubr.bf16.gmra.mrb[0].mxu0 %v1702
        %v1851 = vpop.f32.mrb[0].mxu0
        %v1852 = vadd.f32 0.0, %v1851
        %v1853 = vpop.f32.mrb[0].mxu0
        %v1854 = vpop.f32.mrb[0].mxu0
        %v1855 = vadd.f32 0.0, %v1854
        %v1856 = vpop.f32.mrb[0].mxu0
        %1857 = vmatprep.mubr.bf16.mxu0 0
        %1858 = vmatmul.mubr.bf16.gmra.mrb[0].mxu0 %v1705
        %v1859 = vpop.f32.mrb[0].mxu0
        %v1860 = vadd.f32 0.0, %v1859
        %v1861 = vpop.f32.mrb[0].mxu0
        %v1862 = vpop.f32.mrb[0].mxu0
        %v1863 = vadd.f32 0.0, %v1862
        %v1864 = vpop.f32.mrb[0].mxu0
        %1865 = vmatprep.mubr.bf16.mxu0 0
        %1866 = vmatmul.mubr.bf16.gmra.mrb[0].mxu0 %v1708
        %v1867 = vpop.f32.mrb[0].mxu0
        %v1868 = vadd.f32 0.0, %v1867
        %v1869 = vpop.f32.mrb[0].mxu0
        %v1870 = vpop.f32.mrb[0].mxu0
        %v1871 = vadd.f32 0.0, %v1870
        %v1872 = vpop.f32.mrb[0].mxu0
        %1873 = vdwg.mxu0
        %v1874 = vadd.f32 %v1228, %v1748
        %v1875 = vadd.f32 %v1231, %v1751
        %v1876 = vadd.f32 %v1236, %v1756
        %v1877 = vadd.f32 %v1239, %v1759
        %v1878 = vadd.f32 %v1244, %v1764
        %v1879 = vadd.f32 %v1247, %v1767
        %v1880 = vadd.f32 %v1252, %v1772
        %v1881 = vadd.f32 %v1255, %v1775
        %v1882 = vadd.f32 %v1260, %v1780
        %v1883 = vadd.f32 %v1263, %v1783
        %v1884 = vadd.f32 %v1268, %v1788
        %v1885 = vadd.f32 %v1271, %v1791
        %v1886 = vadd.f32 %v1276, %v1796
        %v1887 = vadd.f32 %v1279, %v1799
        %v1888 = vadd.f32 %v1284, %v1804
        %v1889 = vadd.f32 %v1287, %v1807
        %v1890 = vadd.f32 %v1292, %v1812
        %v1891 = vadd.f32 %v1295, %v1815
        %v1892 = vadd.f32 %v1300, %v1820
        %v1893 = vadd.f32 %v1303, %v1823
        %v1894 = vadd.f32 %v1308, %v1828
        %v1895 = vadd.f32 %v1311, %v1831
        %v1896 = vadd.f32 %v1316, %v1836
        %v1897 = vadd.f32 %v1319, %v1839
        %v1898 = vadd.f32 %v1324, %v1844
        %v1899 = vadd.f32 %v1327, %v1847
        %v1900 = vadd.f32 %v1332, %v1852
        %v1901 = vadd.f32 %v1335, %v1855
        %v1902 = vadd.f32 %v1340, %v1860
        %v1903 = vadd.f32 %v1343, %v1863
        %v1904 = vadd.f32 %v1348, %v1868
        %v1905 = vadd.f32 %v1351, %v1871
        %s1906 = scalar_lea.vmem [#allocation2], 768
        %v1907 = vld [vmem:[%s1906] sm:$0xff]
        %v1908 = vld [vmem:[%s1906 + $0x8] sm:$0xff]
        %v1909 = vld [vmem:[%s1906 + $0x10] sm:$0xff]
        %v1910 = vld [vmem:[%s1906 + $0x18] sm:$0xff]
        %v1911 = vld [vmem:[%s1906 + $0x20] sm:$0xff]
        %v1912 = vld [vmem:[%s1906 + $0x28] sm:$0xff]
        %v1913 = vld [vmem:[%s1906 + $0x30] sm:$0xff]
        %v1914 = vld [vmem:[%s1906 + $0x38] sm:$0xff]
        %v1915 = vld [vmem:[%s1906 + $0x40] sm:$0xff]
        %v1916 = vld [vmem:[%s1906 + $0x48] sm:$0xff]
        %v1917 = vld [vmem:[%s1906 + $0x50] sm:$0xff]
        %v1918 = vld [vmem:[%s1906 + $0x58] sm:$0xff]
        %v1919 = vld [vmem:[%s1906 + $0x60] sm:$0xff]
        %v1920 = vld [vmem:[%s1906 + $0x68] sm:$0xff]
        %v1921 = vld [vmem:[%s1906 + $0x70] sm:$0xff]
        %v1922 = vld [vmem:[%s1906 + $0x78] sm:$0xff]
        %v1923 = vld [vmem:[%s1906 + $0x80] sm:$0xff]
        %v1924 = vld [vmem:[%s1906 + $0x88] sm:$0xff]
        %v1925 = vld [vmem:[%s1906 + $0x90] sm:$0xff]
        %v1926 = vld [vmem:[%s1906 + $0x98] sm:$0xff]
        %v1927 = vld [vmem:[%s1906 + $0xa0] sm:$0xff]
        %v1928 = vld [vmem:[%s1906 + $0xa8] sm:$0xff]
        %v1929 = vld [vmem:[%s1906 + $0xb0] sm:$0xff]
        %v1930 = vld [vmem:[%s1906 + $0xb8] sm:$0xff]
        %v1931 = vld [vmem:[%s1906 + $0xc0] sm:$0xff]
        %v1932 = vld [vmem:[%s1906 + $0xc8] sm:$0xff]
        %v1933 = vld [vmem:[%s1906 + $0xd0] sm:$0xff]
        %v1934 = vld [vmem:[%s1906 + $0xd8] sm:$0xff]
        %v1935 = vld [vmem:[%s1906 + $0xe0] sm:$0xff]
        %v1936 = vld [vmem:[%s1906 + $0xe8] sm:$0xff]
        %v1937 = vld [vmem:[%s1906 + $0xf0] sm:$0xff]
        %v1938 = vld [vmem:[%s1906 + $0xf8] sm:$0xff]
        %1940 = vset.pattern.permute.xlu0 0
        %1941 = vperm.xlu0 %1940, %v1907
        %v1942 = vpop.permute.xlu0 %1941
        %1945 = vset.pattern.permute.xlu0 0
        %1946 = vperm.xlu0 %1945, %v1908
        %v1947 = vpop.permute.xlu0 %1946
        %1950 = vset.pattern.permute.xlu0 0
        %1951 = vperm.xlu0 %1950, %v1909
        %v1952 = vpop.permute.xlu0 %1951
        %1955 = vset.pattern.permute.xlu0 0
        %1956 = vperm.xlu0 %1955, %v1910
        %v1957 = vpop.permute.xlu0 %1956
        %1960 = vset.pattern.permute.xlu0 0
        %1961 = vperm.xlu0 %1960, %v1911
        %v1962 = vpop.permute.xlu0 %1961
        %1965 = vset.pattern.permute.xlu0 0
        %1966 = vperm.xlu0 %1965, %v1912
        %v1967 = vpop.permute.xlu0 %1966
        %1970 = vset.pattern.permute.xlu0 0
        %1971 = vperm.xlu0 %1970, %v1913
        %v1972 = vpop.permute.xlu0 %1971
        %1975 = vset.pattern.permute.xlu0 0
        %1976 = vperm.xlu0 %1975, %v1914
        %v1977 = vpop.permute.xlu0 %1976
        %1980 = vset.pattern.permute.xlu0 0
        %1981 = vperm.xlu0 %1980, %v1915
        %v1982 = vpop.permute.xlu0 %1981
        %1985 = vset.pattern.permute.xlu0 0
        %1986 = vperm.xlu0 %1985, %v1916
        %v1987 = vpop.permute.xlu0 %1986
        %1990 = vset.pattern.permute.xlu0 0
        %1991 = vperm.xlu0 %1990, %v1917
        %v1992 = vpop.permute.xlu0 %1991
        %1995 = vset.pattern.permute.xlu0 0
        %1996 = vperm.xlu0 %1995, %v1918
        %v1997 = vpop.permute.xlu0 %1996
        %2000 = vset.pattern.permute.xlu0 0
        %2001 = vperm.xlu0 %2000, %v1919
        %v2002 = vpop.permute.xlu0 %2001
        %2005 = vset.pattern.permute.xlu0 0
        %2006 = vperm.xlu0 %2005, %v1920
        %v2007 = vpop.permute.xlu0 %2006
        %2010 = vset.pattern.permute.xlu0 0
        %2011 = vperm.xlu0 %2010, %v1921
        %v2012 = vpop.permute.xlu0 %2011
        %2015 = vset.pattern.permute.xlu0 0
        %2016 = vperm.xlu0 %2015, %v1922
        %v2017 = vpop.permute.xlu0 %2016
        %2020 = vset.pattern.permute.xlu0 0
        %2021 = vperm.xlu0 %2020, %v1923
        %v2022 = vpop.permute.xlu0 %2021
        %2025 = vset.pattern.permute.xlu0 0
        %2026 = vperm.xlu0 %2025, %v1924
        %v2027 = vpop.permute.xlu0 %2026
        %2030 = vset.pattern.permute.xlu0 0
        %2031 = vperm.xlu0 %2030, %v1925
        %v2032 = vpop.permute.xlu0 %2031
        %2035 = vset.pattern.permute.xlu0 0
        %2036 = vperm.xlu0 %2035, %v1926
        %v2037 = vpop.permute.xlu0 %2036
        %2040 = vset.pattern.permute.xlu0 0
        %2041 = vperm.xlu0 %2040, %v1927
        %v2042 = vpop.permute.xlu0 %2041
        %2045 = vset.pattern.permute.xlu0 0
        %2046 = vperm.xlu0 %2045, %v1928
        %v2047 = vpop.permute.xlu0 %2046
        %2050 = vset.pattern.permute.xlu0 0
        %2051 = vperm.xlu0 %2050, %v1929
        %v2052 = vpop.permute.xlu0 %2051
        %2055 = vset.pattern.permute.xlu0 0
        %2056 = vperm.xlu0 %2055, %v1930
        %v2057 = vpop.permute.xlu0 %2056
        %2060 = vset.pattern.permute.xlu0 0
        %2061 = vperm.xlu0 %2060, %v1931
        %v2062 = vpop.permute.xlu0 %2061
        %2065 = vset.pattern.permute.xlu0 0
        %2066 = vperm.xlu0 %2065, %v1932
        %v2067 = vpop.permute.xlu0 %2066
        %2070 = vset.pattern.permute.xlu0 0
        %2071 = vperm.xlu0 %2070, %v1933
        %v2072 = vpop.permute.xlu0 %2071
        %2075 = vset.pattern.permute.xlu0 0
        %2076 = vperm.xlu0 %2075, %v1934
        %v2077 = vpop.permute.xlu0 %2076
        %2080 = vset.pattern.permute.xlu0 0
        %2081 = vperm.xlu0 %2080, %v1935
        %v2082 = vpop.permute.xlu0 %2081
        %2085 = vset.pattern.permute.xlu0 0
        %2086 = vperm.xlu0 %2085, %v1936
        %v2087 = vpop.permute.xlu0 %2086
        %2090 = vset.pattern.permute.xlu0 0
        %2091 = vperm.xlu0 %2090, %v1937
        %v2092 = vpop.permute.xlu0 %2091
        %2095 = vset.pattern.permute.xlu0 0
        %2096 = vperm.xlu0 %2095, %v1938
        %v2097 = vpop.permute.xlu0 %2096
        %v2099 = vmul.f32 %v443, %v1942
        %v2100 = vmul.f32 %v442, %v1947
        %v2101 = vmul.f32 %v441, %v1952
        %v2102 = vmul.f32 %v440, %v1957
        %v2103 = vmul.f32 %v439, %v1962
        %v2104 = vmul.f32 %v438, %v1967
        %v2105 = vmul.f32 %v437, %v1972
        %v2106 = vmul.f32 %v436, %v1977
        %v2107 = vmul.f32 %v435, %v1982
        %v2108 = vmul.f32 %v434, %v1987
        %v2109 = vmul.f32 %v433, %v1992
        %v2110 = vmul.f32 %v432, %v1997
        %v2111 = vmul.f32 %v431, %v2002
        %v2112 = vmul.f32 %v430, %v2007
        %v2113 = vmul.f32 %v429, %v2012
        %v2114 = vmul.f32 %v428, %v2017
        %v2115 = vmul.f32 %v427, %v2022
        %v2116 = vmul.f32 %v426, %v2027
        %v2117 = vmul.f32 %v425, %v2032
        %v2118 = vmul.f32 %v424, %v2037
        %v2119 = vmul.f32 %v423, %v2042
        %v2120 = vmul.f32 %v422, %v2047
        %v2121 = vmul.f32 %v421, %v2052
        %v2122 = vmul.f32 %v420, %v2057
        %v2123 = vmul.f32 %v419, %v2062
        %v2124 = vmul.f32 %v418, %v2067
        %v2125 = vmul.f32 %v417, %v2072
        %v2126 = vmul.f32 %v416, %v2077
        %v2127 = vmul.f32 %v415, %v2082
        %v2128 = vmul.f32 %v414, %v2087
        %v2129 = vmul.f32 %v413, %v2092
        %v2130 = vmul.f32 %v412, %v2097
        %v2131 = vpack.c.bf16 %v2100, %v2099
        %v2132 = vpack.c.bf16 %v2102, %v2101
        %v2133 = vpack.c.bf16 %v2104, %v2103
        %v2134 = vpack.c.bf16 %v2106, %v2105
        %v2135 = vpack.c.bf16 %v2108, %v2107
        %v2136 = vpack.c.bf16 %v2110, %v2109
        %v2137 = vpack.c.bf16 %v2112, %v2111
        %v2138 = vpack.c.bf16 %v2114, %v2113
        %v2139 = vpack.c.bf16 %v2116, %v2115
        %v2140 = vpack.c.bf16 %v2118, %v2117
        %v2141 = vpack.c.bf16 %v2120, %v2119
        %v2142 = vpack.c.bf16 %v2122, %v2121
        %v2143 = vpack.c.bf16 %v2124, %v2123
        %v2144 = vpack.c.bf16 %v2126, %v2125
        %v2145 = vpack.c.bf16 %v2128, %v2127
        %v2146 = vpack.c.bf16 %v2130, %v2129
        %s2147 = scalar_lea.vmem %s2, 6
        %v2148 = vld [vmem:[%s2147] sm:$0x3]
        %v2150 = vsel %vm928, %v2131, 0
        %v2153 = vsel %vm928, %v2132, 0
        %v2156 = vsel %vm928, %v2133, 0
        %v2159 = vsel %vm928, %v2134, 0
        %v2162 = vsel %vm928, %v2135, 0
        %v2165 = vsel %vm928, %v2136, 0
        %v2168 = vsel %vm928, %v2137, 0
        %v2171 = vsel %vm928, %v2138, 0
        %v2174 = vsel %vm928, %v2139, 0
        %v2177 = vsel %vm928, %v2140, 0
        %v2180 = vsel %vm928, %v2141, 0
        %v2183 = vsel %vm928, %v2142, 0
        %v2186 = vsel %vm928, %v2143, 0
        %v2189 = vsel %vm928, %v2144, 0
        %v2192 = vsel %vm928, %v2145, 0
        %v2195 = vsel %vm928, %v2146, 0
        %v2198 = vsel %vm977, %v2148, 0
        %2200 = vmatprep.subr.bf16.mxu0 0
        %2201 = vmatpush1.bf16.msra.mxu0 %v2198
        %2202 = vmatprep.subr.bf16.mxu0 0
        %2203 = vmatpush1.bf16.msra.mxu0 0
        %2204 = vmatprep.subr.bf16.mxu0 0
        %2205 = vmatpush1.bf16.msra.mxu0 0
        %2206 = vmatprep.subr.bf16.mxu0 0
        %2207 = vmatpush1.bf16.msra.mxu0 0
        %2208 = vmatprep.subr.bf16.mxu0 0
        %2209 = vmatpush1.bf16.msra.mxu0 0
        %2210 = vmatprep.subr.bf16.mxu0 0
        %2211 = vmatpush1.bf16.msra.mxu0 0
        %2212 = vmatprep.subr.bf16.mxu0 0
        %2213 = vmatpush1.bf16.msra.mxu0 0
        %2214 = vmatprep.subr.bf16.mxu0 0
        %2215 = vmatpush1.bf16.msra.mxu0 0
        %2216 = vmatprep.subr.bf16.mxu0 0
        %2217 = vmatpush1.bf16.msra.mxu0 0
        %2218 = vmatprep.subr.bf16.mxu0 0
        %2219 = vmatpush1.bf16.msra.mxu0 0
        %2220 = vmatprep.subr.bf16.mxu0 0
        %2221 = vmatpush1.bf16.msra.mxu0 0
        %2222 = vmatprep.subr.bf16.mxu0 0
        %2223 = vmatpush1.bf16.msra.mxu0 0
        %2224 = vmatprep.subr.bf16.mxu0 0
        %2225 = vmatpush1.bf16.msra.mxu0 0
        %2226 = vmatprep.subr.bf16.mxu0 0
        %2227 = vmatpush1.bf16.msra.mxu0 0
        %2228 = vmatprep.subr.bf16.mxu0 0
        %2229 = vmatpush1.bf16.msra.mxu0 0
        %2230 = vmatprep.subr.bf16.mxu0 0
        %2231 = vmatpush1.bf16.msra.mxu0 0
        %2232 = vmatprep.mubr.bf16.mxu0 0
        %2233 = vmatmul.mubr.bf16.gmra.mrb[0].mxu0 %v2150
        %v2234 = vpop.f32.mrb[0].mxu0
        %v2235 = vadd.f32 0.0, %v2234
        %v2236 = vpop.f32.mrb[0].mxu0
        %v2237 = vpop.f32.mrb[0].mxu0
        %v2238 = vadd.f32 0.0, %v2237
        %v2239 = vpop.f32.mrb[0].mxu0
        %2240 = vmatprep.mubr.bf16.mxu0 0
        %2241 = vmatmul.mubr.bf16.gmra.mrb[0].mxu0 %v2153
        %v2242 = vpop.f32.mrb[0].mxu0
        %v2243 = vadd.f32 0.0, %v2242
        %v2244 = vpop.f32.mrb[0].mxu0
        %v2245 = vpop.f32.mrb[0].mxu0
        %v2246 = vadd.f32 0.0, %v2245
        %v2247 = vpop.f32.mrb[0].mxu0
        %2248 = vmatprep.mubr.bf16.mxu0 0
        %2249 = vmatmul.mubr.bf16.gmra.mrb[0].mxu0 %v2156
        %v2250 = vpop.f32.mrb[0].mxu0
        %v2251 = vadd.f32 0.0, %v2250
        %v2252 = vpop.f32.mrb[0].mxu0
        %v2253 = vpop.f32.mrb[0].mxu0
        %v2254 = vadd.f32 0.0, %v2253
        %v2255 = vpop.f32.mrb[0].mxu0
        %2256 = vmatprep.mubr.bf16.mxu0 0
        %2257 = vmatmul.mubr.bf16.gmra.mrb[0].mxu0 %v2159
        %v2258 = vpop.f32.mrb[0].mxu0
        %v2259 = vadd.f32 0.0, %v2258
        %v2260 = vpop.f32.mrb[0].mxu0
        %v2261 = vpop.f32.mrb[0].mxu0
        %v2262 = vadd.f32 0.0, %v2261
        %v2263 = vpop.f32.mrb[0].mxu0
        %2264 = vmatprep.mubr.bf16.mxu0 0
        %2265 = vmatmul.mubr.bf16.gmra.mrb[0].mxu0 %v2162
        %v2266 = vpop.f32.mrb[0].mxu0
        %v2267 = vadd.f32 0.0, %v2266
        %v2268 = vpop.f32.mrb[0].mxu0
        %v2269 = vpop.f32.mrb[0].mxu0
        %v2270 = vadd.f32 0.0, %v2269
        %v2271 = vpop.f32.mrb[0].mxu0
        %2272 = vmatprep.mubr.bf16.mxu0 0
        %2273 = vmatmul.mubr.bf16.gmra.mrb[0].mxu0 %v2165
        %v2274 = vpop.f32.mrb[0].mxu0
        %v2275 = vadd.f32 0.0, %v2274
        %v2276 = vpop.f32.mrb[0].mxu0
        %v2277 = vpop.f32.mrb[0].mxu0
        %v2278 = vadd.f32 0.0, %v2277
        %v2279 = vpop.f32.mrb[0].mxu0
        %2280 = vmatprep.mubr.bf16.mxu0 0
        %2281 = vmatmul.mubr.bf16.gmra.mrb[0].mxu0 %v2168
        %v2282 = vpop.f32.mrb[0].mxu0
        %v2283 = vadd.f32 0.0, %v2282
        %v2284 = vpop.f32.mrb[0].mxu0
        %v2285 = vpop.f32.mrb[0].mxu0
        %v2286 = vadd.f32 0.0, %v2285
        %v2287 = vpop.f32.mrb[0].mxu0
        %2288 = vmatprep.mubr.bf16.mxu0 0
        %2289 = vmatmul.mubr.bf16.gmra.mrb[0].mxu0 %v2171
        %v2290 = vpop.f32.mrb[0].mxu0
        %v2291 = vadd.f32 0.0, %v2290
        %v2292 = vpop.f32.mrb[0].mxu0
        %v2293 = vpop.f32.mrb[0].mxu0
        %v2294 = vadd.f32 0.0, %v2293
        %v2295 = vpop.f32.mrb[0].mxu0
        %2296 = vmatprep.mubr.bf16.mxu0 0
        %2297 = vmatmul.mubr.bf16.gmra.mrb[0].mxu0 %v2174
        %v2298 = vpop.f32.mrb[0].mxu0
        %v2299 = vadd.f32 0.0, %v2298
        %v2300 = vpop.f32.mrb[0].mxu0
        %v2301 = vpop.f32.mrb[0].mxu0
        %v2302 = vadd.f32 0.0, %v2301
        %v2303 = vpop.f32.mrb[0].mxu0
        %2304 = vmatprep.mubr.bf16.mxu0 0
        %2305 = vmatmul.mubr.bf16.gmra.mrb[0].mxu0 %v2177
        %v2306 = vpop.f32.mrb[0].mxu0
        %v2307 = vadd.f32 0.0, %v2306
        %v2308 = vpop.f32.mrb[0].mxu0
        %v2309 = vpop.f32.mrb[0].mxu0
        %v2310 = vadd.f32 0.0, %v2309
        %v2311 = vpop.f32.mrb[0].mxu0
        %2312 = vmatprep.mubr.bf16.mxu0 0
        %2313 = vmatmul.mubr.bf16.gmra.mrb[0].mxu0 %v2180
        %v2314 = vpop.f32.mrb[0].mxu0
        %v2315 = vadd.f32 0.0, %v2314
        %v2316 = vpop.f32.mrb[0].mxu0
        %v2317 = vpop.f32.mrb[0].mxu0
        %v2318 = vadd.f32 0.0, %v2317
        %v2319 = vpop.f32.mrb[0].mxu0
        %2320 = vmatprep.mubr.bf16.mxu0 0
        %2321 = vmatmul.mubr.bf16.gmra.mrb[0].mxu0 %v2183
        %v2322 = vpop.f32.mrb[0].mxu0
        %v2323 = vadd.f32 0.0, %v2322
        %v2324 = vpop.f32.mrb[0].mxu0
        %v2325 = vpop.f32.mrb[0].mxu0
        %v2326 = vadd.f32 0.0, %v2325
        %v2327 = vpop.f32.mrb[0].mxu0
        %2328 = vmatprep.mubr.bf16.mxu0 0
        %2329 = vmatmul.mubr.bf16.gmra.mrb[0].mxu0 %v2186
        %v2330 = vpop.f32.mrb[0].mxu0
        %v2331 = vadd.f32 0.0, %v2330
        %v2332 = vpop.f32.mrb[0].mxu0
        %v2333 = vpop.f32.mrb[0].mxu0
        %v2334 = vadd.f32 0.0, %v2333
        %v2335 = vpop.f32.mrb[0].mxu0
        %2336 = vmatprep.mubr.bf16.mxu0 0
        %2337 = vmatmul.mubr.bf16.gmra.mrb[0].mxu0 %v2189
        %v2338 = vpop.f32.mrb[0].mxu0
        %v2339 = vadd.f32 0.0, %v2338
        %v2340 = vpop.f32.mrb[0].mxu0
        %v2341 = vpop.f32.mrb[0].mxu0
        %v2342 = vadd.f32 0.0, %v2341
        %v2343 = vpop.f32.mrb[0].mxu0
        %2344 = vmatprep.mubr.bf16.mxu0 0
        %2345 = vmatmul.mubr.bf16.gmra.mrb[0].mxu0 %v2192
        %v2346 = vpop.f32.mrb[0].mxu0
        %v2347 = vadd.f32 0.0, %v2346
        %v2348 = vpop.f32.mrb[0].mxu0
        %v2349 = vpop.f32.mrb[0].mxu0
        %v2350 = vadd.f32 0.0, %v2349
        %v2351 = vpop.f32.mrb[0].mxu0
        %2352 = vmatprep.mubr.bf16.mxu0 0
        %2353 = vmatmul.mubr.bf16.gmra.mrb[0].mxu0 %v2195
        %v2354 = vpop.f32.mrb[0].mxu0
        %v2355 = vadd.f32 0.0, %v2354
        %v2356 = vpop.f32.mrb[0].mxu0
        %v2357 = vpop.f32.mrb[0].mxu0
        %v2358 = vadd.f32 0.0, %v2357
        %v2359 = vpop.f32.mrb[0].mxu0
        %2360 = vdwg.mxu0
        %v2361 = vadd.f32 %v1874, %v2235
        %v2362 = vadd.f32 %v1875, %v2238
        %v2363 = vadd.f32 %v1876, %v2243
        %v2364 = vadd.f32 %v1877, %v2246
        %v2365 = vadd.f32 %v1878, %v2251
        %v2366 = vadd.f32 %v1879, %v2254
        %v2367 = vadd.f32 %v1880, %v2259
        %v2368 = vadd.f32 %v1881, %v2262
        %v2369 = vadd.f32 %v1882, %v2267
        %v2370 = vadd.f32 %v1883, %v2270
        %v2371 = vadd.f32 %v1884, %v2275
        %v2372 = vadd.f32 %v1885, %v2278
        %v2373 = vadd.f32 %v1886, %v2283
        %v2374 = vadd.f32 %v1887, %v2286
        %v2375 = vadd.f32 %v1888, %v2291
        %v2376 = vadd.f32 %v1889, %v2294
        %v2377 = vadd.f32 %v1890, %v2299
        %v2378 = vadd.f32 %v1891, %v2302
        %v2379 = vadd.f32 %v1892, %v2307
        %v2380 = vadd.f32 %v1893, %v2310
        %v2381 = vadd.f32 %v1894, %v2315
        %v2382 = vadd.f32 %v1895, %v2318
        %v2383 = vadd.f32 %v1896, %v2323
        %v2384 = vadd.f32 %v1897, %v2326
        %v2385 = vadd.f32 %v1898, %v2331
        %v2386 = vadd.f32 %v1899, %v2334
        %v2387 = vadd.f32 %v1900, %v2339
        %v2388 = vadd.f32 %v1901, %v2342
        %v2389 = vadd.f32 %v1902, %v2347
        %v2390 = vadd.f32 %v1903, %v2350
        %v2391 = vadd.f32 %v1904, %v2355
        %v2392 = vadd.f32 %v1905, %v2358
        %s2393 = scalar_lea.vmem [#allocation2], 1024
        %v2394 = vld [vmem:[%s2393] sm:$0xff]
        %v2395 = vld [vmem:[%s2393 + $0x8] sm:$0xff]
        %v2396 = vld [vmem:[%s2393 + $0x10] sm:$0xff]
        %v2397 = vld [vmem:[%s2393 + $0x18] sm:$0xff]
        %v2398 = vld [vmem:[%s2393 + $0x20] sm:$0xff]
        %v2399 = vld [vmem:[%s2393 + $0x28] sm:$0xff]
        %v2400 = vld [vmem:[%s2393 + $0x30] sm:$0xff]
        %v2401 = vld [vmem:[%s2393 + $0x38] sm:$0xff]
        %v2402 = vld [vmem:[%s2393 + $0x40] sm:$0xff]
        %v2403 = vld [vmem:[%s2393 + $0x48] sm:$0xff]
        %v2404 = vld [vmem:[%s2393 + $0x50] sm:$0xff]
        %v2405 = vld [vmem:[%s2393 + $0x58] sm:$0xff]
        %v2406 = vld [vmem:[%s2393 + $0x60] sm:$0xff]
        %v2407 = vld [vmem:[%s2393 + $0x68] sm:$0xff]
        %v2408 = vld [vmem:[%s2393 + $0x70] sm:$0xff]
        %v2409 = vld [vmem:[%s2393 + $0x78] sm:$0xff]
        %v2410 = vld [vmem:[%s2393 + $0x80] sm:$0xff]
        %v2411 = vld [vmem:[%s2393 + $0x88] sm:$0xff]
        %v2412 = vld [vmem:[%s2393 + $0x90] sm:$0xff]
        %v2413 = vld [vmem:[%s2393 + $0x98] sm:$0xff]
        %v2414 = vld [vmem:[%s2393 + $0xa0] sm:$0xff]
        %v2415 = vld [vmem:[%s2393 + $0xa8] sm:$0xff]
        %v2416 = vld [vmem:[%s2393 + $0xb0] sm:$0xff]
        %v2417 = vld [vmem:[%s2393 + $0xb8] sm:$0xff]
        %v2418 = vld [vmem:[%s2393 + $0xc0] sm:$0xff]
        %v2419 = vld [vmem:[%s2393 + $0xc8] sm:$0xff]
        %v2420 = vld [vmem:[%s2393 + $0xd0] sm:$0xff]
        %v2421 = vld [vmem:[%s2393 + $0xd8] sm:$0xff]
        %v2422 = vld [vmem:[%s2393 + $0xe0] sm:$0xff]
        %v2423 = vld [vmem:[%s2393 + $0xe8] sm:$0xff]
        %v2424 = vld [vmem:[%s2393 + $0xf0] sm:$0xff]
        %v2425 = vld [vmem:[%s2393 + $0xf8] sm:$0xff]
        %2427 = vset.pattern.permute.xlu0 0
        %2428 = vperm.xlu0 %2427, %v2394
        %v2429 = vpop.permute.xlu0 %2428
        %2432 = vset.pattern.permute.xlu0 0
        %2433 = vperm.xlu0 %2432, %v2395
        %v2434 = vpop.permute.xlu0 %2433
        %2437 = vset.pattern.permute.xlu0 0
        %2438 = vperm.xlu0 %2437, %v2396
        %v2439 = vpop.permute.xlu0 %2438
        %2442 = vset.pattern.permute.xlu0 0
        %2443 = vperm.xlu0 %2442, %v2397
        %v2444 = vpop.permute.xlu0 %2443
        %2447 = vset.pattern.permute.xlu0 0
        %2448 = vperm.xlu0 %2447, %v2398
        %v2449 = vpop.permute.xlu0 %2448
        %2452 = vset.pattern.permute.xlu0 0
        %2453 = vperm.xlu0 %2452, %v2399
        %v2454 = vpop.permute.xlu0 %2453
        %2457 = vset.pattern.permute.xlu0 0
        %2458 = vperm.xlu0 %2457, %v2400
        %v2459 = vpop.permute.xlu0 %2458
        %2462 = vset.pattern.permute.xlu0 0
        %2463 = vperm.xlu0 %2462, %v2401
        %v2464 = vpop.permute.xlu0 %2463
        %2467 = vset.pattern.permute.xlu0 0
        %2468 = vperm.xlu0 %2467, %v2402
        %v2469 = vpop.permute.xlu0 %2468
        %2472 = vset.pattern.permute.xlu0 0
        %2473 = vperm.xlu0 %2472, %v2403
        %v2474 = vpop.permute.xlu0 %2473
        %2477 = vset.pattern.permute.xlu0 0
        %2478 = vperm.xlu0 %2477, %v2404
        %v2479 = vpop.permute.xlu0 %2478
        %2482 = vset.pattern.permute.xlu0 0
        %2483 = vperm.xlu0 %2482, %v2405
        %v2484 = vpop.permute.xlu0 %2483
        %2487 = vset.pattern.permute.xlu0 0
        %2488 = vperm.xlu0 %2487, %v2406
        %v2489 = vpop.permute.xlu0 %2488
        %2492 = vset.pattern.permute.xlu0 0
        %2493 = vperm.xlu0 %2492, %v2407
        %v2494 = vpop.permute.xlu0 %2493
        %2497 = vset.pattern.permute.xlu0 0
        %2498 = vperm.xlu0 %2497, %v2408
        %v2499 = vpop.permute.xlu0 %2498
        %2502 = vset.pattern.permute.xlu0 0
        %2503 = vperm.xlu0 %2502, %v2409
        %v2504 = vpop.permute.xlu0 %2503
        %2507 = vset.pattern.permute.xlu0 0
        %2508 = vperm.xlu0 %2507, %v2410
        %v2509 = vpop.permute.xlu0 %2508
        %2512 = vset.pattern.permute.xlu0 0
        %2513 = vperm.xlu0 %2512, %v2411
        %v2514 = vpop.permute.xlu0 %2513
        %2517 = vset.pattern.permute.xlu0 0
        %2518 = vperm.xlu0 %2517, %v2412
        %v2519 = vpop.permute.xlu0 %2518
        %2522 = vset.pattern.permute.xlu0 0
        %2523 = vperm.xlu0 %2522, %v2413
        %v2524 = vpop.permute.xlu0 %2523
        %2527 = vset.pattern.permute.xlu0 0
        %2528 = vperm.xlu0 %2527, %v2414
        %v2529 = vpop.permute.xlu0 %2528
        %2532 = vset.pattern.permute.xlu0 0
        %2533 = vperm.xlu0 %2532, %v2415
        %v2534 = vpop.permute.xlu0 %2533
        %2537 = vset.pattern.permute.xlu0 0
        %2538 = vperm.xlu0 %2537, %v2416
        %v2539 = vpop.permute.xlu0 %2538
        %2542 = vset.pattern.permute.xlu0 0
        %2543 = vperm.xlu0 %2542, %v2417
        %v2544 = vpop.permute.xlu0 %2543
        %2547 = vset.pattern.permute.xlu0 0
        %2548 = vperm.xlu0 %2547, %v2418
        %v2549 = vpop.permute.xlu0 %2548
        %2552 = vset.pattern.permute.xlu0 0
        %2553 = vperm.xlu0 %2552, %v2419
        %v2554 = vpop.permute.xlu0 %2553
        %2557 = vset.pattern.permute.xlu0 0
        %2558 = vperm.xlu0 %2557, %v2420
        %v2559 = vpop.permute.xlu0 %2558
        %2562 = vset.pattern.permute.xlu0 0
        %2563 = vperm.xlu0 %2562, %v2421
        %v2564 = vpop.permute.xlu0 %2563
        %2567 = vset.pattern.permute.xlu0 0
        %2568 = vperm.xlu0 %2567, %v2422
        %v2569 = vpop.permute.xlu0 %2568
        %2572 = vset.pattern.permute.xlu0 0
        %2573 = vperm.xlu0 %2572, %v2423
        %v2574 = vpop.permute.xlu0 %2573
        %2577 = vset.pattern.permute.xlu0 0
        %2578 = vperm.xlu0 %2577, %v2424
        %v2579 = vpop.permute.xlu0 %2578
        %2582 = vset.pattern.permute.xlu0 0
        %2583 = vperm.xlu0 %2582, %v2425
        %v2584 = vpop.permute.xlu0 %2583
        %v2586 = vmul.f32 %v345, %v2429
        %v2587 = vmul.f32 %v346, %v2434
        %v2588 = vmul.f32 %v347, %v2439
        %v2589 = vmul.f32 %v348, %v2444
        %v2590 = vmul.f32 %v349, %v2449
        %v2591 = vmul.f32 %v350, %v2454
        %v2592 = vmul.f32 %v351, %v2459
        %v2593 = vmul.f32 %v352, %v2464
        %v2594 = vmul.f32 %v353, %v2469
        %v2595 = vmul.f32 %v354, %v2474
        %v2596 = vmul.f32 %v355, %v2479
        %v2597 = vmul.f32 %v356, %v2484
        %v2598 = vmul.f32 %v357, %v2489
        %v2599 = vmul.f32 %v358, %v2494
        %v2600 = vmul.f32 %v359, %v2499
        %v2601 = vmul.f32 %v360, %v2504
        %v2602 = vmul.f32 %v361, %v2509
        %v2603 = vmul.f32 %v362, %v2514
        %v2604 = vmul.f32 %v363, %v2519
        %v2605 = vmul.f32 %v364, %v2524
        %v2606 = vmul.f32 %v365, %v2529
        %v2607 = vmul.f32 %v366, %v2534
        %v2608 = vmul.f32 %v367, %v2539
        %v2609 = vmul.f32 %v368, %v2544
        %v2610 = vmul.f32 %v369, %v2549
        %v2611 = vmul.f32 %v370, %v2554
        %v2612 = vmul.f32 %v371, %v2559
        %v2613 = vmul.f32 %v372, %v2564
        %v2614 = vmul.f32 %v373, %v2569
        %v2615 = vmul.f32 %v374, %v2574
        %v2616 = vmul.f32 %v375, %v2579
        %v2617 = vmul.f32 %v376, %v2584
        %v2618 = vpack.c.bf16 %v2587, %v2586
        %v2619 = vpack.c.bf16 %v2589, %v2588
        %v2620 = vpack.c.bf16 %v2591, %v2590
        %v2621 = vpack.c.bf16 %v2593, %v2592
        %v2622 = vpack.c.bf16 %v2595, %v2594
        %v2623 = vpack.c.bf16 %v2597, %v2596
        %v2624 = vpack.c.bf16 %v2599, %v2598
        %v2625 = vpack.c.bf16 %v2601, %v2600
        %v2626 = vpack.c.bf16 %v2603, %v2602
        %v2627 = vpack.c.bf16 %v2605, %v2604
        %v2628 = vpack.c.bf16 %v2607, %v2606
        %v2629 = vpack.c.bf16 %v2609, %v2608
        %v2630 = vpack.c.bf16 %v2611, %v2610
        %v2631 = vpack.c.bf16 %v2613, %v2612
        %v2632 = vpack.c.bf16 %v2615, %v2614
        %v2633 = vpack.c.bf16 %v2617, %v2616
        %s2634 = scalar_lea.vmem %s2, 8
        %v2635 = vld [vmem:[%s2634] sm:$0x3]
        %v2637 = vsel %vm928, %v2618, 0
        %v2640 = vsel %vm928, %v2619, 0
        %v2643 = vsel %vm928, %v2620, 0
        %v2646 = vsel %vm928, %v2621, 0
        %v2649 = vsel %vm928, %v2622, 0
        %v2652 = vsel %vm928, %v2623, 0
        %v2655 = vsel %vm928, %v2624, 0
        %v2658 = vsel %vm928, %v2625, 0
        %v2661 = vsel %vm928, %v2626, 0
        %v2664 = vsel %vm928, %v2627, 0
        %v2667 = vsel %vm928, %v2628, 0
        %v2670 = vsel %vm928, %v2629, 0
        %v2673 = vsel %vm928, %v2630, 0
        %v2676 = vsel %vm928, %v2631, 0
        %v2679 = vsel %vm928, %v2632, 0
        %v2682 = vsel %vm928, %v2633, 0
        %v2685 = vsel %vm977, %v2635, 0
        %2687 = vmatprep.subr.bf16.mxu0 0
        %2688 = vmatpush1.bf16.msra.mxu0 %v2685
        %2689 = vmatprep.subr.bf16.mxu0 0
        %2690 = vmatpush1.bf16.msra.mxu0 0
        %2691 = vmatprep.subr.bf16.mxu0 0
        %2692 = vmatpush1.bf16.msra.mxu0 0
        %2693 = vmatprep.subr.bf16.mxu0 0
        %2694 = vmatpush1.bf16.msra.mxu0 0
        %2695 = vmatprep.subr.bf16.mxu0 0
        %2696 = vmatpush1.bf16.msra.mxu0 0
        %2697 = vmatprep.subr.bf16.mxu0 0
        %2698 = vmatpush1.bf16.msra.mxu0 0
        %2699 = vmatprep.subr.bf16.mxu0 0
        %2700 = vmatpush1.bf16.msra.mxu0 0
        %2701 = vmatprep.subr.bf16.mxu0 0
        %2702 = vmatpush1.bf16.msra.mxu0 0
        %2703 = vmatprep.subr.bf16.mxu0 0
        %2704 = vmatpush1.bf16.msra.mxu0 0
        %2705 = vmatprep.subr.bf16.mxu0 0
        %2706 = vmatpush1.bf16.msra.mxu0 0
        %2707 = vmatprep.subr.bf16.mxu0 0
        %2708 = vmatpush1.bf16.msra.mxu0 0
        %2709 = vmatprep.subr.bf16.mxu0 0
        %2710 = vmatpush1.bf16.msra.mxu0 0
        %2711 = vmatprep.subr.bf16.mxu0 0
        %2712 = vmatpush1.bf16.msra.mxu0 0
        %2713 = vmatprep.subr.bf16.mxu0 0
        %2714 = vmatpush1.bf16.msra.mxu0 0
        %2715 = vmatprep.subr.bf16.mxu0 0
        %2716 = vmatpush1.bf16.msra.mxu0 0
        %2717 = vmatprep.subr.bf16.mxu0 0
        %2718 = vmatpush1.bf16.msra.mxu0 0
        %2719 = vmatprep.mubr.bf16.mxu0 0
        %2720 = vmatmul.mubr.bf16.gmra.mrb[0].mxu0 %v2637
        %v2721 = vpop.f32.mrb[0].mxu0
        %v2722 = vadd.f32 0.0, %v2721
        %v2723 = vpop.f32.mrb[0].mxu0
        %v2724 = vpop.f32.mrb[0].mxu0
        %v2725 = vadd.f32 0.0, %v2724
        %v2726 = vpop.f32.mrb[0].mxu0
        %2727 = vmatprep.mubr.bf16.mxu0 0
        %2728 = vmatmul.mubr.bf16.gmra.mrb[0].mxu0 %v2640
        %v2729 = vpop.f32.mrb[0].mxu0
        %v2730 = vadd.f32 0.0, %v2729
        %v2731 = vpop.f32.mrb[0].mxu0
        %v2732 = vpop.f32.mrb[0].mxu0
        %v2733 = vadd.f32 0.0, %v2732
        %v2734 = vpop.f32.mrb[0].mxu0
        %2735 = vmatprep.mubr.bf16.mxu0 0
        %2736 = vmatmul.mubr.bf16.gmra.mrb[0].mxu0 %v2643
        %v2737 = vpop.f32.mrb[0].mxu0
        %v2738 = vadd.f32 0.0, %v2737
        %v2739 = vpop.f32.mrb[0].mxu0
        %v2740 = vpop.f32.mrb[0].mxu0
        %v2741 = vadd.f32 0.0, %v2740
        %v2742 = vpop.f32.mrb[0].mxu0
        %2743 = vmatprep.mubr.bf16.mxu0 0
        %2744 = vmatmul.mubr.bf16.gmra.mrb[0].mxu0 %v2646
        %v2745 = vpop.f32.mrb[0].mxu0
        %v2746 = vadd.f32 0.0, %v2745
        %v2747 = vpop.f32.mrb[0].mxu0
        %v2748 = vpop.f32.mrb[0].mxu0
        %v2749 = vadd.f32 0.0, %v2748
        %v2750 = vpop.f32.mrb[0].mxu0
        %2751 = vmatprep.mubr.bf16.mxu0 0
        %2752 = vmatmul.mubr.bf16.gmra.mrb[0].mxu0 %v2649
        %v2753 = vpop.f32.mrb[0].mxu0
        %v2754 = vadd.f32 0.0, %v2753
        %v2755 = vpop.f32.mrb[0].mxu0
        %v2756 = vpop.f32.mrb[0].mxu0
        %v2757 = vadd.f32 0.0, %v2756
        %v2758 = vpop.f32.mrb[0].mxu0
        %2759 = vmatprep.mubr.bf16.mxu0 0
        %2760 = vmatmul.mubr.bf16.gmra.mrb[0].mxu0 %v2652
        %v2761 = vpop.f32.mrb[0].mxu0
        %v2762 = vadd.f32 0.0, %v2761
        %v2763 = vpop.f32.mrb[0].mxu0
        %v2764 = vpop.f32.mrb[0].mxu0
        %v2765 = vadd.f32 0.0, %v2764
        %v2766 = vpop.f32.mrb[0].mxu0
        %2767 = vmatprep.mubr.bf16.mxu0 0
        %2768 = vmatmul.mubr.bf16.gmra.mrb[0].mxu0 %v2655
        %v2769 = vpop.f32.mrb[0].mxu0
        %v2770 = vadd.f32 0.0, %v2769
        %v2771 = vpop.f32.mrb[0].mxu0
        %v2772 = vpop.f32.mrb[0].mxu0
        %v2773 = vadd.f32 0.0, %v2772
        %v2774 = vpop.f32.mrb[0].mxu0
        %2775 = vmatprep.mubr.bf16.mxu0 0
        %2776 = vmatmul.mubr.bf16.gmra.mrb[0].mxu0 %v2658
        %v2777 = vpop.f32.mrb[0].mxu0
        %v2778 = vadd.f32 0.0, %v2777
        %v2779 = vpop.f32.mrb[0].mxu0
        %v2780 = vpop.f32.mrb[0].mxu0
        %v2781 = vadd.f32 0.0, %v2780
        %v2782 = vpop.f32.mrb[0].mxu0
        %2783 = vmatprep.mubr.bf16.mxu0 0
        %2784 = vmatmul.mubr.bf16.gmra.mrb[0].mxu0 %v2661
        %v2785 = vpop.f32.mrb[0].mxu0
        %v2786 = vadd.f32 0.0, %v2785
        %v2787 = vpop.f32.mrb[0].mxu0
        %v2788 = vpop.f32.mrb[0].mxu0
        %v2789 = vadd.f32 0.0, %v2788
        %v2790 = vpop.f32.mrb[0].mxu0
        %2791 = vmatprep.mubr.bf16.mxu0 0
        %2792 = vmatmul.mubr.bf16.gmra.mrb[0].mxu0 %v2664
        %v2793 = vpop.f32.mrb[0].mxu0
        %v2794 = vadd.f32 0.0, %v2793
        %v2795 = vpop.f32.mrb[0].mxu0
        %v2796 = vpop.f32.mrb[0].mxu0
        %v2797 = vadd.f32 0.0, %v2796
        %v2798 = vpop.f32.mrb[0].mxu0
        %2799 = vmatprep.mubr.bf16.mxu0 0
        %2800 = vmatmul.mubr.bf16.gmra.mrb[0].mxu0 %v2667
        %v2801 = vpop.f32.mrb[0].mxu0
        %v2802 = vadd.f32 0.0, %v2801
        %v2803 = vpop.f32.mrb[0].mxu0
        %v2804 = vpop.f32.mrb[0].mxu0
        %v2805 = vadd.f32 0.0, %v2804
        %v2806 = vpop.f32.mrb[0].mxu0
        %2807 = vmatprep.mubr.bf16.mxu0 0
        %2808 = vmatmul.mubr.bf16.gmra.mrb[0].mxu0 %v2670
        %v2809 = vpop.f32.mrb[0].mxu0
        %v2810 = vadd.f32 0.0, %v2809
        %v2811 = vpop.f32.mrb[0].mxu0
        %v2812 = vpop.f32.mrb[0].mxu0
        %v2813 = vadd.f32 0.0, %v2812
        %v2814 = vpop.f32.mrb[0].mxu0
        %2815 = vmatprep.mubr.bf16.mxu0 0
        %2816 = vmatmul.mubr.bf16.gmra.mrb[0].mxu0 %v2673
        %v2817 = vpop.f32.mrb[0].mxu0
        %v2818 = vadd.f32 0.0, %v2817
        %v2819 = vpop.f32.mrb[0].mxu0
        %v2820 = vpop.f32.mrb[0].mxu0
        %v2821 = vadd.f32 0.0, %v2820
        %v2822 = vpop.f32.mrb[0].mxu0
        %2823 = vmatprep.mubr.bf16.mxu0 0
        %2824 = vmatmul.mubr.bf16.gmra.mrb[0].mxu0 %v2676
        %v2825 = vpop.f32.mrb[0].mxu0
        %v2826 = vadd.f32 0.0, %v2825
        %v2827 = vpop.f32.mrb[0].mxu0
        %v2828 = vpop.f32.mrb[0].mxu0
        %v2829 = vadd.f32 0.0, %v2828
        %v2830 = vpop.f32.mrb[0].mxu0
        %2831 = vmatprep.mubr.bf16.mxu0 0
        %2832 = vmatmul.mubr.bf16.gmra.mrb[0].mxu0 %v2679
        %v2833 = vpop.f32.mrb[0].mxu0
        %v2834 = vadd.f32 0.0, %v2833
        %v2835 = vpop.f32.mrb[0].mxu0
        %v2836 = vpop.f32.mrb[0].mxu0
        %v2837 = vadd.f32 0.0, %v2836
        %v2838 = vpop.f32.mrb[0].mxu0
        %2839 = vmatprep.mubr.bf16.mxu0 0
        %2840 = vmatmul.mubr.bf16.gmra.mrb[0].mxu0 %v2682
        %v2841 = vpop.f32.mrb[0].mxu0
        %v2842 = vadd.f32 0.0, %v2841
        %v2843 = vpop.f32.mrb[0].mxu0
        %v2844 = vpop.f32.mrb[0].mxu0
        %v2845 = vadd.f32 0.0, %v2844
        %v2846 = vpop.f32.mrb[0].mxu0
        %2847 = vdwg.mxu0
        %v2848 = vadd.f32 %v2361, %v2722
        %v2849 = vadd.f32 %v2362, %v2725
        %v2850 = vadd.f32 %v2363, %v2730
        %v2851 = vadd.f32 %v2364, %v2733
        %v2852 = vadd.f32 %v2365, %v2738
        %v2853 = vadd.f32 %v2366, %v2741
        %v2854 = vadd.f32 %v2367, %v2746
        %v2855 = vadd.f32 %v2368, %v2749
        %v2856 = vadd.f32 %v2369, %v2754
        %v2857 = vadd.f32 %v2370, %v2757
        %v2858 = vadd.f32 %v2371, %v2762
        %v2859 = vadd.f32 %v2372, %v2765
        %v2860 = vadd.f32 %v2373, %v2770
        %v2861 = vadd.f32 %v2374, %v2773
        %v2862 = vadd.f32 %v2375, %v2778
        %v2863 = vadd.f32 %v2376, %v2781
        %v2864 = vadd.f32 %v2377, %v2786
        %v2865 = vadd.f32 %v2378, %v2789
        %v2866 = vadd.f32 %v2379, %v2794
        %v2867 = vadd.f32 %v2380, %v2797
        %v2868 = vadd.f32 %v2381, %v2802
        %v2869 = vadd.f32 %v2382, %v2805
        %v2870 = vadd.f32 %v2383, %v2810
        %v2871 = vadd.f32 %v2384, %v2813
        %v2872 = vadd.f32 %v2385, %v2818
        %v2873 = vadd.f32 %v2386, %v2821
        %v2874 = vadd.f32 %v2387, %v2826
        %v2875 = vadd.f32 %v2388, %v2829
        %v2876 = vadd.f32 %v2389, %v2834
        %v2877 = vadd.f32 %v2390, %v2837
        %v2878 = vadd.f32 %v2391, %v2842
        %v2879 = vadd.f32 %v2392, %v2845
        %s2880 = scalar_lea.vmem [#allocation2], 1280
        %v2881 = vld [vmem:[%s2880] sm:$0xff]
        %v2882 = vld [vmem:[%s2880 + $0x8] sm:$0xff]
        %v2883 = vld [vmem:[%s2880 + $0x10] sm:$0xff]
        %v2884 = vld [vmem:[%s2880 + $0x18] sm:$0xff]
        %v2885 = vld [vmem:[%s2880 + $0x20] sm:$0xff]
        %v2886 = vld [vmem:[%s2880 + $0x28] sm:$0xff]
        %v2887 = vld [vmem:[%s2880 + $0x30] sm:$0xff]
        %v2888 = vld [vmem:[%s2880 + $0x38] sm:$0xff]
        %v2889 = vld [vmem:[%s2880 + $0x40] sm:$0xff]
        %v2890 = vld [vmem:[%s2880 + $0x48] sm:$0xff]
        %v2891 = vld [vmem:[%s2880 + $0x50] sm:$0xff]
        %v2892 = vld [vmem:[%s2880 + $0x58] sm:$0xff]
        %v2893 = vld [vmem:[%s2880 + $0x60] sm:$0xff]
        %v2894 = vld [vmem:[%s2880 + $0x68] sm:$0xff]
        %v2895 = vld [vmem:[%s2880 + $0x70] sm:$0xff]
        %v2896 = vld [vmem:[%s2880 + $0x78] sm:$0xff]
        %v2897 = vld [vmem:[%s2880 + $0x80] sm:$0xff]
        %v2898 = vld [vmem:[%s2880 + $0x88] sm:$0xff]
        %v2899 = vld [vmem:[%s2880 + $0x90] sm:$0xff]
        %v2900 = vld [vmem:[%s2880 + $0x98] sm:$0xff]
        %v2901 = vld [vmem:[%s2880 + $0xa0] sm:$0xff]
        %v2902 = vld [vmem:[%s2880 + $0xa8] sm:$0xff]
        %v2903 = vld [vmem:[%s2880 + $0xb0] sm:$0xff]
        %v2904 = vld [vmem:[%s2880 + $0xb8] sm:$0xff]
        %v2905 = vld [vmem:[%s2880 + $0xc0] sm:$0xff]
        %v2906 = vld [vmem:[%s2880 + $0xc8] sm:$0xff]
        %v2907 = vld [vmem:[%s2880 + $0xd0] sm:$0xff]
        %v2908 = vld [vmem:[%s2880 + $0xd8] sm:$0xff]
        %v2909 = vld [vmem:[%s2880 + $0xe0] sm:$0xff]
        %v2910 = vld [vmem:[%s2880 + $0xe8] sm:$0xff]
        %v2911 = vld [vmem:[%s2880 + $0xf0] sm:$0xff]
        %v2912 = vld [vmem:[%s2880 + $0xf8] sm:$0xff]
        %2914 = vset.pattern.permute.xlu0 0
        %2915 = vperm.xlu0 %2914, %v2881
        %v2916 = vpop.permute.xlu0 %2915
        %2919 = vset.pattern.permute.xlu0 0
        %2920 = vperm.xlu0 %2919, %v2882
        %v2921 = vpop.permute.xlu0 %2920
        %2924 = vset.pattern.permute.xlu0 0
        %2925 = vperm.xlu0 %2924, %v2883
        %v2926 = vpop.permute.xlu0 %2925
        %2929 = vset.pattern.permute.xlu0 0
        %2930 = vperm.xlu0 %2929, %v2884
        %v2931 = vpop.permute.xlu0 %2930
        %2934 = vset.pattern.permute.xlu0 0
        %2935 = vperm.xlu0 %2934, %v2885
        %v2936 = vpop.permute.xlu0 %2935
        %2939 = vset.pattern.permute.xlu0 0
        %2940 = vperm.xlu0 %2939, %v2886
        %v2941 = vpop.permute.xlu0 %2940
        %2944 = vset.pattern.permute.xlu0 0
        %2945 = vperm.xlu0 %2944, %v2887
        %v2946 = vpop.permute.xlu0 %2945
        %2949 = vset.pattern.permute.xlu0 0
        %2950 = vperm.xlu0 %2949, %v2888
        %v2951 = vpop.permute.xlu0 %2950
        %2954 = vset.pattern.permute.xlu0 0
        %2955 = vperm.xlu0 %2954, %v2889
        %v2956 = vpop.permute.xlu0 %2955
        %2959 = vset.pattern.permute.xlu0 0
        %2960 = vperm.xlu0 %2959, %v2890
        %v2961 = vpop.permute.xlu0 %2960
        %2964 = vset.pattern.permute.xlu0 0
        %2965 = vperm.xlu0 %2964, %v2891
        %v2966 = vpop.permute.xlu0 %2965
        %2969 = vset.pattern.permute.xlu0 0
        %2970 = vperm.xlu0 %2969, %v2892
        %v2971 = vpop.permute.xlu0 %2970
        %2974 = vset.pattern.permute.xlu0 0
        %2975 = vperm.xlu0 %2974, %v2893
        %v2976 = vpop.permute.xlu0 %2975
        %2979 = vset.pattern.permute.xlu0 0
        %2980 = vperm.xlu0 %2979, %v2894
        %v2981 = vpop.permute.xlu0 %2980
        %2984 = vset.pattern.permute.xlu0 0
        %2985 = vperm.xlu0 %2984, %v2895
        %v2986 = vpop.permute.xlu0 %2985
        %2989 = vset.pattern.permute.xlu0 0
        %2990 = vperm.xlu0 %2989, %v2896
        %v2991 = vpop.permute.xlu0 %2990
        %2994 = vset.pattern.permute.xlu0 0
        %2995 = vperm.xlu0 %2994, %v2897
        %v2996 = vpop.permute.xlu0 %2995
        %2999 = vset.pattern.permute.xlu0 0
        %3000 = vperm.xlu0 %2999, %v2898
        %v3001 = vpop.permute.xlu0 %3000
        %3004 = vset.pattern.permute.xlu0 0
        %3005 = vperm.xlu0 %3004, %v2899
        %v3006 = vpop.permute.xlu0 %3005
        %3009 = vset.pattern.permute.xlu0 0
        %3010 = vperm.xlu0 %3009, %v2900
        %v3011 = vpop.permute.xlu0 %3010
        %3014 = vset.pattern.permute.xlu0 0
        %3015 = vperm.xlu0 %3014, %v2901
        %v3016 = vpop.permute.xlu0 %3015
        %3019 = vset.pattern.permute.xlu0 0
        %3020 = vperm.xlu0 %3019, %v2902
        %v3021 = vpop.permute.xlu0 %3020
        %3024 = vset.pattern.permute.xlu0 0
        %3025 = vperm.xlu0 %3024, %v2903
        %v3026 = vpop.permute.xlu0 %3025
        %3029 = vset.pattern.permute.xlu0 0
        %3030 = vperm.xlu0 %3029, %v2904
        %v3031 = vpop.permute.xlu0 %3030
        %3034 = vset.pattern.permute.xlu0 0
        %3035 = vperm.xlu0 %3034, %v2905
        %v3036 = vpop.permute.xlu0 %3035
        %3039 = vset.pattern.permute.xlu0 0
        %3040 = vperm.xlu0 %3039, %v2906
        %v3041 = vpop.permute.xlu0 %3040
        %3044 = vset.pattern.permute.xlu0 0
        %3045 = vperm.xlu0 %3044, %v2907
        %v3046 = vpop.permute.xlu0 %3045
        %3049 = vset.pattern.permute.xlu0 0
        %3050 = vperm.xlu0 %3049, %v2908
        %v3051 = vpop.permute.xlu0 %3050
        %3054 = vset.pattern.permute.xlu0 0
        %3055 = vperm.xlu0 %3054, %v2909
        %v3056 = vpop.permute.xlu0 %3055
        %3059 = vset.pattern.permute.xlu0 0
        %3060 = vperm.xlu0 %3059, %v2910
        %v3061 = vpop.permute.xlu0 %3060
        %3064 = vset.pattern.permute.xlu0 0
        %3065 = vperm.xlu0 %3064, %v2911
        %v3066 = vpop.permute.xlu0 %3065
        %3069 = vset.pattern.permute.xlu0 0
        %3070 = vperm.xlu0 %3069, %v2912
        %v3071 = vpop.permute.xlu0 %3070
        %v3073 = vmul.f32 %v1417, %v2916
        %v3074 = vmul.f32 %v1416, %v2921
        %v3075 = vmul.f32 %v1415, %v2926
        %v3076 = vmul.f32 %v1414, %v2931
        %v3077 = vmul.f32 %v1413, %v2936
        %v3078 = vmul.f32 %v1412, %v2941
        %v3079 = vmul.f32 %v1411, %v2946
        %v3080 = vmul.f32 %v1410, %v2951
        %v3081 = vmul.f32 %v1409, %v2956
        %v3082 = vmul.f32 %v1408, %v2961
        %v3083 = vmul.f32 %v1407, %v2966
        %v3084 = vmul.f32 %v1406, %v2971
        %v3085 = vmul.f32 %v1405, %v2976
        %v3086 = vmul.f32 %v1404, %v2981
        %v3087 = vmul.f32 %v1403, %v2986
        %v3088 = vmul.f32 %v1402, %v2991
        %v3089 = vmul.f32 %v1401, %v2996
        %v3090 = vmul.f32 %v1400, %v3001
        %v3091 = vmul.f32 %v1399, %v3006
        %v3092 = vmul.f32 %v1398, %v3011
        %v3093 = vmul.f32 %v1397, %v3016
        %v3094 = vmul.f32 %v1396, %v3021
        %v3095 = vmul.f32 %v1395, %v3026
        %v3096 = vmul.f32 %v1394, %v3031
        %v3097 = vmul.f32 %v1393, %v3036
        %v3098 = vmul.f32 %v1392, %v3041
        %v3099 = vmul.f32 %v1391, %v3046
        %v3100 = vmul.f32 %v1390, %v3051
        %v3101 = vmul.f32 %v1389, %v3056
        %v3102 = vmul.f32 %v1388, %v3061
        %v3103 = vmul.f32 %v1387, %v3066
        %v3104 = vmul.f32 %v1418, %v3071
        %v3105 = vpack.c.bf16 %v3074, %v3073
        %v3106 = vpack.c.bf16 %v3076, %v3075
        %v3107 = vpack.c.bf16 %v3078, %v3077
        %v3108 = vpack.c.bf16 %v3080, %v3079
        %v3109 = vpack.c.bf16 %v3082, %v3081
        %v3110 = vpack.c.bf16 %v3084, %v3083
        %v3111 = vpack.c.bf16 %v3086, %v3085
        %v3112 = vpack.c.bf16 %v3088, %v3087
        %v3113 = vpack.c.bf16 %v3090, %v3089
        %v3114 = vpack.c.bf16 %v3092, %v3091
        %v3115 = vpack.c.bf16 %v3094, %v3093
        %v3116 = vpack.c.bf16 %v3096, %v3095
        %v3117 = vpack.c.bf16 %v3098, %v3097
        %v3118 = vpack.c.bf16 %v3100, %v3099
        %v3119 = vpack.c.bf16 %v3102, %v3101
        %v3120 = vpack.c.bf16 %v3104, %v3103
        %s3121 = scalar_lea.vmem %s2, 10
        %v3122 = vld [vmem:[%s3121] sm:$0x3]
        %v3124 = vsel %vm928, %v3105, 0
        %v3127 = vsel %vm928, %v3106, 0
        %v3130 = vsel %vm928, %v3107, 0
        %v3133 = vsel %vm928, %v3108, 0
        %v3136 = vsel %vm928, %v3109, 0
        %v3139 = vsel %vm928, %v3110, 0
        %v3142 = vsel %vm928, %v3111, 0
        %v3145 = vsel %vm928, %v3112, 0
        %v3148 = vsel %vm928, %v3113, 0
        %v3151 = vsel %vm928, %v3114, 0
        %v3154 = vsel %vm928, %v3115, 0
        %v3157 = vsel %vm928, %v3116, 0
        %v3160 = vsel %vm928, %v3117, 0
        %v3163 = vsel %vm928, %v3118, 0
        %v3166 = vsel %vm928, %v3119, 0
        %v3169 = vsel %vm928, %v3120, 0
        %v3172 = vsel %vm977, %v3122, 0
        %3174 = vmatprep.subr.bf16.mxu0 0
        %3175 = vmatpush1.bf16.msra.mxu0 %v3172
        %3176 = vmatprep.subr.bf16.mxu0 0
        %3177 = vmatpush1.bf16.msra.mxu0 0
        %3178 = vmatprep.subr.bf16.mxu0 0
        %3179 = vmatpush1.bf16.msra.mxu0 0
        %3180 = vmatprep.subr.bf16.mxu0 0
        %3181 = vmatpush1.bf16.msra.mxu0 0
        %3182 = vmatprep.subr.bf16.mxu0 0
        %3183 = vmatpush1.bf16.msra.mxu0 0
        %3184 = vmatprep.subr.bf16.mxu0 0
        %3185 = vmatpush1.bf16.msra.mxu0 0
        %3186 = vmatprep.subr.bf16.mxu0 0
        %3187 = vmatpush1.bf16.msra.mxu0 0
        %3188 = vmatprep.subr.bf16.mxu0 0
        %3189 = vmatpush1.bf16.msra.mxu0 0
        %3190 = vmatprep.subr.bf16.mxu0 0
        %3191 = vmatpush1.bf16.msra.mxu0 0
        %3192 = vmatprep.subr.bf16.mxu0 0
        %3193 = vmatpush1.bf16.msra.mxu0 0
        %3194 = vmatprep.subr.bf16.mxu0 0
        %3195 = vmatpush1.bf16.msra.mxu0 0
        %3196 = vmatprep.subr.bf16.mxu0 0
        %3197 = vmatpush1.bf16.msra.mxu0 0
        %3198 = vmatprep.subr.bf16.mxu0 0
        %3199 = vmatpush1.bf16.msra.mxu0 0
        %3200 = vmatprep.subr.bf16.mxu0 0
        %3201 = vmatpush1.bf16.msra.mxu0 0
        %3202 = vmatprep.subr.bf16.mxu0 0
        %3203 = vmatpush1.bf16.msra.mxu0 0
        %3204 = vmatprep.subr.bf16.mxu0 0
        %3205 = vmatpush1.bf16.msra.mxu0 0
        %3206 = vmatprep.mubr.bf16.mxu0 0
        %3207 = vmatmul.mubr.bf16.gmra.mrb[0].mxu0 %v3124
        %v3208 = vpop.f32.mrb[0].mxu0
        %v3209 = vadd.f32 0.0, %v3208
        %v3210 = vpop.f32.mrb[0].mxu0
        %v3211 = vpop.f32.mrb[0].mxu0
        %v3212 = vadd.f32 0.0, %v3211
        %v3213 = vpop.f32.mrb[0].mxu0
        %3214 = vmatprep.mubr.bf16.mxu0 0
        %3215 = vmatmul.mubr.bf16.gmra.mrb[0].mxu0 %v3127
        %v3216 = vpop.f32.mrb[0].mxu0
        %v3217 = vadd.f32 0.0, %v3216
        %v3218 = vpop.f32.mrb[0].mxu0
        %v3219 = vpop.f32.mrb[0].mxu0
        %v3220 = vadd.f32 0.0, %v3219
        %v3221 = vpop.f32.mrb[0].mxu0
        %3222 = vmatprep.mubr.bf16.mxu0 0
        %3223 = vmatmul.mubr.bf16.gmra.mrb[0].mxu0 %v3130
        %v3224 = vpop.f32.mrb[0].mxu0
        %v3225 = vadd.f32 0.0, %v3224
        %v3226 = vpop.f32.mrb[0].mxu0
        %v3227 = vpop.f32.mrb[0].mxu0
        %v3228 = vadd.f32 0.0, %v3227
        %v3229 = vpop.f32.mrb[0].mxu0
        %3230 = vmatprep.mubr.bf16.mxu0 0
        %3231 = vmatmul.mubr.bf16.gmra.mrb[0].mxu0 %v3133
        %v3232 = vpop.f32.mrb[0].mxu0
        %v3233 = vadd.f32 0.0, %v3232
        %v3234 = vpop.f32.mrb[0].mxu0
        %v3235 = vpop.f32.mrb[0].mxu0
        %v3236 = vadd.f32 0.0, %v3235
        %v3237 = vpop.f32.mrb[0].mxu0
        %3238 = vmatprep.mubr.bf16.mxu0 0
        %3239 = vmatmul.mubr.bf16.gmra.mrb[0].mxu0 %v3136
        %v3240 = vpop.f32.mrb[0].mxu0
        %v3241 = vadd.f32 0.0, %v3240
        %v3242 = vpop.f32.mrb[0].mxu0
        %v3243 = vpop.f32.mrb[0].mxu0
        %v3244 = vadd.f32 0.0, %v3243
        %v3245 = vpop.f32.mrb[0].mxu0
        %3246 = vmatprep.mubr.bf16.mxu0 0
        %3247 = vmatmul.mubr.bf16.gmra.mrb[0].mxu0 %v3139
        %v3248 = vpop.f32.mrb[0].mxu0
        %v3249 = vadd.f32 0.0, %v3248
        %v3250 = vpop.f32.mrb[0].mxu0
        %v3251 = vpop.f32.mrb[0].mxu0
        %v3252 = vadd.f32 0.0, %v3251
        %v3253 = vpop.f32.mrb[0].mxu0
        %3254 = vmatprep.mubr.bf16.mxu0 0
        %3255 = vmatmul.mubr.bf16.gmra.mrb[0].mxu0 %v3142
        %v3256 = vpop.f32.mrb[0].mxu0
        %v3257 = vadd.f32 0.0, %v3256
        %v3258 = vpop.f32.mrb[0].mxu0
        %v3259 = vpop.f32.mrb[0].mxu0
        %v3260 = vadd.f32 0.0, %v3259
        %v3261 = vpop.f32.mrb[0].mxu0
        %3262 = vmatprep.mubr.bf16.mxu0 0
        %3263 = vmatmul.mubr.bf16.gmra.mrb[0].mxu0 %v3145
        %v3264 = vpop.f32.mrb[0].mxu0
        %v3265 = vadd.f32 0.0, %v3264
        %v3266 = vpop.f32.mrb[0].mxu0
        %v3267 = vpop.f32.mrb[0].mxu0
        %v3268 = vadd.f32 0.0, %v3267
        %v3269 = vpop.f32.mrb[0].mxu0
        %3270 = vmatprep.mubr.bf16.mxu0 0
        %3271 = vmatmul.mubr.bf16.gmra.mrb[0].mxu0 %v3148
        %v3272 = vpop.f32.mrb[0].mxu0
        %v3273 = vadd.f32 0.0, %v3272
        %v3274 = vpop.f32.mrb[0].mxu0
        %v3275 = vpop.f32.mrb[0].mxu0
        %v3276 = vadd.f32 0.0, %v3275
        %v3277 = vpop.f32.mrb[0].mxu0
        %3278 = vmatprep.mubr.bf16.mxu0 0
        %3279 = vmatmul.mubr.bf16.gmra.mrb[0].mxu0 %v3151
        %v3280 = vpop.f32.mrb[0].mxu0
        %v3281 = vadd.f32 0.0, %v3280
        %v3282 = vpop.f32.mrb[0].mxu0
        %v3283 = vpop.f32.mrb[0].mxu0
        %v3284 = vadd.f32 0.0, %v3283
        %v3285 = vpop.f32.mrb[0].mxu0
        %3286 = vmatprep.mubr.bf16.mxu0 0
        %3287 = vmatmul.mubr.bf16.gmra.mrb[0].mxu0 %v3154
        %v3288 = vpop.f32.mrb[0].mxu0
        %v3289 = vadd.f32 0.0, %v3288
        %v3290 = vpop.f32.mrb[0].mxu0
        %v3291 = vpop.f32.mrb[0].mxu0
        %v3292 = vadd.f32 0.0, %v3291
        %v3293 = vpop.f32.mrb[0].mxu0
        %3294 = vmatprep.mubr.bf16.mxu0 0
        %3295 = vmatmul.mubr.bf16.gmra.mrb[0].mxu0 %v3157
        %v3296 = vpop.f32.mrb[0].mxu0
        %v3297 = vadd.f32 0.0, %v3296
        %v3298 = vpop.f32.mrb[0].mxu0
        %v3299 = vpop.f32.mrb[0].mxu0
        %v3300 = vadd.f32 0.0, %v3299
        %v3301 = vpop.f32.mrb[0].mxu0
        %3302 = vmatprep.mubr.bf16.mxu0 0
        %3303 = vmatmul.mubr.bf16.gmra.mrb[0].mxu0 %v3160
        %v3304 = vpop.f32.mrb[0].mxu0
        %v3305 = vadd.f32 0.0, %v3304
        %v3306 = vpop.f32.mrb[0].mxu0
        %v3307 = vpop.f32.mrb[0].mxu0
        %v3308 = vadd.f32 0.0, %v3307
        %v3309 = vpop.f32.mrb[0].mxu0
        %3310 = vmatprep.mubr.bf16.mxu0 0
        %3311 = vmatmul.mubr.bf16.gmra.mrb[0].mxu0 %v3163
        %v3312 = vpop.f32.mrb[0].mxu0
        %v3313 = vadd.f32 0.0, %v3312
        %v3314 = vpop.f32.mrb[0].mxu0
        %v3315 = vpop.f32.mrb[0].mxu0
        %v3316 = vadd.f32 0.0, %v3315
        %v3317 = vpop.f32.mrb[0].mxu0
        %3318 = vmatprep.mubr.bf16.mxu0 0
        %3319 = vmatmul.mubr.bf16.gmra.mrb[0].mxu0 %v3166
        %v3320 = vpop.f32.mrb[0].mxu0
        %v3321 = vadd.f32 0.0, %v3320
        %v3322 = vpop.f32.mrb[0].mxu0
        %v3323 = vpop.f32.mrb[0].mxu0
        %v3324 = vadd.f32 0.0, %v3323
        %v3325 = vpop.f32.mrb[0].mxu0
        %3326 = vmatprep.mubr.bf16.mxu0 0
        %3327 = vmatmul.mubr.bf16.gmra.mrb[0].mxu0 %v3169
        %v3328 = vpop.f32.mrb[0].mxu0
        %v3329 = vadd.f32 0.0, %v3328
        %v3330 = vpop.f32.mrb[0].mxu0
        %v3331 = vpop.f32.mrb[0].mxu0
        %v3332 = vadd.f32 0.0, %v3331
        %v3333 = vpop.f32.mrb[0].mxu0
        %3334 = vdwg.mxu0
        %v3335 = vadd.f32 %v2848, %v3209
        %v3336 = vadd.f32 %v2849, %v3212
        %v3337 = vadd.f32 %v2850, %v3217
        %v3338 = vadd.f32 %v2851, %v3220
        %v3339 = vadd.f32 %v2852, %v3225
        %v3340 = vadd.f32 %v2853, %v3228
        %v3341 = vadd.f32 %v2854, %v3233
        %v3342 = vadd.f32 %v2855, %v3236
        %v3343 = vadd.f32 %v2856, %v3241
        %v3344 = vadd.f32 %v2857, %v3244
        %v3345 = vadd.f32 %v2858, %v3249
        %v3346 = vadd.f32 %v2859, %v3252
        %v3347 = vadd.f32 %v2860, %v3257
        %v3348 = vadd.f32 %v2861, %v3260
        %v3349 = vadd.f32 %v2862, %v3265
        %v3350 = vadd.f32 %v2863, %v3268
        %v3351 = vadd.f32 %v2864, %v3273
        %v3352 = vadd.f32 %v2865, %v3276
        %v3353 = vadd.f32 %v2866, %v3281
        %v3354 = vadd.f32 %v2867, %v3284
        %v3355 = vadd.f32 %v2868, %v3289
        %v3356 = vadd.f32 %v2869, %v3292
        %v3357 = vadd.f32 %v2870, %v3297
        %v3358 = vadd.f32 %v2871, %v3300
        %v3359 = vadd.f32 %v2872, %v3305
        %v3360 = vadd.f32 %v2873, %v3308
        %v3361 = vadd.f32 %v2874, %v3313
        %v3362 = vadd.f32 %v2875, %v3316
        %v3363 = vadd.f32 %v2876, %v3321
        %v3364 = vadd.f32 %v2877, %v3324
        %v3365 = vadd.f32 %v2878, %v3329
        %v3366 = vadd.f32 %v2879, %v3332
        %s3367 = scalar_lea.vmem [#allocation2], 1536
        %v3368 = vld [vmem:[%s3367] sm:$0xff]
        %v3369 = vld [vmem:[%s3367 + $0x8] sm:$0xff]
        %v3370 = vld [vmem:[%s3367 + $0x10] sm:$0xff]
        %v3371 = vld [vmem:[%s3367 + $0x18] sm:$0xff]
        %v3372 = vld [vmem:[%s3367 + $0x20] sm:$0xff]
        %v3373 = vld [vmem:[%s3367 + $0x28] sm:$0xff]
        %v3374 = vld [vmem:[%s3367 + $0x30] sm:$0xff]
        %v3375 = vld [vmem:[%s3367 + $0x38] sm:$0xff]
        %v3376 = vld [vmem:[%s3367 + $0x40] sm:$0xff]
        %v3377 = vld [vmem:[%s3367 + $0x48] sm:$0xff]
        %v3378 = vld [vmem:[%s3367 + $0x50] sm:$0xff]
        %v3379 = vld [vmem:[%s3367 + $0x58] sm:$0xff]
        %v3380 = vld [vmem:[%s3367 + $0x60] sm:$0xff]
        %v3381 = vld [vmem:[%s3367 + $0x68] sm:$0xff]
        %v3382 = vld [vmem:[%s3367 + $0x70] sm:$0xff]
        %v3383 = vld [vmem:[%s3367 + $0x78] sm:$0xff]
        %v3384 = vld [vmem:[%s3367 + $0x80] sm:$0xff]
        %v3385 = vld [vmem:[%s3367 + $0x88] sm:$0xff]
        %v3386 = vld [vmem:[%s3367 + $0x90] sm:$0xff]
        %v3387 = vld [vmem:[%s3367 + $0x98] sm:$0xff]
        %v3388 = vld [vmem:[%s3367 + $0xa0] sm:$0xff]
        %v3389 = vld [vmem:[%s3367 + $0xa8] sm:$0xff]
        %v3390 = vld [vmem:[%s3367 + $0xb0] sm:$0xff]
        %v3391 = vld [vmem:[%s3367 + $0xb8] sm:$0xff]
        %v3392 = vld [vmem:[%s3367 + $0xc0] sm:$0xff]
        %v3393 = vld [vmem:[%s3367 + $0xc8] sm:$0xff]
        %v3394 = vld [vmem:[%s3367 + $0xd0] sm:$0xff]
        %v3395 = vld [vmem:[%s3367 + $0xd8] sm:$0xff]
        %v3396 = vld [vmem:[%s3367 + $0xe0] sm:$0xff]
        %v3397 = vld [vmem:[%s3367 + $0xe8] sm:$0xff]
        %v3398 = vld [vmem:[%s3367 + $0xf0] sm:$0xff]
        %v3399 = vld [vmem:[%s3367 + $0xf8] sm:$0xff]
        %3401 = vset.pattern.permute.xlu0 0
        %3402 = vperm.xlu0 %3401, %v3368
        %v3403 = vpop.permute.xlu0 %3402
        %3406 = vset.pattern.permute.xlu0 0
        %3407 = vperm.xlu0 %3406, %v3369
        %v3408 = vpop.permute.xlu0 %3407
        %3411 = vset.pattern.permute.xlu0 0
        %3412 = vperm.xlu0 %3411, %v3370
        %v3413 = vpop.permute.xlu0 %3412
        %3416 = vset.pattern.permute.xlu0 0
        %3417 = vperm.xlu0 %3416, %v3371
        %v3418 = vpop.permute.xlu0 %3417
        %3421 = vset.pattern.permute.xlu0 0
        %3422 = vperm.xlu0 %3421, %v3372
        %v3423 = vpop.permute.xlu0 %3422
        %3426 = vset.pattern.permute.xlu0 0
        %3427 = vperm.xlu0 %3426, %v3373
        %v3428 = vpop.permute.xlu0 %3427
        %3431 = vset.pattern.permute.xlu0 0
        %3432 = vperm.xlu0 %3431, %v3374
        %v3433 = vpop.permute.xlu0 %3432
        %3436 = vset.pattern.permute.xlu0 0
        %3437 = vperm.xlu0 %3436, %v3375
        %v3438 = vpop.permute.xlu0 %3437
        %3441 = vset.pattern.permute.xlu0 0
        %3442 = vperm.xlu0 %3441, %v3376
        %v3443 = vpop.permute.xlu0 %3442
        %3446 = vset.pattern.permute.xlu0 0
        %3447 = vperm.xlu0 %3446, %v3377
        %v3448 = vpop.permute.xlu0 %3447
        %3451 = vset.pattern.permute.xlu0 0
        %3452 = vperm.xlu0 %3451, %v3378
        %v3453 = vpop.permute.xlu0 %3452
        %3456 = vset.pattern.permute.xlu0 0
        %3457 = vperm.xlu0 %3456, %v3379
        %v3458 = vpop.permute.xlu0 %3457
        %3461 = vset.pattern.permute.xlu0 0
        %3462 = vperm.xlu0 %3461, %v3380
        %v3463 = vpop.permute.xlu0 %3462
        %3466 = vset.pattern.permute.xlu0 0
        %3467 = vperm.xlu0 %3466, %v3381
        %v3468 = vpop.permute.xlu0 %3467
        %3471 = vset.pattern.permute.xlu0 0
        %3472 = vperm.xlu0 %3471, %v3382
        %v3473 = vpop.permute.xlu0 %3472
        %3476 = vset.pattern.permute.xlu0 0
        %3477 = vperm.xlu0 %3476, %v3383
        %v3478 = vpop.permute.xlu0 %3477
        %3481 = vset.pattern.permute.xlu0 0
        %3482 = vperm.xlu0 %3481, %v3384
        %v3483 = vpop.permute.xlu0 %3482
        %3486 = vset.pattern.permute.xlu0 0
        %3487 = vperm.xlu0 %3486, %v3385
        %v3488 = vpop.permute.xlu0 %3487
        %3491 = vset.pattern.permute.xlu0 0
        %3492 = vperm.xlu0 %3491, %v3386
        %v3493 = vpop.permute.xlu0 %3492
        %3496 = vset.pattern.permute.xlu0 0
        %3497 = vperm.xlu0 %3496, %v3387
        %v3498 = vpop.permute.xlu0 %3497
        %3501 = vset.pattern.permute.xlu0 0
        %3502 = vperm.xlu0 %3501, %v3388
        %v3503 = vpop.permute.xlu0 %3502
        %3506 = vset.pattern.permute.xlu0 0
        %3507 = vperm.xlu0 %3506, %v3389
        %v3508 = vpop.permute.xlu0 %3507
        %3511 = vset.pattern.permute.xlu0 0
        %3512 = vperm.xlu0 %3511, %v3390
        %v3513 = vpop.permute.xlu0 %3512
        %3516 = vset.pattern.permute.xlu0 0
        %3517 = vperm.xlu0 %3516, %v3391
        %v3518 = vpop.permute.xlu0 %3517
        %3521 = vset.pattern.permute.xlu0 0
        %3522 = vperm.xlu0 %3521, %v3392
        %v3523 = vpop.permute.xlu0 %3522
        %3526 = vset.pattern.permute.xlu0 0
        %3527 = vperm.xlu0 %3526, %v3393
        %v3528 = vpop.permute.xlu0 %3527
        %3531 = vset.pattern.permute.xlu0 0
        %3532 = vperm.xlu0 %3531, %v3394
        %v3533 = vpop.permute.xlu0 %3532
        %3536 = vset.pattern.permute.xlu0 0
        %3537 = vperm.xlu0 %3536, %v3395
        %v3538 = vpop.permute.xlu0 %3537
        %3541 = vset.pattern.permute.xlu0 0
        %3542 = vperm.xlu0 %3541, %v3396
        %v3543 = vpop.permute.xlu0 %3542
        %3546 = vset.pattern.permute.xlu0 0
        %3547 = vperm.xlu0 %3546, %v3397
        %v3548 = vpop.permute.xlu0 %3547
        %3551 = vset.pattern.permute.xlu0 0
        %3552 = vperm.xlu0 %3551, %v3398
        %v3553 = vpop.permute.xlu0 %3552
        %3556 = vset.pattern.permute.xlu0 0
        %3557 = vperm.xlu0 %3556, %v3399
        %v3558 = vpop.permute.xlu0 %3557
        %v3560 = vmul.f32 %v441, %v3403
        %v3561 = vmul.f32 %v440, %v3408
        %v3562 = vmul.f32 %v439, %v3413
        %v3563 = vmul.f32 %v438, %v3418
        %v3564 = vmul.f32 %v437, %v3423
        %v3565 = vmul.f32 %v436, %v3428
        %v3566 = vmul.f32 %v435, %v3433
        %v3567 = vmul.f32 %v434, %v3438
        %v3568 = vmul.f32 %v433, %v3443
        %v3569 = vmul.f32 %v432, %v3448
        %v3570 = vmul.f32 %v431, %v3453
        %v3571 = vmul.f32 %v430, %v3458
        %v3572 = vmul.f32 %v429, %v3463
        %v3573 = vmul.f32 %v428, %v3468
        %v3574 = vmul.f32 %v427, %v3473
        %v3575 = vmul.f32 %v426, %v3478
        %v3576 = vmul.f32 %v425, %v3483
        %v3577 = vmul.f32 %v424, %v3488
        %v3578 = vmul.f32 %v423, %v3493
        %v3579 = vmul.f32 %v422, %v3498
        %v3580 = vmul.f32 %v421, %v3503
        %v3581 = vmul.f32 %v420, %v3508
        %v3582 = vmul.f32 %v419, %v3513
        %v3583 = vmul.f32 %v418, %v3518
        %v3584 = vmul.f32 %v417, %v3523
        %v3585 = vmul.f32 %v416, %v3528
        %v3586 = vmul.f32 %v415, %v3533
        %v3587 = vmul.f32 %v414, %v3538
        %v3588 = vmul.f32 %v413, %v3543
        %v3589 = vmul.f32 %v412, %v3548
        %v3590 = vmul.f32 %v443, %v3553
        %v3591 = vmul.f32 %v442, %v3558
        %v3592 = vpack.c.bf16 %v3561, %v3560
        %v3593 = vpack.c.bf16 %v3563, %v3562
        %v3594 = vpack.c.bf16 %v3565, %v3564
        %v3595 = vpack.c.bf16 %v3567, %v3566
        %v3596 = vpack.c.bf16 %v3569, %v3568
        %v3597 = vpack.c.bf16 %v3571, %v3570
        %v3598 = vpack.c.bf16 %v3573, %v3572
        %v3599 = vpack.c.bf16 %v3575, %v3574
        %v3600 = vpack.c.bf16 %v3577, %v3576
        %v3601 = vpack.c.bf16 %v3579, %v3578
        %v3602 = vpack.c.bf16 %v3581, %v3580
        %v3603 = vpack.c.bf16 %v3583, %v3582
        %v3604 = vpack.c.bf16 %v3585, %v3584
        %v3605 = vpack.c.bf16 %v3587, %v3586
        %v3606 = vpack.c.bf16 %v3589, %v3588
        %v3607 = vpack.c.bf16 %v3591, %v3590
        %s3608 = scalar_lea.vmem %s2, 12
        %v3609 = vld [vmem:[%s3608] sm:$0x3]
        %v3611 = vsel %vm928, %v3592, 0
        %v3614 = vsel %vm928, %v3593, 0
        %v3617 = vsel %vm928, %v3594, 0
        %v3620 = vsel %vm928, %v3595, 0
        %v3623 = vsel %vm928, %v3596, 0
        %v3626 = vsel %vm928, %v3597, 0
        %v3629 = vsel %vm928, %v3598, 0
        %v3632 = vsel %vm928, %v3599, 0
        %v3635 = vsel %vm928, %v3600, 0
        %v3638 = vsel %vm928, %v3601, 0
        %v3641 = vsel %vm928, %v3602, 0
        %v3644 = vsel %vm928, %v3603, 0
        %v3647 = vsel %vm928, %v3604, 0
        %v3650 = vsel %vm928, %v3605, 0
        %v3653 = vsel %vm928, %v3606, 0
        %v3656 = vsel %vm928, %v3607, 0
        %v3659 = vsel %vm977, %v3609, 0
        %3661 = vmatprep.subr.bf16.mxu0 0
        %3662 = vmatpush1.bf16.msra.mxu0 %v3659
        %3663 = vmatprep.subr.bf16.mxu0 0
        %3664 = vmatpush1.bf16.msra.mxu0 0
        %3665 = vmatprep.subr.bf16.mxu0 0
        %3666 = vmatpush1.bf16.msra.mxu0 0
        %3667 = vmatprep.subr.bf16.mxu0 0
        %3668 = vmatpush1.bf16.msra.mxu0 0
        %3669 = vmatprep.subr.bf16.mxu0 0
        %3670 = vmatpush1.bf16.msra.mxu0 0
        %3671 = vmatprep.subr.bf16.mxu0 0
        %3672 = vmatpush1.bf16.msra.mxu0 0
        %3673 = vmatprep.subr.bf16.mxu0 0
        %3674 = vmatpush1.bf16.msra.mxu0 0
        %3675 = vmatprep.subr.bf16.mxu0 0
        %3676 = vmatpush1.bf16.msra.mxu0 0
        %3677 = vmatprep.subr.bf16.mxu0 0
        %3678 = vmatpush1.bf16.msra.mxu0 0
        %3679 = vmatprep.subr.bf16.mxu0 0
        %3680 = vmatpush1.bf16.msra.mxu0 0
        %3681 = vmatprep.subr.bf16.mxu0 0
        %3682 = vmatpush1.bf16.msra.mxu0 0
        %3683 = vmatprep.subr.bf16.mxu0 0
        %3684 = vmatpush1.bf16.msra.mxu0 0
        %3685 = vmatprep.subr.bf16.mxu0 0
        %3686 = vmatpush1.bf16.msra.mxu0 0
        %3687 = vmatprep.subr.bf16.mxu0 0
        %3688 = vmatpush1.bf16.msra.mxu0 0
        %3689 = vmatprep.subr.bf16.mxu0 0
        %3690 = vmatpush1.bf16.msra.mxu0 0
        %3691 = vmatprep.subr.bf16.mxu0 0
        %3692 = vmatpush1.bf16.msra.mxu0 0
        %3693 = vmatprep.mubr.bf16.mxu0 0
        %3694 = vmatmul.mubr.bf16.gmra.mrb[0].mxu0 %v3611
        %v3695 = vpop.f32.mrb[0].mxu0
        %v3696 = vadd.f32 0.0, %v3695
        %v3697 = vpop.f32.mrb[0].mxu0
        %v3698 = vpop.f32.mrb[0].mxu0
        %v3699 = vadd.f32 0.0, %v3698
        %v3700 = vpop.f32.mrb[0].mxu0
        %3701 = vmatprep.mubr.bf16.mxu0 0
        %3702 = vmatmul.mubr.bf16.gmra.mrb[0].mxu0 %v3614
        %v3703 = vpop.f32.mrb[0].mxu0
        %v3704 = vadd.f32 0.0, %v3703
        %v3705 = vpop.f32.mrb[0].mxu0
        %v3706 = vpop.f32.mrb[0].mxu0
        %v3707 = vadd.f32 0.0, %v3706
        %v3708 = vpop.f32.mrb[0].mxu0
        %3709 = vmatprep.mubr.bf16.mxu0 0
        %3710 = vmatmul.mubr.bf16.gmra.mrb[0].mxu0 %v3617
        %v3711 = vpop.f32.mrb[0].mxu0
        %v3712 = vadd.f32 0.0, %v3711
        %v3713 = vpop.f32.mrb[0].mxu0
        %v3714 = vpop.f32.mrb[0].mxu0
        %v3715 = vadd.f32 0.0, %v3714
        %v3716 = vpop.f32.mrb[0].mxu0
        %3717 = vmatprep.mubr.bf16.mxu0 0
        %3718 = vmatmul.mubr.bf16.gmra.mrb[0].mxu0 %v3620
        %v3719 = vpop.f32.mrb[0].mxu0
        %v3720 = vadd.f32 0.0, %v3719
        %v3721 = vpop.f32.mrb[0].mxu0
        %v3722 = vpop.f32.mrb[0].mxu0
        %v3723 = vadd.f32 0.0, %v3722
        %v3724 = vpop.f32.mrb[0].mxu0
        %3725 = vmatprep.mubr.bf16.mxu0 0
        %3726 = vmatmul.mubr.bf16.gmra.mrb[0].mxu0 %v3623
        %v3727 = vpop.f32.mrb[0].mxu0
        %v3728 = vadd.f32 0.0, %v3727
        %v3729 = vpop.f32.mrb[0].mxu0
        %v3730 = vpop.f32.mrb[0].mxu0
        %v3731 = vadd.f32 0.0, %v3730
        %v3732 = vpop.f32.mrb[0].mxu0
        %3733 = vmatprep.mubr.bf16.mxu0 0
        %3734 = vmatmul.mubr.bf16.gmra.mrb[0].mxu0 %v3626
        %v3735 = vpop.f32.mrb[0].mxu0
        %v3736 = vadd.f32 0.0, %v3735
        %v3737 = vpop.f32.mrb[0].mxu0
        %v3738 = vpop.f32.mrb[0].mxu0
        %v3739 = vadd.f32 0.0, %v3738
        %v3740 = vpop.f32.mrb[0].mxu0
        %3741 = vmatprep.mubr.bf16.mxu0 0
        %3742 = vmatmul.mubr.bf16.gmra.mrb[0].mxu0 %v3629
        %v3743 = vpop.f32.mrb[0].mxu0
        %v3744 = vadd.f32 0.0, %v3743
        %v3745 = vpop.f32.mrb[0].mxu0
        %v3746 = vpop.f32.mrb[0].mxu0
        %v3747 = vadd.f32 0.0, %v3746
        %v3748 = vpop.f32.mrb[0].mxu0
        %3749 = vmatprep.mubr.bf16.mxu0 0
        %3750 = vmatmul.mubr.bf16.gmra.mrb[0].mxu0 %v3632
        %v3751 = vpop.f32.mrb[0].mxu0
        %v3752 = vadd.f32 0.0, %v3751
        %v3753 = vpop.f32.mrb[0].mxu0
        %v3754 = vpop.f32.mrb[0].mxu0
        %v3755 = vadd.f32 0.0, %v3754
        %v3756 = vpop.f32.mrb[0].mxu0
        %3757 = vmatprep.mubr.bf16.mxu0 0
        %3758 = vmatmul.mubr.bf16.gmra.mrb[0].mxu0 %v3635
        %v3759 = vpop.f32.mrb[0].mxu0
        %v3760 = vadd.f32 0.0, %v3759
        %v3761 = vpop.f32.mrb[0].mxu0
        %v3762 = vpop.f32.mrb[0].mxu0
        %v3763 = vadd.f32 0.0, %v3762
        %v3764 = vpop.f32.mrb[0].mxu0
        %3765 = vmatprep.mubr.bf16.mxu0 0
        %3766 = vmatmul.mubr.bf16.gmra.mrb[0].mxu0 %v3638
        %v3767 = vpop.f32.mrb[0].mxu0
        %v3768 = vadd.f32 0.0, %v3767
        %v3769 = vpop.f32.mrb[0].mxu0
        %v3770 = vpop.f32.mrb[0].mxu0
        %v3771 = vadd.f32 0.0, %v3770
        %v3772 = vpop.f32.mrb[0].mxu0
        %3773 = vmatprep.mubr.bf16.mxu0 0
        %3774 = vmatmul.mubr.bf16.gmra.mrb[0].mxu0 %v3641
        %v3775 = vpop.f32.mrb[0].mxu0
        %v3776 = vadd.f32 0.0, %v3775
        %v3777 = vpop.f32.mrb[0].mxu0
        %v3778 = vpop.f32.mrb[0].mxu0
        %v3779 = vadd.f32 0.0, %v3778
        %v3780 = vpop.f32.mrb[0].mxu0
        %3781 = vmatprep.mubr.bf16.mxu0 0
        %3782 = vmatmul.mubr.bf16.gmra.mrb[0].mxu0 %v3644
        %v3783 = vpop.f32.mrb[0].mxu0
        %v3784 = vadd.f32 0.0, %v3783
        %v3785 = vpop.f32.mrb[0].mxu0
        %v3786 = vpop.f32.mrb[0].mxu0
        %v3787 = vadd.f32 0.0, %v3786
        %v3788 = vpop.f32.mrb[0].mxu0
        %3789 = vmatprep.mubr.bf16.mxu0 0
        %3790 = vmatmul.mubr.bf16.gmra.mrb[0].mxu0 %v3647
        %v3791 = vpop.f32.mrb[0].mxu0
        %v3792 = vadd.f32 0.0, %v3791
        %v3793 = vpop.f32.mrb[0].mxu0
        %v3794 = vpop.f32.mrb[0].mxu0
        %v3795 = vadd.f32 0.0, %v3794
        %v3796 = vpop.f32.mrb[0].mxu0
        %3797 = vmatprep.mubr.bf16.mxu0 0
        %3798 = vmatmul.mubr.bf16.gmra.mrb[0].mxu0 %v3650
        %v3799 = vpop.f32.mrb[0].mxu0
        %v3800 = vadd.f32 0.0, %v3799
        %v3801 = vpop.f32.mrb[0].mxu0
        %v3802 = vpop.f32.mrb[0].mxu0
        %v3803 = vadd.f32 0.0, %v3802
        %v3804 = vpop.f32.mrb[0].mxu0
        %3805 = vmatprep.mubr.bf16.mxu0 0
        %3806 = vmatmul.mubr.bf16.gmra.mrb[0].mxu0 %v3653
        %v3807 = vpop.f32.mrb[0].mxu0
        %v3808 = vadd.f32 0.0, %v3807
        %v3809 = vpop.f32.mrb[0].mxu0
        %v3810 = vpop.f32.mrb[0].mxu0
        %v3811 = vadd.f32 0.0, %v3810
        %v3812 = vpop.f32.mrb[0].mxu0
        %3813 = vmatprep.mubr.bf16.mxu0 0
        %3814 = vmatmul.mubr.bf16.gmra.mrb[0].mxu0 %v3656
        %v3815 = vpop.f32.mrb[0].mxu0
        %v3816 = vadd.f32 0.0, %v3815
        %v3817 = vpop.f32.mrb[0].mxu0
        %v3818 = vpop.f32.mrb[0].mxu0
        %v3819 = vadd.f32 0.0, %v3818
        %v3820 = vpop.f32.mrb[0].mxu0
        %3821 = vdwg.mxu0
        %v3822 = vadd.f32 %v3335, %v3696
        %v3823 = vadd.f32 %v3336, %v3699
        %v3824 = vadd.f32 %v3337, %v3704
        %v3825 = vadd.f32 %v3338, %v3707
        %v3826 = vadd.f32 %v3339, %v3712
        %v3827 = vadd.f32 %v3340, %v3715
        %v3828 = vadd.f32 %v3341, %v3720
        %v3829 = vadd.f32 %v3342, %v3723
        %v3830 = vadd.f32 %v3343, %v3728
        %v3831 = vadd.f32 %v3344, %v3731
        %v3832 = vadd.f32 %v3345, %v3736
        %v3833 = vadd.f32 %v3346, %v3739
        %v3834 = vadd.f32 %v3347, %v3744
        %v3835 = vadd.f32 %v3348, %v3747
        %v3836 = vadd.f32 %v3349, %v3752
        %v3837 = vadd.f32 %v3350, %v3755
        %v3838 = vadd.f32 %v3351, %v3760
        %v3839 = vadd.f32 %v3352, %v3763
        %v3840 = vadd.f32 %v3353, %v3768
        %v3841 = vadd.f32 %v3354, %v3771
        %v3842 = vadd.f32 %v3355, %v3776
        %v3843 = vadd.f32 %v3356, %v3779
        %v3844 = vadd.f32 %v3357, %v3784
        %v3845 = vadd.f32 %v3358, %v3787
        %v3846 = vadd.f32 %v3359, %v3792
        %v3847 = vadd.f32 %v3360, %v3795
        %v3848 = vadd.f32 %v3361, %v3800
        %v3849 = vadd.f32 %v3362, %v3803
        %v3850 = vadd.f32 %v3363, %v3808
        %v3851 = vadd.f32 %v3364, %v3811
        %v3852 = vadd.f32 %v3365, %v3816
        %v3853 = vadd.f32 %v3366, %v3819
        %s3854 = scalar_lea.vmem [#allocation2], 1792
        %v3855 = vld [vmem:[%s3854] sm:$0xff]
        %v3856 = vld [vmem:[%s3854 + $0x8] sm:$0xff]
        %v3857 = vld [vmem:[%s3854 + $0x10] sm:$0xff]
        %v3858 = vld [vmem:[%s3854 + $0x18] sm:$0xff]
        %v3859 = vld [vmem:[%s3854 + $0x20] sm:$0xff]
        %v3860 = vld [vmem:[%s3854 + $0x28] sm:$0xff]
        %v3861 = vld [vmem:[%s3854 + $0x30] sm:$0xff]
        %v3862 = vld [vmem:[%s3854 + $0x38] sm:$0xff]
        %v3863 = vld [vmem:[%s3854 + $0x40] sm:$0xff]
        %v3864 = vld [vmem:[%s3854 + $0x48] sm:$0xff]
        %v3865 = vld [vmem:[%s3854 + $0x50] sm:$0xff]
        %v3866 = vld [vmem:[%s3854 + $0x58] sm:$0xff]
        %v3867 = vld [vmem:[%s3854 + $0x60] sm:$0xff]
        %v3868 = vld [vmem:[%s3854 + $0x68] sm:$0xff]
        %v3869 = vld [vmem:[%s3854 + $0x70] sm:$0xff]
        %v3870 = vld [vmem:[%s3854 + $0x78] sm:$0xff]
        %v3871 = vld [vmem:[%s3854 + $0x80] sm:$0xff]
        %v3872 = vld [vmem:[%s3854 + $0x88] sm:$0xff]
        %v3873 = vld [vmem:[%s3854 + $0x90] sm:$0xff]
        %v3874 = vld [vmem:[%s3854 + $0x98] sm:$0xff]
        %v3875 = vld [vmem:[%s3854 + $0xa0] sm:$0xff]
        %v3876 = vld [vmem:[%s3854 + $0xa8] sm:$0xff]
        %v3877 = vld [vmem:[%s3854 + $0xb0] sm:$0xff]
        %v3878 = vld [vmem:[%s3854 + $0xb8] sm:$0xff]
        %v3879 = vld [vmem:[%s3854 + $0xc0] sm:$0xff]
        %v3880 = vld [vmem:[%s3854 + $0xc8] sm:$0xff]
        %v3881 = vld [vmem:[%s3854 + $0xd0] sm:$0xff]
        %v3882 = vld [vmem:[%s3854 + $0xd8] sm:$0xff]
        %v3883 = vld [vmem:[%s3854 + $0xe0] sm:$0xff]
        %v3884 = vld [vmem:[%s3854 + $0xe8] sm:$0xff]
        %v3885 = vld [vmem:[%s3854 + $0xf0] sm:$0xff]
        %v3886 = vld [vmem:[%s3854 + $0xf8] sm:$0xff]
        %3888 = vset.pattern.permute.xlu0 0
        %3889 = vperm.xlu0 %3888, %v3855
        %v3890 = vpop.permute.xlu0 %3889
        %3893 = vset.pattern.permute.xlu0 0
        %3894 = vperm.xlu0 %3893, %v3856
        %v3895 = vpop.permute.xlu0 %3894
        %3898 = vset.pattern.permute.xlu0 0
        %3899 = vperm.xlu0 %3898, %v3857
        %v3900 = vpop.permute.xlu0 %3899
        %3903 = vset.pattern.permute.xlu0 0
        %3904 = vperm.xlu0 %3903, %v3858
        %v3905 = vpop.permute.xlu0 %3904
        %3908 = vset.pattern.permute.xlu0 0
        %3909 = vperm.xlu0 %3908, %v3859
        %v3910 = vpop.permute.xlu0 %3909
        %3913 = vset.pattern.permute.xlu0 0
        %3914 = vperm.xlu0 %3913, %v3860
        %v3915 = vpop.permute.xlu0 %3914
        %3918 = vset.pattern.permute.xlu0 0
        %3919 = vperm.xlu0 %3918, %v3861
        %v3920 = vpop.permute.xlu0 %3919
        %3923 = vset.pattern.permute.xlu0 0
        %3924 = vperm.xlu0 %3923, %v3862
        %v3925 = vpop.permute.xlu0 %3924
        %3928 = vset.pattern.permute.xlu0 0
        %3929 = vperm.xlu0 %3928, %v3863
        %v3930 = vpop.permute.xlu0 %3929
        %3933 = vset.pattern.permute.xlu0 0
        %3934 = vperm.xlu0 %3933, %v3864
        %v3935 = vpop.permute.xlu0 %3934
        %3938 = vset.pattern.permute.xlu0 0
        %3939 = vperm.xlu0 %3938, %v3865
        %v3940 = vpop.permute.xlu0 %3939
        %3943 = vset.pattern.permute.xlu0 0
        %3944 = vperm.xlu0 %3943, %v3866
        %v3945 = vpop.permute.xlu0 %3944
        %3948 = vset.pattern.permute.xlu0 0
        %3949 = vperm.xlu0 %3948, %v3867
        %v3950 = vpop.permute.xlu0 %3949
        %3953 = vset.pattern.permute.xlu0 0
        %3954 = vperm.xlu0 %3953, %v3868
        %v3955 = vpop.permute.xlu0 %3954
        %3958 = vset.pattern.permute.xlu0 0
        %3959 = vperm.xlu0 %3958, %v3869
        %v3960 = vpop.permute.xlu0 %3959
        %3963 = vset.pattern.permute.xlu0 0
        %3964 = vperm.xlu0 %3963, %v3870
        %v3965 = vpop.permute.xlu0 %3964
        %3968 = vset.pattern.permute.xlu0 0
        %3969 = vperm.xlu0 %3968, %v3871
        %v3970 = vpop.permute.xlu0 %3969
        %3973 = vset.pattern.permute.xlu0 0
        %3974 = vperm.xlu0 %3973, %v3872
        %v3975 = vpop.permute.xlu0 %3974
        %3978 = vset.pattern.permute.xlu0 0
        %3979 = vperm.xlu0 %3978, %v3873
        %v3980 = vpop.permute.xlu0 %3979
        %3983 = vset.pattern.permute.xlu0 0
        %3984 = vperm.xlu0 %3983, %v3874
        %v3985 = vpop.permute.xlu0 %3984
        %3988 = vset.pattern.permute.xlu0 0
        %3989 = vperm.xlu0 %3988, %v3875
        %v3990 = vpop.permute.xlu0 %3989
        %3993 = vset.pattern.permute.xlu0 0
        %3994 = vperm.xlu0 %3993, %v3876
        %v3995 = vpop.permute.xlu0 %3994
        %3998 = vset.pattern.permute.xlu0 0
        %3999 = vperm.xlu0 %3998, %v3877
        %v4000 = vpop.permute.xlu0 %3999
        %4003 = vset.pattern.permute.xlu0 0
        %4004 = vperm.xlu0 %4003, %v3878
        %v4005 = vpop.permute.xlu0 %4004
        %4008 = vset.pattern.permute.xlu0 0
        %4009 = vperm.xlu0 %4008, %v3879
        %v4010 = vpop.permute.xlu0 %4009
        %4013 = vset.pattern.permute.xlu0 0
        %4014 = vperm.xlu0 %4013, %v3880
        %v4015 = vpop.permute.xlu0 %4014
        %4018 = vset.pattern.permute.xlu0 0
        %4019 = vperm.xlu0 %4018, %v3881
        %v4020 = vpop.permute.xlu0 %4019
        %4023 = vset.pattern.permute.xlu0 0
        %4024 = vperm.xlu0 %4023, %v3882
        %v4025 = vpop.permute.xlu0 %4024
        %4028 = vset.pattern.permute.xlu0 0
        %4029 = vperm.xlu0 %4028, %v3883
        %v4030 = vpop.permute.xlu0 %4029
        %4033 = vset.pattern.permute.xlu0 0
        %4034 = vperm.xlu0 %4033, %v3884
        %v4035 = vpop.permute.xlu0 %4034
        %4038 = vset.pattern.permute.xlu0 0
        %4039 = vperm.xlu0 %4038, %v3885
        %v4040 = vpop.permute.xlu0 %4039
        %4043 = vset.pattern.permute.xlu0 0
        %4044 = vperm.xlu0 %4043, %v3886
        %v4045 = vpop.permute.xlu0 %4044
        %v4047 = vmul.f32 %v347, %v3890
        %v4048 = vmul.f32 %v348, %v3895
        %v4049 = vmul.f32 %v349, %v3900
        %v4050 = vmul.f32 %v350, %v3905
        %v4051 = vmul.f32 %v351, %v3910
        %v4052 = vmul.f32 %v352, %v3915
        %v4053 = vmul.f32 %v353, %v3920
        %v4054 = vmul.f32 %v354, %v3925
        %v4055 = vmul.f32 %v355, %v3930
        %v4056 = vmul.f32 %v356, %v3935
        %v4057 = vmul.f32 %v357, %v3940
        %v4058 = vmul.f32 %v358, %v3945
        %v4059 = vmul.f32 %v359, %v3950
        %v4060 = vmul.f32 %v360, %v3955
        %v4061 = vmul.f32 %v361, %v3960
        %v4062 = vmul.f32 %v362, %v3965
        %v4063 = vmul.f32 %v363, %v3970
        %v4064 = vmul.f32 %v364, %v3975
        %v4065 = vmul.f32 %v365, %v3980
        %v4066 = vmul.f32 %v366, %v3985
        %v4067 = vmul.f32 %v367, %v3990
        %v4068 = vmul.f32 %v368, %v3995
        %v4069 = vmul.f32 %v369, %v4000
        %v4070 = vmul.f32 %v370, %v4005
        %v4071 = vmul.f32 %v371, %v4010
        %v4072 = vmul.f32 %v372, %v4015
        %v4073 = vmul.f32 %v373, %v4020
        %v4074 = vmul.f32 %v374, %v4025
        %v4075 = vmul.f32 %v375, %v4030
        %v4076 = vmul.f32 %v376, %v4035
        %v4077 = vmul.f32 %v345, %v4040
        %v4078 = vmul.f32 %v346, %v4045
        %v4079 = vpack.c.bf16 %v4048, %v4047
        %v4080 = vpack.c.bf16 %v4050, %v4049
        %v4081 = vpack.c.bf16 %v4052, %v4051
        %v4082 = vpack.c.bf16 %v4054, %v4053
        %v4083 = vpack.c.bf16 %v4056, %v4055
        %v4084 = vpack.c.bf16 %v4058, %v4057
        %v4085 = vpack.c.bf16 %v4060, %v4059
        %v4086 = vpack.c.bf16 %v4062, %v4061
        %v4087 = vpack.c.bf16 %v4064, %v4063
        %v4088 = vpack.c.bf16 %v4066, %v4065
        %v4089 = vpack.c.bf16 %v4068, %v4067
        %v4090 = vpack.c.bf16 %v4070, %v4069
        %v4091 = vpack.c.bf16 %v4072, %v4071
        %v4092 = vpack.c.bf16 %v4074, %v4073
        %v4093 = vpack.c.bf16 %v4076, %v4075
        %v4094 = vpack.c.bf16 %v4078, %v4077
        %s4095 = scalar_lea.vmem %s2, 14
        %v4096 = vld [vmem:[%s4095] sm:$0x3]
        %v4098 = vsel %vm928, %v4079, 0
        %v4101 = vsel %vm928, %v4080, 0
        %v4104 = vsel %vm928, %v4081, 0
        %v4107 = vsel %vm928, %v4082, 0
        %v4110 = vsel %vm928, %v4083, 0
        %v4113 = vsel %vm928, %v4084, 0
        %v4116 = vsel %vm928, %v4085, 0
        %v4119 = vsel %vm928, %v4086, 0
        %v4122 = vsel %vm928, %v4087, 0
        %v4125 = vsel %vm928, %v4088, 0
        %v4128 = vsel %vm928, %v4089, 0
        %v4131 = vsel %vm928, %v4090, 0
        %v4134 = vsel %vm928, %v4091, 0
        %v4137 = vsel %vm928, %v4092, 0
        %v4140 = vsel %vm928, %v4093, 0
        %v4143 = vsel %vm928, %v4094, 0
        %v4146 = vsel %vm977, %v4096, 0
        %4148 = vmatprep.subr.bf16.mxu0 0
        %4149 = vmatpush1.bf16.msra.mxu0 %v4146
        %4150 = vmatprep.subr.bf16.mxu0 0
        %4151 = vmatpush1.bf16.msra.mxu0 0
        %4152 = vmatprep.subr.bf16.mxu0 0
        %4153 = vmatpush1.bf16.msra.mxu0 0
        %4154 = vmatprep.subr.bf16.mxu0 0
        %4155 = vmatpush1.bf16.msra.mxu0 0
        %4156 = vmatprep.subr.bf16.mxu0 0
        %4157 = vmatpush1.bf16.msra.mxu0 0
        %4158 = vmatprep.subr.bf16.mxu0 0
        %4159 = vmatpush1.bf16.msra.mxu0 0
        %4160 = vmatprep.subr.bf16.mxu0 0
        %4161 = vmatpush1.bf16.msra.mxu0 0
        %4162 = vmatprep.subr.bf16.mxu0 0
        %4163 = vmatpush1.bf16.msra.mxu0 0
        %4164 = vmatprep.subr.bf16.mxu0 0
        %4165 = vmatpush1.bf16.msra.mxu0 0
        %4166 = vmatprep.subr.bf16.mxu0 0
        %4167 = vmatpush1.bf16.msra.mxu0 0
        %4168 = vmatprep.subr.bf16.mxu0 0
        %4169 = vmatpush1.bf16.msra.mxu0 0
        %4170 = vmatprep.subr.bf16.mxu0 0
        %4171 = vmatpush1.bf16.msra.mxu0 0
        %4172 = vmatprep.subr.bf16.mxu0 0
        %4173 = vmatpush1.bf16.msra.mxu0 0
        %4174 = vmatprep.subr.bf16.mxu0 0
        %4175 = vmatpush1.bf16.msra.mxu0 0
        %4176 = vmatprep.subr.bf16.mxu0 0
        %4177 = vmatpush1.bf16.msra.mxu0 0
        %4178 = vmatprep.subr.bf16.mxu0 0
        %4179 = vmatpush1.bf16.msra.mxu0 0
        %4180 = vmatprep.mubr.bf16.mxu0 0
        %4181 = vmatmul.mubr.bf16.gmra.mrb[0].mxu0 %v4098
        %v4182 = vpop.f32.mrb[0].mxu0
        %v4183 = vadd.f32 0.0, %v4182
        %v4184 = vpop.f32.mrb[0].mxu0
        %v4185 = vpop.f32.mrb[0].mxu0
        %v4186 = vadd.f32 0.0, %v4185
        %v4187 = vpop.f32.mrb[0].mxu0
        %4188 = vmatprep.mubr.bf16.mxu0 0
        %4189 = vmatmul.mubr.bf16.gmra.mrb[0].mxu0 %v4101
        %v4190 = vpop.f32.mrb[0].mxu0
        %v4191 = vadd.f32 0.0, %v4190
        %v4192 = vpop.f32.mrb[0].mxu0
        %v4193 = vpop.f32.mrb[0].mxu0
        %v4194 = vadd.f32 0.0, %v4193
        %v4195 = vpop.f32.mrb[0].mxu0
        %4196 = vmatprep.mubr.bf16.mxu0 0
        %4197 = vmatmul.mubr.bf16.gmra.mrb[0].mxu0 %v4104
        %v4198 = vpop.f32.mrb[0].mxu0
        %v4199 = vadd.f32 0.0, %v4198
        %v4200 = vpop.f32.mrb[0].mxu0
        %v4201 = vpop.f32.mrb[0].mxu0
        %v4202 = vadd.f32 0.0, %v4201
        %v4203 = vpop.f32.mrb[0].mxu0
        %4204 = vmatprep.mubr.bf16.mxu0 0
        %4205 = vmatmul.mubr.bf16.gmra.mrb[0].mxu0 %v4107
        %v4206 = vpop.f32.mrb[0].mxu0
        %v4207 = vadd.f32 0.0, %v4206
        %v4208 = vpop.f32.mrb[0].mxu0
        %v4209 = vpop.f32.mrb[0].mxu0
        %v4210 = vadd.f32 0.0, %v4209
        %v4211 = vpop.f32.mrb[0].mxu0
        %4212 = vmatprep.mubr.bf16.mxu0 0
        %4213 = vmatmul.mubr.bf16.gmra.mrb[0].mxu0 %v4110
        %v4214 = vpop.f32.mrb[0].mxu0
        %v4215 = vadd.f32 0.0, %v4214
        %v4216 = vpop.f32.mrb[0].mxu0
        %v4217 = vpop.f32.mrb[0].mxu0
        %v4218 = vadd.f32 0.0, %v4217
        %v4219 = vpop.f32.mrb[0].mxu0
        %4220 = vmatprep.mubr.bf16.mxu0 0
        %4221 = vmatmul.mubr.bf16.gmra.mrb[0].mxu0 %v4113
        %v4222 = vpop.f32.mrb[0].mxu0
        %v4223 = vadd.f32 0.0, %v4222
        %v4224 = vpop.f32.mrb[0].mxu0
        %v4225 = vpop.f32.mrb[0].mxu0
        %v4226 = vadd.f32 0.0, %v4225
        %v4227 = vpop.f32.mrb[0].mxu0
        %4228 = vmatprep.mubr.bf16.mxu0 0
        %4229 = vmatmul.mubr.bf16.gmra.mrb[0].mxu0 %v4116
        %v4230 = vpop.f32.mrb[0].mxu0
        %v4231 = vadd.f32 0.0, %v4230
        %v4232 = vpop.f32.mrb[0].mxu0
        %v4233 = vpop.f32.mrb[0].mxu0
        %v4234 = vadd.f32 0.0, %v4233
        %v4235 = vpop.f32.mrb[0].mxu0
        %4236 = vmatprep.mubr.bf16.mxu0 0
        %4237 = vmatmul.mubr.bf16.gmra.mrb[0].mxu0 %v4119
        %v4238 = vpop.f32.mrb[0].mxu0
        %v4239 = vadd.f32 0.0, %v4238
        %v4240 = vpop.f32.mrb[0].mxu0
        %v4241 = vpop.f32.mrb[0].mxu0
        %v4242 = vadd.f32 0.0, %v4241
        %v4243 = vpop.f32.mrb[0].mxu0
        %4244 = vmatprep.mubr.bf16.mxu0 0
        %4245 = vmatmul.mubr.bf16.gmra.mrb[0].mxu0 %v4122
        %v4246 = vpop.f32.mrb[0].mxu0
        %v4247 = vadd.f32 0.0, %v4246
        %v4248 = vpop.f32.mrb[0].mxu0
        %v4249 = vpop.f32.mrb[0].mxu0
        %v4250 = vadd.f32 0.0, %v4249
        %v4251 = vpop.f32.mrb[0].mxu0
        %4252 = vmatprep.mubr.bf16.mxu0 0
        %4253 = vmatmul.mubr.bf16.gmra.mrb[0].mxu0 %v4125
        %v4254 = vpop.f32.mrb[0].mxu0
        %v4255 = vadd.f32 0.0, %v4254
        %v4256 = vpop.f32.mrb[0].mxu0
        %v4257 = vpop.f32.mrb[0].mxu0
        %v4258 = vadd.f32 0.0, %v4257
        %v4259 = vpop.f32.mrb[0].mxu0
        %4260 = vmatprep.mubr.bf16.mxu0 0
        %4261 = vmatmul.mubr.bf16.gmra.mrb[0].mxu0 %v4128
        %v4262 = vpop.f32.mrb[0].mxu0
        %v4263 = vadd.f32 0.0, %v4262
        %v4264 = vpop.f32.mrb[0].mxu0
        %v4265 = vpop.f32.mrb[0].mxu0
        %v4266 = vadd.f32 0.0, %v4265
        %v4267 = vpop.f32.mrb[0].mxu0
        %4268 = vmatprep.mubr.bf16.mxu0 0
        %4269 = vmatmul.mubr.bf16.gmra.mrb[0].mxu0 %v4131
        %v4270 = vpop.f32.mrb[0].mxu0
        %v4271 = vadd.f32 0.0, %v4270
        %v4272 = vpop.f32.mrb[0].mxu0
        %v4273 = vpop.f32.mrb[0].mxu0
        %v4274 = vadd.f32 0.0, %v4273
        %v4275 = vpop.f32.mrb[0].mxu0
        %4276 = vmatprep.mubr.bf16.mxu0 0
        %4277 = vmatmul.mubr.bf16.gmra.mrb[0].mxu0 %v4134
        %v4278 = vpop.f32.mrb[0].mxu0
        %v4279 = vadd.f32 0.0, %v4278
        %v4280 = vpop.f32.mrb[0].mxu0
        %v4281 = vpop.f32.mrb[0].mxu0
        %v4282 = vadd.f32 0.0, %v4281
        %v4283 = vpop.f32.mrb[0].mxu0
        %4284 = vmatprep.mubr.bf16.mxu0 0
        %4285 = vmatmul.mubr.bf16.gmra.mrb[0].mxu0 %v4137
        %v4286 = vpop.f32.mrb[0].mxu0
        %v4287 = vadd.f32 0.0, %v4286
        %v4288 = vpop.f32.mrb[0].mxu0
        %v4289 = vpop.f32.mrb[0].mxu0
        %v4290 = vadd.f32 0.0, %v4289
        %v4291 = vpop.f32.mrb[0].mxu0
        %4292 = vmatprep.mubr.bf16.mxu0 0
        %4293 = vmatmul.mubr.bf16.gmra.mrb[0].mxu0 %v4140
        %v4294 = vpop.f32.mrb[0].mxu0
        %v4295 = vadd.f32 0.0, %v4294
        %v4296 = vpop.f32.mrb[0].mxu0
        %v4297 = vpop.f32.mrb[0].mxu0
        %v4298 = vadd.f32 0.0, %v4297
        %v4299 = vpop.f32.mrb[0].mxu0
        %4300 = vmatprep.mubr.bf16.mxu0 0
        %4301 = vmatmul.mubr.bf16.gmra.mrb[0].mxu0 %v4143
        %v4302 = vpop.f32.mrb[0].mxu0
        %v4303 = vadd.f32 0.0, %v4302
        %v4304 = vpop.f32.mrb[0].mxu0
        %v4305 = vpop.f32.mrb[0].mxu0
        %v4306 = vadd.f32 0.0, %v4305
        %v4307 = vpop.f32.mrb[0].mxu0
        %4308 = vdwg.mxu0
        %v4309 = vadd.f32 %v3822, %v4183
        %v4310 = vadd.f32 %v3823, %v4186
        %v4311 = vadd.f32 %v3824, %v4191
        %v4312 = vadd.f32 %v3825, %v4194
        %v4313 = vadd.f32 %v3826, %v4199
        %v4314 = vadd.f32 %v3827, %v4202
        %v4315 = vadd.f32 %v3828, %v4207
        %v4316 = vadd.f32 %v3829, %v4210
        %v4317 = vadd.f32 %v3830, %v4215
        %v4318 = vadd.f32 %v3831, %v4218
        %v4319 = vadd.f32 %v3832, %v4223
        %v4320 = vadd.f32 %v3833, %v4226
        %v4321 = vadd.f32 %v3834, %v4231
        %v4322 = vadd.f32 %v3835, %v4234
        %v4323 = vadd.f32 %v3836, %v4239
        %v4324 = vadd.f32 %v3837, %v4242
        %v4325 = vadd.f32 %v3838, %v4247
        %v4326 = vadd.f32 %v3839, %v4250
        %v4327 = vadd.f32 %v3840, %v4255
        %v4328 = vadd.f32 %v3841, %v4258
        %v4329 = vadd.f32 %v3842, %v4263
        %v4330 = vadd.f32 %v3843, %v4266
        %v4331 = vadd.f32 %v3844, %v4271
        %v4332 = vadd.f32 %v3845, %v4274
        %v4333 = vadd.f32 %v3846, %v4279
        %v4334 = vadd.f32 %v3847, %v4282
        %v4335 = vadd.f32 %v3848, %v4287
        %v4336 = vadd.f32 %v3849, %v4290
        %v4337 = vadd.f32 %v3850, %v4295
        %v4338 = vadd.f32 %v3851, %v4298
        %v4339 = vadd.f32 %v3852, %v4303
        %v4340 = vadd.f32 %v3853, %v4306
        %s4341 = scalar_lea.vmem [#allocation2], 2048
        %v4342 = vld [vmem:[%s4341] sm:$0xff]
        %v4343 = vld [vmem:[%s4341 + $0x8] sm:$0xff]
        %v4344 = vld [vmem:[%s4341 + $0x10] sm:$0xff]
        %v4345 = vld [vmem:[%s4341 + $0x18] sm:$0xff]
        %v4346 = vld [vmem:[%s4341 + $0x20] sm:$0xff]
        %v4347 = vld [vmem:[%s4341 + $0x28] sm:$0xff]
        %v4348 = vld [vmem:[%s4341 + $0x30] sm:$0xff]
        %v4349 = vld [vmem:[%s4341 + $0x38] sm:$0xff]
        %v4350 = vld [vmem:[%s4341 + $0x40] sm:$0xff]
        %v4351 = vld [vmem:[%s4341 + $0x48] sm:$0xff]
        %v4352 = vld [vmem:[%s4341 + $0x50] sm:$0xff]
        %v4353 = vld [vmem:[%s4341 + $0x58] sm:$0xff]
        %v4354 = vld [vmem:[%s4341 + $0x60] sm:$0xff]
        %v4355 = vld [vmem:[%s4341 + $0x68] sm:$0xff]
        %v4356 = vld [vmem:[%s4341 + $0x70] sm:$0xff]
        %v4357 = vld [vmem:[%s4341 + $0x78] sm:$0xff]
        %v4358 = vld [vmem:[%s4341 + $0x80] sm:$0xff]
        %v4359 = vld [vmem:[%s4341 + $0x88] sm:$0xff]
        %v4360 = vld [vmem:[%s4341 + $0x90] sm:$0xff]
        %v4361 = vld [vmem:[%s4341 + $0x98] sm:$0xff]
        %v4362 = vld [vmem:[%s4341 + $0xa0] sm:$0xff]
        %v4363 = vld [vmem:[%s4341 + $0xa8] sm:$0xff]
        %v4364 = vld [vmem:[%s4341 + $0xb0] sm:$0xff]
        %v4365 = vld [vmem:[%s4341 + $0xb8] sm:$0xff]
        %v4366 = vld [vmem:[%s4341 + $0xc0] sm:$0xff]
        %v4367 = vld [vmem:[%s4341 + $0xc8] sm:$0xff]
        %v4368 = vld [vmem:[%s4341 + $0xd0] sm:$0xff]
        %v4369 = vld [vmem:[%s4341 + $0xd8] sm:$0xff]
        %v4370 = vld [vmem:[%s4341 + $0xe0] sm:$0xff]
        %v4371 = vld [vmem:[%s4341 + $0xe8] sm:$0xff]
        %v4372 = vld [vmem:[%s4341 + $0xf0] sm:$0xff]
        %v4373 = vld [vmem:[%s4341 + $0xf8] sm:$0xff]
        %4375 = vset.pattern.permute.xlu0 0
        %4376 = vperm.xlu0 %4375, %v4342
        %v4377 = vpop.permute.xlu0 %4376
        %4380 = vset.pattern.permute.xlu0 0
        %4381 = vperm.xlu0 %4380, %v4343
        %v4382 = vpop.permute.xlu0 %4381
        %4385 = vset.pattern.permute.xlu0 0
        %4386 = vperm.xlu0 %4385, %v4344
        %v4387 = vpop.permute.xlu0 %4386
        %4390 = vset.pattern.permute.xlu0 0
        %4391 = vperm.xlu0 %4390, %v4345
        %v4392 = vpop.permute.xlu0 %4391
        %4395 = vset.pattern.permute.xlu0 0
        %4396 = vperm.xlu0 %4395, %v4346
        %v4397 = vpop.permute.xlu0 %4396
        %4400 = vset.pattern.permute.xlu0 0
        %4401 = vperm.xlu0 %4400, %v4347
        %v4402 = vpop.permute.xlu0 %4401
        %4405 = vset.pattern.permute.xlu0 0
        %4406 = vperm.xlu0 %4405, %v4348
        %v4407 = vpop.permute.xlu0 %4406
        %4410 = vset.pattern.permute.xlu0 0
        %4411 = vperm.xlu0 %4410, %v4349
        %v4412 = vpop.permute.xlu0 %4411
        %4415 = vset.pattern.permute.xlu0 0
        %4416 = vperm.xlu0 %4415, %v4350
        %v4417 = vpop.permute.xlu0 %4416
        %4420 = vset.pattern.permute.xlu0 0
        %4421 = vperm.xlu0 %4420, %v4351
        %v4422 = vpop.permute.xlu0 %4421
        %4425 = vset.pattern.permute.xlu0 0
        %4426 = vperm.xlu0 %4425, %v4352
        %v4427 = vpop.permute.xlu0 %4426
        %4430 = vset.pattern.permute.xlu0 0
        %4431 = vperm.xlu0 %4430, %v4353
        %v4432 = vpop.permute.xlu0 %4431
        %4435 = vset.pattern.permute.xlu0 0
        %4436 = vperm.xlu0 %4435, %v4354
        %v4437 = vpop.permute.xlu0 %4436
        %4440 = vset.pattern.permute.xlu0 0
        %4441 = vperm.xlu0 %4440, %v4355
        %v4442 = vpop.permute.xlu0 %4441
        %4445 = vset.pattern.permute.xlu0 0
        %4446 = vperm.xlu0 %4445, %v4356
        %v4447 = vpop.permute.xlu0 %4446
        %4450 = vset.pattern.permute.xlu0 0
        %4451 = vperm.xlu0 %4450, %v4357
        %v4452 = vpop.permute.xlu0 %4451
        %4455 = vset.pattern.permute.xlu0 0
        %4456 = vperm.xlu0 %4455, %v4358
        %v4457 = vpop.permute.xlu0 %4456
        %4460 = vset.pattern.permute.xlu0 0
        %4461 = vperm.xlu0 %4460, %v4359
        %v4462 = vpop.permute.xlu0 %4461
        %4465 = vset.pattern.permute.xlu0 0
        %4466 = vperm.xlu0 %4465, %v4360
        %v4467 = vpop.permute.xlu0 %4466
        %4470 = vset.pattern.permute.xlu0 0
        %4471 = vperm.xlu0 %4470, %v4361
        %v4472 = vpop.permute.xlu0 %4471
        %4475 = vset.pattern.permute.xlu0 0
        %4476 = vperm.xlu0 %4475, %v4362
        %v4477 = vpop.permute.xlu0 %4476
        %4480 = vset.pattern.permute.xlu0 0
        %4481 = vperm.xlu0 %4480, %v4363
        %v4482 = vpop.permute.xlu0 %4481
        %4485 = vset.pattern.permute.xlu0 0
        %4486 = vperm.xlu0 %4485, %v4364
        %v4487 = vpop.permute.xlu0 %4486
        %4490 = vset.pattern.permute.xlu0 0
        %4491 = vperm.xlu0 %4490, %v4365
        %v4492 = vpop.permute.xlu0 %4491
        %4495 = vset.pattern.permute.xlu0 0
        %4496 = vperm.xlu0 %4495, %v4366
        %v4497 = vpop.permute.xlu0 %4496
        %4500 = vset.pattern.permute.xlu0 0
        %4501 = vperm.xlu0 %4500, %v4367
        %v4502 = vpop.permute.xlu0 %4501
        %4505 = vset.pattern.permute.xlu0 0
        %4506 = vperm.xlu0 %4505, %v4368
        %v4507 = vpop.permute.xlu0 %4506
        %4510 = vset.pattern.permute.xlu0 0
        %4511 = vperm.xlu0 %4510, %v4369
        %v4512 = vpop.permute.xlu0 %4511
        %4515 = vset.pattern.permute.xlu0 0
        %4516 = vperm.xlu0 %4515, %v4370
        %v4517 = vpop.permute.xlu0 %4516
        %4520 = vset.pattern.permute.xlu0 0
        %4521 = vperm.xlu0 %4520, %v4371
        %v4522 = vpop.permute.xlu0 %4521
        %4525 = vset.pattern.permute.xlu0 0
        %4526 = vperm.xlu0 %4525, %v4372
        %v4527 = vpop.permute.xlu0 %4526
        %4530 = vset.pattern.permute.xlu0 0
        %4531 = vperm.xlu0 %4530, %v4373
        %v4532 = vpop.permute.xlu0 %4531
        %v4534 = vmul.f32 %v1415, %v4377
        %v4535 = vmul.f32 %v1414, %v4382
        %v4536 = vmul.f32 %v1413, %v4387
        %v4537 = vmul.f32 %v1412, %v4392
        %v4538 = vmul.f32 %v1411, %v4397
        %v4539 = vmul.f32 %v1410, %v4402
        %v4540 = vmul.f32 %v1409, %v4407
        %v4541 = vmul.f32 %v1408, %v4412
        %v4542 = vmul.f32 %v1407, %v4417
        %v4543 = vmul.f32 %v1406, %v4422
        %v4544 = vmul.f32 %v1405, %v4427
        %v4545 = vmul.f32 %v1404, %v4432
        %v4546 = vmul.f32 %v1403, %v4437
        %v4547 = vmul.f32 %v1402, %v4442
        %v4548 = vmul.f32 %v1401, %v4447
        %v4549 = vmul.f32 %v1400, %v4452
        %v4550 = vmul.f32 %v1399, %v4457
        %v4551 = vmul.f32 %v1398, %v4462
        %v4552 = vmul.f32 %v1397, %v4467
        %v4553 = vmul.f32 %v1396, %v4472
        %v4554 = vmul.f32 %v1395, %v4477
        %v4555 = vmul.f32 %v1394, %v4482
        %v4556 = vmul.f32 %v1393, %v4487
        %v4557 = vmul.f32 %v1392, %v4492
        %v4558 = vmul.f32 %v1391, %v4497
        %v4559 = vmul.f32 %v1390, %v4502
        %v4560 = vmul.f32 %v1389, %v4507
        %v4561 = vmul.f32 %v1388, %v4512
        %v4562 = vmul.f32 %v1387, %v4517
        %v4563 = vmul.f32 %v1418, %v4522
        %v4564 = vmul.f32 %v1417, %v4527
        %v4565 = vmul.f32 %v1416, %v4532
        %v4566 = vpack.c.bf16 %v4535, %v4534
        %v4567 = vpack.c.bf16 %v4537, %v4536
        %v4568 = vpack.c.bf16 %v4539, %v4538
        %v4569 = vpack.c.bf16 %v4541, %v4540
        %v4570 = vpack.c.bf16 %v4543, %v4542
        %v4571 = vpack.c.bf16 %v4545, %v4544
        %v4572 = vpack.c.bf16 %v4547, %v4546
        %v4573 = vpack.c.bf16 %v4549, %v4548
        %v4574 = vpack.c.bf16 %v4551, %v4550
        %v4575 = vpack.c.bf16 %v4553, %v4552
        %v4576 = vpack.c.bf16 %v4555, %v4554
        %v4577 = vpack.c.bf16 %v4557, %v4556
        %v4578 = vpack.c.bf16 %v4559, %v4558
        %v4579 = vpack.c.bf16 %v4561, %v4560
        %v4580 = vpack.c.bf16 %v4563, %v4562
        %v4581 = vpack.c.bf16 %v4565, %v4564
        %s4582 = scalar_lea.vmem %s2, 16
        %v4583 = vld [vmem:[%s4582] sm:$0x3]
        %v4585 = vsel %vm928, %v4566, 0
        %v4588 = vsel %vm928, %v4567, 0
        %v4591 = vsel %vm928, %v4568, 0
        %v4594 = vsel %vm928, %v4569, 0
        %v4597 = vsel %vm928, %v4570, 0
        %v4600 = vsel %vm928, %v4571, 0
        %v4603 = vsel %vm928, %v4572, 0
        %v4606 = vsel %vm928, %v4573, 0
        %v4609 = vsel %vm928, %v4574, 0
        %v4612 = vsel %vm928, %v4575, 0
        %v4615 = vsel %vm928, %v4576, 0
        %v4618 = vsel %vm928, %v4577, 0
        %v4621 = vsel %vm928, %v4578, 0
        %v4624 = vsel %vm928, %v4579, 0
        %v4627 = vsel %vm928, %v4580, 0
        %v4630 = vsel %vm928, %v4581, 0
        %v4633 = vsel %vm977, %v4583, 0
        %4635 = vmatprep.subr.bf16.mxu0 0
        %4636 = vmatpush1.bf16.msra.mxu0 %v4633
        %4637 = vmatprep.subr.bf16.mxu0 0
        %4638 = vmatpush1.bf16.msra.mxu0 0
        %4639 = vmatprep.subr.bf16.mxu0 0
        %4640 = vmatpush1.bf16.msra.mxu0 0
        %4641 = vmatprep.subr.bf16.mxu0 0
        %4642 = vmatpush1.bf16.msra.mxu0 0
        %4643 = vmatprep.subr.bf16.mxu0 0
        %4644 = vmatpush1.bf16.msra.mxu0 0
        %4645 = vmatprep.subr.bf16.mxu0 0
        %4646 = vmatpush1.bf16.msra.mxu0 0
        %4647 = vmatprep.subr.bf16.mxu0 0
        %4648 = vmatpush1.bf16.msra.mxu0 0
        %4649 = vmatprep.subr.bf16.mxu0 0
        %4650 = vmatpush1.bf16.msra.mxu0 0
        %4651 = vmatprep.subr.bf16.mxu0 0
        %4652 = vmatpush1.bf16.msra.mxu0 0
        %4653 = vmatprep.subr.bf16.mxu0 0
        %4654 = vmatpush1.bf16.msra.mxu0 0
        %4655 = vmatprep.subr.bf16.mxu0 0
        %4656 = vmatpush1.bf16.msra.mxu0 0
        %4657 = vmatprep.subr.bf16.mxu0 0
        %4658 = vmatpush1.bf16.msra.mxu0 0
        %4659 = vmatprep.subr.bf16.mxu0 0
        %4660 = vmatpush1.bf16.msra.mxu0 0
        %4661 = vmatprep.subr.bf16.mxu0 0
        %4662 = vmatpush1.bf16.msra.mxu0 0
        %4663 = vmatprep.subr.bf16.mxu0 0
        %4664 = vmatpush1.bf16.msra.mxu0 0
        %4665 = vmatprep.subr.bf16.mxu0 0
        %4666 = vmatpush1.bf16.msra.mxu0 0
        %4667 = vmatprep.mubr.bf16.mxu0 0
        %4668 = vmatmul.mubr.bf16.gmra.mrb[0].mxu0 %v4585
        %v4669 = vpop.f32.mrb[0].mxu0
        %v4670 = vadd.f32 0.0, %v4669
        %v4671 = vpop.f32.mrb[0].mxu0
        %v4672 = vpop.f32.mrb[0].mxu0
        %v4673 = vadd.f32 0.0, %v4672
        %v4674 = vpop.f32.mrb[0].mxu0
        %4675 = vmatprep.mubr.bf16.mxu0 0
        %4676 = vmatmul.mubr.bf16.gmra.mrb[0].mxu0 %v4588
        %v4677 = vpop.f32.mrb[0].mxu0
        %v4678 = vadd.f32 0.0, %v4677
        %v4679 = vpop.f32.mrb[0].mxu0
        %v4680 = vpop.f32.mrb[0].mxu0
        %v4681 = vadd.f32 0.0, %v4680
        %v4682 = vpop.f32.mrb[0].mxu0
        %4683 = vmatprep.mubr.bf16.mxu0 0
        %4684 = vmatmul.mubr.bf16.gmra.mrb[0].mxu0 %v4591
        %v4685 = vpop.f32.mrb[0].mxu0
        %v4686 = vadd.f32 0.0, %v4685
        %v4687 = vpop.f32.mrb[0].mxu0
        %v4688 = vpop.f32.mrb[0].mxu0
        %v4689 = vadd.f32 0.0, %v4688
        %v4690 = vpop.f32.mrb[0].mxu0
        %4691 = vmatprep.mubr.bf16.mxu0 0
        %4692 = vmatmul.mubr.bf16.gmra.mrb[0].mxu0 %v4594
        %v4693 = vpop.f32.mrb[0].mxu0
        %v4694 = vadd.f32 0.0, %v4693
        %v4695 = vpop.f32.mrb[0].mxu0
        %v4696 = vpop.f32.mrb[0].mxu0
        %v4697 = vadd.f32 0.0, %v4696
        %v4698 = vpop.f32.mrb[0].mxu0
        %4699 = vmatprep.mubr.bf16.mxu0 0
        %4700 = vmatmul.mubr.bf16.gmra.mrb[0].mxu0 %v4597
        %v4701 = vpop.f32.mrb[0].mxu0
        %v4702 = vadd.f32 0.0, %v4701
        %v4703 = vpop.f32.mrb[0].mxu0
        %v4704 = vpop.f32.mrb[0].mxu0
        %v4705 = vadd.f32 0.0, %v4704
        %v4706 = vpop.f32.mrb[0].mxu0
        %4707 = vmatprep.mubr.bf16.mxu0 0
        %4708 = vmatmul.mubr.bf16.gmra.mrb[0].mxu0 %v4600
        %v4709 = vpop.f32.mrb[0].mxu0
        %v4710 = vadd.f32 0.0, %v4709
        %v4711 = vpop.f32.mrb[0].mxu0
        %v4712 = vpop.f32.mrb[0].mxu0
        %v4713 = vadd.f32 0.0, %v4712
        %v4714 = vpop.f32.mrb[0].mxu0
        %4715 = vmatprep.mubr.bf16.mxu0 0
        %4716 = vmatmul.mubr.bf16.gmra.mrb[0].mxu0 %v4603
        %v4717 = vpop.f32.mrb[0].mxu0
        %v4718 = vadd.f32 0.0, %v4717
        %v4719 = vpop.f32.mrb[0].mxu0
        %v4720 = vpop.f32.mrb[0].mxu0
        %v4721 = vadd.f32 0.0, %v4720
        %v4722 = vpop.f32.mrb[0].mxu0
        %4723 = vmatprep.mubr.bf16.mxu0 0
        %4724 = vmatmul.mubr.bf16.gmra.mrb[0].mxu0 %v4606
        %v4725 = vpop.f32.mrb[0].mxu0
        %v4726 = vadd.f32 0.0, %v4725
        %v4727 = vpop.f32.mrb[0].mxu0
        %v4728 = vpop.f32.mrb[0].mxu0
        %v4729 = vadd.f32 0.0, %v4728
        %v4730 = vpop.f32.mrb[0].mxu0
        %4731 = vmatprep.mubr.bf16.mxu0 0
        %4732 = vmatmul.mubr.bf16.gmra.mrb[0].mxu0 %v4609
        %v4733 = vpop.f32.mrb[0].mxu0
        %v4734 = vadd.f32 0.0, %v4733
        %v4735 = vpop.f32.mrb[0].mxu0
        %v4736 = vpop.f32.mrb[0].mxu0
        %v4737 = vadd.f32 0.0, %v4736
        %v4738 = vpop.f32.mrb[0].mxu0
        %4739 = vmatprep.mubr.bf16.mxu0 0
        %4740 = vmatmul.mubr.bf16.gmra.mrb[0].mxu0 %v4612
        %v4741 = vpop.f32.mrb[0].mxu0
        %v4742 = vadd.f32 0.0, %v4741
        %v4743 = vpop.f32.mrb[0].mxu0
        %v4744 = vpop.f32.mrb[0].mxu0
        %v4745 = vadd.f32 0.0, %v4744
        %v4746 = vpop.f32.mrb[0].mxu0
        %4747 = vmatprep.mubr.bf16.mxu0 0
        %4748 = vmatmul.mubr.bf16.gmra.mrb[0].mxu0 %v4615
        %v4749 = vpop.f32.mrb[0].mxu0
        %v4750 = vadd.f32 0.0, %v4749
        %v4751 = vpop.f32.mrb[0].mxu0
        %v4752 = vpop.f32.mrb[0].mxu0
        %v4753 = vadd.f32 0.0, %v4752
        %v4754 = vpop.f32.mrb[0].mxu0
        %4755 = vmatprep.mubr.bf16.mxu0 0
        %4756 = vmatmul.mubr.bf16.gmra.mrb[0].mxu0 %v4618
        %v4757 = vpop.f32.mrb[0].mxu0
        %v4758 = vadd.f32 0.0, %v4757
        %v4759 = vpop.f32.mrb[0].mxu0
        %v4760 = vpop.f32.mrb[0].mxu0
        %v4761 = vadd.f32 0.0, %v4760
        %v4762 = vpop.f32.mrb[0].mxu0
        %4763 = vmatprep.mubr.bf16.mxu0 0
        %4764 = vmatmul.mubr.bf16.gmra.mrb[0].mxu0 %v4621
        %v4765 = vpop.f32.mrb[0].mxu0
        %v4766 = vadd.f32 0.0, %v4765
        %v4767 = vpop.f32.mrb[0].mxu0
        %v4768 = vpop.f32.mrb[0].mxu0
        %v4769 = vadd.f32 0.0, %v4768
        %v4770 = vpop.f32.mrb[0].mxu0
        %4771 = vmatprep.mubr.bf16.mxu0 0
        %4772 = vmatmul.mubr.bf16.gmra.mrb[0].mxu0 %v4624
        %v4773 = vpop.f32.mrb[0].mxu0
        %v4774 = vadd.f32 0.0, %v4773
        %v4775 = vpop.f32.mrb[0].mxu0
        %v4776 = vpop.f32.mrb[0].mxu0
        %v4777 = vadd.f32 0.0, %v4776
        %v4778 = vpop.f32.mrb[0].mxu0
        %4779 = vmatprep.mubr.bf16.mxu0 0
        %4780 = vmatmul.mubr.bf16.gmra.mrb[0].mxu0 %v4627
        %v4781 = vpop.f32.mrb[0].mxu0
        %v4782 = vadd.f32 0.0, %v4781
        %v4783 = vpop.f32.mrb[0].mxu0
        %v4784 = vpop.f32.mrb[0].mxu0
        %v4785 = vadd.f32 0.0, %v4784
        %v4786 = vpop.f32.mrb[0].mxu0
        %4787 = vmatprep.mubr.bf16.mxu0 0
        %4788 = vmatmul.mubr.bf16.gmra.mrb[0].mxu0 %v4630
        %v4789 = vpop.f32.mrb[0].mxu0
        %v4790 = vadd.f32 0.0, %v4789
        %v4791 = vpop.f32.mrb[0].mxu0
        %v4792 = vpop.f32.mrb[0].mxu0
        %v4793 = vadd.f32 0.0, %v4792
        %v4794 = vpop.f32.mrb[0].mxu0
        %4795 = vdwg.mxu0
        %v4796 = vadd.f32 %v4309, %v4670
        %v4797 = vadd.f32 %v4310, %v4673
        %v4798 = vadd.f32 %v4311, %v4678
        %v4799 = vadd.f32 %v4312, %v4681
        %v4800 = vadd.f32 %v4313, %v4686
        %v4801 = vadd.f32 %v4314, %v4689
        %v4802 = vadd.f32 %v4315, %v4694
        %v4803 = vadd.f32 %v4316, %v4697
        %v4804 = vadd.f32 %v4317, %v4702
        %v4805 = vadd.f32 %v4318, %v4705
        %v4806 = vadd.f32 %v4319, %v4710
        %v4807 = vadd.f32 %v4320, %v4713
        %v4808 = vadd.f32 %v4321, %v4718
        %v4809 = vadd.f32 %v4322, %v4721
        %v4810 = vadd.f32 %v4323, %v4726
        %v4811 = vadd.f32 %v4324, %v4729
        %v4812 = vadd.f32 %v4325, %v4734
        %v4813 = vadd.f32 %v4326, %v4737
        %v4814 = vadd.f32 %v4327, %v4742
        %v4815 = vadd.f32 %v4328, %v4745
        %v4816 = vadd.f32 %v4329, %v4750
        %v4817 = vadd.f32 %v4330, %v4753
        %v4818 = vadd.f32 %v4331, %v4758
        %v4819 = vadd.f32 %v4332, %v4761
        %v4820 = vadd.f32 %v4333, %v4766
        %v4821 = vadd.f32 %v4334, %v4769
        %v4822 = vadd.f32 %v4335, %v4774
        %v4823 = vadd.f32 %v4336, %v4777
        %v4824 = vadd.f32 %v4337, %v4782
        %v4825 = vadd.f32 %v4338, %v4785
        %v4826 = vadd.f32 %v4339, %v4790
        %v4827 = vadd.f32 %v4340, %v4793
        %v4828 = vld [vmem:[#allocation5] sm:$0x1]
        %v4830 = vlaneseq
        %v4831 = vshrl.u32 %v4830, 7
        %v4832 = vsub.s32 0, %v4831
        %v4833 = vrot.slane %v4828, %v4832
        %v4835 = vadd.f32 %v4796, %v4833
        %v4836 = vadd.f32 %v4797, %v4833
        %v4837 = vadd.f32 %v4798, %v4833
        %v4838 = vadd.f32 %v4799, %v4833
        %v4839 = vadd.f32 %v4800, %v4833
        %v4840 = vadd.f32 %v4801, %v4833
        %v4841 = vadd.f32 %v4802, %v4833
        %v4842 = vadd.f32 %v4803, %v4833
        %v4843 = vadd.f32 %v4804, %v4833
        %v4844 = vadd.f32 %v4805, %v4833
        %v4845 = vadd.f32 %v4806, %v4833
        %v4846 = vadd.f32 %v4807, %v4833
        %v4847 = vadd.f32 %v4808, %v4833
        %v4848 = vadd.f32 %v4809, %v4833
        %v4849 = vadd.f32 %v4810, %v4833
        %v4850 = vadd.f32 %v4811, %v4833
        %v4851 = vadd.f32 %v4812, %v4833
        %v4852 = vadd.f32 %v4813, %v4833
        %v4853 = vadd.f32 %v4814, %v4833
        %v4854 = vadd.f32 %v4815, %v4833
        %v4855 = vadd.f32 %v4816, %v4833
        %v4856 = vadd.f32 %v4817, %v4833
        %v4857 = vadd.f32 %v4818, %v4833
        %v4858 = vadd.f32 %v4819, %v4833
        %v4859 = vadd.f32 %v4820, %v4833
        %v4860 = vadd.f32 %v4821, %v4833
        %v4861 = vadd.f32 %v4822, %v4833
        %v4862 = vadd.f32 %v4823, %v4833
        %v4863 = vadd.f32 %v4824, %v4833
        %v4864 = vadd.f32 %v4825, %v4833
        %v4865 = vadd.f32 %v4826, %v4833
        %v4866 = vadd.f32 %v4827, %v4833
        %v4867 = vmax.f32 %v4835, 0.0
        %v4868 = vmax.f32 %v4836, 0.0
        %v4869 = vmax.f32 %v4837, 0.0
        %v4870 = vmax.f32 %v4838, 0.0
        %v4871 = vmax.f32 %v4839, 0.0
        %v4872 = vmax.f32 %v4840, 0.0
        %v4873 = vmax.f32 %v4841, 0.0
        %v4874 = vmax.f32 %v4842, 0.0
        %v4875 = vmax.f32 %v4843, 0.0
        %v4876 = vmax.f32 %v4844, 0.0
        %v4877 = vmax.f32 %v4845, 0.0
        %v4878 = vmax.f32 %v4846, 0.0
        %v4879 = vmax.f32 %v4847, 0.0
        %v4880 = vmax.f32 %v4848, 0.0
        %v4881 = vmax.f32 %v4849, 0.0
        %v4882 = vmax.f32 %v4850, 0.0
        %v4883 = vmax.f32 %v4851, 0.0
        %v4884 = vmax.f32 %v4852, 0.0
        %v4885 = vmax.f32 %v4853, 0.0
        %v4886 = vmax.f32 %v4854, 0.0
        %v4887 = vmax.f32 %v4855, 0.0
        %v4888 = vmax.f32 %v4856, 0.0
        %v4889 = vmax.f32 %v4857, 0.0
        %v4890 = vmax.f32 %v4858, 0.0
        %v4891 = vmax.f32 %v4859, 0.0
        %v4892 = vmax.f32 %v4860, 0.0
        %v4893 = vmax.f32 %v4861, 0.0
        %v4894 = vmax.f32 %v4862, 0.0
        %v4895 = vmax.f32 %v4863, 0.0
        %v4896 = vmax.f32 %v4864, 0.0
        %v4897 = vmax.f32 %v4865, 0.0
        %v4898 = vmax.f32 %v4866, 0.0
        %v4899 = vrot.slane %v4867, 7
        %v4900 = vrot.slane %v4868, 7
        %v4901 = vrot.slane %v4869, 7
        %v4902 = vrot.slane %v4870, 7
        %v4903 = vrot.slane %v4871, 7
        %v4904 = vrot.slane %v4872, 7
        %v4905 = vrot.slane %v4873, 7
        %v4906 = vrot.slane %v4874, 7
        %v4907 = vrot.slane %v4875, 7
        %v4908 = vrot.slane %v4876, 7
        %v4909 = vrot.slane %v4877, 7
        %v4910 = vrot.slane %v4878, 7
        %v4911 = vrot.slane %v4879, 7
        %v4912 = vrot.slane %v4880, 7
        %v4913 = vrot.slane %v4881, 7
        %v4914 = vrot.slane %v4882, 7
        %v4915 = vrot.slane %v4883, 7
        %v4916 = vrot.slane %v4884, 7
        %v4917 = vrot.slane %v4885, 7
        %v4918 = vrot.slane %v4886, 7
        %v4919 = vrot.slane %v4887, 7
        %v4920 = vrot.slane %v4888, 7
        %v4921 = vrot.slane %v4889, 7
        %v4922 = vrot.slane %v4890, 7
        %v4923 = vrot.slane %v4891, 7
        %v4924 = vrot.slane %v4892, 7
        %v4925 = vrot.slane %v4893, 7
        %v4926 = vrot.slane %v4894, 7
        %v4927 = vrot.slane %v4895, 7
        %v4928 = vrot.slane %v4896, 7
        %v4929 = vrot.slane %v4897, 7
        %v4930 = vrot.slane %v4898, 7
        %v4931 = vsel %vm411, %v4929, %v4930
        %v4932 = vsel %vm411, %v4928, %v4929
        %v4933 = vsel %vm411, %v4927, %v4928
        %v4934 = vsel %vm411, %v4926, %v4927
        %v4935 = vsel %vm411, %v4925, %v4926
        %v4936 = vsel %vm411, %v4924, %v4925
        %v4937 = vsel %vm411, %v4923, %v4924
        %v4938 = vsel %vm411, %v4922, %v4923
        %v4939 = vsel %vm411, %v4921, %v4922
        %v4940 = vsel %vm411, %v4920, %v4921
        %v4941 = vsel %vm411, %v4919, %v4920
        %v4942 = vsel %vm411, %v4918, %v4919
        %v4943 = vsel %vm411, %v4917, %v4918
        %v4944 = vsel %vm411, %v4916, %v4917
        %v4945 = vsel %vm411, %v4915, %v4916
        %v4946 = vsel %vm411, %v4914, %v4915
        %v4947 = vsel %vm411, %v4913, %v4914
        %v4948 = vsel %vm411, %v4912, %v4913
        %v4949 = vsel %vm411, %v4911, %v4912
        %v4950 = vsel %vm411, %v4910, %v4911
        %v4951 = vsel %vm411, %v4909, %v4910
        %v4952 = vsel %vm411, %v4908, %v4909
        %v4953 = vsel %vm411, %v4907, %v4908
        %v4954 = vsel %vm411, %v4906, %v4907
        %v4955 = vsel %vm411, %v4905, %v4906
        %v4956 = vsel %vm411, %v4904, %v4905
        %v4957 = vsel %vm411, %v4903, %v4904
        %v4958 = vsel %vm411, %v4902, %v4903
        %v4959 = vsel %vm411, %v4901, %v4902
        %v4960 = vsel %vm411, %v4900, %v4901
        %v4961 = vsel %vm411, %v4899, %v4900
        %v4962 = vsel %vm411, %v4930, %v4899
        %v4963 = vmul.f32 %v4932, %v479
        %v4964 = vmul.f32 %v4931, %v484
        %v4965 = vmul.f32 %v4962, %v489
        %v4966 = vmul.f32 %v4961, %v494
        %v4967 = vmul.f32 %v4960, %v499
        %v4968 = vmul.f32 %v4959, %v504
        %v4969 = vmul.f32 %v4958, %v509
        %v4970 = vmul.f32 %v4957, %v514
        %v4971 = vmul.f32 %v4956, %v519
        %v4972 = vmul.f32 %v4955, %v524
        %v4973 = vmul.f32 %v4954, %v529
        %v4974 = vmul.f32 %v4953, %v534
        %v4975 = vmul.f32 %v4952, %v539
        %v4976 = vmul.f32 %v4951, %v544
        %v4977 = vmul.f32 %v4950, %v549
        %v4978 = vmul.f32 %v4949, %v554
        %v4979 = vmul.f32 %v4948, %v559
        %v4980 = vmul.f32 %v4947, %v564
        %v4981 = vmul.f32 %v4946, %v569
        %v4982 = vmul.f32 %v4945, %v574
        %v4983 = vmul.f32 %v4944, %v579
        %v4984 = vmul.f32 %v4943, %v584
        %v4985 = vmul.f32 %v4942, %v589
        %v4986 = vmul.f32 %v4941, %v594
        %v4987 = vmul.f32 %v4940, %v599
        %v4988 = vmul.f32 %v4939, %v604
        %v4989 = vmul.f32 %v4938, %v609
        %v4990 = vmul.f32 %v4937, %v614
        %v4991 = vmul.f32 %v4936, %v619
        %v4992 = vmul.f32 %v4935, %v624
        %v4993 = vmul.f32 %v4934, %v629
        %v4994 = vmul.f32 %v4933, %v634
        %v4995 = vpack.c.bf16 %v4964, %v4963
        %v4996 = vpack.c.bf16 %v4966, %v4965
        %v4997 = vpack.c.bf16 %v4968, %v4967
        %v4998 = vpack.c.bf16 %v4970, %v4969
        %v4999 = vpack.c.bf16 %v4972, %v4971
        %v5000 = vpack.c.bf16 %v4974, %v4973
        %v5001 = vpack.c.bf16 %v4976, %v4975
        %v5002 = vpack.c.bf16 %v4978, %v4977
        %v5003 = vpack.c.bf16 %v4980, %v4979
        %v5004 = vpack.c.bf16 %v4982, %v4981
        %v5005 = vpack.c.bf16 %v4984, %v4983
        %v5006 = vpack.c.bf16 %v4986, %v4985
        %v5007 = vpack.c.bf16 %v4988, %v4987
        %v5008 = vpack.c.bf16 %v4990, %v4989
        %v5009 = vpack.c.bf16 %v4992, %v4991
        %v5010 = vpack.c.bf16 %v4994, %v4993
        %v5011 = vld [vmem:[%s4] sm:$0xf]
        %v5012 = vld [vmem:[%s4 + $0x4] sm:$0xf]
        %v5013 = vld [vmem:[%s4 + $0x8] sm:$0xf]
        %v5014 = vld [vmem:[%s4 + $0xc] sm:$0xf]
        %v5015 = vmul.f32 %v4897, %v721
        %v5016 = vmul.f32 %v4898, %v726
        %v5017 = vmul.f32 %v4867, %v731
        %v5018 = vmul.f32 %v4868, %v736
        %v5019 = vmul.f32 %v4869, %v741
        %v5020 = vmul.f32 %v4870, %v746
        %v5021 = vmul.f32 %v4871, %v751
        %v5022 = vmul.f32 %v4872, %v756
        %v5023 = vmul.f32 %v4873, %v761
        %v5024 = vmul.f32 %v4874, %v766
        %v5025 = vmul.f32 %v4875, %v771
        %v5026 = vmul.f32 %v4876, %v776
        %v5027 = vmul.f32 %v4877, %v781
        %v5028 = vmul.f32 %v4878, %v786
        %v5029 = vmul.f32 %v4879, %v791
        %v5030 = vmul.f32 %v4880, %v796
        %v5031 = vmul.f32 %v4881, %v801
        %v5032 = vmul.f32 %v4882, %v806
        %v5033 = vmul.f32 %v4883, %v811
        %v5034 = vmul.f32 %v4884, %v816
        %v5035 = vmul.f32 %v4885, %v821
        %v5036 = vmul.f32 %v4886, %v826
        %v5037 = vmul.f32 %v4887, %v831
        %v5038 = vmul.f32 %v4888, %v836
        %v5039 = vmul.f32 %v4889, %v841
        %v5040 = vmul.f32 %v4890, %v846
        %v5041 = vmul.f32 %v4891, %v851
        %v5042 = vmul.f32 %v4892, %v856
        %v5043 = vmul.f32 %v4893, %v861
        %v5044 = vmul.f32 %v4894, %v866
        %v5045 = vmul.f32 %v4895, %v871
        %v5046 = vmul.f32 %v4896, %v876
        %v5047 = vpack.c.bf16 %v5016, %v5015
        %v5048 = vpack.c.bf16 %v5018, %v5017
        %v5049 = vpack.c.bf16 %v5020, %v5019
        %v5050 = vpack.c.bf16 %v5022, %v5021
        %v5051 = vpack.c.bf16 %v5024, %v5023
        %v5052 = vpack.c.bf16 %v5026, %v5025
        %v5053 = vpack.c.bf16 %v5028, %v5027
        %v5054 = vpack.c.bf16 %v5030, %v5029
        %v5055 = vpack.c.bf16 %v5032, %v5031
        %v5056 = vpack.c.bf16 %v5034, %v5033
        %v5057 = vpack.c.bf16 %v5036, %v5035
        %v5058 = vpack.c.bf16 %v5038, %v5037
        %v5059 = vpack.c.bf16 %v5040, %v5039
        %v5060 = vpack.c.bf16 %v5042, %v5041
        %v5061 = vpack.c.bf16 %v5044, %v5043
        %v5062 = vpack.c.bf16 %v5046, %v5045
        %s5063 = scalar_lea.vmem %s4, 16
        %v5064 = vld [vmem:[%s5063] sm:$0xf]
        %v5065 = vld [vmem:[%s5063 + $0x4] sm:$0xf]
        %v5066 = vld [vmem:[%s5063 + $0x8] sm:$0xf]
        %v5067 = vld [vmem:[%s5063 + $0xc] sm:$0xf]
        %v5072 = vunpack.c.l.b16 %v5064
        %v5073 = vunpack.c.l.b16 %v5065
        %v5074 = vunpack.c.l.b16 %v5066
        %v5075 = vunpack.c.l.b16 %v5067
        %v5076 = vpack.c.b16 %v5073, %v5072
        %v5077 = vpack.c.b16 %v5075, %v5074
        %vm5080 = vcmask 261120
        %v5082 = vsel %vm5080, %v5047, 0
        %v5085 = vsel %vm5080, %v5048, 0
        %v5088 = vsel %vm5080, %v5049, 0
        %v5091 = vsel %vm5080, %v5050, 0
        %v5094 = vsel %vm5080, %v5051, 0
        %v5097 = vsel %vm5080, %v5052, 0
        %v5100 = vsel %vm5080, %v5053, 0
        %v5103 = vsel %vm5080, %v5054, 0
        %v5106 = vsel %vm5080, %v5055, 0
        %v5109 = vsel %vm5080, %v5056, 0
        %v5112 = vsel %vm5080, %v5057, 0
        %v5115 = vsel %vm5080, %v5058, 0
        %v5118 = vsel %vm5080, %v5059, 0
        %v5121 = vsel %vm5080, %v5060, 0
        %v5124 = vsel %vm5080, %v5061, 0
        %v5127 = vsel %vm5080, %v5062, 0
        %5129 = vmatprep.subr.bf16.mxu0 0
        %5130 = vmatpush1.bf16.msra.mxu0 %v5076
        %5131 = vmatprep.subr.bf16.mxu0 0
        %5132 = vmatpush1.bf16.msra.mxu0 %v5077
        %5133 = vmatprep.subr.bf16.mxu0 0
        %5134 = vmatpush1.bf16.msra.mxu0 0
        %5135 = vmatprep.subr.bf16.mxu0 0
        %5136 = vmatpush1.bf16.msra.mxu0 0
        %5137 = vmatprep.subr.bf16.mxu0 0
        %5138 = vmatpush1.bf16.msra.mxu0 0
        %5139 = vmatprep.subr.bf16.mxu0 0
        %5140 = vmatpush1.bf16.msra.mxu0 0
        %5141 = vmatprep.subr.bf16.mxu0 0
        %5142 = vmatpush1.bf16.msra.mxu0 0
        %5143 = vmatprep.subr.bf16.mxu0 0
        %5144 = vmatpush1.bf16.msra.mxu0 0
        %5145 = vmatprep.subr.bf16.mxu0 0
        %5146 = vmatpush1.bf16.msra.mxu0 0
        %5147 = vmatprep.subr.bf16.mxu0 0
        %5148 = vmatpush1.bf16.msra.mxu0 0
        %5149 = vmatprep.subr.bf16.mxu0 0
        %5150 = vmatpush1.bf16.msra.mxu0 0
        %5151 = vmatprep.subr.bf16.mxu0 0
        %5152 = vmatpush1.bf16.msra.mxu0 0
        %5153 = vmatprep.subr.bf16.mxu0 0
        %5154 = vmatpush1.bf16.msra.mxu0 0
        %5155 = vmatprep.subr.bf16.mxu0 0
        %5156 = vmatpush1.bf16.msra.mxu0 0
        %5157 = vmatprep.subr.bf16.mxu0 0
        %5158 = vmatpush1.bf16.msra.mxu0 0
        %5159 = vmatprep.subr.bf16.mxu0 0
        %5160 = vmatpush1.bf16.msra.mxu0 0
        %5161 = vmatprep.mubr.bf16.mxu0 0
        %5162 = vmatmul.mubr.bf16.gmra.mrb[0].mxu0 %v5082
        %v5163 = vpop.f32.mrb[0].mxu0
        %v5164 = vadd.f32 0.0, %v5163
        %v5165 = vpop.f32.mrb[0].mxu0
        %v5166 = vpop.f32.mrb[0].mxu0
        %v5167 = vadd.f32 0.0, %v5166
        %v5168 = vpop.f32.mrb[0].mxu0
        %5169 = vmatprep.mubr.bf16.mxu0 0
        %5170 = vmatmul.mubr.bf16.gmra.mrb[0].mxu0 %v5085
        %v5171 = vpop.f32.mrb[0].mxu0
        %v5172 = vadd.f32 0.0, %v5171
        %v5173 = vpop.f32.mrb[0].mxu0
        %v5174 = vpop.f32.mrb[0].mxu0
        %v5175 = vadd.f32 0.0, %v5174
        %v5176 = vpop.f32.mrb[0].mxu0
        %5177 = vmatprep.mubr.bf16.mxu0 0
        %5178 = vmatmul.mubr.bf16.gmra.mrb[0].mxu0 %v5088
        %v5179 = vpop.f32.mrb[0].mxu0
        %v5180 = vadd.f32 0.0, %v5179
        %v5181 = vpop.f32.mrb[0].mxu0
        %v5182 = vpop.f32.mrb[0].mxu0
        %v5183 = vadd.f32 0.0, %v5182
        %v5184 = vpop.f32.mrb[0].mxu0
        %5185 = vmatprep.mubr.bf16.mxu0 0
        %5186 = vmatmul.mubr.bf16.gmra.mrb[0].mxu0 %v5091
        %v5187 = vpop.f32.mrb[0].mxu0
        %v5188 = vadd.f32 0.0, %v5187
        %v5189 = vpop.f32.mrb[0].mxu0
        %v5190 = vpop.f32.mrb[0].mxu0
        %v5191 = vadd.f32 0.0, %v5190
        %v5192 = vpop.f32.mrb[0].mxu0
        %5193 = vmatprep.mubr.bf16.mxu0 0
        %5194 = vmatmul.mubr.bf16.gmra.mrb[0].mxu0 %v5094
        %v5195 = vpop.f32.mrb[0].mxu0
        %v5196 = vadd.f32 0.0, %v5195
        %v5197 = vpop.f32.mrb[0].mxu0
        %v5198 = vpop.f32.mrb[0].mxu0
        %v5199 = vadd.f32 0.0, %v5198
        %v5200 = vpop.f32.mrb[0].mxu0
        %5201 = vmatprep.mubr.bf16.mxu0 0
        %5202 = vmatmul.mubr.bf16.gmra.mrb[0].mxu0 %v5097
        %v5203 = vpop.f32.mrb[0].mxu0
        %v5204 = vadd.f32 0.0, %v5203
        %v5205 = vpop.f32.mrb[0].mxu0
        %v5206 = vpop.f32.mrb[0].mxu0
        %v5207 = vadd.f32 0.0, %v5206
        %v5208 = vpop.f32.mrb[0].mxu0
        %5209 = vmatprep.mubr.bf16.mxu0 0
        %5210 = vmatmul.mubr.bf16.gmra.mrb[0].mxu0 %v5100
        %v5211 = vpop.f32.mrb[0].mxu0
        %v5212 = vadd.f32 0.0, %v5211
        %v5213 = vpop.f32.mrb[0].mxu0
        %v5214 = vpop.f32.mrb[0].mxu0
        %v5215 = vadd.f32 0.0, %v5214
        %v5216 = vpop.f32.mrb[0].mxu0
        %5217 = vmatprep.mubr.bf16.mxu0 0
        %5218 = vmatmul.mubr.bf16.gmra.mrb[0].mxu0 %v5103
        %v5219 = vpop.f32.mrb[0].mxu0
        %v5220 = vadd.f32 0.0, %v5219
        %v5221 = vpop.f32.mrb[0].mxu0
        %v5222 = vpop.f32.mrb[0].mxu0
        %v5223 = vadd.f32 0.0, %v5222
        %v5224 = vpop.f32.mrb[0].mxu0
        %5225 = vmatprep.mubr.bf16.mxu0 0
        %5226 = vmatmul.mubr.bf16.gmra.mrb[0].mxu0 %v5106
        %v5227 = vpop.f32.mrb[0].mxu0
        %v5228 = vadd.f32 0.0, %v5227
        %v5229 = vpop.f32.mrb[0].mxu0
        %v5230 = vpop.f32.mrb[0].mxu0
        %v5231 = vadd.f32 0.0, %v5230
        %v5232 = vpop.f32.mrb[0].mxu0
        %5233 = vmatprep.mubr.bf16.mxu0 0
        %5234 = vmatmul.mubr.bf16.gmra.mrb[0].mxu0 %v5109
        %v5235 = vpop.f32.mrb[0].mxu0
        %v5236 = vadd.f32 0.0, %v5235
        %v5237 = vpop.f32.mrb[0].mxu0
        %v5238 = vpop.f32.mrb[0].mxu0
        %v5239 = vadd.f32 0.0, %v5238
        %v5240 = vpop.f32.mrb[0].mxu0
        %5241 = vmatprep.mubr.bf16.mxu0 0
        %5242 = vmatmul.mubr.bf16.gmra.mrb[0].mxu0 %v5112
        %v5243 = vpop.f32.mrb[0].mxu0
        %v5244 = vadd.f32 0.0, %v5243
        %v5245 = vpop.f32.mrb[0].mxu0
        %v5246 = vpop.f32.mrb[0].mxu0
        %v5247 = vadd.f32 0.0, %v5246
        %v5248 = vpop.f32.mrb[0].mxu0
        %5249 = vmatprep.mubr.bf16.mxu0 0
        %5250 = vmatmul.mubr.bf16.gmra.mrb[0].mxu0 %v5115
        %v5251 = vpop.f32.mrb[0].mxu0
        %v5252 = vadd.f32 0.0, %v5251
        %v5253 = vpop.f32.mrb[0].mxu0
        %v5254 = vpop.f32.mrb[0].mxu0
        %v5255 = vadd.f32 0.0, %v5254
        %v5256 = vpop.f32.mrb[0].mxu0
        %5257 = vmatprep.mubr.bf16.mxu0 0
        %5258 = vmatmul.mubr.bf16.gmra.mrb[0].mxu0 %v5118
        %v5259 = vpop.f32.mrb[0].mxu0
        %v5260 = vadd.f32 0.0, %v5259
        %v5261 = vpop.f32.mrb[0].mxu0
        %v5262 = vpop.f32.mrb[0].mxu0
        %v5263 = vadd.f32 0.0, %v5262
        %v5264 = vpop.f32.mrb[0].mxu0
        %5265 = vmatprep.mubr.bf16.mxu0 0
        %5266 = vmatmul.mubr.bf16.gmra.mrb[0].mxu0 %v5121
        %v5267 = vpop.f32.mrb[0].mxu0
        %v5268 = vadd.f32 0.0, %v5267
        %v5269 = vpop.f32.mrb[0].mxu0
        %v5270 = vpop.f32.mrb[0].mxu0
        %v5271 = vadd.f32 0.0, %v5270
        %v5272 = vpop.f32.mrb[0].mxu0
        %5273 = vmatprep.mubr.bf16.mxu0 0
        %5274 = vmatmul.mubr.bf16.gmra.mrb[0].mxu0 %v5124
        %v5275 = vpop.f32.mrb[0].mxu0
        %v5276 = vadd.f32 0.0, %v5275
        %v5277 = vpop.f32.mrb[0].mxu0
        %v5278 = vpop.f32.mrb[0].mxu0
        %v5279 = vadd.f32 0.0, %v5278
        %v5280 = vpop.f32.mrb[0].mxu0
        %5281 = vmatprep.mubr.bf16.mxu0 0
        %5282 = vmatmul.mubr.bf16.gmra.mrb[0].mxu0 %v5127
        %v5283 = vpop.f32.mrb[0].mxu0
        %v5284 = vadd.f32 0.0, %v5283
        %v5285 = vpop.f32.mrb[0].mxu0
        %v5286 = vpop.f32.mrb[0].mxu0
        %v5287 = vadd.f32 0.0, %v5286
        %v5288 = vpop.f32.mrb[0].mxu0
        %5289 = vdwg.mxu0
        %v5294 = vunpack.c.l.b16 %v5011
        %v5295 = vunpack.c.l.b16 %v5012
        %v5296 = vunpack.c.l.b16 %v5013
        %v5297 = vunpack.c.l.b16 %v5014
        %v5298 = vpack.c.b16 %v5295, %v5294
        %v5299 = vpack.c.b16 %v5297, %v5296
        %v5303 = vsel %vm5080, %v4995, 0
        %v5306 = vsel %vm5080, %v4996, 0
        %v5309 = vsel %vm5080, %v4997, 0
        %v5312 = vsel %vm5080, %v4998, 0
        %v5315 = vsel %vm5080, %v4999, 0
        %v5318 = vsel %vm5080, %v5000, 0
        %v5321 = vsel %vm5080, %v5001, 0
        %v5324 = vsel %vm5080, %v5002, 0
        %v5327 = vsel %vm5080, %v5003, 0
        %v5330 = vsel %vm5080, %v5004, 0
        %v5333 = vsel %vm5080, %v5005, 0
        %v5336 = vsel %vm5080, %v5006, 0
        %v5339 = vsel %vm5080, %v5007, 0
        %v5342 = vsel %vm5080, %v5008, 0
        %v5345 = vsel %vm5080, %v5009, 0
        %v5348 = vsel %vm5080, %v5010, 0
        %5350 = vmatprep.subr.bf16.mxu0 0
        %5351 = vmatpush1.bf16.msra.mxu0 %v5298
        %5352 = vmatprep.subr.bf16.mxu0 0
        %5353 = vmatpush1.bf16.msra.mxu0 %v5299
        %5354 = vmatprep.subr.bf16.mxu0 0
        %5355 = vmatpush1.bf16.msra.mxu0 0
        %5356 = vmatprep.subr.bf16.mxu0 0
        %5357 = vmatpush1.bf16.msra.mxu0 0
        %5358 = vmatprep.subr.bf16.mxu0 0
        %5359 = vmatpush1.bf16.msra.mxu0 0
        %5360 = vmatprep.subr.bf16.mxu0 0
        %5361 = vmatpush1.bf16.msra.mxu0 0
        %5362 = vmatprep.subr.bf16.mxu0 0
        %5363 = vmatpush1.bf16.msra.mxu0 0
        %5364 = vmatprep.subr.bf16.mxu0 0
        %5365 = vmatpush1.bf16.msra.mxu0 0
        %5366 = vmatprep.subr.bf16.mxu0 0
        %5367 = vmatpush1.bf16.msra.mxu0 0
        %5368 = vmatprep.subr.bf16.mxu0 0
        %5369 = vmatpush1.bf16.msra.mxu0 0
        %5370 = vmatprep.subr.bf16.mxu0 0
        %5371 = vmatpush1.bf16.msra.mxu0 0
        %5372 = vmatprep.subr.bf16.mxu0 0
        %5373 = vmatpush1.bf16.msra.mxu0 0
        %5374 = vmatprep.subr.bf16.mxu0 0
        %5375 = vmatpush1.bf16.msra.mxu0 0
        %5376 = vmatprep.subr.bf16.mxu0 0
        %5377 = vmatpush1.bf16.msra.mxu0 0
        %5378 = vmatprep.subr.bf16.mxu0 0
        %5379 = vmatpush1.bf16.msra.mxu0 0
        %5380 = vmatprep.subr.bf16.mxu0 0
        %5381 = vmatpush1.bf16.msra.mxu0 0
        %5382 = vmatprep.mubr.bf16.mxu0 0
        %5383 = vmatmul.mubr.bf16.gmra.mrb[0].mxu0 %v5303
        %v5384 = vpop.f32.mrb[0].mxu0
        %v5385 = vadd.f32 %v5164, %v5384
        %v5386 = vpop.f32.mrb[0].mxu0
        %v5387 = vpop.f32.mrb[0].mxu0
        %v5388 = vadd.f32 %v5167, %v5387
        %v5389 = vpop.f32.mrb[0].mxu0
        %5390 = vmatprep.mubr.bf16.mxu0 0
        %5391 = vmatmul.mubr.bf16.gmra.mrb[0].mxu0 %v5306
        %v5392 = vpop.f32.mrb[0].mxu0
        %v5393 = vadd.f32 %v5172, %v5392
        %v5394 = vpop.f32.mrb[0].mxu0
        %v5395 = vpop.f32.mrb[0].mxu0
        %v5396 = vadd.f32 %v5175, %v5395
        %v5397 = vpop.f32.mrb[0].mxu0
        %5398 = vmatprep.mubr.bf16.mxu0 0
        %5399 = vmatmul.mubr.bf16.gmra.mrb[0].mxu0 %v5309
        %v5400 = vpop.f32.mrb[0].mxu0
        %v5401 = vadd.f32 %v5180, %v5400
        %v5402 = vpop.f32.mrb[0].mxu0
        %v5403 = vpop.f32.mrb[0].mxu0
        %v5404 = vadd.f32 %v5183, %v5403
        %v5405 = vpop.f32.mrb[0].mxu0
        %5406 = vmatprep.mubr.bf16.mxu0 0
        %5407 = vmatmul.mubr.bf16.gmra.mrb[0].mxu0 %v5312
        %v5408 = vpop.f32.mrb[0].mxu0
        %v5409 = vadd.f32 %v5188, %v5408
        %v5410 = vpop.f32.mrb[0].mxu0
        %v5411 = vpop.f32.mrb[0].mxu0
        %v5412 = vadd.f32 %v5191, %v5411
        %v5413 = vpop.f32.mrb[0].mxu0
        %5414 = vmatprep.mubr.bf16.mxu0 0
        %5415 = vmatmul.mubr.bf16.gmra.mrb[0].mxu0 %v5315
        %v5416 = vpop.f32.mrb[0].mxu0
        %v5417 = vadd.f32 %v5196, %v5416
        %v5418 = vpop.f32.mrb[0].mxu0
        %v5419 = vpop.f32.mrb[0].mxu0
        %v5420 = vadd.f32 %v5199, %v5419
        %v5421 = vpop.f32.mrb[0].mxu0
        %5422 = vmatprep.mubr.bf16.mxu0 0
        %5423 = vmatmul.mubr.bf16.gmra.mrb[0].mxu0 %v5318
        %v5424 = vpop.f32.mrb[0].mxu0
        %v5425 = vadd.f32 %v5204, %v5424
        %v5426 = vpop.f32.mrb[0].mxu0
        %v5427 = vpop.f32.mrb[0].mxu0
        %v5428 = vadd.f32 %v5207, %v5427
        %v5429 = vpop.f32.mrb[0].mxu0
        %5430 = vmatprep.mubr.bf16.mxu0 0
        %5431 = vmatmul.mubr.bf16.gmra.mrb[0].mxu0 %v5321
        %v5432 = vpop.f32.mrb[0].mxu0
        %v5433 = vadd.f32 %v5212, %v5432
        %v5434 = vpop.f32.mrb[0].mxu0
        %v5435 = vpop.f32.mrb[0].mxu0
        %v5436 = vadd.f32 %v5215, %v5435
        %v5437 = vpop.f32.mrb[0].mxu0
        %5438 = vmatprep.mubr.bf16.mxu0 0
        %5439 = vmatmul.mubr.bf16.gmra.mrb[0].mxu0 %v5324
        %v5440 = vpop.f32.mrb[0].mxu0
        %v5441 = vadd.f32 %v5220, %v5440
        %v5442 = vpop.f32.mrb[0].mxu0
        %v5443 = vpop.f32.mrb[0].mxu0
        %v5444 = vadd.f32 %v5223, %v5443
        %v5445 = vpop.f32.mrb[0].mxu0
        %5446 = vmatprep.mubr.bf16.mxu0 0
        %5447 = vmatmul.mubr.bf16.gmra.mrb[0].mxu0 %v5327
        %v5448 = vpop.f32.mrb[0].mxu0
        %v5449 = vadd.f32 %v5228, %v5448
        %v5450 = vpop.f32.mrb[0].mxu0
        %v5451 = vpop.f32.mrb[0].mxu0
        %v5452 = vadd.f32 %v5231, %v5451
        %v5453 = vpop.f32.mrb[0].mxu0
        %5454 = vmatprep.mubr.bf16.mxu0 0
        %5455 = vmatmul.mubr.bf16.gmra.mrb[0].mxu0 %v5330
        %v5456 = vpop.f32.mrb[0].mxu0
        %v5457 = vadd.f32 %v5236, %v5456
        %v5458 = vpop.f32.mrb[0].mxu0
        %v5459 = vpop.f32.mrb[0].mxu0
        %v5460 = vadd.f32 %v5239, %v5459
        %v5461 = vpop.f32.mrb[0].mxu0
        %5462 = vmatprep.mubr.bf16.mxu0 0
        %5463 = vmatmul.mubr.bf16.gmra.mrb[0].mxu0 %v5333
        %v5464 = vpop.f32.mrb[0].mxu0
        %v5465 = vadd.f32 %v5244, %v5464
        %v5466 = vpop.f32.mrb[0].mxu0
        %v5467 = vpop.f32.mrb[0].mxu0
        %v5468 = vadd.f32 %v5247, %v5467
        %v5469 = vpop.f32.mrb[0].mxu0
        %5470 = vmatprep.mubr.bf16.mxu0 0
        %5471 = vmatmul.mubr.bf16.gmra.mrb[0].mxu0 %v5336
        %v5472 = vpop.f32.mrb[0].mxu0
        %v5473 = vadd.f32 %v5252, %v5472
        %v5474 = vpop.f32.mrb[0].mxu0
        %v5475 = vpop.f32.mrb[0].mxu0
        %v5476 = vadd.f32 %v5255, %v5475
        %v5477 = vpop.f32.mrb[0].mxu0
        %5478 = vmatprep.mubr.bf16.mxu0 0
        %5479 = vmatmul.mubr.bf16.gmra.mrb[0].mxu0 %v5339
        %v5480 = vpop.f32.mrb[0].mxu0
        %v5481 = vadd.f32 %v5260, %v5480
        %v5482 = vpop.f32.mrb[0].mxu0
        %v5483 = vpop.f32.mrb[0].mxu0
        %v5484 = vadd.f32 %v5263, %v5483
        %v5485 = vpop.f32.mrb[0].mxu0
        %5486 = vmatprep.mubr.bf16.mxu0 0
        %5487 = vmatmul.mubr.bf16.gmra.mrb[0].mxu0 %v5342
        %v5488 = vpop.f32.mrb[0].mxu0
        %v5489 = vadd.f32 %v5268, %v5488
        %v5490 = vpop.f32.mrb[0].mxu0
        %v5491 = vpop.f32.mrb[0].mxu0
        %v5492 = vadd.f32 %v5271, %v5491
        %v5493 = vpop.f32.mrb[0].mxu0
        %5494 = vmatprep.mubr.bf16.mxu0 0
        %5495 = vmatmul.mubr.bf16.gmra.mrb[0].mxu0 %v5345
        %v5496 = vpop.f32.mrb[0].mxu0
        %v5497 = vadd.f32 %v5276, %v5496
        %v5498 = vpop.f32.mrb[0].mxu0
        %v5499 = vpop.f32.mrb[0].mxu0
        %v5500 = vadd.f32 %v5279, %v5499
        %v5501 = vpop.f32.mrb[0].mxu0
        %5502 = vmatprep.mubr.bf16.mxu0 0
        %5503 = vmatmul.mubr.bf16.gmra.mrb[0].mxu0 %v5348
        %v5504 = vpop.f32.mrb[0].mxu0
        %v5505 = vadd.f32 %v5284, %v5504
        %v5506 = vpop.f32.mrb[0].mxu0
        %v5507 = vpop.f32.mrb[0].mxu0
        %v5508 = vadd.f32 %v5287, %v5507
        %v5509 = vpop.f32.mrb[0].mxu0
        %5510 = vdwg.mxu0
        %v5511 = vrot.slane %v4867, 1
        %v5512 = vrot.slane %v4868, 1
        %v5513 = vrot.slane %v4869, 1
        %v5514 = vrot.slane %v4870, 1
        %v5515 = vrot.slane %v4871, 1
        %v5516 = vrot.slane %v4872, 1
        %v5517 = vrot.slane %v4873, 1
        %v5518 = vrot.slane %v4874, 1
        %v5519 = vrot.slane %v4875, 1
        %v5520 = vrot.slane %v4876, 1
        %v5521 = vrot.slane %v4877, 1
        %v5522 = vrot.slane %v4878, 1
        %v5523 = vrot.slane %v4879, 1
        %v5524 = vrot.slane %v4880, 1
        %v5525 = vrot.slane %v4881, 1
        %v5526 = vrot.slane %v4882, 1
        %v5527 = vrot.slane %v4883, 1
        %v5528 = vrot.slane %v4884, 1
        %v5529 = vrot.slane %v4885, 1
        %v5530 = vrot.slane %v4886, 1
        %v5531 = vrot.slane %v4887, 1
        %v5532 = vrot.slane %v4888, 1
        %v5533 = vrot.slane %v4889, 1
        %v5534 = vrot.slane %v4890, 1
        %v5535 = vrot.slane %v4891, 1
        %v5536 = vrot.slane %v4892, 1
        %v5537 = vrot.slane %v4893, 1
        %v5538 = vrot.slane %v4894, 1
        %v5539 = vrot.slane %v4895, 1
        %v5540 = vrot.slane %v4896, 1
        %v5541 = vrot.slane %v4897, 1
        %v5542 = vrot.slane %v4898, 1
        %v5543 = vsel %vm1386, %v5541, %v5542
        %v5544 = vsel %vm1386, %v5540, %v5541
        %v5545 = vsel %vm1386, %v5539, %v5540
        %v5546 = vsel %vm1386, %v5538, %v5539
        %v5547 = vsel %vm1386, %v5537, %v5538
        %v5548 = vsel %vm1386, %v5536, %v5537
        %v5549 = vsel %vm1386, %v5535, %v5536
        %v5550 = vsel %vm1386, %v5534, %v5535
        %v5551 = vsel %vm1386, %v5533, %v5534
        %v5552 = vsel %vm1386, %v5532, %v5533
        %v5553 = vsel %vm1386, %v5531, %v5532
        %v5554 = vsel %vm1386, %v5530, %v5531
        %v5555 = vsel %vm1386, %v5529, %v5530
        %v5556 = vsel %vm1386, %v5528, %v5529
        %v5557 = vsel %vm1386, %v5527, %v5528
        %v5558 = vsel %vm1386, %v5526, %v5527
        %v5559 = vsel %vm1386, %v5525, %v5526
        %v5560 = vsel %vm1386, %v5524, %v5525
        %v5561 = vsel %vm1386, %v5523, %v5524
        %v5562 = vsel %vm1386, %v5522, %v5523
        %v5563 = vsel %vm1386, %v5521, %v5522
        %v5564 = vsel %vm1386, %v5520, %v5521
        %v5565 = vsel %vm1386, %v5519, %v5520
        %v5566 = vsel %vm1386, %v5518, %v5519
        %v5567 = vsel %vm1386, %v5517, %v5518
        %v5568 = vsel %vm1386, %v5516, %v5517
        %v5569 = vsel %vm1386, %v5515, %v5516
        %v5570 = vsel %vm1386, %v5514, %v5515
        %v5571 = vsel %vm1386, %v5513, %v5514
        %v5572 = vsel %vm1386, %v5512, %v5513
        %v5573 = vsel %vm1386, %v5511, %v5512
        %v5574 = vsel %vm1386, %v5542, %v5511
        %v5575 = vmul.f32 %v5543, %v1455
        %v5576 = vmul.f32 %v5574, %v1460
        %v5577 = vmul.f32 %v5573, %v1465
        %v5578 = vmul.f32 %v5572, %v1470
        %v5579 = vmul.f32 %v5571, %v1475
        %v5580 = vmul.f32 %v5570, %v1480
        %v5581 = vmul.f32 %v5569, %v1485
        %v5582 = vmul.f32 %v5568, %v1490
        %v5583 = vmul.f32 %v5567, %v1495
        %v5584 = vmul.f32 %v5566, %v1500
        %v5585 = vmul.f32 %v5565, %v1505
        %v5586 = vmul.f32 %v5564, %v1510
        %v5587 = vmul.f32 %v5563, %v1515
        %v5588 = vmul.f32 %v5562, %v1520
        %v5589 = vmul.f32 %v5561, %v1525
        %v5590 = vmul.f32 %v5560, %v1530
        %v5591 = vmul.f32 %v5559, %v1535
        %v5592 = vmul.f32 %v5558, %v1540
        %v5593 = vmul.f32 %v5557, %v1545
        %v5594 = vmul.f32 %v5556, %v1550
        %v5595 = vmul.f32 %v5555, %v1555
        %v5596 = vmul.f32 %v5554, %v1560
        %v5597 = vmul.f32 %v5553, %v1565
        %v5598 = vmul.f32 %v5552, %v1570
        %v5599 = vmul.f32 %v5551, %v1575
        %v5600 = vmul.f32 %v5550, %v1580
        %v5601 = vmul.f32 %v5549, %v1585
        %v5602 = vmul.f32 %v5548, %v1590
        %v5603 = vmul.f32 %v5547, %v1595
        %v5604 = vmul.f32 %v5546, %v1600
        %v5605 = vmul.f32 %v5545, %v1605
        %v5606 = vmul.f32 %v5544, %v1610
        %v5607 = vpack.c.bf16 %v5576, %v5575
        %v5608 = vpack.c.bf16 %v5578, %v5577
        %v5609 = vpack.c.bf16 %v5580, %v5579
        %v5610 = vpack.c.bf16 %v5582, %v5581
        %v5611 = vpack.c.bf16 %v5584, %v5583
        %v5612 = vpack.c.bf16 %v5586, %v5585
        %v5613 = vpack.c.bf16 %v5588, %v5587
        %v5614 = vpack.c.bf16 %v5590, %v5589
        %v5615 = vpack.c.bf16 %v5592, %v5591
        %v5616 = vpack.c.bf16 %v5594, %v5593
        %v5617 = vpack.c.bf16 %v5596, %v5595
        %v5618 = vpack.c.bf16 %v5598, %v5597
        %v5619 = vpack.c.bf16 %v5600, %v5599
        %v5620 = vpack.c.bf16 %v5602, %v5601
        %v5621 = vpack.c.bf16 %v5604, %v5603
        %v5622 = vpack.c.bf16 %v5606, %v5605
        %s5623 = scalar_lea.vmem %s4, 32
        %v5624 = vld [vmem:[%s5623] sm:$0xf]
        %v5625 = vld [vmem:[%s5623 + $0x4] sm:$0xf]
        %v5626 = vld [vmem:[%s5623 + $0x8] sm:$0xf]
        %v5627 = vld [vmem:[%s5623 + $0xc] sm:$0xf]
        %v5632 = vunpack.c.l.b16 %v5624
        %v5633 = vunpack.c.l.b16 %v5625
        %v5634 = vunpack.c.l.b16 %v5626
        %v5635 = vunpack.c.l.b16 %v5627
        %v5636 = vpack.c.b16 %v5633, %v5632
        %v5637 = vpack.c.b16 %v5635, %v5634
        %v5641 = vsel %vm5080, %v5607, 0
        %v5644 = vsel %vm5080, %v5608, 0
        %v5647 = vsel %vm5080, %v5609, 0
        %v5650 = vsel %vm5080, %v5610, 0
        %v5653 = vsel %vm5080, %v5611, 0
        %v5656 = vsel %vm5080, %v5612, 0
        %v5659 = vsel %vm5080, %v5613, 0
        %v5662 = vsel %vm5080, %v5614, 0
        %v5665 = vsel %vm5080, %v5615, 0
        %v5668 = vsel %vm5080, %v5616, 0
        %v5671 = vsel %vm5080, %v5617, 0
        %v5674 = vsel %vm5080, %v5618, 0
        %v5677 = vsel %vm5080, %v5619, 0
        %v5680 = vsel %vm5080, %v5620, 0
        %v5683 = vsel %vm5080, %v5621, 0
        %v5686 = vsel %vm5080, %v5622, 0
        %5688 = vmatprep.subr.bf16.mxu0 0
        %5689 = vmatpush1.bf16.msra.mxu0 %v5636
        %5690 = vmatprep.subr.bf16.mxu0 0
        %5691 = vmatpush1.bf16.msra.mxu0 %v5637
        %5692 = vmatprep.subr.bf16.mxu0 0
        %5693 = vmatpush1.bf16.msra.mxu0 0
        %5694 = vmatprep.subr.bf16.mxu0 0
        %5695 = vmatpush1.bf16.msra.mxu0 0
        %5696 = vmatprep.subr.bf16.mxu0 0
        %5697 = vmatpush1.bf16.msra.mxu0 0
        %5698 = vmatprep.subr.bf16.mxu0 0
        %5699 = vmatpush1.bf16.msra.mxu0 0
        %5700 = vmatprep.subr.bf16.mxu0 0
        %5701 = vmatpush1.bf16.msra.mxu0 0
        %5702 = vmatprep.subr.bf16.mxu0 0
        %5703 = vmatpush1.bf16.msra.mxu0 0
        %5704 = vmatprep.subr.bf16.mxu0 0
        %5705 = vmatpush1.bf16.msra.mxu0 0
        %5706 = vmatprep.subr.bf16.mxu0 0
        %5707 = vmatpush1.bf16.msra.mxu0 0
        %5708 = vmatprep.subr.bf16.mxu0 0
        %5709 = vmatpush1.bf16.msra.mxu0 0
        %5710 = vmatprep.subr.bf16.mxu0 0
        %5711 = vmatpush1.bf16.msra.mxu0 0
        %5712 = vmatprep.subr.bf16.mxu0 0
        %5713 = vmatpush1.bf16.msra.mxu0 0
        %5714 = vmatprep.subr.bf16.mxu0 0
        %5715 = vmatpush1.bf16.msra.mxu0 0
        %5716 = vmatprep.subr.bf16.mxu0 0
        %5717 = vmatpush1.bf16.msra.mxu0 0
        %5718 = vmatprep.subr.bf16.mxu0 0
        %5719 = vmatpush1.bf16.msra.mxu0 0
        %5720 = vmatprep.mubr.bf16.mxu0 0
        %5721 = vmatmul.mubr.bf16.gmra.mrb[0].mxu0 %v5641
        %v5722 = vpop.f32.mrb[0].mxu0
        %v5723 = vadd.f32 0.0, %v5722
        %v5724 = vpop.f32.mrb[0].mxu0
        %v5725 = vpop.f32.mrb[0].mxu0
        %v5726 = vadd.f32 0.0, %v5725
        %v5727 = vpop.f32.mrb[0].mxu0
        %5728 = vmatprep.mubr.bf16.mxu0 0
        %5729 = vmatmul.mubr.bf16.gmra.mrb[0].mxu0 %v5644
        %v5730 = vpop.f32.mrb[0].mxu0
        %v5731 = vadd.f32 0.0, %v5730
        %v5732 = vpop.f32.mrb[0].mxu0
        %v5733 = vpop.f32.mrb[0].mxu0
        %v5734 = vadd.f32 0.0, %v5733
        %v5735 = vpop.f32.mrb[0].mxu0
        %5736 = vmatprep.mubr.bf16.mxu0 0
        %5737 = vmatmul.mubr.bf16.gmra.mrb[0].mxu0 %v5647
        %v5738 = vpop.f32.mrb[0].mxu0
        %v5739 = vadd.f32 0.0, %v5738
        %v5740 = vpop.f32.mrb[0].mxu0
        %v5741 = vpop.f32.mrb[0].mxu0
        %v5742 = vadd.f32 0.0, %v5741
        %v5743 = vpop.f32.mrb[0].mxu0
        %5744 = vmatprep.mubr.bf16.mxu0 0
        %5745 = vmatmul.mubr.bf16.gmra.mrb[0].mxu0 %v5650
        %v5746 = vpop.f32.mrb[0].mxu0
        %v5747 = vadd.f32 0.0, %v5746
        %v5748 = vpop.f32.mrb[0].mxu0
        %v5749 = vpop.f32.mrb[0].mxu0
        %v5750 = vadd.f32 0.0, %v5749
        %v5751 = vpop.f32.mrb[0].mxu0
        %5752 = vmatprep.mubr.bf16.mxu0 0
        %5753 = vmatmul.mubr.bf16.gmra.mrb[0].mxu0 %v5653
        %v5754 = vpop.f32.mrb[0].mxu0
        %v5755 = vadd.f32 0.0, %v5754
        %v5756 = vpop.f32.mrb[0].mxu0
        %v5757 = vpop.f32.mrb[0].mxu0
        %v5758 = vadd.f32 0.0, %v5757
        %v5759 = vpop.f32.mrb[0].mxu0
        %5760 = vmatprep.mubr.bf16.mxu0 0
        %5761 = vmatmul.mubr.bf16.gmra.mrb[0].mxu0 %v5656
        %v5762 = vpop.f32.mrb[0].mxu0
        %v5763 = vadd.f32 0.0, %v5762
        %v5764 = vpop.f32.mrb[0].mxu0
        %v5765 = vpop.f32.mrb[0].mxu0
        %v5766 = vadd.f32 0.0, %v5765
        %v5767 = vpop.f32.mrb[0].mxu0
        %5768 = vmatprep.mubr.bf16.mxu0 0
        %5769 = vmatmul.mubr.bf16.gmra.mrb[0].mxu0 %v5659
        %v5770 = vpop.f32.mrb[0].mxu0
        %v5771 = vadd.f32 0.0, %v5770
        %v5772 = vpop.f32.mrb[0].mxu0
        %v5773 = vpop.f32.mrb[0].mxu0
        %v5774 = vadd.f32 0.0, %v5773
        %v5775 = vpop.f32.mrb[0].mxu0
        %5776 = vmatprep.mubr.bf16.mxu0 0
        %5777 = vmatmul.mubr.bf16.gmra.mrb[0].mxu0 %v5662
        %v5778 = vpop.f32.mrb[0].mxu0
        %v5779 = vadd.f32 0.0, %v5778
        %v5780 = vpop.f32.mrb[0].mxu0
        %v5781 = vpop.f32.mrb[0].mxu0
        %v5782 = vadd.f32 0.0, %v5781
        %v5783 = vpop.f32.mrb[0].mxu0
        %5784 = vmatprep.mubr.bf16.mxu0 0
        %5785 = vmatmul.mubr.bf16.gmra.mrb[0].mxu0 %v5665
        %v5786 = vpop.f32.mrb[0].mxu0
        %v5787 = vadd.f32 0.0, %v5786
        %v5788 = vpop.f32.mrb[0].mxu0
        %v5789 = vpop.f32.mrb[0].mxu0
        %v5790 = vadd.f32 0.0, %v5789
        %v5791 = vpop.f32.mrb[0].mxu0
        %5792 = vmatprep.mubr.bf16.mxu0 0
        %5793 = vmatmul.mubr.bf16.gmra.mrb[0].mxu0 %v5668
        %v5794 = vpop.f32.mrb[0].mxu0
        %v5795 = vadd.f32 0.0, %v5794
        %v5796 = vpop.f32.mrb[0].mxu0
        %v5797 = vpop.f32.mrb[0].mxu0
        %v5798 = vadd.f32 0.0, %v5797
        %v5799 = vpop.f32.mrb[0].mxu0
        %5800 = vmatprep.mubr.bf16.mxu0 0
        %5801 = vmatmul.mubr.bf16.gmra.mrb[0].mxu0 %v5671
        %v5802 = vpop.f32.mrb[0].mxu0
        %v5803 = vadd.f32 0.0, %v5802
        %v5804 = vpop.f32.mrb[0].mxu0
        %v5805 = vpop.f32.mrb[0].mxu0
        %v5806 = vadd.f32 0.0, %v5805
        %v5807 = vpop.f32.mrb[0].mxu0
        %5808 = vmatprep.mubr.bf16.mxu0 0
        %5809 = vmatmul.mubr.bf16.gmra.mrb[0].mxu0 %v5674
        %v5810 = vpop.f32.mrb[0].mxu0
        %v5811 = vadd.f32 0.0, %v5810
        %v5812 = vpop.f32.mrb[0].mxu0
        %v5813 = vpop.f32.mrb[0].mxu0
        %v5814 = vadd.f32 0.0, %v5813
        %v5815 = vpop.f32.mrb[0].mxu0
        %5816 = vmatprep.mubr.bf16.mxu0 0
        %5817 = vmatmul.mubr.bf16.gmra.mrb[0].mxu0 %v5677
        %v5818 = vpop.f32.mrb[0].mxu0
        %v5819 = vadd.f32 0.0, %v5818
        %v5820 = vpop.f32.mrb[0].mxu0
        %v5821 = vpop.f32.mrb[0].mxu0
        %v5822 = vadd.f32 0.0, %v5821
        %v5823 = vpop.f32.mrb[0].mxu0
        %5824 = vmatprep.mubr.bf16.mxu0 0
        %5825 = vmatmul.mubr.bf16.gmra.mrb[0].mxu0 %v5680
        %v5826 = vpop.f32.mrb[0].mxu0
        %v5827 = vadd.f32 0.0, %v5826
        %v5828 = vpop.f32.mrb[0].mxu0
        %v5829 = vpop.f32.mrb[0].mxu0
        %v5830 = vadd.f32 0.0, %v5829
        %v5831 = vpop.f32.mrb[0].mxu0
        %5832 = vmatprep.mubr.bf16.mxu0 0
        %5833 = vmatmul.mubr.bf16.gmra.mrb[0].mxu0 %v5683
        %v5834 = vpop.f32.mrb[0].mxu0
        %v5835 = vadd.f32 0.0, %v5834
        %v5836 = vpop.f32.mrb[0].mxu0
        %v5837 = vpop.f32.mrb[0].mxu0
        %v5838 = vadd.f32 0.0, %v5837
        %v5839 = vpop.f32.mrb[0].mxu0
        %5840 = vmatprep.mubr.bf16.mxu0 0
        %5841 = vmatmul.mubr.bf16.gmra.mrb[0].mxu0 %v5686
        %v5842 = vpop.f32.mrb[0].mxu0
        %v5843 = vadd.f32 0.0, %v5842
        %v5844 = vpop.f32.mrb[0].mxu0
        %v5845 = vpop.f32.mrb[0].mxu0
        %v5846 = vadd.f32 0.0, %v5845
        %v5847 = vpop.f32.mrb[0].mxu0
        %5848 = vdwg.mxu0
        %v5849 = vadd.f32 %v5385, %v5723
        %v5850 = vadd.f32 %v5388, %v5726
        %v5851 = vadd.f32 %v5393, %v5731
        %v5852 = vadd.f32 %v5396, %v5734
        %v5853 = vadd.f32 %v5401, %v5739
        %v5854 = vadd.f32 %v5404, %v5742
        %v5855 = vadd.f32 %v5409, %v5747
        %v5856 = vadd.f32 %v5412, %v5750
        %v5857 = vadd.f32 %v5417, %v5755
        %v5858 = vadd.f32 %v5420, %v5758
        %v5859 = vadd.f32 %v5425, %v5763
        %v5860 = vadd.f32 %v5428, %v5766
        %v5861 = vadd.f32 %v5433, %v5771
        %v5862 = vadd.f32 %v5436, %v5774
        %v5863 = vadd.f32 %v5441, %v5779
        %v5864 = vadd.f32 %v5444, %v5782
        %v5865 = vadd.f32 %v5449, %v5787
        %v5866 = vadd.f32 %v5452, %v5790
        %v5867 = vadd.f32 %v5457, %v5795
        %v5868 = vadd.f32 %v5460, %v5798
        %v5869 = vadd.f32 %v5465, %v5803
        %v5870 = vadd.f32 %v5468, %v5806
        %v5871 = vadd.f32 %v5473, %v5811
        %v5872 = vadd.f32 %v5476, %v5814
        %v5873 = vadd.f32 %v5481, %v5819
        %v5874 = vadd.f32 %v5484, %v5822
        %v5875 = vadd.f32 %v5489, %v5827
        %v5876 = vadd.f32 %v5492, %v5830
        %v5877 = vadd.f32 %v5497, %v5835
        %v5878 = vadd.f32 %v5500, %v5838
        %v5879 = vadd.f32 %v5505, %v5843
        %v5880 = vadd.f32 %v5508, %v5846
        %v5881 = vmul.f32 %v4962, %v1942
        %v5882 = vmul.f32 %v4961, %v1947
        %v5883 = vmul.f32 %v4960, %v1952
        %v5884 = vmul.f32 %v4959, %v1957
        %v5885 = vmul.f32 %v4958, %v1962
        %v5886 = vmul.f32 %v4957, %v1967
        %v5887 = vmul.f32 %v4956, %v1972
        %v5888 = vmul.f32 %v4955, %v1977
        %v5889 = vmul.f32 %v4954, %v1982
        %v5890 = vmul.f32 %v4953, %v1987
        %v5891 = vmul.f32 %v4952, %v1992
        %v5892 = vmul.f32 %v4951, %v1997
        %v5893 = vmul.f32 %v4950, %v2002
        %v5894 = vmul.f32 %v4949, %v2007
        %v5895 = vmul.f32 %v4948, %v2012
        %v5896 = vmul.f32 %v4947, %v2017
        %v5897 = vmul.f32 %v4946, %v2022
        %v5898 = vmul.f32 %v4945, %v2027
        %v5899 = vmul.f32 %v4944, %v2032
        %v5900 = vmul.f32 %v4943, %v2037
        %v5901 = vmul.f32 %v4942, %v2042
        %v5902 = vmul.f32 %v4941, %v2047
        %v5903 = vmul.f32 %v4940, %v2052
        %v5904 = vmul.f32 %v4939, %v2057
        %v5905 = vmul.f32 %v4938, %v2062
        %v5906 = vmul.f32 %v4937, %v2067
        %v5907 = vmul.f32 %v4936, %v2072
        %v5908 = vmul.f32 %v4935, %v2077
        %v5909 = vmul.f32 %v4934, %v2082
        %v5910 = vmul.f32 %v4933, %v2087
        %v5911 = vmul.f32 %v4932, %v2092
        %v5912 = vmul.f32 %v4931, %v2097
        %v5913 = vpack.c.bf16 %v5882, %v5881
        %v5914 = vpack.c.bf16 %v5884, %v5883
        %v5915 = vpack.c.bf16 %v5886, %v5885
        %v5916 = vpack.c.bf16 %v5888, %v5887
        %v5917 = vpack.c.bf16 %v5890, %v5889
        %v5918 = vpack.c.bf16 %v5892, %v5891
        %v5919 = vpack.c.bf16 %v5894, %v5893
        %v5920 = vpack.c.bf16 %v5896, %v5895
        %v5921 = vpack.c.bf16 %v5898, %v5897
        %v5922 = vpack.c.bf16 %v5900, %v5899
        %v5923 = vpack.c.bf16 %v5902, %v5901
        %v5924 = vpack.c.bf16 %v5904, %v5903
        %v5925 = vpack.c.bf16 %v5906, %v5905
        %v5926 = vpack.c.bf16 %v5908, %v5907
        %v5927 = vpack.c.bf16 %v5910, %v5909
        %v5928 = vpack.c.bf16 %v5912, %v5911
        %s5929 = scalar_lea.vmem %s4, 48
        %v5930 = vld [vmem:[%s5929] sm:$0xf]
        %v5931 = vld [vmem:[%s5929 + $0x4] sm:$0xf]
        %v5932 = vld [vmem:[%s5929 + $0x8] sm:$0xf]
        %v5933 = vld [vmem:[%s5929 + $0xc] sm:$0xf]
        %v5938 = vunpack.c.l.b16 %v5930
        %v5939 = vunpack.c.l.b16 %v5931
        %v5940 = vunpack.c.l.b16 %v5932
        %v5941 = vunpack.c.l.b16 %v5933
        %v5942 = vpack.c.b16 %v5939, %v5938
        %v5943 = vpack.c.b16 %v5941, %v5940
        %v5947 = vsel %vm5080, %v5913, 0
        %v5950 = vsel %vm5080, %v5914, 0
        %v5953 = vsel %vm5080, %v5915, 0
        %v5956 = vsel %vm5080, %v5916, 0
        %v5959 = vsel %vm5080, %v5917, 0
        %v5962 = vsel %vm5080, %v5918, 0
        %v5965 = vsel %vm5080, %v5919, 0
        %v5968 = vsel %vm5080, %v5920, 0
        %v5971 = vsel %vm5080, %v5921, 0
        %v5974 = vsel %vm5080, %v5922, 0
        %v5977 = vsel %vm5080, %v5923, 0
        %v5980 = vsel %vm5080, %v5924, 0
        %v5983 = vsel %vm5080, %v5925, 0
        %v5986 = vsel %vm5080, %v5926, 0
        %v5989 = vsel %vm5080, %v5927, 0
        %v5992 = vsel %vm5080, %v5928, 0
        %5994 = vmatprep.subr.bf16.mxu0 0
        %5995 = vmatpush1.bf16.msra.mxu0 %v5942
        %5996 = vmatprep.subr.bf16.mxu0 0
        %5997 = vmatpush1.bf16.msra.mxu0 %v5943
        %5998 = vmatprep.subr.bf16.mxu0 0
        %5999 = vmatpush1.bf16.msra.mxu0 0
        %6000 = vmatprep.subr.bf16.mxu0 0
        %6001 = vmatpush1.bf16.msra.mxu0 0
        %6002 = vmatprep.subr.bf16.mxu0 0
        %6003 = vmatpush1.bf16.msra.mxu0 0
        %6004 = vmatprep.subr.bf16.mxu0 0
        %6005 = vmatpush1.bf16.msra.mxu0 0
        %6006 = vmatprep.subr.bf16.mxu0 0
        %6007 = vmatpush1.bf16.msra.mxu0 0
        %6008 = vmatprep.subr.bf16.mxu0 0
        %6009 = vmatpush1.bf16.msra.mxu0 0
        %6010 = vmatprep.subr.bf16.mxu0 0
        %6011 = vmatpush1.bf16.msra.mxu0 0
        %6012 = vmatprep.subr.bf16.mxu0 0
        %6013 = vmatpush1.bf16.msra.mxu0 0
        %6014 = vmatprep.subr.bf16.mxu0 0
        %6015 = vmatpush1.bf16.msra.mxu0 0
        %6016 = vmatprep.subr.bf16.mxu0 0
        %6017 = vmatpush1.bf16.msra.mxu0 0
        %6018 = vmatprep.subr.bf16.mxu0 0
        %6019 = vmatpush1.bf16.msra.mxu0 0
        %6020 = vmatprep.subr.bf16.mxu0 0
        %6021 = vmatpush1.bf16.msra.mxu0 0
        %6022 = vmatprep.subr.bf16.mxu0 0
        %6023 = vmatpush1.bf16.msra.mxu0 0
        %6024 = vmatprep.subr.bf16.mxu0 0
        %6025 = vmatpush1.bf16.msra.mxu0 0
        %6026 = vmatprep.mubr.bf16.mxu0 0
        %6027 = vmatmul.mubr.bf16.gmra.mrb[0].mxu0 %v5947
        %v6028 = vpop.f32.mrb[0].mxu0
        %v6029 = vadd.f32 0.0, %v6028
        %v6030 = vpop.f32.mrb[0].mxu0
        %v6031 = vpop.f32.mrb[0].mxu0
        %v6032 = vadd.f32 0.0, %v6031
        %v6033 = vpop.f32.mrb[0].mxu0
        %6034 = vmatprep.mubr.bf16.mxu0 0
        %6035 = vmatmul.mubr.bf16.gmra.mrb[0].mxu0 %v5950
        %v6036 = vpop.f32.mrb[0].mxu0
        %v6037 = vadd.f32 0.0, %v6036
        %v6038 = vpop.f32.mrb[0].mxu0
        %v6039 = vpop.f32.mrb[0].mxu0
        %v6040 = vadd.f32 0.0, %v6039
        %v6041 = vpop.f32.mrb[0].mxu0
        %6042 = vmatprep.mubr.bf16.mxu0 0
        %6043 = vmatmul.mubr.bf16.gmra.mrb[0].mxu0 %v5953
        %v6044 = vpop.f32.mrb[0].mxu0
        %v6045 = vadd.f32 0.0, %v6044
        %v6046 = vpop.f32.mrb[0].mxu0
        %v6047 = vpop.f32.mrb[0].mxu0
        %v6048 = vadd.f32 0.0, %v6047
        %v6049 = vpop.f32.mrb[0].mxu0
        %6050 = vmatprep.mubr.bf16.mxu0 0
        %6051 = vmatmul.mubr.bf16.gmra.mrb[0].mxu0 %v5956
        %v6052 = vpop.f32.mrb[0].mxu0
        %v6053 = vadd.f32 0.0, %v6052
        %v6054 = vpop.f32.mrb[0].mxu0
        %v6055 = vpop.f32.mrb[0].mxu0
        %v6056 = vadd.f32 0.0, %v6055
        %v6057 = vpop.f32.mrb[0].mxu0
        %6058 = vmatprep.mubr.bf16.mxu0 0
        %6059 = vmatmul.mubr.bf16.gmra.mrb[0].mxu0 %v5959
        %v6060 = vpop.f32.mrb[0].mxu0
        %v6061 = vadd.f32 0.0, %v6060
        %v6062 = vpop.f32.mrb[0].mxu0
        %v6063 = vpop.f32.mrb[0].mxu0
        %v6064 = vadd.f32 0.0, %v6063
        %v6065 = vpop.f32.mrb[0].mxu0
        %6066 = vmatprep.mubr.bf16.mxu0 0
        %6067 = vmatmul.mubr.bf16.gmra.mrb[0].mxu0 %v5962
        %v6068 = vpop.f32.mrb[0].mxu0
        %v6069 = vadd.f32 0.0, %v6068
        %v6070 = vpop.f32.mrb[0].mxu0
        %v6071 = vpop.f32.mrb[0].mxu0
        %v6072 = vadd.f32 0.0, %v6071
        %v6073 = vpop.f32.mrb[0].mxu0
        %6074 = vmatprep.mubr.bf16.mxu0 0
        %6075 = vmatmul.mubr.bf16.gmra.mrb[0].mxu0 %v5965
        %v6076 = vpop.f32.mrb[0].mxu0
        %v6077 = vadd.f32 0.0, %v6076
        %v6078 = vpop.f32.mrb[0].mxu0
        %v6079 = vpop.f32.mrb[0].mxu0
        %v6080 = vadd.f32 0.0, %v6079
        %v6081 = vpop.f32.mrb[0].mxu0
        %6082 = vmatprep.mubr.bf16.mxu0 0
        %6083 = vmatmul.mubr.bf16.gmra.mrb[0].mxu0 %v5968
        %v6084 = vpop.f32.mrb[0].mxu0
        %v6085 = vadd.f32 0.0, %v6084
        %v6086 = vpop.f32.mrb[0].mxu0
        %v6087 = vpop.f32.mrb[0].mxu0
        %v6088 = vadd.f32 0.0, %v6087
        %v6089 = vpop.f32.mrb[0].mxu0
        %6090 = vmatprep.mubr.bf16.mxu0 0
        %6091 = vmatmul.mubr.bf16.gmra.mrb[0].mxu0 %v5971
        %v6092 = vpop.f32.mrb[0].mxu0
        %v6093 = vadd.f32 0.0, %v6092
        %v6094 = vpop.f32.mrb[0].mxu0
        %v6095 = vpop.f32.mrb[0].mxu0
        %v6096 = vadd.f32 0.0, %v6095
        %v6097 = vpop.f32.mrb[0].mxu0
        %6098 = vmatprep.mubr.bf16.mxu0 0
        %6099 = vmatmul.mubr.bf16.gmra.mrb[0].mxu0 %v5974
        %v6100 = vpop.f32.mrb[0].mxu0
        %v6101 = vadd.f32 0.0, %v6100
        %v6102 = vpop.f32.mrb[0].mxu0
        %v6103 = vpop.f32.mrb[0].mxu0
        %v6104 = vadd.f32 0.0, %v6103
        %v6105 = vpop.f32.mrb[0].mxu0
        %6106 = vmatprep.mubr.bf16.mxu0 0
        %6107 = vmatmul.mubr.bf16.gmra.mrb[0].mxu0 %v5977
        %v6108 = vpop.f32.mrb[0].mxu0
        %v6109 = vadd.f32 0.0, %v6108
        %v6110 = vpop.f32.mrb[0].mxu0
        %v6111 = vpop.f32.mrb[0].mxu0
        %v6112 = vadd.f32 0.0, %v6111
        %v6113 = vpop.f32.mrb[0].mxu0
        %6114 = vmatprep.mubr.bf16.mxu0 0
        %6115 = vmatmul.mubr.bf16.gmra.mrb[0].mxu0 %v5980
        %v6116 = vpop.f32.mrb[0].mxu0
        %v6117 = vadd.f32 0.0, %v6116
        %v6118 = vpop.f32.mrb[0].mxu0
        %v6119 = vpop.f32.mrb[0].mxu0
        %v6120 = vadd.f32 0.0, %v6119
        %v6121 = vpop.f32.mrb[0].mxu0
        %6122 = vmatprep.mubr.bf16.mxu0 0
        %6123 = vmatmul.mubr.bf16.gmra.mrb[0].mxu0 %v5983
        %v6124 = vpop.f32.mrb[0].mxu0
        %v6125 = vadd.f32 0.0, %v6124
        %v6126 = vpop.f32.mrb[0].mxu0
        %v6127 = vpop.f32.mrb[0].mxu0
        %v6128 = vadd.f32 0.0, %v6127
        %v6129 = vpop.f32.mrb[0].mxu0
        %6130 = vmatprep.mubr.bf16.mxu0 0
        %6131 = vmatmul.mubr.bf16.gmra.mrb[0].mxu0 %v5986
        %v6132 = vpop.f32.mrb[0].mxu0
        %v6133 = vadd.f32 0.0, %v6132
        %v6134 = vpop.f32.mrb[0].mxu0
        %v6135 = vpop.f32.mrb[0].mxu0
        %v6136 = vadd.f32 0.0, %v6135
        %v6137 = vpop.f32.mrb[0].mxu0
        %6138 = vmatprep.mubr.bf16.mxu0 0
        %6139 = vmatmul.mubr.bf16.gmra.mrb[0].mxu0 %v5989
        %v6140 = vpop.f32.mrb[0].mxu0
        %v6141 = vadd.f32 0.0, %v6140
        %v6142 = vpop.f32.mrb[0].mxu0
        %v6143 = vpop.f32.mrb[0].mxu0
        %v6144 = vadd.f32 0.0, %v6143
        %v6145 = vpop.f32.mrb[0].mxu0
        %6146 = vmatprep.mubr.bf16.mxu0 0
        %6147 = vmatmul.mubr.bf16.gmra.mrb[0].mxu0 %v5992
        %v6148 = vpop.f32.mrb[0].mxu0
        %v6149 = vadd.f32 0.0, %v6148
        %v6150 = vpop.f32.mrb[0].mxu0
        %v6151 = vpop.f32.mrb[0].mxu0
        %v6152 = vadd.f32 0.0, %v6151
        %v6153 = vpop.f32.mrb[0].mxu0
        %6154 = vdwg.mxu0
        %v6155 = vadd.f32 %v5849, %v6029
        %v6156 = vadd.f32 %v5850, %v6032
        %v6157 = vadd.f32 %v5851, %v6037
        %v6158 = vadd.f32 %v5852, %v6040
        %v6159 = vadd.f32 %v5853, %v6045
        %v6160 = vadd.f32 %v5854, %v6048
        %v6161 = vadd.f32 %v5855, %v6053
        %v6162 = vadd.f32 %v5856, %v6056
        %v6163 = vadd.f32 %v5857, %v6061
        %v6164 = vadd.f32 %v5858, %v6064
        %v6165 = vadd.f32 %v5859, %v6069
        %v6166 = vadd.f32 %v5860, %v6072
        %v6167 = vadd.f32 %v5861, %v6077
        %v6168 = vadd.f32 %v5862, %v6080
        %v6169 = vadd.f32 %v5863, %v6085
        %v6170 = vadd.f32 %v5864, %v6088
        %v6171 = vadd.f32 %v5865, %v6093
        %v6172 = vadd.f32 %v5866, %v6096
        %v6173 = vadd.f32 %v5867, %v6101
        %v6174 = vadd.f32 %v5868, %v6104
        %v6175 = vadd.f32 %v5869, %v6109
        %v6176 = vadd.f32 %v5870, %v6112
        %v6177 = vadd.f32 %v5871, %v6117
        %v6178 = vadd.f32 %v5872, %v6120
        %v6179 = vadd.f32 %v5873, %v6125
        %v6180 = vadd.f32 %v5874, %v6128
        %v6181 = vadd.f32 %v5875, %v6133
        %v6182 = vadd.f32 %v5876, %v6136
        %v6183 = vadd.f32 %v5877, %v6141
        %v6184 = vadd.f32 %v5878, %v6144
        %v6185 = vadd.f32 %v5879, %v6149
        %v6186 = vadd.f32 %v5880, %v6152
        %v6187 = vmul.f32 %v4867, %v2429
        %v6188 = vmul.f32 %v4868, %v2434
        %v6189 = vmul.f32 %v4869, %v2439
        %v6190 = vmul.f32 %v4870, %v2444
        %v6191 = vmul.f32 %v4871, %v2449
        %v6192 = vmul.f32 %v4872, %v2454
        %v6193 = vmul.f32 %v4873, %v2459
        %v6194 = vmul.f32 %v4874, %v2464
        %v6195 = vmul.f32 %v4875, %v2469
        %v6196 = vmul.f32 %v4876, %v2474
        %v6197 = vmul.f32 %v4877, %v2479
        %v6198 = vmul.f32 %v4878, %v2484
        %v6199 = vmul.f32 %v4879, %v2489
        %v6200 = vmul.f32 %v4880, %v2494
        %v6201 = vmul.f32 %v4881, %v2499
        %v6202 = vmul.f32 %v4882, %v2504
        %v6203 = vmul.f32 %v4883, %v2509
        %v6204 = vmul.f32 %v4884, %v2514
        %v6205 = vmul.f32 %v4885, %v2519
        %v6206 = vmul.f32 %v4886, %v2524
        %v6207 = vmul.f32 %v4887, %v2529
        %v6208 = vmul.f32 %v4888, %v2534
        %v6209 = vmul.f32 %v4889, %v2539
        %v6210 = vmul.f32 %v4890, %v2544
        %v6211 = vmul.f32 %v4891, %v2549
        %v6212 = vmul.f32 %v4892, %v2554
        %v6213 = vmul.f32 %v4893, %v2559
        %v6214 = vmul.f32 %v4894, %v2564
        %v6215 = vmul.f32 %v4895, %v2569
        %v6216 = vmul.f32 %v4896, %v2574
        %v6217 = vmul.f32 %v4897, %v2579
        %v6218 = vmul.f32 %v4898, %v2584
        %v6219 = vpack.c.bf16 %v6188, %v6187
        %v6220 = vpack.c.bf16 %v6190, %v6189
        %v6221 = vpack.c.bf16 %v6192, %v6191
        %v6222 = vpack.c.bf16 %v6194, %v6193
        %v6223 = vpack.c.bf16 %v6196, %v6195
        %v6224 = vpack.c.bf16 %v6198, %v6197
        %v6225 = vpack.c.bf16 %v6200, %v6199
        %v6226 = vpack.c.bf16 %v6202, %v6201
        %v6227 = vpack.c.bf16 %v6204, %v6203
        %v6228 = vpack.c.bf16 %v6206, %v6205
        %v6229 = vpack.c.bf16 %v6208, %v6207
        %v6230 = vpack.c.bf16 %v6210, %v6209
        %v6231 = vpack.c.bf16 %v6212, %v6211
        %v6232 = vpack.c.bf16 %v6214, %v6213
        %v6233 = vpack.c.bf16 %v6216, %v6215
        %v6234 = vpack.c.bf16 %v6218, %v6217
        %s6235 = scalar_lea.vmem %s4, 64
        %v6236 = vld [vmem:[%s6235] sm:$0xf]
        %v6237 = vld [vmem:[%s6235 + $0x4] sm:$0xf]
        %v6238 = vld [vmem:[%s6235 + $0x8] sm:$0xf]
        %v6239 = vld [vmem:[%s6235 + $0xc] sm:$0xf]
        %v6244 = vunpack.c.l.b16 %v6236
        %v6245 = vunpack.c.l.b16 %v6237
        %v6246 = vunpack.c.l.b16 %v6238
        %v6247 = vunpack.c.l.b16 %v6239
        %v6248 = vpack.c.b16 %v6245, %v6244
        %v6249 = vpack.c.b16 %v6247, %v6246
        %v6253 = vsel %vm5080, %v6219, 0
        %v6256 = vsel %vm5080, %v6220, 0
        %v6259 = vsel %vm5080, %v6221, 0
        %v6262 = vsel %vm5080, %v6222, 0
        %v6265 = vsel %vm5080, %v6223, 0
        %v6268 = vsel %vm5080, %v6224, 0
        %v6271 = vsel %vm5080, %v6225, 0
        %v6274 = vsel %vm5080, %v6226, 0
        %v6277 = vsel %vm5080, %v6227, 0
        %v6280 = vsel %vm5080, %v6228, 0
        %v6283 = vsel %vm5080, %v6229, 0
        %v6286 = vsel %vm5080, %v6230, 0
        %v6289 = vsel %vm5080, %v6231, 0
        %v6292 = vsel %vm5080, %v6232, 0
        %v6295 = vsel %vm5080, %v6233, 0
        %v6298 = vsel %vm5080, %v6234, 0
        %6300 = vmatprep.subr.bf16.mxu0 0
        %6301 = vmatpush1.bf16.msra.mxu0 %v6248
        %6302 = vmatprep.subr.bf16.mxu0 0
        %6303 = vmatpush1.bf16.msra.mxu0 %v6249
        %6304 = vmatprep.subr.bf16.mxu0 0
        %6305 = vmatpush1.bf16.msra.mxu0 0
        %6306 = vmatprep.subr.bf16.mxu0 0
        %6307 = vmatpush1.bf16.msra.mxu0 0
        %6308 = vmatprep.subr.bf16.mxu0 0
        %6309 = vmatpush1.bf16.msra.mxu0 0
        %6310 = vmatprep.subr.bf16.mxu0 0
        %6311 = vmatpush1.bf16.msra.mxu0 0
        %6312 = vmatprep.subr.bf16.mxu0 0
        %6313 = vmatpush1.bf16.msra.mxu0 0
        %6314 = vmatprep.subr.bf16.mxu0 0
        %6315 = vmatpush1.bf16.msra.mxu0 0
        %6316 = vmatprep.subr.bf16.mxu0 0
        %6317 = vmatpush1.bf16.msra.mxu0 0
        %6318 = vmatprep.subr.bf16.mxu0 0
        %6319 = vmatpush1.bf16.msra.mxu0 0
        %6320 = vmatprep.subr.bf16.mxu0 0
        %6321 = vmatpush1.bf16.msra.mxu0 0
        %6322 = vmatprep.subr.bf16.mxu0 0
        %6323 = vmatpush1.bf16.msra.mxu0 0
        %6324 = vmatprep.subr.bf16.mxu0 0
        %6325 = vmatpush1.bf16.msra.mxu0 0
        %6326 = vmatprep.subr.bf16.mxu0 0
        %6327 = vmatpush1.bf16.msra.mxu0 0
        %6328 = vmatprep.subr.bf16.mxu0 0
        %6329 = vmatpush1.bf16.msra.mxu0 0
        %6330 = vmatprep.subr.bf16.mxu0 0
        %6331 = vmatpush1.bf16.msra.mxu0 0
        %6332 = vmatprep.mubr.bf16.mxu0 0
        %6333 = vmatmul.mubr.bf16.gmra.mrb[0].mxu0 %v6253
        %v6334 = vpop.f32.mrb[0].mxu0
        %v6335 = vadd.f32 0.0, %v6334
        %v6336 = vpop.f32.mrb[0].mxu0
        %v6337 = vpop.f32.mrb[0].mxu0
        %v6338 = vadd.f32 0.0, %v6337
        %v6339 = vpop.f32.mrb[0].mxu0
        %6340 = vmatprep.mubr.bf16.mxu0 0
        %6341 = vmatmul.mubr.bf16.gmra.mrb[0].mxu0 %v6256
        %v6342 = vpop.f32.mrb[0].mxu0
        %v6343 = vadd.f32 0.0, %v6342
        %v6344 = vpop.f32.mrb[0].mxu0
        %v6345 = vpop.f32.mrb[0].mxu0
        %v6346 = vadd.f32 0.0, %v6345
        %v6347 = vpop.f32.mrb[0].mxu0
        %6348 = vmatprep.mubr.bf16.mxu0 0
        %6349 = vmatmul.mubr.bf16.gmra.mrb[0].mxu0 %v6259
        %v6350 = vpop.f32.mrb[0].mxu0
        %v6351 = vadd.f32 0.0, %v6350
        %v6352 = vpop.f32.mrb[0].mxu0
        %v6353 = vpop.f32.mrb[0].mxu0
        %v6354 = vadd.f32 0.0, %v6353
        %v6355 = vpop.f32.mrb[0].mxu0
        %6356 = vmatprep.mubr.bf16.mxu0 0
        %6357 = vmatmul.mubr.bf16.gmra.mrb[0].mxu0 %v6262
        %v6358 = vpop.f32.mrb[0].mxu0
        %v6359 = vadd.f32 0.0, %v6358
        %v6360 = vpop.f32.mrb[0].mxu0
        %v6361 = vpop.f32.mrb[0].mxu0
        %v6362 = vadd.f32 0.0, %v6361
        %v6363 = vpop.f32.mrb[0].mxu0
        %6364 = vmatprep.mubr.bf16.mxu0 0
        %6365 = vmatmul.mubr.bf16.gmra.mrb[0].mxu0 %v6265
        %v6366 = vpop.f32.mrb[0].mxu0
        %v6367 = vadd.f32 0.0, %v6366
        %v6368 = vpop.f32.mrb[0].mxu0
        %v6369 = vpop.f32.mrb[0].mxu0
        %v6370 = vadd.f32 0.0, %v6369
        %v6371 = vpop.f32.mrb[0].mxu0
        %6372 = vmatprep.mubr.bf16.mxu0 0
        %6373 = vmatmul.mubr.bf16.gmra.mrb[0].mxu0 %v6268
        %v6374 = vpop.f32.mrb[0].mxu0
        %v6375 = vadd.f32 0.0, %v6374
        %v6376 = vpop.f32.mrb[0].mxu0
        %v6377 = vpop.f32.mrb[0].mxu0
        %v6378 = vadd.f32 0.0, %v6377
        %v6379 = vpop.f32.mrb[0].mxu0
        %6380 = vmatprep.mubr.bf16.mxu0 0
        %6381 = vmatmul.mubr.bf16.gmra.mrb[0].mxu0 %v6271
        %v6382 = vpop.f32.mrb[0].mxu0
        %v6383 = vadd.f32 0.0, %v6382
        %v6384 = vpop.f32.mrb[0].mxu0
        %v6385 = vpop.f32.mrb[0].mxu0
        %v6386 = vadd.f32 0.0, %v6385
        %v6387 = vpop.f32.mrb[0].mxu0
        %6388 = vmatprep.mubr.bf16.mxu0 0
        %6389 = vmatmul.mubr.bf16.gmra.mrb[0].mxu0 %v6274
        %v6390 = vpop.f32.mrb[0].mxu0
        %v6391 = vadd.f32 0.0, %v6390
        %v6392 = vpop.f32.mrb[0].mxu0
        %v6393 = vpop.f32.mrb[0].mxu0
        %v6394 = vadd.f32 0.0, %v6393
        %v6395 = vpop.f32.mrb[0].mxu0
        %6396 = vmatprep.mubr.bf16.mxu0 0
        %6397 = vmatmul.mubr.bf16.gmra.mrb[0].mxu0 %v6277
        %v6398 = vpop.f32.mrb[0].mxu0
        %v6399 = vadd.f32 0.0, %v6398
        %v6400 = vpop.f32.mrb[0].mxu0
        %v6401 = vpop.f32.mrb[0].mxu0
        %v6402 = vadd.f32 0.0, %v6401
        %v6403 = vpop.f32.mrb[0].mxu0
        %6404 = vmatprep.mubr.bf16.mxu0 0
        %6405 = vmatmul.mubr.bf16.gmra.mrb[0].mxu0 %v6280
        %v6406 = vpop.f32.mrb[0].mxu0
        %v6407 = vadd.f32 0.0, %v6406
        %v6408 = vpop.f32.mrb[0].mxu0
        %v6409 = vpop.f32.mrb[0].mxu0
        %v6410 = vadd.f32 0.0, %v6409
        %v6411 = vpop.f32.mrb[0].mxu0
        %6412 = vmatprep.mubr.bf16.mxu0 0
        %6413 = vmatmul.mubr.bf16.gmra.mrb[0].mxu0 %v6283
        %v6414 = vpop.f32.mrb[0].mxu0
        %v6415 = vadd.f32 0.0, %v6414
        %v6416 = vpop.f32.mrb[0].mxu0
        %v6417 = vpop.f32.mrb[0].mxu0
        %v6418 = vadd.f32 0.0, %v6417
        %v6419 = vpop.f32.mrb[0].mxu0
        %6420 = vmatprep.mubr.bf16.mxu0 0
        %6421 = vmatmul.mubr.bf16.gmra.mrb[0].mxu0 %v6286
        %v6422 = vpop.f32.mrb[0].mxu0
        %v6423 = vadd.f32 0.0, %v6422
        %v6424 = vpop.f32.mrb[0].mxu0
        %v6425 = vpop.f32.mrb[0].mxu0
        %v6426 = vadd.f32 0.0, %v6425
        %v6427 = vpop.f32.mrb[0].mxu0
        %6428 = vmatprep.mubr.bf16.mxu0 0
        %6429 = vmatmul.mubr.bf16.gmra.mrb[0].mxu0 %v6289
        %v6430 = vpop.f32.mrb[0].mxu0
        %v6431 = vadd.f32 0.0, %v6430
        %v6432 = vpop.f32.mrb[0].mxu0
        %v6433 = vpop.f32.mrb[0].mxu0
        %v6434 = vadd.f32 0.0, %v6433
        %v6435 = vpop.f32.mrb[0].mxu0
        %6436 = vmatprep.mubr.bf16.mxu0 0
        %6437 = vmatmul.mubr.bf16.gmra.mrb[0].mxu0 %v6292
        %v6438 = vpop.f32.mrb[0].mxu0
        %v6439 = vadd.f32 0.0, %v6438
        %v6440 = vpop.f32.mrb[0].mxu0
        %v6441 = vpop.f32.mrb[0].mxu0
        %v6442 = vadd.f32 0.0, %v6441
        %v6443 = vpop.f32.mrb[0].mxu0
        %6444 = vmatprep.mubr.bf16.mxu0 0
        %6445 = vmatmul.mubr.bf16.gmra.mrb[0].mxu0 %v6295
        %v6446 = vpop.f32.mrb[0].mxu0
        %v6447 = vadd.f32 0.0, %v6446
        %v6448 = vpop.f32.mrb[0].mxu0
        %v6449 = vpop.f32.mrb[0].mxu0
        %v6450 = vadd.f32 0.0, %v6449
        %v6451 = vpop.f32.mrb[0].mxu0
        %6452 = vmatprep.mubr.bf16.mxu0 0
        %6453 = vmatmul.mubr.bf16.gmra.mrb[0].mxu0 %v6298
        %v6454 = vpop.f32.mrb[0].mxu0
        %v6455 = vadd.f32 0.0, %v6454
        %v6456 = vpop.f32.mrb[0].mxu0
        %v6457 = vpop.f32.mrb[0].mxu0
        %v6458 = vadd.f32 0.0, %v6457
        %v6459 = vpop.f32.mrb[0].mxu0
        %6460 = vdwg.mxu0
        %v6461 = vadd.f32 %v6155, %v6335
        %v6462 = vadd.f32 %v6156, %v6338
        %v6463 = vadd.f32 %v6157, %v6343
        %v6464 = vadd.f32 %v6158, %v6346
        %v6465 = vadd.f32 %v6159, %v6351
        %v6466 = vadd.f32 %v6160, %v6354
        %v6467 = vadd.f32 %v6161, %v6359
        %v6468 = vadd.f32 %v6162, %v6362
        %v6469 = vadd.f32 %v6163, %v6367
        %v6470 = vadd.f32 %v6164, %v6370
        %v6471 = vadd.f32 %v6165, %v6375
        %v6472 = vadd.f32 %v6166, %v6378
        %v6473 = vadd.f32 %v6167, %v6383
        %v6474 = vadd.f32 %v6168, %v6386
        %v6475 = vadd.f32 %v6169, %v6391
        %v6476 = vadd.f32 %v6170, %v6394
        %v6477 = vadd.f32 %v6171, %v6399
        %v6478 = vadd.f32 %v6172, %v6402
        %v6479 = vadd.f32 %v6173, %v6407
        %v6480 = vadd.f32 %v6174, %v6410
        %v6481 = vadd.f32 %v6175, %v6415
        %v6482 = vadd.f32 %v6176, %v6418
        %v6483 = vadd.f32 %v6177, %v6423
        %v6484 = vadd.f32 %v6178, %v6426
        %v6485 = vadd.f32 %v6179, %v6431
        %v6486 = vadd.f32 %v6180, %v6434
        %v6487 = vadd.f32 %v6181, %v6439
        %v6488 = vadd.f32 %v6182, %v6442
        %v6489 = vadd.f32 %v6183, %v6447
        %v6490 = vadd.f32 %v6184, %v6450
        %v6491 = vadd.f32 %v6185, %v6455
        %v6492 = vadd.f32 %v6186, %v6458
        %v6493 = vmul.f32 %v5573, %v2916
        %v6494 = vmul.f32 %v5572, %v2921
        %v6495 = vmul.f32 %v5571, %v2926
        %v6496 = vmul.f32 %v5570, %v2931
        %v6497 = vmul.f32 %v5569, %v2936
        %v6498 = vmul.f32 %v5568, %v2941
        %v6499 = vmul.f32 %v5567, %v2946
        %v6500 = vmul.f32 %v5566, %v2951
        %v6501 = vmul.f32 %v5565, %v2956
        %v6502 = vmul.f32 %v5564, %v2961
        %v6503 = vmul.f32 %v5563, %v2966
        %v6504 = vmul.f32 %v5562, %v2971
        %v6505 = vmul.f32 %v5561, %v2976
        %v6506 = vmul.f32 %v5560, %v2981
        %v6507 = vmul.f32 %v5559, %v2986
        %v6508 = vmul.f32 %v5558, %v2991
        %v6509 = vmul.f32 %v5557, %v2996
        %v6510 = vmul.f32 %v5556, %v3001
        %v6511 = vmul.f32 %v5555, %v3006
        %v6512 = vmul.f32 %v5554, %v3011
        %v6513 = vmul.f32 %v5553, %v3016
        %v6514 = vmul.f32 %v5552, %v3021
        %v6515 = vmul.f32 %v5551, %v3026
        %v6516 = vmul.f32 %v5550, %v3031
        %v6517 = vmul.f32 %v5549, %v3036
        %v6518 = vmul.f32 %v5548, %v3041
        %v6519 = vmul.f32 %v5547, %v3046
        %v6520 = vmul.f32 %v5546, %v3051
        %v6521 = vmul.f32 %v5545, %v3056
        %v6522 = vmul.f32 %v5544, %v3061
        %v6523 = vmul.f32 %v5543, %v3066
        %v6524 = vmul.f32 %v5574, %v3071
        %v6525 = vpack.c.bf16 %v6494, %v6493
        %v6526 = vpack.c.bf16 %v6496, %v6495
        %v6527 = vpack.c.bf16 %v6498, %v6497
        %v6528 = vpack.c.bf16 %v6500, %v6499
        %v6529 = vpack.c.bf16 %v6502, %v6501
        %v6530 = vpack.c.bf16 %v6504, %v6503
        %v6531 = vpack.c.bf16 %v6506, %v6505
        %v6532 = vpack.c.bf16 %v6508, %v6507
        %v6533 = vpack.c.bf16 %v6510, %v6509
        %v6534 = vpack.c.bf16 %v6512, %v6511
        %v6535 = vpack.c.bf16 %v6514, %v6513
        %v6536 = vpack.c.bf16 %v6516, %v6515
        %v6537 = vpack.c.bf16 %v6518, %v6517
        %v6538 = vpack.c.bf16 %v6520, %v6519
        %v6539 = vpack.c.bf16 %v6522, %v6521
        %v6540 = vpack.c.bf16 %v6524, %v6523
        %s6541 = scalar_lea.vmem %s4, 80
        %v6542 = vld [vmem:[%s6541] sm:$0xf]
        %v6543 = vld [vmem:[%s6541 + $0x4] sm:$0xf]
        %v6544 = vld [vmem:[%s6541 + $0x8] sm:$0xf]
        %v6545 = vld [vmem:[%s6541 + $0xc] sm:$0xf]
        %v6550 = vunpack.c.l.b16 %v6542
        %v6551 = vunpack.c.l.b16 %v6543
        %v6552 = vunpack.c.l.b16 %v6544
        %v6553 = vunpack.c.l.b16 %v6545
        %v6554 = vpack.c.b16 %v6551, %v6550
        %v6555 = vpack.c.b16 %v6553, %v6552
        %v6559 = vsel %vm5080, %v6525, 0
        %v6562 = vsel %vm5080, %v6526, 0
        %v6565 = vsel %vm5080, %v6527, 0
        %v6568 = vsel %vm5080, %v6528, 0
        %v6571 = vsel %vm5080, %v6529, 0
        %v6574 = vsel %vm5080, %v6530, 0
        %v6577 = vsel %vm5080, %v6531, 0
        %v6580 = vsel %vm5080, %v6532, 0
        %v6583 = vsel %vm5080, %v6533, 0
        %v6586 = vsel %vm5080, %v6534, 0
        %v6589 = vsel %vm5080, %v6535, 0
        %v6592 = vsel %vm5080, %v6536, 0
        %v6595 = vsel %vm5080, %v6537, 0
        %v6598 = vsel %vm5080, %v6538, 0
        %v6601 = vsel %vm5080, %v6539, 0
        %v6604 = vsel %vm5080, %v6540, 0
        %6606 = vmatprep.subr.bf16.mxu0 0
        %6607 = vmatpush1.bf16.msra.mxu0 %v6554
        %6608 = vmatprep.subr.bf16.mxu0 0
        %6609 = vmatpush1.bf16.msra.mxu0 %v6555
        %6610 = vmatprep.subr.bf16.mxu0 0
        %6611 = vmatpush1.bf16.msra.mxu0 0
        %6612 = vmatprep.subr.bf16.mxu0 0
        %6613 = vmatpush1.bf16.msra.mxu0 0
        %6614 = vmatprep.subr.bf16.mxu0 0
        %6615 = vmatpush1.bf16.msra.mxu0 0
        %6616 = vmatprep.subr.bf16.mxu0 0
        %6617 = vmatpush1.bf16.msra.mxu0 0
        %6618 = vmatprep.subr.bf16.mxu0 0
        %6619 = vmatpush1.bf16.msra.mxu0 0
        %6620 = vmatprep.subr.bf16.mxu0 0
        %6621 = vmatpush1.bf16.msra.mxu0 0
        %6622 = vmatprep.subr.bf16.mxu0 0
        %6623 = vmatpush1.bf16.msra.mxu0 0
        %6624 = vmatprep.subr.bf16.mxu0 0
        %6625 = vmatpush1.bf16.msra.mxu0 0
        %6626 = vmatprep.subr.bf16.mxu0 0
        %6627 = vmatpush1.bf16.msra.mxu0 0
        %6628 = vmatprep.subr.bf16.mxu0 0
        %6629 = vmatpush1.bf16.msra.mxu0 0
        %6630 = vmatprep.subr.bf16.mxu0 0
        %6631 = vmatpush1.bf16.msra.mxu0 0
        %6632 = vmatprep.subr.bf16.mxu0 0
        %6633 = vmatpush1.bf16.msra.mxu0 0
        %6634 = vmatprep.subr.bf16.mxu0 0
        %6635 = vmatpush1.bf16.msra.mxu0 0
        %6636 = vmatprep.subr.bf16.mxu0 0
        %6637 = vmatpush1.bf16.msra.mxu0 0
        %6638 = vmatprep.mubr.bf16.mxu0 0
        %6639 = vmatmul.mubr.bf16.gmra.mrb[0].mxu0 %v6559
        %v6640 = vpop.f32.mrb[0].mxu0
        %v6641 = vadd.f32 0.0, %v6640
        %v6642 = vpop.f32.mrb[0].mxu0
        %v6643 = vpop.f32.mrb[0].mxu0
        %v6644 = vadd.f32 0.0, %v6643
        %v6645 = vpop.f32.mrb[0].mxu0
        %6646 = vmatprep.mubr.bf16.mxu0 0
        %6647 = vmatmul.mubr.bf16.gmra.mrb[0].mxu0 %v6562
        %v6648 = vpop.f32.mrb[0].mxu0
        %v6649 = vadd.f32 0.0, %v6648
        %v6650 = vpop.f32.mrb[0].mxu0
        %v6651 = vpop.f32.mrb[0].mxu0
        %v6652 = vadd.f32 0.0, %v6651
        %v6653 = vpop.f32.mrb[0].mxu0
        %6654 = vmatprep.mubr.bf16.mxu0 0
        %6655 = vmatmul.mubr.bf16.gmra.mrb[0].mxu0 %v6565
        %v6656 = vpop.f32.mrb[0].mxu0
        %v6657 = vadd.f32 0.0, %v6656
        %v6658 = vpop.f32.mrb[0].mxu0
        %v6659 = vpop.f32.mrb[0].mxu0
        %v6660 = vadd.f32 0.0, %v6659
        %v6661 = vpop.f32.mrb[0].mxu0
        %6662 = vmatprep.mubr.bf16.mxu0 0
        %6663 = vmatmul.mubr.bf16.gmra.mrb[0].mxu0 %v6568
        %v6664 = vpop.f32.mrb[0].mxu0
        %v6665 = vadd.f32 0.0, %v6664
        %v6666 = vpop.f32.mrb[0].mxu0
        %v6667 = vpop.f32.mrb[0].mxu0
        %v6668 = vadd.f32 0.0, %v6667
        %v6669 = vpop.f32.mrb[0].mxu0
        %6670 = vmatprep.mubr.bf16.mxu0 0
        %6671 = vmatmul.mubr.bf16.gmra.mrb[0].mxu0 %v6571
        %v6672 = vpop.f32.mrb[0].mxu0
        %v6673 = vadd.f32 0.0, %v6672
        %v6674 = vpop.f32.mrb[0].mxu0
        %v6675 = vpop.f32.mrb[0].mxu0
        %v6676 = vadd.f32 0.0, %v6675
        %v6677 = vpop.f32.mrb[0].mxu0
        %6678 = vmatprep.mubr.bf16.mxu0 0
        %6679 = vmatmul.mubr.bf16.gmra.mrb[0].mxu0 %v6574
        %v6680 = vpop.f32.mrb[0].mxu0
        %v6681 = vadd.f32 0.0, %v6680
        %v6682 = vpop.f32.mrb[0].mxu0
        %v6683 = vpop.f32.mrb[0].mxu0
        %v6684 = vadd.f32 0.0, %v6683
        %v6685 = vpop.f32.mrb[0].mxu0
        %6686 = vmatprep.mubr.bf16.mxu0 0
        %6687 = vmatmul.mubr.bf16.gmra.mrb[0].mxu0 %v6577
        %v6688 = vpop.f32.mrb[0].mxu0
        %v6689 = vadd.f32 0.0, %v6688
        %v6690 = vpop.f32.mrb[0].mxu0
        %v6691 = vpop.f32.mrb[0].mxu0
        %v6692 = vadd.f32 0.0, %v6691
        %v6693 = vpop.f32.mrb[0].mxu0
        %6694 = vmatprep.mubr.bf16.mxu0 0
        %6695 = vmatmul.mubr.bf16.gmra.mrb[0].mxu0 %v6580
        %v6696 = vpop.f32.mrb[0].mxu0
        %v6697 = vadd.f32 0.0, %v6696
        %v6698 = vpop.f32.mrb[0].mxu0
        %v6699 = vpop.f32.mrb[0].mxu0
        %v6700 = vadd.f32 0.0, %v6699
        %v6701 = vpop.f32.mrb[0].mxu0
        %6702 = vmatprep.mubr.bf16.mxu0 0
        %6703 = vmatmul.mubr.bf16.gmra.mrb[0].mxu0 %v6583
        %v6704 = vpop.f32.mrb[0].mxu0
        %v6705 = vadd.f32 0.0, %v6704
        %v6706 = vpop.f32.mrb[0].mxu0
        %v6707 = vpop.f32.mrb[0].mxu0
        %v6708 = vadd.f32 0.0, %v6707
        %v6709 = vpop.f32.mrb[0].mxu0
        %6710 = vmatprep.mubr.bf16.mxu0 0
        %6711 = vmatmul.mubr.bf16.gmra.mrb[0].mxu0 %v6586
        %v6712 = vpop.f32.mrb[0].mxu0
        %v6713 = vadd.f32 0.0, %v6712
        %v6714 = vpop.f32.mrb[0].mxu0
        %v6715 = vpop.f32.mrb[0].mxu0
        %v6716 = vadd.f32 0.0, %v6715
        %v6717 = vpop.f32.mrb[0].mxu0
        %6718 = vmatprep.mubr.bf16.mxu0 0
        %6719 = vmatmul.mubr.bf16.gmra.mrb[0].mxu0 %v6589
        %v6720 = vpop.f32.mrb[0].mxu0
        %v6721 = vadd.f32 0.0, %v6720
        %v6722 = vpop.f32.mrb[0].mxu0
        %v6723 = vpop.f32.mrb[0].mxu0
        %v6724 = vadd.f32 0.0, %v6723
        %v6725 = vpop.f32.mrb[0].mxu0
        %6726 = vmatprep.mubr.bf16.mxu0 0
        %6727 = vmatmul.mubr.bf16.gmra.mrb[0].mxu0 %v6592
        %v6728 = vpop.f32.mrb[0].mxu0
        %v6729 = vadd.f32 0.0, %v6728
        %v6730 = vpop.f32.mrb[0].mxu0
        %v6731 = vpop.f32.mrb[0].mxu0
        %v6732 = vadd.f32 0.0, %v6731
        %v6733 = vpop.f32.mrb[0].mxu0
        %6734 = vmatprep.mubr.bf16.mxu0 0
        %6735 = vmatmul.mubr.bf16.gmra.mrb[0].mxu0 %v6595
        %v6736 = vpop.f32.mrb[0].mxu0
        %v6737 = vadd.f32 0.0, %v6736
        %v6738 = vpop.f32.mrb[0].mxu0
        %v6739 = vpop.f32.mrb[0].mxu0
        %v6740 = vadd.f32 0.0, %v6739
        %v6741 = vpop.f32.mrb[0].mxu0
        %6742 = vmatprep.mubr.bf16.mxu0 0
        %6743 = vmatmul.mubr.bf16.gmra.mrb[0].mxu0 %v6598
        %v6744 = vpop.f32.mrb[0].mxu0
        %v6745 = vadd.f32 0.0, %v6744
        %v6746 = vpop.f32.mrb[0].mxu0
        %v6747 = vpop.f32.mrb[0].mxu0
        %v6748 = vadd.f32 0.0, %v6747
        %v6749 = vpop.f32.mrb[0].mxu0
        %6750 = vmatprep.mubr.bf16.mxu0 0
        %6751 = vmatmul.mubr.bf16.gmra.mrb[0].mxu0 %v6601
        %v6752 = vpop.f32.mrb[0].mxu0
        %v6753 = vadd.f32 0.0, %v6752
        %v6754 = vpop.f32.mrb[0].mxu0
        %v6755 = vpop.f32.mrb[0].mxu0
        %v6756 = vadd.f32 0.0, %v6755
        %v6757 = vpop.f32.mrb[0].mxu0
        %6758 = vmatprep.mubr.bf16.mxu0 0
        %6759 = vmatmul.mubr.bf16.gmra.mrb[0].mxu0 %v6604
        %v6760 = vpop.f32.mrb[0].mxu0
        %v6761 = vadd.f32 0.0, %v6760
        %v6762 = vpop.f32.mrb[0].mxu0
        %v6763 = vpop.f32.mrb[0].mxu0
        %v6764 = vadd.f32 0.0, %v6763
        %v6765 = vpop.f32.mrb[0].mxu0
        %6766 = vdwg.mxu0
        %v6767 = vadd.f32 %v6461, %v6641
        %v6768 = vadd.f32 %v6462, %v6644
        %v6769 = vadd.f32 %v6463, %v6649
        %v6770 = vadd.f32 %v6464, %v6652
        %v6771 = vadd.f32 %v6465, %v6657
        %v6772 = vadd.f32 %v6466, %v6660
        %v6773 = vadd.f32 %v6467, %v6665
        %v6774 = vadd.f32 %v6468, %v6668
        %v6775 = vadd.f32 %v6469, %v6673
        %v6776 = vadd.f32 %v6470, %v6676
        %v6777 = vadd.f32 %v6471, %v6681
        %v6778 = vadd.f32 %v6472, %v6684
        %v6779 = vadd.f32 %v6473, %v6689
        %v6780 = vadd.f32 %v6474, %v6692
        %v6781 = vadd.f32 %v6475, %v6697
        %v6782 = vadd.f32 %v6476, %v6700
        %v6783 = vadd.f32 %v6477, %v6705
        %v6784 = vadd.f32 %v6478, %v6708
        %v6785 = vadd.f32 %v6479, %v6713
        %v6786 = vadd.f32 %v6480, %v6716
        %v6787 = vadd.f32 %v6481, %v6721
        %v6788 = vadd.f32 %v6482, %v6724
        %v6789 = vadd.f32 %v6483, %v6729
        %v6790 = vadd.f32 %v6484, %v6732
        %v6791 = vadd.f32 %v6485, %v6737
        %v6792 = vadd.f32 %v6486, %v6740
        %v6793 = vadd.f32 %v6487, %v6745
        %v6794 = vadd.f32 %v6488, %v6748
        %v6795 = vadd.f32 %v6489, %v6753
        %v6796 = vadd.f32 %v6490, %v6756
        %v6797 = vadd.f32 %v6491, %v6761
        %v6798 = vadd.f32 %v6492, %v6764
        %v6799 = vmul.f32 %v4960, %v3403
        %v6800 = vmul.f32 %v4959, %v3408
        %v6801 = vmul.f32 %v4958, %v3413
        %v6802 = vmul.f32 %v4957, %v3418
        %v6803 = vmul.f32 %v4956, %v3423
        %v6804 = vmul.f32 %v4955, %v3428
        %v6805 = vmul.f32 %v4954, %v3433
        %v6806 = vmul.f32 %v4953, %v3438
        %v6807 = vmul.f32 %v4952, %v3443
        %v6808 = vmul.f32 %v4951, %v3448
        %v6809 = vmul.f32 %v4950, %v3453
        %v6810 = vmul.f32 %v4949, %v3458
        %v6811 = vmul.f32 %v4948, %v3463
        %v6812 = vmul.f32 %v4947, %v3468
        %v6813 = vmul.f32 %v4946, %v3473
        %v6814 = vmul.f32 %v4945, %v3478
        %v6815 = vmul.f32 %v4944, %v3483
        %v6816 = vmul.f32 %v4943, %v3488
        %v6817 = vmul.f32 %v4942, %v3493
        %v6818 = vmul.f32 %v4941, %v3498
        %v6819 = vmul.f32 %v4940, %v3503
        %v6820 = vmul.f32 %v4939, %v3508
        %v6821 = vmul.f32 %v4938, %v3513
        %v6822 = vmul.f32 %v4937, %v3518
        %v6823 = vmul.f32 %v4936, %v3523
        %v6824 = vmul.f32 %v4935, %v3528
        %v6825 = vmul.f32 %v4934, %v3533
        %v6826 = vmul.f32 %v4933, %v3538
        %v6827 = vmul.f32 %v4932, %v3543
        %v6828 = vmul.f32 %v4931, %v3548
        %v6829 = vmul.f32 %v4962, %v3553
        %v6830 = vmul.f32 %v4961, %v3558
        %v6831 = vpack.c.bf16 %v6800, %v6799
        %v6832 = vpack.c.bf16 %v6802, %v6801
        %v6833 = vpack.c.bf16 %v6804, %v6803
        %v6834 = vpack.c.bf16 %v6806, %v6805
        %v6835 = vpack.c.bf16 %v6808, %v6807
        %v6836 = vpack.c.bf16 %v6810, %v6809
        %v6837 = vpack.c.bf16 %v6812, %v6811
        %v6838 = vpack.c.bf16 %v6814, %v6813
        %v6839 = vpack.c.bf16 %v6816, %v6815
        %v6840 = vpack.c.bf16 %v6818, %v6817
        %v6841 = vpack.c.bf16 %v6820, %v6819
        %v6842 = vpack.c.bf16 %v6822, %v6821
        %v6843 = vpack.c.bf16 %v6824, %v6823
        %v6844 = vpack.c.bf16 %v6826, %v6825
        %v6845 = vpack.c.bf16 %v6828, %v6827
        %v6846 = vpack.c.bf16 %v6830, %v6829
        %s6847 = scalar_lea.vmem %s4, 96
        %v6848 = vld [vmem:[%s6847] sm:$0xf]
        %v6849 = vld [vmem:[%s6847 + $0x4] sm:$0xf]
        %v6850 = vld [vmem:[%s6847 + $0x8] sm:$0xf]
        %v6851 = vld [vmem:[%s6847 + $0xc] sm:$0xf]
        %v6856 = vunpack.c.l.b16 %v6848
        %v6857 = vunpack.c.l.b16 %v6849
        %v6858 = vunpack.c.l.b16 %v6850
        %v6859 = vunpack.c.l.b16 %v6851
        %v6860 = vpack.c.b16 %v6857, %v6856
        %v6861 = vpack.c.b16 %v6859, %v6858
        %v6865 = vsel %vm5080, %v6831, 0
        %v6868 = vsel %vm5080, %v6832, 0
        %v6871 = vsel %vm5080, %v6833, 0
        %v6874 = vsel %vm5080, %v6834, 0
        %v6877 = vsel %vm5080, %v6835, 0
        %v6880 = vsel %vm5080, %v6836, 0
        %v6883 = vsel %vm5080, %v6837, 0
        %v6886 = vsel %vm5080, %v6838, 0
        %v6889 = vsel %vm5080, %v6839, 0
        %v6892 = vsel %vm5080, %v6840, 0
        %v6895 = vsel %vm5080, %v6841, 0
        %v6898 = vsel %vm5080, %v6842, 0
        %v6901 = vsel %vm5080, %v6843, 0
        %v6904 = vsel %vm5080, %v6844, 0
        %v6907 = vsel %vm5080, %v6845, 0
        %v6910 = vsel %vm5080, %v6846, 0
        %6912 = vmatprep.subr.bf16.mxu0 0
        %6913 = vmatpush1.bf16.msra.mxu0 %v6860
        %6914 = vmatprep.subr.bf16.mxu0 0
        %6915 = vmatpush1.bf16.msra.mxu0 %v6861
        %6916 = vmatprep.subr.bf16.mxu0 0
        %6917 = vmatpush1.bf16.msra.mxu0 0
        %6918 = vmatprep.subr.bf16.mxu0 0
        %6919 = vmatpush1.bf16.msra.mxu0 0
        %6920 = vmatprep.subr.bf16.mxu0 0
        %6921 = vmatpush1.bf16.msra.mxu0 0
        %6922 = vmatprep.subr.bf16.mxu0 0
        %6923 = vmatpush1.bf16.msra.mxu0 0
        %6924 = vmatprep.subr.bf16.mxu0 0
        %6925 = vmatpush1.bf16.msra.mxu0 0
        %6926 = vmatprep.subr.bf16.mxu0 0
        %6927 = vmatpush1.bf16.msra.mxu0 0
        %6928 = vmatprep.subr.bf16.mxu0 0
        %6929 = vmatpush1.bf16.msra.mxu0 0
        %6930 = vmatprep.subr.bf16.mxu0 0
        %6931 = vmatpush1.bf16.msra.mxu0 0
        %6932 = vmatprep.subr.bf16.mxu0 0
        %6933 = vmatpush1.bf16.msra.mxu0 0
        %6934 = vmatprep.subr.bf16.mxu0 0
        %6935 = vmatpush1.bf16.msra.mxu0 0
        %6936 = vmatprep.subr.bf16.mxu0 0
        %6937 = vmatpush1.bf16.msra.mxu0 0
        %6938 = vmatprep.subr.bf16.mxu0 0
        %6939 = vmatpush1.bf16.msra.mxu0 0
        %6940 = vmatprep.subr.bf16.mxu0 0
        %6941 = vmatpush1.bf16.msra.mxu0 0
        %6942 = vmatprep.subr.bf16.mxu0 0
        %6943 = vmatpush1.bf16.msra.mxu0 0
        %6944 = vmatprep.mubr.bf16.mxu0 0
        %6945 = vmatmul.mubr.bf16.gmra.mrb[0].mxu0 %v6865
        %v6946 = vpop.f32.mrb[0].mxu0
        %v6947 = vadd.f32 0.0, %v6946
        %v6948 = vpop.f32.mrb[0].mxu0
        %v6949 = vpop.f32.mrb[0].mxu0
        %v6950 = vadd.f32 0.0, %v6949
        %v6951 = vpop.f32.mrb[0].mxu0
        %6952 = vmatprep.mubr.bf16.mxu0 0
        %6953 = vmatmul.mubr.bf16.gmra.mrb[0].mxu0 %v6868
        %v6954 = vpop.f32.mrb[0].mxu0
        %v6955 = vadd.f32 0.0, %v6954
        %v6956 = vpop.f32.mrb[0].mxu0
        %v6957 = vpop.f32.mrb[0].mxu0
        %v6958 = vadd.f32 0.0, %v6957
        %v6959 = vpop.f32.mrb[0].mxu0
        %6960 = vmatprep.mubr.bf16.mxu0 0
        %6961 = vmatmul.mubr.bf16.gmra.mrb[0].mxu0 %v6871
        %v6962 = vpop.f32.mrb[0].mxu0
        %v6963 = vadd.f32 0.0, %v6962
        %v6964 = vpop.f32.mrb[0].mxu0
        %v6965 = vpop.f32.mrb[0].mxu0
        %v6966 = vadd.f32 0.0, %v6965
        %v6967 = vpop.f32.mrb[0].mxu0
        %6968 = vmatprep.mubr.bf16.mxu0 0
        %6969 = vmatmul.mubr.bf16.gmra.mrb[0].mxu0 %v6874
        %v6970 = vpop.f32.mrb[0].mxu0
        %v6971 = vadd.f32 0.0, %v6970
        %v6972 = vpop.f32.mrb[0].mxu0
        %v6973 = vpop.f32.mrb[0].mxu0
        %v6974 = vadd.f32 0.0, %v6973
        %v6975 = vpop.f32.mrb[0].mxu0
        %6976 = vmatprep.mubr.bf16.mxu0 0
        %6977 = vmatmul.mubr.bf16.gmra.mrb[0].mxu0 %v6877
        %v6978 = vpop.f32.mrb[0].mxu0
        %v6979 = vadd.f32 0.0, %v6978
        %v6980 = vpop.f32.mrb[0].mxu0
        %v6981 = vpop.f32.mrb[0].mxu0
        %v6982 = vadd.f32 0.0, %v6981
        %v6983 = vpop.f32.mrb[0].mxu0
        %6984 = vmatprep.mubr.bf16.mxu0 0
        %6985 = vmatmul.mubr.bf16.gmra.mrb[0].mxu0 %v6880
        %v6986 = vpop.f32.mrb[0].mxu0
        %v6987 = vadd.f32 0.0, %v6986
        %v6988 = vpop.f32.mrb[0].mxu0
        %v6989 = vpop.f32.mrb[0].mxu0
        %v6990 = vadd.f32 0.0, %v6989
        %v6991 = vpop.f32.mrb[0].mxu0
        %6992 = vmatprep.mubr.bf16.mxu0 0
        %6993 = vmatmul.mubr.bf16.gmra.mrb[0].mxu0 %v6883
        %v6994 = vpop.f32.mrb[0].mxu0
        %v6995 = vadd.f32 0.0, %v6994
        %v6996 = vpop.f32.mrb[0].mxu0
        %v6997 = vpop.f32.mrb[0].mxu0
        %v6998 = vadd.f32 0.0, %v6997
        %v6999 = vpop.f32.mrb[0].mxu0
        %7000 = vmatprep.mubr.bf16.mxu0 0
        %7001 = vmatmul.mubr.bf16.gmra.mrb[0].mxu0 %v6886
        %v7002 = vpop.f32.mrb[0].mxu0
        %v7003 = vadd.f32 0.0, %v7002
        %v7004 = vpop.f32.mrb[0].mxu0
        %v7005 = vpop.f32.mrb[0].mxu0
        %v7006 = vadd.f32 0.0, %v7005
        %v7007 = vpop.f32.mrb[0].mxu0
        %7008 = vmatprep.mubr.bf16.mxu0 0
        %7009 = vmatmul.mubr.bf16.gmra.mrb[0].mxu0 %v6889
        %v7010 = vpop.f32.mrb[0].mxu0
        %v7011 = vadd.f32 0.0, %v7010
        %v7012 = vpop.f32.mrb[0].mxu0
        %v7013 = vpop.f32.mrb[0].mxu0
        %v7014 = vadd.f32 0.0, %v7013
        %v7015 = vpop.f32.mrb[0].mxu0
        %7016 = vmatprep.mubr.bf16.mxu0 0
        %7017 = vmatmul.mubr.bf16.gmra.mrb[0].mxu0 %v6892
        %v7018 = vpop.f32.mrb[0].mxu0
        %v7019 = vadd.f32 0.0, %v7018
        %v7020 = vpop.f32.mrb[0].mxu0
        %v7021 = vpop.f32.mrb[0].mxu0
        %v7022 = vadd.f32 0.0, %v7021
        %v7023 = vpop.f32.mrb[0].mxu0
        %7024 = vmatprep.mubr.bf16.mxu0 0
        %7025 = vmatmul.mubr.bf16.gmra.mrb[0].mxu0 %v6895
        %v7026 = vpop.f32.mrb[0].mxu0
        %v7027 = vadd.f32 0.0, %v7026
        %v7028 = vpop.f32.mrb[0].mxu0
        %v7029 = vpop.f32.mrb[0].mxu0
        %v7030 = vadd.f32 0.0, %v7029
        %v7031 = vpop.f32.mrb[0].mxu0
        %7032 = vmatprep.mubr.bf16.mxu0 0
        %7033 = vmatmul.mubr.bf16.gmra.mrb[0].mxu0 %v6898
        %v7034 = vpop.f32.mrb[0].mxu0
        %v7035 = vadd.f32 0.0, %v7034
        %v7036 = vpop.f32.mrb[0].mxu0
        %v7037 = vpop.f32.mrb[0].mxu0
        %v7038 = vadd.f32 0.0, %v7037
        %v7039 = vpop.f32.mrb[0].mxu0
        %7040 = vmatprep.mubr.bf16.mxu0 0
        %7041 = vmatmul.mubr.bf16.gmra.mrb[0].mxu0 %v6901
        %v7042 = vpop.f32.mrb[0].mxu0
        %v7043 = vadd.f32 0.0, %v7042
        %v7044 = vpop.f32.mrb[0].mxu0
        %v7045 = vpop.f32.mrb[0].mxu0
        %v7046 = vadd.f32 0.0, %v7045
        %v7047 = vpop.f32.mrb[0].mxu0
        %7048 = vmatprep.mubr.bf16.mxu0 0
        %7049 = vmatmul.mubr.bf16.gmra.mrb[0].mxu0 %v6904
        %v7050 = vpop.f32.mrb[0].mxu0
        %v7051 = vadd.f32 0.0, %v7050
        %v7052 = vpop.f32.mrb[0].mxu0
        %v7053 = vpop.f32.mrb[0].mxu0
        %v7054 = vadd.f32 0.0, %v7053
        %v7055 = vpop.f32.mrb[0].mxu0
        %7056 = vmatprep.mubr.bf16.mxu0 0
        %7057 = vmatmul.mubr.bf16.gmra.mrb[0].mxu0 %v6907
        %v7058 = vpop.f32.mrb[0].mxu0
        %v7059 = vadd.f32 0.0, %v7058
        %v7060 = vpop.f32.mrb[0].mxu0
        %v7061 = vpop.f32.mrb[0].mxu0
        %v7062 = vadd.f32 0.0, %v7061
        %v7063 = vpop.f32.mrb[0].mxu0
        %7064 = vmatprep.mubr.bf16.mxu0 0
        %7065 = vmatmul.mubr.bf16.gmra.mrb[0].mxu0 %v6910
        %v7066 = vpop.f32.mrb[0].mxu0
        %v7067 = vadd.f32 0.0, %v7066
        %v7068 = vpop.f32.mrb[0].mxu0
        %v7069 = vpop.f32.mrb[0].mxu0
        %v7070 = vadd.f32 0.0, %v7069
        %v7071 = vpop.f32.mrb[0].mxu0
        %7072 = vdwg.mxu0
        %v7073 = vadd.f32 %v6767, %v6947
        %v7074 = vadd.f32 %v6768, %v6950
        %v7075 = vadd.f32 %v6769, %v6955
        %v7076 = vadd.f32 %v6770, %v6958
        %v7077 = vadd.f32 %v6771, %v6963
        %v7078 = vadd.f32 %v6772, %v6966
        %v7079 = vadd.f32 %v6773, %v6971
        %v7080 = vadd.f32 %v6774, %v6974
        %v7081 = vadd.f32 %v6775, %v6979
        %v7082 = vadd.f32 %v6776, %v6982
        %v7083 = vadd.f32 %v6777, %v6987
        %v7084 = vadd.f32 %v6778, %v6990
        %v7085 = vadd.f32 %v6779, %v6995
        %v7086 = vadd.f32 %v6780, %v6998
        %v7087 = vadd.f32 %v6781, %v7003
        %v7088 = vadd.f32 %v6782, %v7006
        %v7089 = vadd.f32 %v6783, %v7011
        %v7090 = vadd.f32 %v6784, %v7014
        %v7091 = vadd.f32 %v6785, %v7019
        %v7092 = vadd.f32 %v6786, %v7022
        %v7093 = vadd.f32 %v6787, %v7027
        %v7094 = vadd.f32 %v6788, %v7030
        %v7095 = vadd.f32 %v6789, %v7035
        %v7096 = vadd.f32 %v6790, %v7038
        %v7097 = vadd.f32 %v6791, %v7043
        %v7098 = vadd.f32 %v6792, %v7046
        %v7099 = vadd.f32 %v6793, %v7051
        %v7100 = vadd.f32 %v6794, %v7054
        %v7101 = vadd.f32 %v6795, %v7059
        %v7102 = vadd.f32 %v6796, %v7062
        %v7103 = vadd.f32 %v6797, %v7067
        %v7104 = vadd.f32 %v6798, %v7070
        %v7105 = vmul.f32 %v4869, %v3890
        %v7106 = vmul.f32 %v4870, %v3895
        %v7107 = vmul.f32 %v4871, %v3900
        %v7108 = vmul.f32 %v4872, %v3905
        %v7109 = vmul.f32 %v4873, %v3910
        %v7110 = vmul.f32 %v4874, %v3915
        %v7111 = vmul.f32 %v4875, %v3920
        %v7112 = vmul.f32 %v4876, %v3925
        %v7113 = vmul.f32 %v4877, %v3930
        %v7114 = vmul.f32 %v4878, %v3935
        %v7115 = vmul.f32 %v4879, %v3940
        %v7116 = vmul.f32 %v4880, %v3945
        %v7117 = vmul.f32 %v4881, %v3950
        %v7118 = vmul.f32 %v4882, %v3955
        %v7119 = vmul.f32 %v4883, %v3960
        %v7120 = vmul.f32 %v4884, %v3965
        %v7121 = vmul.f32 %v4885, %v3970
        %v7122 = vmul.f32 %v4886, %v3975
        %v7123 = vmul.f32 %v4887, %v3980
        %v7124 = vmul.f32 %v4888, %v3985
        %v7125 = vmul.f32 %v4889, %v3990
        %v7126 = vmul.f32 %v4890, %v3995
        %v7127 = vmul.f32 %v4891, %v4000
        %v7128 = vmul.f32 %v4892, %v4005
        %v7129 = vmul.f32 %v4893, %v4010
        %v7130 = vmul.f32 %v4894, %v4015
        %v7131 = vmul.f32 %v4895, %v4020
        %v7132 = vmul.f32 %v4896, %v4025
        %v7133 = vmul.f32 %v4897, %v4030
        %v7134 = vmul.f32 %v4898, %v4035
        %v7135 = vmul.f32 %v4867, %v4040
        %v7136 = vmul.f32 %v4868, %v4045
        %v7137 = vpack.c.bf16 %v7106, %v7105
        %v7138 = vpack.c.bf16 %v7108, %v7107
        %v7139 = vpack.c.bf16 %v7110, %v7109
        %v7140 = vpack.c.bf16 %v7112, %v7111
        %v7141 = vpack.c.bf16 %v7114, %v7113
        %v7142 = vpack.c.bf16 %v7116, %v7115
        %v7143 = vpack.c.bf16 %v7118, %v7117
        %v7144 = vpack.c.bf16 %v7120, %v7119
        %v7145 = vpack.c.bf16 %v7122, %v7121
        %v7146 = vpack.c.bf16 %v7124, %v7123
        %v7147 = vpack.c.bf16 %v7126, %v7125
        %v7148 = vpack.c.bf16 %v7128, %v7127
        %v7149 = vpack.c.bf16 %v7130, %v7129
        %v7150 = vpack.c.bf16 %v7132, %v7131
        %v7151 = vpack.c.bf16 %v7134, %v7133
        %v7152 = vpack.c.bf16 %v7136, %v7135
        %s7153 = scalar_lea.vmem %s4, 112
        %v7154 = vld [vmem:[%s7153] sm:$0xf]
        %v7155 = vld [vmem:[%s7153 + $0x4] sm:$0xf]
        %v7156 = vld [vmem:[%s7153 + $0x8] sm:$0xf]
        %v7157 = vld [vmem:[%s7153 + $0xc] sm:$0xf]
        %v7162 = vunpack.c.l.b16 %v7154
        %v7163 = vunpack.c.l.b16 %v7155
        %v7164 = vunpack.c.l.b16 %v7156
        %v7165 = vunpack.c.l.b16 %v7157
        %v7166 = vpack.c.b16 %v7163, %v7162
        %v7167 = vpack.c.b16 %v7165, %v7164
        %v7171 = vsel %vm5080, %v7137, 0
        %v7174 = vsel %vm5080, %v7138, 0
        %v7177 = vsel %vm5080, %v7139, 0
        %v7180 = vsel %vm5080, %v7140, 0
        %v7183 = vsel %vm5080, %v7141, 0
        %v7186 = vsel %vm5080, %v7142, 0
        %v7189 = vsel %vm5080, %v7143, 0
        %v7192 = vsel %vm5080, %v7144, 0
        %v7195 = vsel %vm5080, %v7145, 0
        %v7198 = vsel %vm5080, %v7146, 0
        %v7201 = vsel %vm5080, %v7147, 0
        %v7204 = vsel %vm5080, %v7148, 0
        %v7207 = vsel %vm5080, %v7149, 0
        %v7210 = vsel %vm5080, %v7150, 0
        %v7213 = vsel %vm5080, %v7151, 0
        %v7216 = vsel %vm5080, %v7152, 0
        %7218 = vmatprep.subr.bf16.mxu0 0
        %7219 = vmatpush1.bf16.msra.mxu0 %v7166
        %7220 = vmatprep.subr.bf16.mxu0 0
        %7221 = vmatpush1.bf16.msra.mxu0 %v7167
        %7222 = vmatprep.subr.bf16.mxu0 0
        %7223 = vmatpush1.bf16.msra.mxu0 0
        %7224 = vmatprep.subr.bf16.mxu0 0
        %7225 = vmatpush1.bf16.msra.mxu0 0
        %7226 = vmatprep.subr.bf16.mxu0 0
        %7227 = vmatpush1.bf16.msra.mxu0 0
        %7228 = vmatprep.subr.bf16.mxu0 0
        %7229 = vmatpush1.bf16.msra.mxu0 0
        %7230 = vmatprep.subr.bf16.mxu0 0
        %7231 = vmatpush1.bf16.msra.mxu0 0
        %7232 = vmatprep.subr.bf16.mxu0 0
        %7233 = vmatpush1.bf16.msra.mxu0 0
        %7234 = vmatprep.subr.bf16.mxu0 0
        %7235 = vmatpush1.bf16.msra.mxu0 0
        %7236 = vmatprep.subr.bf16.mxu0 0
        %7237 = vmatpush1.bf16.msra.mxu0 0
        %7238 = vmatprep.subr.bf16.mxu0 0
        %7239 = vmatpush1.bf16.msra.mxu0 0
        %7240 = vmatprep.subr.bf16.mxu0 0
        %7241 = vmatpush1.bf16.msra.mxu0 0
        %7242 = vmatprep.subr.bf16.mxu0 0
        %7243 = vmatpush1.bf16.msra.mxu0 0
        %7244 = vmatprep.subr.bf16.mxu0 0
        %7245 = vmatpush1.bf16.msra.mxu0 0
        %7246 = vmatprep.subr.bf16.mxu0 0
        %7247 = vmatpush1.bf16.msra.mxu0 0
        %7248 = vmatprep.subr.bf16.mxu0 0
        %7249 = vmatpush1.bf16.msra.mxu0 0
        %7250 = vmatprep.mubr.bf16.mxu0 0
        %7251 = vmatmul.mubr.bf16.gmra.mrb[0].mxu0 %v7171
        %v7252 = vpop.f32.mrb[0].mxu0
        %v7253 = vadd.f32 0.0, %v7252
        %v7254 = vpop.f32.mrb[0].mxu0
        %v7255 = vpop.f32.mrb[0].mxu0
        %v7256 = vadd.f32 0.0, %v7255
        %v7257 = vpop.f32.mrb[0].mxu0
        %7258 = vmatprep.mubr.bf16.mxu0 0
        %7259 = vmatmul.mubr.bf16.gmra.mrb[0].mxu0 %v7174
        %v7260 = vpop.f32.mrb[0].mxu0
        %v7261 = vadd.f32 0.0, %v7260
        %v7262 = vpop.f32.mrb[0].mxu0
        %v7263 = vpop.f32.mrb[0].mxu0
        %v7264 = vadd.f32 0.0, %v7263
        %v7265 = vpop.f32.mrb[0].mxu0
        %7266 = vmatprep.mubr.bf16.mxu0 0
        %7267 = vmatmul.mubr.bf16.gmra.mrb[0].mxu0 %v7177
        %v7268 = vpop.f32.mrb[0].mxu0
        %v7269 = vadd.f32 0.0, %v7268
        %v7270 = vpop.f32.mrb[0].mxu0
        %v7271 = vpop.f32.mrb[0].mxu0
        %v7272 = vadd.f32 0.0, %v7271
        %v7273 = vpop.f32.mrb[0].mxu0
        %7274 = vmatprep.mubr.bf16.mxu0 0
        %7275 = vmatmul.mubr.bf16.gmra.mrb[0].mxu0 %v7180
        %v7276 = vpop.f32.mrb[0].mxu0
        %v7277 = vadd.f32 0.0, %v7276
        %v7278 = vpop.f32.mrb[0].mxu0
        %v7279 = vpop.f32.mrb[0].mxu0
        %v7280 = vadd.f32 0.0, %v7279
        %v7281 = vpop.f32.mrb[0].mxu0
        %7282 = vmatprep.mubr.bf16.mxu0 0
        %7283 = vmatmul.mubr.bf16.gmra.mrb[0].mxu0 %v7183
        %v7284 = vpop.f32.mrb[0].mxu0
        %v7285 = vadd.f32 0.0, %v7284
        %v7286 = vpop.f32.mrb[0].mxu0
        %v7287 = vpop.f32.mrb[0].mxu0
        %v7288 = vadd.f32 0.0, %v7287
        %v7289 = vpop.f32.mrb[0].mxu0
        %7290 = vmatprep.mubr.bf16.mxu0 0
        %7291 = vmatmul.mubr.bf16.gmra.mrb[0].mxu0 %v7186
        %v7292 = vpop.f32.mrb[0].mxu0
        %v7293 = vadd.f32 0.0, %v7292
        %v7294 = vpop.f32.mrb[0].mxu0
        %v7295 = vpop.f32.mrb[0].mxu0
        %v7296 = vadd.f32 0.0, %v7295
        %v7297 = vpop.f32.mrb[0].mxu0
        %7298 = vmatprep.mubr.bf16.mxu0 0
        %7299 = vmatmul.mubr.bf16.gmra.mrb[0].mxu0 %v7189
        %v7300 = vpop.f32.mrb[0].mxu0
        %v7301 = vadd.f32 0.0, %v7300
        %v7302 = vpop.f32.mrb[0].mxu0
        %v7303 = vpop.f32.mrb[0].mxu0
        %v7304 = vadd.f32 0.0, %v7303
        %v7305 = vpop.f32.mrb[0].mxu0
        %7306 = vmatprep.mubr.bf16.mxu0 0
        %7307 = vmatmul.mubr.bf16.gmra.mrb[0].mxu0 %v7192
        %v7308 = vpop.f32.mrb[0].mxu0
        %v7309 = vadd.f32 0.0, %v7308
        %v7310 = vpop.f32.mrb[0].mxu0
        %v7311 = vpop.f32.mrb[0].mxu0
        %v7312 = vadd.f32 0.0, %v7311
        %v7313 = vpop.f32.mrb[0].mxu0
        %7314 = vmatprep.mubr.bf16.mxu0 0
        %7315 = vmatmul.mubr.bf16.gmra.mrb[0].mxu0 %v7195
        %v7316 = vpop.f32.mrb[0].mxu0
        %v7317 = vadd.f32 0.0, %v7316
        %v7318 = vpop.f32.mrb[0].mxu0
        %v7319 = vpop.f32.mrb[0].mxu0
        %v7320 = vadd.f32 0.0, %v7319
        %v7321 = vpop.f32.mrb[0].mxu0
        %7322 = vmatprep.mubr.bf16.mxu0 0
        %7323 = vmatmul.mubr.bf16.gmra.mrb[0].mxu0 %v7198
        %v7324 = vpop.f32.mrb[0].mxu0
        %v7325 = vadd.f32 0.0, %v7324
        %v7326 = vpop.f32.mrb[0].mxu0
        %v7327 = vpop.f32.mrb[0].mxu0
        %v7328 = vadd.f32 0.0, %v7327
        %v7329 = vpop.f32.mrb[0].mxu0
        %7330 = vmatprep.mubr.bf16.mxu0 0
        %7331 = vmatmul.mubr.bf16.gmra.mrb[0].mxu0 %v7201
        %v7332 = vpop.f32.mrb[0].mxu0
        %v7333 = vadd.f32 0.0, %v7332
        %v7334 = vpop.f32.mrb[0].mxu0
        %v7335 = vpop.f32.mrb[0].mxu0
        %v7336 = vadd.f32 0.0, %v7335
        %v7337 = vpop.f32.mrb[0].mxu0
        %7338 = vmatprep.mubr.bf16.mxu0 0
        %7339 = vmatmul.mubr.bf16.gmra.mrb[0].mxu0 %v7204
        %v7340 = vpop.f32.mrb[0].mxu0
        %v7341 = vadd.f32 0.0, %v7340
        %v7342 = vpop.f32.mrb[0].mxu0
        %v7343 = vpop.f32.mrb[0].mxu0
        %v7344 = vadd.f32 0.0, %v7343
        %v7345 = vpop.f32.mrb[0].mxu0
        %7346 = vmatprep.mubr.bf16.mxu0 0
        %7347 = vmatmul.mubr.bf16.gmra.mrb[0].mxu0 %v7207
        %v7348 = vpop.f32.mrb[0].mxu0
        %v7349 = vadd.f32 0.0, %v7348
        %v7350 = vpop.f32.mrb[0].mxu0
        %v7351 = vpop.f32.mrb[0].mxu0
        %v7352 = vadd.f32 0.0, %v7351
        %v7353 = vpop.f32.mrb[0].mxu0
        %7354 = vmatprep.mubr.bf16.mxu0 0
        %7355 = vmatmul.mubr.bf16.gmra.mrb[0].mxu0 %v7210
        %v7356 = vpop.f32.mrb[0].mxu0
        %v7357 = vadd.f32 0.0, %v7356
        %v7358 = vpop.f32.mrb[0].mxu0
        %v7359 = vpop.f32.mrb[0].mxu0
        %v7360 = vadd.f32 0.0, %v7359
        %v7361 = vpop.f32.mrb[0].mxu0
        %7362 = vmatprep.mubr.bf16.mxu0 0
        %7363 = vmatmul.mubr.bf16.gmra.mrb[0].mxu0 %v7213
        %v7364 = vpop.f32.mrb[0].mxu0
        %v7365 = vadd.f32 0.0, %v7364
        %v7366 = vpop.f32.mrb[0].mxu0
        %v7367 = vpop.f32.mrb[0].mxu0
        %v7368 = vadd.f32 0.0, %v7367
        %v7369 = vpop.f32.mrb[0].mxu0
        %7370 = vmatprep.mubr.bf16.mxu0 0
        %7371 = vmatmul.mubr.bf16.gmra.mrb[0].mxu0 %v7216
        %v7372 = vpop.f32.mrb[0].mxu0
        %v7373 = vadd.f32 0.0, %v7372
        %v7374 = vpop.f32.mrb[0].mxu0
        %v7375 = vpop.f32.mrb[0].mxu0
        %v7376 = vadd.f32 0.0, %v7375
        %v7377 = vpop.f32.mrb[0].mxu0
        %7378 = vdwg.mxu0
        %v7379 = vadd.f32 %v7073, %v7253
        %v7380 = vadd.f32 %v7074, %v7256
        %v7381 = vadd.f32 %v7075, %v7261
        %v7382 = vadd.f32 %v7076, %v7264
        %v7383 = vadd.f32 %v7077, %v7269
        %v7384 = vadd.f32 %v7078, %v7272
        %v7385 = vadd.f32 %v7079, %v7277
        %v7386 = vadd.f32 %v7080, %v7280
        %v7387 = vadd.f32 %v7081, %v7285
        %v7388 = vadd.f32 %v7082, %v7288
        %v7389 = vadd.f32 %v7083, %v7293
        %v7390 = vadd.f32 %v7084, %v7296
        %v7391 = vadd.f32 %v7085, %v7301
        %v7392 = vadd.f32 %v7086, %v7304
        %v7393 = vadd.f32 %v7087, %v7309
        %v7394 = vadd.f32 %v7088, %v7312
        %v7395 = vadd.f32 %v7089, %v7317
        %v7396 = vadd.f32 %v7090, %v7320
        %v7397 = vadd.f32 %v7091, %v7325
        %v7398 = vadd.f32 %v7092, %v7328
        %v7399 = vadd.f32 %v7093, %v7333
        %v7400 = vadd.f32 %v7094, %v7336
        %v7401 = vadd.f32 %v7095, %v7341
        %v7402 = vadd.f32 %v7096, %v7344
        %v7403 = vadd.f32 %v7097, %v7349
        %v7404 = vadd.f32 %v7098, %v7352
        %v7405 = vadd.f32 %v7099, %v7357
        %v7406 = vadd.f32 %v7100, %v7360
        %v7407 = vadd.f32 %v7101, %v7365
        %v7408 = vadd.f32 %v7102, %v7368
        %v7409 = vadd.f32 %v7103, %v7373
        %v7410 = vadd.f32 %v7104, %v7376
        %v7411 = vmul.f32 %v5571, %v4377
        %v7412 = vmul.f32 %v5570, %v4382
        %v7413 = vmul.f32 %v5569, %v4387
        %v7414 = vmul.f32 %v5568, %v4392
        %v7415 = vmul.f32 %v5567, %v4397
        %v7416 = vmul.f32 %v5566, %v4402
        %v7417 = vmul.f32 %v5565, %v4407
        %v7418 = vmul.f32 %v5564, %v4412
        %v7419 = vmul.f32 %v5563, %v4417
        %v7420 = vmul.f32 %v5562, %v4422
        %v7421 = vmul.f32 %v5561, %v4427
        %v7422 = vmul.f32 %v5560, %v4432
        %v7423 = vmul.f32 %v5559, %v4437
        %v7424 = vmul.f32 %v5558, %v4442
        %v7425 = vmul.f32 %v5557, %v4447
        %v7426 = vmul.f32 %v5556, %v4452
        %v7427 = vmul.f32 %v5555, %v4457
        %v7428 = vmul.f32 %v5554, %v4462
        %v7429 = vmul.f32 %v5553, %v4467
        %v7430 = vmul.f32 %v5552, %v4472
        %v7431 = vmul.f32 %v5551, %v4477
        %v7432 = vmul.f32 %v5550, %v4482
        %v7433 = vmul.f32 %v5549, %v4487
        %v7434 = vmul.f32 %v5548, %v4492
        %v7435 = vmul.f32 %v5547, %v4497
        %v7436 = vmul.f32 %v5546, %v4502
        %v7437 = vmul.f32 %v5545, %v4507
        %v7438 = vmul.f32 %v5544, %v4512
        %v7439 = vmul.f32 %v5543, %v4517
        %v7440 = vmul.f32 %v5574, %v4522
        %v7441 = vmul.f32 %v5573, %v4527
        %v7442 = vmul.f32 %v5572, %v4532
        %v7443 = vpack.c.bf16 %v7412, %v7411
        %v7444 = vpack.c.bf16 %v7414, %v7413
        %v7445 = vpack.c.bf16 %v7416, %v7415
        %v7446 = vpack.c.bf16 %v7418, %v7417
        %v7447 = vpack.c.bf16 %v7420, %v7419
        %v7448 = vpack.c.bf16 %v7422, %v7421
        %v7449 = vpack.c.bf16 %v7424, %v7423
        %v7450 = vpack.c.bf16 %v7426, %v7425
        %v7451 = vpack.c.bf16 %v7428, %v7427
        %v7452 = vpack.c.bf16 %v7430, %v7429
        %v7453 = vpack.c.bf16 %v7432, %v7431
        %v7454 = vpack.c.bf16 %v7434, %v7433
        %v7455 = vpack.c.bf16 %v7436, %v7435
        %v7456 = vpack.c.bf16 %v7438, %v7437
        %v7457 = vpack.c.bf16 %v7440, %v7439
        %v7458 = vpack.c.bf16 %v7442, %v7441
        %s7459 = scalar_lea.vmem %s4, 128
        %v7460 = vld [vmem:[%s7459] sm:$0xf]
        %v7461 = vld [vmem:[%s7459 + $0x4] sm:$0xf]
        %v7462 = vld [vmem:[%s7459 + $0x8] sm:$0xf]
        %v7463 = vld [vmem:[%s7459 + $0xc] sm:$0xf]
        %v7468 = vunpack.c.l.b16 %v7460
        %v7469 = vunpack.c.l.b16 %v7461
        %v7470 = vunpack.c.l.b16 %v7462
        %v7471 = vunpack.c.l.b16 %v7463
        %v7472 = vpack.c.b16 %v7469, %v7468
        %v7473 = vpack.c.b16 %v7471, %v7470
        %v7477 = vsel %vm5080, %v7443, 0
        %v7480 = vsel %vm5080, %v7444, 0
        %v7483 = vsel %vm5080, %v7445, 0
        %v7486 = vsel %vm5080, %v7446, 0
        %v7489 = vsel %vm5080, %v7447, 0
        %v7492 = vsel %vm5080, %v7448, 0
        %v7495 = vsel %vm5080, %v7449, 0
        %v7498 = vsel %vm5080, %v7450, 0
        %v7501 = vsel %vm5080, %v7451, 0
        %v7504 = vsel %vm5080, %v7452, 0
        %v7507 = vsel %vm5080, %v7453, 0
        %v7510 = vsel %vm5080, %v7454, 0
        %v7513 = vsel %vm5080, %v7455, 0
        %v7516 = vsel %vm5080, %v7456, 0
        %v7519 = vsel %vm5080, %v7457, 0
        %v7522 = vsel %vm5080, %v7458, 0
        %7524 = vmatprep.subr.bf16.mxu0 0
        %7525 = vmatpush1.bf16.msra.mxu0 %v7472
        %7526 = vmatprep.subr.bf16.mxu0 0
        %7527 = vmatpush1.bf16.msra.mxu0 %v7473
        %7528 = vmatprep.subr.bf16.mxu0 0
        %7529 = vmatpush1.bf16.msra.mxu0 0
        %7530 = vmatprep.subr.bf16.mxu0 0
        %7531 = vmatpush1.bf16.msra.mxu0 0
        %7532 = vmatprep.subr.bf16.mxu0 0
        %7533 = vmatpush1.bf16.msra.mxu0 0
        %7534 = vmatprep.subr.bf16.mxu0 0
        %7535 = vmatpush1.bf16.msra.mxu0 0
        %7536 = vmatprep.subr.bf16.mxu0 0
        %7537 = vmatpush1.bf16.msra.mxu0 0
        %7538 = vmatprep.subr.bf16.mxu0 0
        %7539 = vmatpush1.bf16.msra.mxu0 0
        %7540 = vmatprep.subr.bf16.mxu0 0
        %7541 = vmatpush1.bf16.msra.mxu0 0
        %7542 = vmatprep.subr.bf16.mxu0 0
        %7543 = vmatpush1.bf16.msra.mxu0 0
        %7544 = vmatprep.subr.bf16.mxu0 0
        %7545 = vmatpush1.bf16.msra.mxu0 0
        %7546 = vmatprep.subr.bf16.mxu0 0
        %7547 = vmatpush1.bf16.msra.mxu0 0
        %7548 = vmatprep.subr.bf16.mxu0 0
        %7549 = vmatpush1.bf16.msra.mxu0 0
        %7550 = vmatprep.subr.bf16.mxu0 0
        %7551 = vmatpush1.bf16.msra.mxu0 0
        %7552 = vmatprep.subr.bf16.mxu0 0
        %7553 = vmatpush1.bf16.msra.mxu0 0
        %7554 = vmatprep.subr.bf16.mxu0 0
        %7555 = vmatpush1.bf16.msra.mxu0 0
        %7556 = vmatprep.mubr.bf16.mxu0 0
        %7557 = vmatmul.mubr.bf16.gmra.mrb[0].mxu0 %v7477
        %v7558 = vpop.f32.mrb[0].mxu0
        %v7559 = vadd.f32 0.0, %v7558
        %v7560 = vpop.f32.mrb[0].mxu0
        %v7561 = vpop.f32.mrb[0].mxu0
        %v7562 = vadd.f32 0.0, %v7561
        %v7563 = vpop.f32.mrb[0].mxu0
        %7564 = vmatprep.mubr.bf16.mxu0 0
        %7565 = vmatmul.mubr.bf16.gmra.mrb[0].mxu0 %v7480
        %v7566 = vpop.f32.mrb[0].mxu0
        %v7567 = vadd.f32 0.0, %v7566
        %v7568 = vpop.f32.mrb[0].mxu0
        %v7569 = vpop.f32.mrb[0].mxu0
        %v7570 = vadd.f32 0.0, %v7569
        %v7571 = vpop.f32.mrb[0].mxu0
        %7572 = vmatprep.mubr.bf16.mxu0 0
        %7573 = vmatmul.mubr.bf16.gmra.mrb[0].mxu0 %v7483
        %v7574 = vpop.f32.mrb[0].mxu0
        %v7575 = vadd.f32 0.0, %v7574
        %v7576 = vpop.f32.mrb[0].mxu0
        %v7577 = vpop.f32.mrb[0].mxu0
        %v7578 = vadd.f32 0.0, %v7577
        %v7579 = vpop.f32.mrb[0].mxu0
        %7580 = vmatprep.mubr.bf16.mxu0 0
        %7581 = vmatmul.mubr.bf16.gmra.mrb[0].mxu0 %v7486
        %v7582 = vpop.f32.mrb[0].mxu0
        %v7583 = vadd.f32 0.0, %v7582
        %v7584 = vpop.f32.mrb[0].mxu0
        %v7585 = vpop.f32.mrb[0].mxu0
        %v7586 = vadd.f32 0.0, %v7585
        %v7587 = vpop.f32.mrb[0].mxu0
        %7588 = vmatprep.mubr.bf16.mxu0 0
        %7589 = vmatmul.mubr.bf16.gmra.mrb[0].mxu0 %v7489
        %v7590 = vpop.f32.mrb[0].mxu0
        %v7591 = vadd.f32 0.0, %v7590
        %v7592 = vpop.f32.mrb[0].mxu0
        %v7593 = vpop.f32.mrb[0].mxu0
        %v7594 = vadd.f32 0.0, %v7593
        %v7595 = vpop.f32.mrb[0].mxu0
        %7596 = vmatprep.mubr.bf16.mxu0 0
        %7597 = vmatmul.mubr.bf16.gmra.mrb[0].mxu0 %v7492
        %v7598 = vpop.f32.mrb[0].mxu0
        %v7599 = vadd.f32 0.0, %v7598
        %v7600 = vpop.f32.mrb[0].mxu0
        %v7601 = vpop.f32.mrb[0].mxu0
        %v7602 = vadd.f32 0.0, %v7601
        %v7603 = vpop.f32.mrb[0].mxu0
        %7604 = vmatprep.mubr.bf16.mxu0 0
        %7605 = vmatmul.mubr.bf16.gmra.mrb[0].mxu0 %v7495
        %v7606 = vpop.f32.mrb[0].mxu0
        %v7607 = vadd.f32 0.0, %v7606
        %v7608 = vpop.f32.mrb[0].mxu0
        %v7609 = vpop.f32.mrb[0].mxu0
        %v7610 = vadd.f32 0.0, %v7609
        %v7611 = vpop.f32.mrb[0].mxu0
        %7612 = vmatprep.mubr.bf16.mxu0 0
        %7613 = vmatmul.mubr.bf16.gmra.mrb[0].mxu0 %v7498
        %v7614 = vpop.f32.mrb[0].mxu0
        %v7615 = vadd.f32 0.0, %v7614
        %v7616 = vpop.f32.mrb[0].mxu0
        %v7617 = vpop.f32.mrb[0].mxu0
        %v7618 = vadd.f32 0.0, %v7617
        %v7619 = vpop.f32.mrb[0].mxu0
        %7620 = vmatprep.mubr.bf16.mxu0 0
        %7621 = vmatmul.mubr.bf16.gmra.mrb[0].mxu0 %v7501
        %v7622 = vpop.f32.mrb[0].mxu0
        %v7623 = vadd.f32 0.0, %v7622
        %v7624 = vpop.f32.mrb[0].mxu0
        %v7625 = vpop.f32.mrb[0].mxu0
        %v7626 = vadd.f32 0.0, %v7625
        %v7627 = vpop.f32.mrb[0].mxu0
        %7628 = vmatprep.mubr.bf16.mxu0 0
        %7629 = vmatmul.mubr.bf16.gmra.mrb[0].mxu0 %v7504
        %v7630 = vpop.f32.mrb[0].mxu0
        %v7631 = vadd.f32 0.0, %v7630
        %v7632 = vpop.f32.mrb[0].mxu0
        %v7633 = vpop.f32.mrb[0].mxu0
        %v7634 = vadd.f32 0.0, %v7633
        %v7635 = vpop.f32.mrb[0].mxu0
        %7636 = vmatprep.mubr.bf16.mxu0 0
        %7637 = vmatmul.mubr.bf16.gmra.mrb[0].mxu0 %v7507
        %v7638 = vpop.f32.mrb[0].mxu0
        %v7639 = vadd.f32 0.0, %v7638
        %v7640 = vpop.f32.mrb[0].mxu0
        %v7641 = vpop.f32.mrb[0].mxu0
        %v7642 = vadd.f32 0.0, %v7641
        %v7643 = vpop.f32.mrb[0].mxu0
        %7644 = vmatprep.mubr.bf16.mxu0 0
        %7645 = vmatmul.mubr.bf16.gmra.mrb[0].mxu0 %v7510
        %v7646 = vpop.f32.mrb[0].mxu0
        %v7647 = vadd.f32 0.0, %v7646
        %v7648 = vpop.f32.mrb[0].mxu0
        %v7649 = vpop.f32.mrb[0].mxu0
        %v7650 = vadd.f32 0.0, %v7649
        %v7651 = vpop.f32.mrb[0].mxu0
        %7652 = vmatprep.mubr.bf16.mxu0 0
        %7653 = vmatmul.mubr.bf16.gmra.mrb[0].mxu0 %v7513
        %v7654 = vpop.f32.mrb[0].mxu0
        %v7655 = vadd.f32 0.0, %v7654
        %v7656 = vpop.f32.mrb[0].mxu0
        %v7657 = vpop.f32.mrb[0].mxu0
        %v7658 = vadd.f32 0.0, %v7657
        %v7659 = vpop.f32.mrb[0].mxu0
        %7660 = vmatprep.mubr.bf16.mxu0 0
        %7661 = vmatmul.mubr.bf16.gmra.mrb[0].mxu0 %v7516
        %v7662 = vpop.f32.mrb[0].mxu0
        %v7663 = vadd.f32 0.0, %v7662
        %v7664 = vpop.f32.mrb[0].mxu0
        %v7665 = vpop.f32.mrb[0].mxu0
        %v7666 = vadd.f32 0.0, %v7665
        %v7667 = vpop.f32.mrb[0].mxu0
        %7668 = vmatprep.mubr.bf16.mxu0 0
        %7669 = vmatmul.mubr.bf16.gmra.mrb[0].mxu0 %v7519
        %v7670 = vpop.f32.mrb[0].mxu0
        %v7671 = vadd.f32 0.0, %v7670
        %v7672 = vpop.f32.mrb[0].mxu0
        %v7673 = vpop.f32.mrb[0].mxu0
        %v7674 = vadd.f32 0.0, %v7673
        %v7675 = vpop.f32.mrb[0].mxu0
        %7676 = vmatprep.mubr.bf16.mxu0 0
        %7677 = vmatmul.mubr.bf16.gmra.mrb[0].mxu0 %v7522
        %v7678 = vpop.f32.mrb[0].mxu0
        %v7679 = vadd.f32 0.0, %v7678
        %v7680 = vpop.f32.mrb[0].mxu0
        %v7681 = vpop.f32.mrb[0].mxu0
        %v7682 = vadd.f32 0.0, %v7681
        %v7683 = vpop.f32.mrb[0].mxu0
        %7684 = vdwg.mxu0
        %v7685 = vadd.f32 %v7379, %v7559
        %v7686 = vadd.f32 %v7380, %v7562
        %v7687 = vadd.f32 %v7381, %v7567
        %v7688 = vadd.f32 %v7382, %v7570
        %v7689 = vadd.f32 %v7383, %v7575
        %v7690 = vadd.f32 %v7384, %v7578
        %v7691 = vadd.f32 %v7385, %v7583
        %v7692 = vadd.f32 %v7386, %v7586
        %v7693 = vadd.f32 %v7387, %v7591
        %v7694 = vadd.f32 %v7388, %v7594
        %v7695 = vadd.f32 %v7389, %v7599
        %v7696 = vadd.f32 %v7390, %v7602
        %v7697 = vadd.f32 %v7391, %v7607
        %v7698 = vadd.f32 %v7392, %v7610
        %v7699 = vadd.f32 %v7393, %v7615
        %v7700 = vadd.f32 %v7394, %v7618
        %v7701 = vadd.f32 %v7395, %v7623
        %v7702 = vadd.f32 %v7396, %v7626
        %v7703 = vadd.f32 %v7397, %v7631
        %v7704 = vadd.f32 %v7398, %v7634
        %v7705 = vadd.f32 %v7399, %v7639
        %v7706 = vadd.f32 %v7400, %v7642
        %v7707 = vadd.f32 %v7401, %v7647
        %v7708 = vadd.f32 %v7402, %v7650
        %v7709 = vadd.f32 %v7403, %v7655
        %v7710 = vadd.f32 %v7404, %v7658
        %v7711 = vadd.f32 %v7405, %v7663
        %v7712 = vadd.f32 %v7406, %v7666
        %v7713 = vadd.f32 %v7407, %v7671
        %v7714 = vadd.f32 %v7408, %v7674
        %v7715 = vadd.f32 %v7409, %v7679
        %v7716 = vadd.f32 %v7410, %v7682
        %v7717 = vld [vmem:[#allocation7] sm:$0x1]
        %v7719 = vlaneseq
        %v7720 = vshrl.u32 %v7719, 7
        %v7721 = vsub.s32 0, %v7720
        %v7722 = vrot.slane %v7717, %v7721
        %v7724 = vadd.f32 %v7685, %v7722
        %v7725 = vadd.f32 %v7686, %v7722
        %v7726 = vadd.f32 %v7687, %v7722
        %v7727 = vadd.f32 %v7688, %v7722
        %v7728 = vadd.f32 %v7689, %v7722
        %v7729 = vadd.f32 %v7690, %v7722
        %v7730 = vadd.f32 %v7691, %v7722
        %v7731 = vadd.f32 %v7692, %v7722
        %v7732 = vadd.f32 %v7693, %v7722
        %v7733 = vadd.f32 %v7694, %v7722
        %v7734 = vadd.f32 %v7695, %v7722
        %v7735 = vadd.f32 %v7696, %v7722
        %v7736 = vadd.f32 %v7697, %v7722
        %v7737 = vadd.f32 %v7698, %v7722
        %v7738 = vadd.f32 %v7699, %v7722
        %v7739 = vadd.f32 %v7700, %v7722
        %v7740 = vadd.f32 %v7701, %v7722
        %v7741 = vadd.f32 %v7702, %v7722
        %v7742 = vadd.f32 %v7703, %v7722
        %v7743 = vadd.f32 %v7704, %v7722
        %v7744 = vadd.f32 %v7705, %v7722
        %v7745 = vadd.f32 %v7706, %v7722
        %v7746 = vadd.f32 %v7707, %v7722
        %v7747 = vadd.f32 %v7708, %v7722
        %v7748 = vadd.f32 %v7709, %v7722
        %v7749 = vadd.f32 %v7710, %v7722
        %v7750 = vadd.f32 %v7711, %v7722
        %v7751 = vadd.f32 %v7712, %v7722
        %v7752 = vadd.f32 %v7713, %v7722
        %v7753 = vadd.f32 %v7714, %v7722
        %v7754 = vadd.f32 %v7715, %v7722
        %v7755 = vadd.f32 %v7716, %v7722
        %v7756 = vmax.f32 %v7724, 0.0
        %v7757 = vmax.f32 %v7725, 0.0
        %v7758 = vmax.f32 %v7726, 0.0
        %v7759 = vmax.f32 %v7727, 0.0
        %v7760 = vmax.f32 %v7728, 0.0
        %v7761 = vmax.f32 %v7729, 0.0
        %v7762 = vmax.f32 %v7730, 0.0
        %v7763 = vmax.f32 %v7731, 0.0
        %v7764 = vmax.f32 %v7732, 0.0
        %v7765 = vmax.f32 %v7733, 0.0
        %v7766 = vmax.f32 %v7734, 0.0
        %v7767 = vmax.f32 %v7735, 0.0
        %v7768 = vmax.f32 %v7736, 0.0
        %v7769 = vmax.f32 %v7737, 0.0
        %v7770 = vmax.f32 %v7738, 0.0
        %v7771 = vmax.f32 %v7739, 0.0
        %v7772 = vmax.f32 %v7740, 0.0
        %v7773 = vmax.f32 %v7741, 0.0
        %v7774 = vmax.f32 %v7742, 0.0
        %v7775 = vmax.f32 %v7743, 0.0
        %v7776 = vmax.f32 %v7744, 0.0
        %v7777 = vmax.f32 %v7745, 0.0
        %v7778 = vmax.f32 %v7746, 0.0
        %v7779 = vmax.f32 %v7747, 0.0
        %v7780 = vmax.f32 %v7748, 0.0
        %v7781 = vmax.f32 %v7749, 0.0
        %v7782 = vmax.f32 %v7750, 0.0
        %v7783 = vmax.f32 %v7751, 0.0
        %v7784 = vmax.f32 %v7752, 0.0
        %v7785 = vmax.f32 %v7753, 0.0
        %v7786 = vmax.f32 %v7754, 0.0
        %v7787 = vmax.f32 %v7755, 0.0
        %v7788 = vpack.c.bf16 %v7757, %v7756
        %v7789 = vpack.c.bf16 %v7759, %v7758
        %v7790 = vpack.c.bf16 %v7761, %v7760
        %v7791 = vpack.c.bf16 %v7763, %v7762
        %v7792 = vpack.c.bf16 %v7765, %v7764
        %v7793 = vpack.c.bf16 %v7767, %v7766
        %v7794 = vpack.c.bf16 %v7769, %v7768
        %v7795 = vpack.c.bf16 %v7771, %v7770
        %v7796 = vpack.c.bf16 %v7773, %v7772
        %v7797 = vpack.c.bf16 %v7775, %v7774
        %v7798 = vpack.c.bf16 %v7777, %v7776
        %v7799 = vpack.c.bf16 %v7779, %v7778
        %v7800 = vpack.c.bf16 %v7781, %v7780
        %v7801 = vpack.c.bf16 %v7783, %v7782
        %v7802 = vpack.c.bf16 %v7785, %v7784
        %v7803 = vpack.c.bf16 %v7787, %v7786
        %v7804 = vld [vmem:[%s6] sm:$0xf]
        %v7805 = vld [vmem:[%s6 + $0x4] sm:$0xf]
        %v7806 = vld [vmem:[%s6 + $0x8] sm:$0xf]
        %v7807 = vld [vmem:[%s6 + $0xc] sm:$0xf]
        %v7808 = vld [vmem:[%s7] sm:$0x1]
        %v7810 = vlaneseq
        %v7811 = vshrl.u32 %v7810, 7
        %v7812 = vsub.s32 0, %v7811
        %v7813 = vrot.slane %v7808, %v7812
        %v7819 = vunpack.c.l.b16 %v7804
        %v7820 = vunpack.c.l.b16 %v7805
        %v7821 = vunpack.c.l.b16 %v7806
        %v7822 = vunpack.c.l.b16 %v7807
        %v7823 = vpack.c.b16 %v7820, %v7819
        %v7824 = vpack.c.b16 %v7822, %v7821
        %v7828 = vsel %vm5080, %v7788, 0
        %v7831 = vsel %vm5080, %v7789, 0
        %v7834 = vsel %vm5080, %v7790, 0
        %v7837 = vsel %vm5080, %v7791, 0
        %v7840 = vsel %vm5080, %v7792, 0
        %v7843 = vsel %vm5080, %v7793, 0
        %v7846 = vsel %vm5080, %v7794, 0
        %v7849 = vsel %vm5080, %v7795, 0
        %v7852 = vsel %vm5080, %v7796, 0
        %v7855 = vsel %vm5080, %v7797, 0
        %v7858 = vsel %vm5080, %v7798, 0
        %v7861 = vsel %vm5080, %v7799, 0
        %v7864 = vsel %vm5080, %v7800, 0
        %v7867 = vsel %vm5080, %v7801, 0
        %v7870 = vsel %vm5080, %v7802, 0
        %v7873 = vsel %vm5080, %v7803, 0
        %7875 = vmatprep.subr.bf16.mxu0 0
        %7876 = vmatpush1.bf16.msra.mxu0 %v7823
        %7877 = vmatprep.subr.bf16.mxu0 0
        %7878 = vmatpush1.bf16.msra.mxu0 %v7824
        %7879 = vmatprep.subr.bf16.mxu0 0
        %7880 = vmatpush1.bf16.msra.mxu0 0
        %7881 = vmatprep.subr.bf16.mxu0 0
        %7882 = vmatpush1.bf16.msra.mxu0 0
        %7883 = vmatprep.subr.bf16.mxu0 0
        %7884 = vmatpush1.bf16.msra.mxu0 0
        %7885 = vmatprep.subr.bf16.mxu0 0
        %7886 = vmatpush1.bf16.msra.mxu0 0
        %7887 = vmatprep.subr.bf16.mxu0 0
        %7888 = vmatpush1.bf16.msra.mxu0 0
        %7889 = vmatprep.subr.bf16.mxu0 0
        %7890 = vmatpush1.bf16.msra.mxu0 0
        %7891 = vmatprep.subr.bf16.mxu0 0
        %7892 = vmatpush1.bf16.msra.mxu0 0
        %7893 = vmatprep.subr.bf16.mxu0 0
        %7894 = vmatpush1.bf16.msra.mxu0 0
        %7895 = vmatprep.subr.bf16.mxu0 0
        %7896 = vmatpush1.bf16.msra.mxu0 0
        %7897 = vmatprep.subr.bf16.mxu0 0
        %7898 = vmatpush1.bf16.msra.mxu0 0
        %7899 = vmatprep.subr.bf16.mxu0 0
        %7900 = vmatpush1.bf16.msra.mxu0 0
        %7901 = vmatprep.subr.bf16.mxu0 0
        %7902 = vmatpush1.bf16.msra.mxu0 0
        %7903 = vmatprep.subr.bf16.mxu0 0
        %7904 = vmatpush1.bf16.msra.mxu0 0
        %7905 = vmatprep.subr.bf16.mxu0 0
        %7906 = vmatpush1.bf16.msra.mxu0 0
        %7907 = vmatprep.mubr.bf16.mxu0 0
        %7908 = vmatmul.mubr.bf16.gmra.mrb[0].mxu0 %v7828
        %v7909 = vpop.f32.mrb[0].mxu0
        %v7910 = vadd.f32 %v7813, %v7909
        %v7911 = vpop.f32.mrb[0].mxu0
        %v7912 = vpop.f32.mrb[0].mxu0
        %v7913 = vadd.f32 %v7813, %v7912
        %v7914 = vpop.f32.mrb[0].mxu0
        %7915 = vmatprep.mubr.bf16.mxu0 0
        %7916 = vmatmul.mubr.bf16.gmra.mrb[0].mxu0 %v7831
        %v7917 = vpop.f32.mrb[0].mxu0
        %v7918 = vadd.f32 %v7813, %v7917
        %v7919 = vpop.f32.mrb[0].mxu0
        %v7920 = vpop.f32.mrb[0].mxu0
        %v7921 = vadd.f32 %v7813, %v7920
        %v7922 = vpop.f32.mrb[0].mxu0
        %7923 = vmatprep.mubr.bf16.mxu0 0
        %7924 = vmatmul.mubr.bf16.gmra.mrb[0].mxu0 %v7834
        %v7925 = vpop.f32.mrb[0].mxu0
        %v7926 = vadd.f32 %v7813, %v7925
        %v7927 = vpop.f32.mrb[0].mxu0
        %v7928 = vpop.f32.mrb[0].mxu0
        %v7929 = vadd.f32 %v7813, %v7928
        %v7930 = vpop.f32.mrb[0].mxu0
        %7931 = vmatprep.mubr.bf16.mxu0 0
        %7932 = vmatmul.mubr.bf16.gmra.mrb[0].mxu0 %v7837
        %v7933 = vpop.f32.mrb[0].mxu0
        %v7934 = vadd.f32 %v7813, %v7933
        %v7935 = vpop.f32.mrb[0].mxu0
        %v7936 = vpop.f32.mrb[0].mxu0
        %v7937 = vadd.f32 %v7813, %v7936
        %v7938 = vpop.f32.mrb[0].mxu0
        %7939 = vmatprep.mubr.bf16.mxu0 0
        %7940 = vmatmul.mubr.bf16.gmra.mrb[0].mxu0 %v7840
        %v7941 = vpop.f32.mrb[0].mxu0
        %v7942 = vadd.f32 %v7813, %v7941
        %v7943 = vpop.f32.mrb[0].mxu0
        %v7944 = vpop.f32.mrb[0].mxu0
        %v7945 = vadd.f32 %v7813, %v7944
        %v7946 = vpop.f32.mrb[0].mxu0
        %7947 = vmatprep.mubr.bf16.mxu0 0
        %7948 = vmatmul.mubr.bf16.gmra.mrb[0].mxu0 %v7843
        %v7949 = vpop.f32.mrb[0].mxu0
        %v7950 = vadd.f32 %v7813, %v7949
        %v7951 = vpop.f32.mrb[0].mxu0
        %v7952 = vpop.f32.mrb[0].mxu0
        %v7953 = vadd.f32 %v7813, %v7952
        %v7954 = vpop.f32.mrb[0].mxu0
        %7955 = vmatprep.mubr.bf16.mxu0 0
        %7956 = vmatmul.mubr.bf16.gmra.mrb[0].mxu0 %v7846
        %v7957 = vpop.f32.mrb[0].mxu0
        %v7958 = vadd.f32 %v7813, %v7957
        %v7959 = vpop.f32.mrb[0].mxu0
        %v7960 = vpop.f32.mrb[0].mxu0
        %v7961 = vadd.f32 %v7813, %v7960
        %v7962 = vpop.f32.mrb[0].mxu0
        %7963 = vmatprep.mubr.bf16.mxu0 0
        %7964 = vmatmul.mubr.bf16.gmra.mrb[0].mxu0 %v7849
        %v7965 = vpop.f32.mrb[0].mxu0
        %v7966 = vadd.f32 %v7813, %v7965
        %v7967 = vpop.f32.mrb[0].mxu0
        %v7968 = vpop.f32.mrb[0].mxu0
        %v7969 = vadd.f32 %v7813, %v7968
        %v7970 = vpop.f32.mrb[0].mxu0
        %7971 = vmatprep.mubr.bf16.mxu0 0
        %7972 = vmatmul.mubr.bf16.gmra.mrb[0].mxu0 %v7852
        %v7973 = vpop.f32.mrb[0].mxu0
        %v7974 = vadd.f32 %v7813, %v7973
        %v7975 = vpop.f32.mrb[0].mxu0
        %v7976 = vpop.f32.mrb[0].mxu0
        %v7977 = vadd.f32 %v7813, %v7976
        %v7978 = vpop.f32.mrb[0].mxu0
        %7979 = vmatprep.mubr.bf16.mxu0 0
        %7980 = vmatmul.mubr.bf16.gmra.mrb[0].mxu0 %v7855
        %v7981 = vpop.f32.mrb[0].mxu0
        %v7982 = vadd.f32 %v7813, %v7981
        %v7983 = vpop.f32.mrb[0].mxu0
        %v7984 = vpop.f32.mrb[0].mxu0
        %v7985 = vadd.f32 %v7813, %v7984
        %v7986 = vpop.f32.mrb[0].mxu0
        %7987 = vmatprep.mubr.bf16.mxu0 0
        %7988 = vmatmul.mubr.bf16.gmra.mrb[0].mxu0 %v7858
        %v7989 = vpop.f32.mrb[0].mxu0
        %v7990 = vadd.f32 %v7813, %v7989
        %v7991 = vpop.f32.mrb[0].mxu0
        %v7992 = vpop.f32.mrb[0].mxu0
        %v7993 = vadd.f32 %v7813, %v7992
        %v7994 = vpop.f32.mrb[0].mxu0
        %7995 = vmatprep.mubr.bf16.mxu0 0
        %7996 = vmatmul.mubr.bf16.gmra.mrb[0].mxu0 %v7861
        %v7997 = vpop.f32.mrb[0].mxu0
        %v7998 = vadd.f32 %v7813, %v7997
        %v7999 = vpop.f32.mrb[0].mxu0
        %v8000 = vpop.f32.mrb[0].mxu0
        %v8001 = vadd.f32 %v7813, %v8000
        %v8002 = vpop.f32.mrb[0].mxu0
        %8003 = vmatprep.mubr.bf16.mxu0 0
        %8004 = vmatmul.mubr.bf16.gmra.mrb[0].mxu0 %v7864
        %v8005 = vpop.f32.mrb[0].mxu0
        %v8006 = vadd.f32 %v7813, %v8005
        %v8007 = vpop.f32.mrb[0].mxu0
        %v8008 = vpop.f32.mrb[0].mxu0
        %v8009 = vadd.f32 %v7813, %v8008
        %v8010 = vpop.f32.mrb[0].mxu0
        %8011 = vmatprep.mubr.bf16.mxu0 0
        %8012 = vmatmul.mubr.bf16.gmra.mrb[0].mxu0 %v7867
        %v8013 = vpop.f32.mrb[0].mxu0
        %v8014 = vadd.f32 %v7813, %v8013
        %v8015 = vpop.f32.mrb[0].mxu0
        %v8016 = vpop.f32.mrb[0].mxu0
        %v8017 = vadd.f32 %v7813, %v8016
        %v8018 = vpop.f32.mrb[0].mxu0
        %8019 = vmatprep.mubr.bf16.mxu0 0
        %8020 = vmatmul.mubr.bf16.gmra.mrb[0].mxu0 %v7870
        %v8021 = vpop.f32.mrb[0].mxu0
        %v8022 = vadd.f32 %v7813, %v8021
        %v8023 = vpop.f32.mrb[0].mxu0
        %v8024 = vpop.f32.mrb[0].mxu0
        %v8025 = vadd.f32 %v7813, %v8024
        %v8026 = vpop.f32.mrb[0].mxu0
        %8027 = vmatprep.mubr.bf16.mxu0 0
        %8028 = vmatmul.mubr.bf16.gmra.mrb[0].mxu0 %v7873
        %v8029 = vpop.f32.mrb[0].mxu0
        %v8030 = vadd.f32 %v7813, %v8029
        %v8031 = vpop.f32.mrb[0].mxu0
        %v8032 = vpop.f32.mrb[0].mxu0
        %v8033 = vadd.f32 %v7813, %v8032
        %v8034 = vpop.f32.mrb[0].mxu0
        %8035 = vdwg.mxu0
        %8036 = vst [vmem:[%s338] sm:$0xff] %v7910
        %8037 = vst [vmem:[%s338 + $0x8] sm:$0xff] %v7913
        %8038 = vst [vmem:[%s338 + $0x10] sm:$0xff] %v7918
        %8039 = vst [vmem:[%s338 + $0x18] sm:$0xff] %v7921
        %8040 = vst [vmem:[%s338 + $0x20] sm:$0xff] %v7926
        %8041 = vst [vmem:[%s338 + $0x28] sm:$0xff] %v7929
        %8042 = vst [vmem:[%s338 + $0x30] sm:$0xff] %v7934
        %8043 = vst [vmem:[%s338 + $0x38] sm:$0xff] %v7937
        %8044 = vst [vmem:[%s338 + $0x40] sm:$0xff] %v7942
        %8045 = vst [vmem:[%s338 + $0x48] sm:$0xff] %v7945
        %8046 = vst [vmem:[%s338 + $0x50] sm:$0xff] %v7950
        %8047 = vst [vmem:[%s338 + $0x58] sm:$0xff] %v7953
        %8048 = vst [vmem:[%s338 + $0x60] sm:$0xff] %v7958
        %8049 = vst [vmem:[%s338 + $0x68] sm:$0xff] %v7961
        %8050 = vst [vmem:[%s338 + $0x70] sm:$0xff] %v7966
        %8051 = vst [vmem:[%s338 + $0x78] sm:$0xff] %v7969
        %8052 = vst [vmem:[%s338 + $0x80] sm:$0xff] %v7974
        %8053 = vst [vmem:[%s338 + $0x88] sm:$0xff] %v7977
        %8054 = vst [vmem:[%s338 + $0x90] sm:$0xff] %v7982
        %8055 = vst [vmem:[%s338 + $0x98] sm:$0xff] %v7985
        %8056 = vst [vmem:[%s338 + $0xa0] sm:$0xff] %v7990
        %8057 = vst [vmem:[%s338 + $0xa8] sm:$0xff] %v7993
        %8058 = vst [vmem:[%s338 + $0xb0] sm:$0xff] %v7998
        %8059 = vst [vmem:[%s338 + $0xb8] sm:$0xff] %v8001
        %8060 = vst [vmem:[%s338 + $0xc0] sm:$0xff] %v8006
        %8061 = vst [vmem:[%s338 + $0xc8] sm:$0xff] %v8009
        %8062 = vst [vmem:[%s338 + $0xd0] sm:$0xff] %v8014
        %8063 = vst [vmem:[%s338 + $0xd8] sm:$0xff] %v8017
        %8064 = vst [vmem:[%s338 + $0xe0] sm:$0xff] %v8022
        %8065 = vst [vmem:[%s338 + $0xe8] sm:$0xff] %v8025
        %8066 = vst [vmem:[%s338 + $0xf0] sm:$0xff] %v8030
        %8067 = vst [vmem:[%s338 + $0xf8] sm:$0xff] %v8033
        %s8068 = sand.u32 %s205, 1
        %s8069 = scalar_lea.sflag [#allocation4], %s8068
        %s8070 = sand.u32 %s205, 1
        %s8071 = smul.addr %s8070, 256
        %s8072 = scalar_lea.vmem [#allocation8], %s8071
        // Predicated region
        $region65: #{pdfnet_forward.1} parent=51 // pred_check
          %p8073 = pneg %p215
        $region66: #{pdfnet_forward.1} parent=51 // pred_check_branch
          %8075 = sbr.rel (%p8073) target = $region68
        $region67: #{pdfnet_forward.1} parent=51 // pred_region
          %s8077 = ssub.s32 4096, 4096
          %8078 = vsyncadd %s8069, %s8077
          %s8079 = smul.addr %s24, 32
          %s8080 = smul.addr %s8079, 128
          %s8081 = scalar_lea.hbm %s8, %s8080
          %s8082 = sshll.u32 %s8072, 4
          %s8083 = int_to_ptr.vmem [resolvable:$true] %s8082
          %8088 = dma.vmem_to_hbm [thread:$0]  %s8083, 4096, %s8081, %s8069, 128, 128, 8
        $region68: #{pdfnet_forward.1} parent=51 // pred_fallthru
          _
      $region52: #{pdfnet_forward.1} parent=5 // pred_fallthru
        _
      %p8089 = scmp.le.s32.totalorder 2, %s19
      // Predicated region
      $region69: #{pdfnet_forward.1} parent=5 // pred_check
        %p8090 = pneg %p8089
      $region70: #{pdfnet_forward.1} parent=5 // pred_check_branch
        %8092 = sbr.rel (%p8090) target = $region72
      $region71: #{pdfnet_forward.1} parent=5 // pred_region
        %s8093 = ssub.s32 %s19, 2
        // Predicated region
        $region73: #{pdfnet_forward.1} parent=71 // pred_check
          %p8094 = pneg %p221
        $region74: #{pdfnet_forward.1} parent=71 // pred_check_branch
          %8096 = sbr.rel (%p8094) target = $region76
        $region75: #{pdfnet_forward.1} parent=71 // pred_region
          %s8097 = sand.u32 %s206, 1
          %s8098 = scalar_lea.sflag [#allocation4], %s8097
          %s8099 = sand.u32 %s206, 1
          %s8100 = smul.addr %s8099, 256
          %s8101 = scalar_lea.vmem [#allocation8], %s8100
          %8102 = dma.done %s8098, 4096
        $region76: #{pdfnet_forward.1} parent=71 // pred_fallthru
          _
      $region72: #{pdfnet_forward.1} parent=5 // pred_fallthru
        _
    $region6: #{pdfnet_forward.1} parent=1 // loop_footer
      %s23 = sadd.s32 1, %s19
    $region7: #{pdfnet_forward.1} parent=1 // loop_footer_branch
      %18 = sbr.rel target = $region3
    $region8: #{pdfnet_forward.1} parent=1 // loop_exit
      _
    %8103 = vsyncpa [#allocation3], 1
    %s8104 = scalar_lea.sflag [#allocation3], 1
    %8105 = vsyncpa %s8104, 1
    %8106 = vsyncpa [#allocation6], 1
    %8107 = vsyncpa [#allocation4], 1
    %s8108 = scalar_lea.sflag [#allocation4], 1
    %8109 = vsyncpa %s8108, 1

</llo_original>
